<compile_context>
chip_gen: v7x
topology: tpu7x:2x2x1
jax: 0.10.0
libtpu: 0.0.40
codegen_flags: <defaults>
</compile_context>

<pallas_src>
import functools
import math

import numpy as np
import jax
import jax.numpy as jnp
from jax.experimental import pallas as pl
from jax.experimental.pallas import tpu as pltpu

# ----------------------------- configuration ---------------------------------
MUL = 8                 # "mul" multiplicity of hidden irreps
NB = 10                 # number_of_basis
FC_HIDDEN = 100         # fc_neurons hidden width
HID_PAD = ((FC_HIDDEN + 7) // 8) * 8     # 104, keeps fused-MLP row blocks 8-aligned
MAX_RADIUS = 2.0
NUM_NEIGHBORS = 3.0
NUM_NODES = 8.0
OUT_DIM = 4             # irreps_out = "4x0e"
LANE = 128
C_S = math.sin(math.pi / 8.0)
C_X = math.cos(math.pi / 8.0)
INV_SQRT3 = 3.0 ** -0.5
INV_SQRT_NN = NUM_NEIGHBORS ** -0.5
INV_SQRT_NODES = NUM_NODES ** -0.5
SC3_ROWS = 8            # layer-3 self-connection output (4 valid) padded to 8 sublanes

assert MUL % 8 == 0, "slab / fused-weight row slices must stay (8,128)-tile aligned"


# ----------------------------- the fused kernel --------------------------------
def _network_kernel(
    # per-bucket graph tensors (channel-major: channels on sublanes, nodes/edges on lanes)
    x0r_ref,     # (1, N)   node features (ones on real nodes)
    ea_ref,      # (8, E)   edge attr rows 0..3 = [Y0 | Y1x Y1y Y1z] * smooth_cutoff, rows 4..7 = 0
    emb_ref,     # (NB, E)  radial embedding (zero columns on padded edges)
    gat_ref,     # (N, E)   one-hot gather matrix (edge_src), bf16
    sca_ref,     # (E, N)   one-hot scatter matrix (edge_dst), bf16
    gra_ref,     # (N, B)   one-hot graph pooling matrix, bf16
    # fused / prepared weights
    fc1_ref,     # (3*HID_PAD, NB)            stacked radial-MLP layer-1 weights, bf16
    fc2_ref,     # (8+4M+2M, 3*HID_PAD)       block-diagonal radial-MLP layer-2 weights, bf16
    l1_sc_ref,   # (2M, 1)  f32   layer-1 self-connection column
    l1_l2s_ref,  # (2M, 1)  f32   layer-1 lin2 scalar block  (lin1 * 1/sqrt(nn) folded in)
    l1_l2v_ref,  # (M, 1)   f32   layer-1 lin2 1o block      (lin1 * 1/sqrt(nn) folded in)
    w_node_l2_ref,   # (9M, 4M) bf16  fused layer-2 [sc_s; sc_v xyz; lin1_s; lin1_v xyz]
    w_lin2_l2_ref,   # (5M, 8M) bf16  fused layer-2 lin2 (1/sqrt(nn) folded in)
    w_node_l3_ref,   # (8+4M, 4M) bf16  fused layer-3 [sc; lin1_s; lin1_1o xyz]
    w_lin2_l3_ref,   # (8, 2M)  bf16  layer-3 lin2 (padded rows, 1/sqrt(nn) folded in)
    # output
    out_ref,     # (OUT_DIM, B)
    # VMEM scratch: packed per-edge tensor-product slab (bf16)
    slab_ref,    # (8*M, E)
    *, M):
    f32 = jnp.float32
    bf16 = jnp.bfloat16

    def dot(a, b):
        # bf16 MXU operands, f32 accumulation (review: native bf16 passes on v5e/v6e/v7x).
        return jnp.dot(a.astype(bf16), b.astype(bf16), preferred_element_type=f32)

    def silu(t):
        return t * jax.nn.sigmoid(t)

    x0r = x0r_ref[...]
    ea = ea_ref[...]
    gat = gat_ref[...]
    sca = sca_ref[...]
    gra = gra_ref[...]
    E = ea.shape[1]

    y0 = ea[0:1, :]
    ax, ay, az = ea[1:2, :], ea[2:3, :], ea[3:4, :]

    # =============== fused radial MLPs (all three layers at once) ===============
    h_all = silu(dot(fc1_ref[...], emb_ref[...]))      # (3*HID_PAD, E)
    tw_all = dot(fc2_ref[...], h_all)                  # (8 + 4M + 2M, E)
    tw1 = tw_all[0:8, :]                               # layer 1 (rows 0..1 valid)
    tw2 = tw_all[8:8 + 4 * M, :]                       # layer 2 (w0..w3; dead 1e path dropped)
    tw3 = tw_all[8 + 4 * M:8 + 6 * M, :]               # layer 3

    # ===================== layer 1: Convolution -> Gate ==========================
    s_sc = l1_sc_ref[...] * x0r                        # (2M, N)  self-connection
    # uvu TP: row 0 -> 0e x 0e -> 0e (weight tw1[0]); rows 1..3 -> 0e x 1o -> 1o (weight tw1[1]).
    # The lin1 scalar and 1/sqrt(num_neighbors) are folded into l1_l2s / l1_l2v on the host.
    w8 = jnp.concatenate(
        [tw1[0:1, :], tw1[1:2, :], tw1[1:2, :], tw1[1:2, :], jnp.zeros_like(tw1[0:4, :])],
        axis=0)                                        # (8, E)
    mid1 = dot(w8 * ea, sca)                           # (8, N); rows 4..7 zero
    x_s = l1_l2s_ref[...] * mid1[0:1, :]               # (2M, N)
    out_s = C_S * s_sc + C_X * x_s
    # Gate: silu on scalars, sigmoid gates on the 1o block
    # TODO(synk): e3nn Gate uses variance-normalized activations; plain silu/sigmoid here.
    s = silu(out_s[0:M, :])                            # (M, N)
    g = jax.nn.sigmoid(out_s[M:2 * M, :])
    v1 = [g * (l1_l2v_ref[...] * mid1[1 + c:2 + c, :]) for c in range(3)]   # 3 x (M, N) 1o

    # ===================== layer 2: Convolution -> Gate ==========================
    sv = jnp.concatenate([s, v1[0], v1[1], v1[2]], axis=0)        # (4M, N)
    node_mix = dot(w_node_l2_ref[...], sv)                        # (9M, N) = [sc_s; sc_v; lin1]
    s_sc2 = node_mix[0:2 * M, :]                                  # (2M, N)
    v_sc = [node_mix[2 * M + c * M:2 * M + (c + 1) * M, :] for c in range(3)]
    # one fused node->edge gather for [s1; v1x; v1y; v1z]
    edge_sv = dot(node_mix[5 * M:9 * M, :], gat)                  # (4M, E)
    se = edge_sv[0:M, :]
    vex, vey, vez = edge_sv[M:2 * M, :], edge_sv[2 * M:3 * M, :], edge_sv[3 * M:4 * M, :]
    w0, w1 = tw2[0:M, :], tw2[M:2 * M, :]
    w2, w3 = tw2[2 * M:3 * M, :], tw2[3 * M:4 * M, :]
    # uvu tensor product paths (CG for l<=1); the 1o x 1o -> 1e cross-product path is dead
    # w.r.t. the final 4x0e head and is not computed.
    osa = w0 * se * y0                                            # 0e x 0e -> 0e
    osb = (w3 * INV_SQRT3) * (vex * ax + vey * ay + vez * az)     # 1o x 1o -> 0e
    ws = w1 * se                                                  # 0e x 1o -> 1o
    wy = w2 * y0                                                  # 1o x 0e -> 1o
    # pack TP outputs into the bf16 slab (16-row aligned stores) -> ONE fused scatter matmul
    slab_ref[0:2 * M, :] = jnp.concatenate([osa, osb], axis=0).astype(bf16)
    for c, (a_c, ve_c) in enumerate(((ax, vex), (ay, vey), (az, vez))):
        blk = jnp.concatenate([ws * a_c, wy * ve_c], axis=0)      # [ova_c; ovb_c]
        slab_ref[(2 + 2 * c) * M:(4 + 2 * c) * M, :] = blk.astype(bf16)
    mid2 = dot(slab_ref[...], sca)                                # (8M, N)
    lin2 = dot(w_lin2_l2_ref[...], mid2)                          # (5M, N) = [x_s; x_v xyz]
    out_s = C_S * s_sc2 + C_X * lin2[0:2 * M, :]
    out_v = [C_S * v_sc[c] + C_X * lin2[2 * M + c * M:2 * M + (c + 1) * M, :] for c in range(3)]
    s = silu(out_s[0:M, :])
    g1 = jax.nn.sigmoid(out_s[M:2 * M, :])
    v1 = [g1 * out_v[c] for c in range(3)]

    # ============ final layer: Convolution to irreps_out = 4x0e ==================
    sv = jnp.concatenate([s, v1[0], v1[1], v1[2]], axis=0)        # (4M, N)
    node_mix3 = dot(w_node_l3_ref[...], sv)                       # (8+4M, N) = [sc; lin1]
    s_sc3 = node_mix3[0:SC3_ROWS, :]                              # (8, N), rows 0..3 valid
    edge_sv = dot(node_mix3[SC3_ROWS:SC3_ROWS + 4 * M, :], gat)   # (4M, E)
    se = edge_sv[0:M, :]
    vex, vey, vez = edge_sv[M:2 * M, :], edge_sv[2 * M:3 * M, :], edge_sv[3 * M:4 * M, :]
    osa = tw3[0:M, :] * se * y0                                               # 0e x 0e -> 0e
    osb = (tw3[M:2 * M, :] * INV_SQRT3) * (vex * ax + vey * ay + vez * az)    # 1o x 1o -> 0e
    slab_ref[0:2 * M, :] = jnp.concatenate([osa, osb], axis=0).astype(bf16)
    mid3 = dot(slab_ref[0:2 * M, :], sca)                         # (2M, N)
    x_out = dot(w_lin2_l3_ref[...], mid3)                         # (8, N), rows 0..3 valid
    # self-connection blend + reduce_output (sum / sqrt(num_nodes) folded into the constants)
    node_out = (C_S * INV_SQRT_NODES) * s_sc3 + (C_X * INV_SQRT_NODES) * x_out
    out_ref[...] = dot(node_out, gra)[0:OUT_DIM, :]               # (OUT_DIM, B)


# ----------------------------- parameters -------------------------------------
def init_params(key, M=MUL, nb=NB, hid=FC_HIDDEN, out_dim=OUT_DIM):
    keys = iter(jax.random.split(key, 32))

    def w(shape, fan_in):
        return jax.random.normal(next(keys), shape, jnp.float32) / np.sqrt(float(fan_in))

    return {
        "l1": {  # Convolution(1x0e -> Mx0e + Mx0e + Mx1o) + Gate
            "fc_w1": w((nb, hid), nb), "fc_w2": w((hid, 2), hid),
            "sc_w": w((1, 2 * M), 1), "lin1_w": w((1, 1), 1),
            "lin2_w_s": w((1, 2 * M), 1), "lin2_w_v": w((1, M), 1),
        },
        "l2": {  # Convolution(Mx0e+Mx1o -> Mx0e + 2Mx0e + Mx1o + Mx1e) + Gate
            "fc_w1": w((nb, hid), nb), "fc_w2": w((hid, 5 * M), hid),
            "sc_w_s": w((M, 3 * M), M), "sc_w_v": w((M, M), M),
            "lin1_w_s": w((M, M), M), "lin1_w_v": w((M, M), M),
            "lin2_w_s": w((2 * M, 3 * M), 2 * M),
            "lin2_w_1o": w((2 * M, M), 2 * M), "lin2_w_1e": w((M, M), M),
        },
        "l3": {  # final Convolution(Mx0e+Mx1o+Mx1e -> 4x0e)
            "fc_w1": w((nb, hid), nb), "fc_w2": w((hid, 2 * M), hid),
            "sc_w": w((M, out_dim), M),
            "lin1_w_s": w((M, M), M), "lin1_w_1o": w((M, M), M), "lin1_w_1e": w((M, M), M),
            "lin2_w": w((2 * M, out_dim), 2 * M),
        },
    }


def prepare_params(params):
    """One-time host-side weight preparation (OUT of the jitted per-call path):
    transpose to (C_out, C_in), fuse per-layer maps into block-diagonal / block-structured
    matrices, fold the layer-1 lin1 scalar and 1/sqrt(num_neighbors), cast MXU weights to bf16.
    Dead paths (layer-2 1e TP output, dead gate columns, layer-3 1e lin1) are dropped."""
    M, HP = MUL, HID_PAD

    def T(w):
        return np.asarray(w, np.float32).T

    p1, p2, p3 = params["l1"], params["l2"], params["l3"]

    # --- fused radial MLPs: one stacked fc1, one block-diagonal fc2 -------------
    fc1_all = np.zeros((3 * HP, NB), np.float32)
    fc1_all[0:FC_HIDDEN, :] = T(p1["fc_w1"])
    fc1_all[HP:HP + FC_HIDDEN, :] = T(p2["fc_w1"])
    fc1_all[2 * HP:2 * HP + FC_HIDDEN, :] = T(p3["fc_w1"])

    fc2_all = np.zeros((8 + 4 * M + 2 * M, 3 * HP), np.float32)
    fc2_all[0:2, 0:FC_HIDDEN] = T(p1["fc_w2"])                         # layer 1 (2 weights)
    fc2_all[8:8 + 4 * M, HP:HP + FC_HIDDEN] = T(p2["fc_w2"])[:4 * M, :]  # layer 2 (w0..w3)
    fc2_all[8 + 4 * M:8 + 6 * M, 2 * HP:2 * HP + FC_HIDDEN] = T(p3["fc_w2"])   # layer 3

    # --- layer 1 (K=1 maps stay VPU broadcast columns, f32) ---------------------
    lin1 = float(np.asarray(p1["lin1_w"])[0, 0])
    l1_sc = T(p1["sc_w"])                                  # (2M, 1)
    l1_l2s = T(p1["lin2_w_s"]) * lin1 * INV_SQRT_NN        # (2M, 1)
    l1_l2v = T(p1["lin2_w_v"]) * lin1 * INV_SQRT_NN        # (M, 1)

    # --- layer 2 fused node map: [sc_s(2M); sc_v xyz(3M); lin1_s(M); lin1_v xyz(3M)] ----
    scs = T(p2["sc_w_s"])[:2 * M, :]
    scv = T(p2["sc_w_v"])
    l1s = T(p2["lin1_w_s"])
    l1v = T(p2["lin1_w_v"])
    w_node_l2 = np.zeros((9 * M, 4 * M), np.float32)
    w_node_l2[0:2 * M, 0:M] = scs
    w_node_l2[5 * M:6 * M, 0:M] = l1s
    for c in range(3):
        w_node_l2[2 * M + c * M:2 * M + (c + 1) * M, (1 + c) * M:(2 + c) * M] = scv
        w_node_l2[6 * M + c * M:6 * M + (c + 1) * M, (1 + c) * M:(2 + c) * M] = l1v

    # --- layer 2 fused lin2: out [x_s(2M); x_v xyz(3M)] from mid(8M) ------------
    l2s = T(p2["lin2_w_s"])[:2 * M, :]                     # (2M, 2M)
    l2o = T(p2["lin2_w_1o"])                               # (M, 2M)
    w_lin2_l2 = np.zeros((5 * M, 8 * M), np.float32)
    w_lin2_l2[0:2 * M, 0:2 * M] = l2s
    for c in range(3):
        w_lin2_l2[2 * M + c * M:2 * M + (c + 1) * M,
                  2 * M + 2 * c * M:2 * M + (2 * c + 2) * M] = l2o
    w_lin2_l2 *= INV_SQRT_NN

    # --- layer 3 fused node map: [sc(8 rows, 4 valid); lin1_s(M); lin1_1o xyz(3M)] ------
    sc3 = T(p3["sc_w"])                                    # (4, M)
    l1s3 = T(p3["lin1_w_s"])
    l1o3 = T(p3["lin1_w_1o"])
    w_node_l3 = np.zeros((SC3_ROWS + 4 * M, 4 * M), np.float32)
    w_node_l3[0:OUT_DIM, 0:M] = sc3
    w_node_l3[SC3_ROWS:SC3_ROWS + M, 0:M] = l1s3
    for c in range(3):
        w_node_l3[SC3_ROWS + M + c * M:SC3_ROWS + M + (c + 1) * M,
                  (1 + c) * M:(2 + c) * M] = l1o3

    # --- layer 3 lin2 (padded to 8 output rows) ----------------------------------
    w_lin2_l3 = np.zeros((8, 2 * M), np.float32)
    w_lin2_l3[0:OUT_DIM, :] = T(p3["lin2_w"])
    w_lin2_l3 *= INV_SQRT_NN

    bf = jnp.bfloat16
    return (jnp.asarray(fc1_all, bf), jnp.asarray(fc2_all, bf),
            jnp.asarray(l1_sc), jnp.asarray(l1_l2s), jnp.asarray(l1_l2v),
            jnp.asarray(w_node_l2, bf), jnp.asarray(w_lin2_l2, bf),
            jnp.asarray(w_node_l3, bf), jnp.asarray(w_lin2_l3, bf))


# ----------------------------- network forward --------------------------------
def network_forward(x0r, ea, emb, gat, sca, gra, *weights):
    graph_inputs = (x0r, ea, emb, gat, sca, gra)
    G = x0r.shape[0]
    B_per = gra.shape[2]
    E = ea.shape[2]

    def gspec(a):
        nd = a.ndim
        return pl.BlockSpec((None,) + tuple(a.shape[1:]),
                            lambda g, nd=nd: (g,) + (0,) * (nd - 1))

    def wspec(a):
        nd = a.ndim
        return pl.BlockSpec(tuple(a.shape), lambda g, nd=nd: (0,) * nd)

    out = pl.pallas_call(
        functools.partial(_network_kernel, M=MUL),
        out_shape=jax.ShapeDtypeStruct((G, OUT_DIM, B_per), jnp.float32),
        grid=(G,),
        in_specs=[gspec(a) for a in graph_inputs] + [wspec(w) for w in weights],
        out_specs=pl.BlockSpec((None, OUT_DIM, B_per), lambda g: (g, 0, 0)),
        scratch_shapes=[pltpu.VMEM((8 * MUL, E), jnp.bfloat16)],
        compiler_params=pltpu.CompilerParams(dimension_semantics=("parallel",)),
    )(*graph_inputs, *weights)
    # (G, OUT_DIM, B_per) -> (num_graphs, OUT_DIM)
    return out.transpose(0, 2, 1).reshape(G * B_per, OUT_DIM)


network_forward = jax.jit(network_forward)


# ----------------------------- preprocessing glue ------------------------------
def radius_graph_np(pos, batch, r):
    dist = np.linalg.norm(pos[:, None, :] - pos[None, :, :], axis=-1)
    adj = (dist < r) & (batch[:, None] == batch[None, :]) & (dist > 1e-9)
    src, dst = np.nonzero(adj)
    return src.astype(np.int32), dst.astype(np.int32)


def edge_features_np(pos, src, dst):
    """Host preprocessing (as in Network.preprocess + forward preamble)."""
    vec = pos[src] - pos[dst]
    length = np.linalg.norm(vec, axis=-1)
    unit = vec / length[:, None]
    # spherical harmonics (lmax=1, 'component' normalization): Y0 = 1, Y1 = sqrt(3)*unit
    sh = np.concatenate([np.ones((len(src), 1), np.float32),
                         np.sqrt(3.0) * unit], axis=-1)
    # gaussian radial basis (soft_one_hot_linspace, cutoff=False) * sqrt(number_of_basis)
    centers = np.linspace(0.0, MAX_RADIUS, NB)
    step = centers[1] - centers[0]
    diff = (length[:, None] - centers[None, :]) / step
    emb = np.exp(-diff ** 2) / 1.12 * np.sqrt(NB)
    # smooth_cutoff(edge_length / max_radius)
    u = 2.0 * (length / MAX_RADIUS - 1.0)
    cut = (1.0 - np.cos(np.pi * u)) / 2.0
    cut = np.where(u > 0.0, 0.0, np.where(u < -1.0, 1.0, cut))
    attr = cut[:, None] * sh
    return attr.astype(np.float32), emb.astype(np.float32)


def pack_buckets(pos, batch, num_graphs, num_buckets=1):
    """Pack graphs into `num_buckets` lane-dense buckets (channel-major layout).
    Nodes padded to a multiple of 128 lanes; edges padded to a common multiple of 128.
    Padded nodes/edges have zero attrs / zero one-hot columns and contribute nothing."""
    assert num_graphs % num_buckets == 0
    b_per = num_graphs // num_buckets

    per_bucket, n_max, e_max = [], 0, 0
    for g in range(num_buckets):
        gids = np.arange(g * b_per, (g + 1) * b_per)
        nodes = np.nonzero(np.isin(batch, gids))[0]
        lpos, lbatch = pos[nodes], batch[nodes]
        src, dst = radius_graph_np(lpos, lbatch, MAX_RADIUS)
        per_bucket.append((gids, lpos, lbatch, src, dst))
        n_max, e_max = max(n_max, len(nodes)), max(e_max, len(src))
    n_pad = max(LANE, ((n_max + LANE - 1) // LANE) * LANE)
    e_pad = max(LANE, ((e_max + LANE - 1) // LANE) * LANE)

    G = num_buckets
    x0r = np.zeros((G, 1, n_pad), np.float32)
    ea = np.zeros((G, 8, e_pad), np.float32)
    emb = np.zeros((G, NB, e_pad), np.float32)
    gat = np.zeros((G, n_pad, e_pad), np.float32)
    sca = np.zeros((G, e_pad, n_pad), np.float32)
    gra = np.zeros((G, n_pad, b_per), np.float32)
    for g, (gids, lpos, lbatch, src, dst) in enumerate(per_bucket):
        n, e = lpos.shape[0], src.shape[0]
        x0r[g, 0, :n] = 1.0                      # irreps_in is None -> node features = ones
        if e:
            attr, emb_e = edge_features_np(lpos, src, dst)
            ea[g, :4, :e] = attr.T
            emb[g, :, :e] = emb_e.T
            gat[g, src, np.arange(e)] = 1.0
            sca[g, np.arange(e), dst] = 1.0
        gra[g, np.arange(n), lbatch - gids[0]] = 1.0
    return (jnp.asarray(x0r), jnp.asarray(ea), jnp.asarray(emb),
            jnp.asarray(gat, jnp.bfloat16), jnp.asarray(sca, jnp.bfloat16),
            jnp.asarray(gra, jnp.bfloat16))


# ----------------------------- main --------------------------------------------
if __name__ == "__main__":
    key = jax.random.PRNGKey(0)
    k_pos, k_w = jax.random.split(key)

    # 16 graphs x 8 nodes -> the node axis fills all 128 lanes (lane-dense node tensors).
    NUM_GRAPHS, NODES_PER_GRAPH, NUM_BUCKETS = 16, 8, 1
    N_TOTAL = NUM_GRAPHS * NODES_PER_GRAPH
    pos = np.asarray(jax.random.uniform(k_pos, (N_TOTAL, 3), jnp.float32, 0.0, 2.0))
    batch = np.repeat(np.arange(NUM_GRAPHS), NODES_PER_GRAPH).astype(np.int32)

    graph_arrays = pack_buckets(pos, batch, NUM_GRAPHS, num_buckets=NUM_BUCKETS)
    params = init_params(k_w)
    weights = prepare_params(params)     # one-time host prep (outside the jitted call path)

    out = network_forward(*graph_arrays, *weights)
    out = jax.block_until_ready(out)
    out_np = np.asarray(out)
    assert out_np.shape == (NUM_GRAPHS, OUT_DIM) and np.all(np.isfinite(out_np))
    print("KERNEL_OK")
</pallas_src>

<mosaic_0001>
module attributes {stable_mosaic.version = 11 : i64} {
  func.func @_network_kernel(%arg0: i32, %arg1: memref<1x1x128xf32, #tpu.memory_space<vmem>>, %arg2: memref<1x8x896xf32, #tpu.memory_space<vmem>>, %arg3: memref<1x10x896xf32, #tpu.memory_space<vmem>>, %arg4: memref<1x128x896xbf16, #tpu.memory_space<vmem>>, %arg5: memref<1x896x128xbf16, #tpu.memory_space<vmem>>, %arg6: memref<1x128x16xbf16, #tpu.memory_space<vmem>>, %arg7: memref<312x10xbf16, #tpu.memory_space<vmem>>, %arg8: memref<56x312xbf16, #tpu.memory_space<vmem>>, %arg9: memref<16x1xf32, #tpu.memory_space<vmem>>, %arg10: memref<16x1xf32, #tpu.memory_space<vmem>>, %arg11: memref<8x1xf32, #tpu.memory_space<vmem>>, %arg12: memref<72x32xbf16, #tpu.memory_space<vmem>>, %arg13: memref<40x64xbf16, #tpu.memory_space<vmem>>, %arg14: memref<40x32xbf16, #tpu.memory_space<vmem>>, %arg15: memref<8x16xbf16, #tpu.memory_space<vmem>>, %arg16: memref<1x4x16xf32, #tpu.memory_space<vmem>>, %arg17: memref<64x896xbf16, #tpu.memory_space<vmem>>) attributes {dimension_semantics = [#tpu.dimension_semantics<parallel>], iteration_bounds = array<i64: 1>, scalar_prefetch = 0 : i64, scratch_operands = 1 : i64, tpu.core_type = #tpu.core_type<tc>, window_params = [{transform_indices = @transform_0, window_bounds = array<i64: 1, 1, 128>}, {transform_indices = @transform_1, window_bounds = array<i64: 1, 8, 896>}, {transform_indices = @transform_2, window_bounds = array<i64: 1, 10, 896>}, {transform_indices = @transform_3, window_bounds = array<i64: 1, 128, 896>}, {transform_indices = @transform_4, window_bounds = array<i64: 1, 896, 128>}, {transform_indices = @transform_5, window_bounds = array<i64: 1, 128, 16>}, {pipeline_mode = #tpu.pipeline_mode<synchronous>, transform_indices = @transform_6, window_bounds = array<i64: 312, 10>}, {pipeline_mode = #tpu.pipeline_mode<synchronous>, transform_indices = @transform_7, window_bounds = array<i64: 56, 312>}, {pipeline_mode = #tpu.pipeline_mode<synchronous>, transform_indices = @transform_8, window_bounds = array<i64: 16, 1>}, {pipeline_mode = #tpu.pipeline_mode<synchronous>, transform_indices = @transform_9, window_bounds = array<i64: 16, 1>}, {pipeline_mode = #tpu.pipeline_mode<synchronous>, transform_indices = @transform_10, window_bounds = array<i64: 8, 1>}, {pipeline_mode = #tpu.pipeline_mode<synchronous>, transform_indices = @transform_11, window_bounds = array<i64: 72, 32>}, {pipeline_mode = #tpu.pipeline_mode<synchronous>, transform_indices = @transform_12, window_bounds = array<i64: 40, 64>}, {pipeline_mode = #tpu.pipeline_mode<synchronous>, transform_indices = @transform_13, window_bounds = array<i64: 40, 32>}, {pipeline_mode = #tpu.pipeline_mode<synchronous>, transform_indices = @transform_14, window_bounds = array<i64: 8, 16>}, {transform_indices = @transform_15, window_bounds = array<i64: 1, 4, 16>}]} {
    %c0 = arith.constant 0 : index
    %c0_0 = arith.constant 0 : index
    %c0_1 = arith.constant 0 : index
    %0 = vector.load %arg1[%c0, %c0_0, %c0_1] : memref<1x1x128xf32, #tpu.memory_space<vmem>>, vector<1x1x128xf32>
    %1 = vector.shape_cast %0 : vector<1x1x128xf32> to vector<1x128xf32>
    %c0_2 = arith.constant 0 : index
    %c0_3 = arith.constant 0 : index
    %c0_4 = arith.constant 0 : index
    %2 = vector.load %arg2[%c0_2, %c0_3, %c0_4] : memref<1x8x896xf32, #tpu.memory_space<vmem>>, vector<1x8x896xf32>
    %3 = vector.shape_cast %2 : vector<1x8x896xf32> to vector<8x896xf32>
    %c0_5 = arith.constant 0 : index
    %c0_6 = arith.constant 0 : index
    %c0_7 = arith.constant 0 : index
    %4 = vector.load %arg4[%c0_5, %c0_6, %c0_7] : memref<1x128x896xbf16, #tpu.memory_space<vmem>>, vector<1x128x896xbf16>
    %5 = vector.shape_cast %4 : vector<1x128x896xbf16> to vector<128x896xbf16>
    %c0_8 = arith.constant 0 : index
    %c0_9 = arith.constant 0 : index
    %c0_10 = arith.constant 0 : index
    %6 = vector.load %arg5[%c0_8, %c0_9, %c0_10] : memref<1x896x128xbf16, #tpu.memory_space<vmem>>, vector<1x896x128xbf16>
    %7 = vector.shape_cast %6 : vector<1x896x128xbf16> to vector<896x128xbf16>
    %c0_11 = arith.constant 0 : index
    %c0_12 = arith.constant 0 : index
    %c0_13 = arith.constant 0 : index
    %8 = vector.load %arg6[%c0_11, %c0_12, %c0_13] : memref<1x128x16xbf16, #tpu.memory_space<vmem>>, vector<1x128x16xbf16>
    %9 = vector.shape_cast %8 : vector<1x128x16xbf16> to vector<128x16xbf16>
    %10 = vector.extract_strided_slice %3 {offsets = [0, 0], sizes = [1, 896], strides = [1, 1]} : vector<8x896xf32> to vector<1x896xf32>
    %11 = vector.extract_strided_slice %3 {offsets = [1, 0], sizes = [1, 896], strides = [1, 1]} : vector<8x896xf32> to vector<1x896xf32>
    %12 = vector.extract_strided_slice %3 {offsets = [2, 0], sizes = [1, 896], strides = [1, 1]} : vector<8x896xf32> to vector<1x896xf32>
    %13 = vector.extract_strided_slice %3 {offsets = [3, 0], sizes = [1, 896], strides = [1, 1]} : vector<8x896xf32> to vector<1x896xf32>
    %c0_14 = arith.constant 0 : index
    %c0_15 = arith.constant 0 : index
    %14 = vector.load %arg7[%c0_14, %c0_15] : memref<312x10xbf16, #tpu.memory_space<vmem>>, vector<312x10xbf16>
    %c0_16 = arith.constant 0 : index
    %c0_17 = arith.constant 0 : index
    %c0_18 = arith.constant 0 : index
    %15 = vector.load %arg3[%c0_16, %c0_17, %c0_18] : memref<1x10x896xf32, #tpu.memory_space<vmem>>, vector<1x10x896xf32>
    %16 = vector.shape_cast %15 : vector<1x10x896xf32> to vector<10x896xf32>
    %17 = arith.truncf %16 : vector<10x896xf32> to vector<10x896xbf16>
    %cst = arith.constant dense<0.000000e+00> : vector<312x896xf32>
    %18 = tpu.matmul %14, %17, %cst {dimension_numbers = #tpu.dot_dimension_numbers<[1], [0], [0], [1], [0, 0, 1, 1], [], []>} : vector<312x10xbf16>, vector<10x896xbf16>, vector<312x896xf32> -> vector<312x896xf32>
    %19 = arith.negf %18 : vector<312x896xf32>
    %20 = math.exp %19 : vector<312x896xf32>
    %cst_19 = arith.constant 1.000000e+00 : f32
    %21 = vector.broadcast %cst_19 : f32 to vector<312x896xf32>
    %22 = arith.addf %21, %20 : vector<312x896xf32>
    %23 = arith.divf %21, %22 : vector<312x896xf32>
    %24 = arith.mulf %18, %23 : vector<312x896xf32>
    %c0_20 = arith.constant 0 : index
    %c0_21 = arith.constant 0 : index
    %25 = vector.load %arg8[%c0_20, %c0_21] : memref<56x312xbf16, #tpu.memory_space<vmem>>, vector<56x312xbf16>
    %26 = arith.truncf %24 : vector<312x896xf32> to vector<312x896xbf16>
    %cst_22 = arith.constant dense<0.000000e+00> : vector<56x896xf32>
    %27 = tpu.matmul %25, %26, %cst_22 {dimension_numbers = #tpu.dot_dimension_numbers<[1], [0], [0], [1], [0, 0, 1, 1], [], []>} : vector<56x312xbf16>, vector<312x896xbf16>, vector<56x896xf32> -> vector<56x896xf32>
    %28 = vector.extract_strided_slice %27 {offsets = [0, 0], sizes = [8, 896], strides = [1, 1]} : vector<56x896xf32> to vector<8x896xf32>
    %29 = vector.extract_strided_slice %27 {offsets = [8, 0], sizes = [32, 896], strides = [1, 1]} : vector<56x896xf32> to vector<32x896xf32>
    %30 = vector.extract_strided_slice %27 {offsets = [40, 0], sizes = [16, 896], strides = [1, 1]} : vector<56x896xf32> to vector<16x896xf32>
    %c0_23 = arith.constant 0 : index
    %c0_24 = arith.constant 0 : index
    %31 = vector.load %arg9[%c0_23, %c0_24] : memref<16x1xf32, #tpu.memory_space<vmem>>, vector<16x1xf32>
    %32 = vector.broadcast %31 : vector<16x1xf32> to vector<16x128xf32>
    %33 = vector.broadcast %1 : vector<1x128xf32> to vector<16x128xf32>
    %34 = arith.mulf %32, %33 : vector<16x128xf32>
    %35 = vector.extract_strided_slice %28 {offsets = [0, 0], sizes = [1, 896], strides = [1, 1]} : vector<8x896xf32> to vector<1x896xf32>
    %36 = vector.extract_strided_slice %28 {offsets = [1, 0], sizes = [1, 896], strides = [1, 1]} : vector<8x896xf32> to vector<1x896xf32>
    %37 = vector.extract_strided_slice %28 {offsets = [1, 0], sizes = [1, 896], strides = [1, 1]} : vector<8x896xf32> to vector<1x896xf32>
    %38 = vector.extract_strided_slice %28 {offsets = [1, 0], sizes = [1, 896], strides = [1, 1]} : vector<8x896xf32> to vector<1x896xf32>
    %cst_25 = arith.constant 0.000000e+00 : f32
    %39 = vector.broadcast %cst_25 : f32 to vector<4x896xf32>
    %40 = tpu.concatenate %35, %36, %37, %38, %39 in 0 : vector<1x896xf32>, vector<1x896xf32>, vector<1x896xf32>, vector<1x896xf32>, vector<4x896xf32> -> vector<8x896xf32>
    %41 = arith.mulf %40, %3 : vector<8x896xf32>
    %42 = arith.truncf %41 : vector<8x896xf32> to vector<8x896xbf16>
    %cst_26 = arith.constant dense<0.000000e+00> : vector<8x128xf32>
    %43 = tpu.matmul %42, %7, %cst_26 {dimension_numbers = #tpu.dot_dimension_numbers<[1], [0], [0], [1], [0, 0, 1, 1], [], []>} : vector<8x896xbf16>, vector<896x128xbf16>, vector<8x128xf32> -> vector<8x128xf32>
    %c0_27 = arith.constant 0 : index
    %c0_28 = arith.constant 0 : index
    %44 = vector.load %arg10[%c0_27, %c0_28] : memref<16x1xf32, #tpu.memory_space<vmem>>, vector<16x1xf32>
    %45 = vector.extract_strided_slice %43 {offsets = [0, 0], sizes = [1, 128], strides = [1, 1]} : vector<8x128xf32> to vector<1x128xf32>
    %46 = vector.broadcast %44 : vector<16x1xf32> to vector<16x128xf32>
    %47 = vector.broadcast %45 : vector<1x128xf32> to vector<16x128xf32>
    %48 = arith.mulf %46, %47 : vector<16x128xf32>
    %cst_29 = arith.constant 0.382683426 : f32
    %49 = vector.broadcast %cst_29 : f32 to vector<16x128xf32>
    %50 = arith.mulf %49, %34 : vector<16x128xf32>
    %cst_30 = arith.constant 0.923879504 : f32
    %51 = vector.broadcast %cst_30 : f32 to vector<16x128xf32>
    %52 = arith.mulf %51, %48 : vector<16x128xf32>
    %53 = arith.addf %50, %52 : vector<16x128xf32>
    %54 = vector.extract_strided_slice %53 {offsets = [0, 0], sizes = [8, 128], strides = [1, 1]} : vector<16x128xf32> to vector<8x128xf32>
    %55 = arith.negf %54 : vector<8x128xf32>
    %56 = math.exp %55 : vector<8x128xf32>
    %cst_31 = arith.constant 1.000000e+00 : f32
    %57 = vector.broadcast %cst_31 : f32 to vector<8x128xf32>
    %58 = arith.addf %57, %56 : vector<8x128xf32>
    %59 = arith.divf %57, %58 : vector<8x128xf32>
    %60 = arith.mulf %54, %59 : vector<8x128xf32>
    %61 = vector.extract_strided_slice %53 {offsets = [8, 0], sizes = [8, 128], strides = [1, 1]} : vector<16x128xf32> to vector<8x128xf32>
    %62 = arith.negf %61 : vector<8x128xf32>
    %63 = math.exp %62 : vector<8x128xf32>
    %cst_32 = arith.constant 1.000000e+00 : f32
    %64 = vector.broadcast %cst_32 : f32 to vector<8x128xf32>
    %65 = arith.addf %64, %63 : vector<8x128xf32>
    %66 = arith.divf %64, %65 : vector<8x128xf32>
    %c0_33 = arith.constant 0 : index
    %c0_34 = arith.constant 0 : index
    %67 = vector.load %arg11[%c0_33, %c0_34] : memref<8x1xf32, #tpu.memory_space<vmem>>, vector<8x1xf32>
    %68 = vector.extract_strided_slice %43 {offsets = [1, 0], sizes = [1, 128], strides = [1, 1]} : vector<8x128xf32> to vector<1x128xf32>
    %69 = vector.broadcast %67 : vector<8x1xf32> to vector<8x128xf32>
    %70 = vector.broadcast %68 : vector<1x128xf32> to vector<8x128xf32>
    %71 = arith.mulf %69, %70 : vector<8x128xf32>
    %72 = arith.mulf %66, %71 : vector<8x128xf32>
    %c0_35 = arith.constant 0 : index
    %c0_36 = arith.constant 0 : index
    %73 = vector.load %arg11[%c0_35, %c0_36] : memref<8x1xf32, #tpu.memory_space<vmem>>, vector<8x1xf32>
    %74 = vector.extract_strided_slice %43 {offsets = [2, 0], sizes = [1, 128], strides = [1, 1]} : vector<8x128xf32> to vector<1x128xf32>
    %75 = vector.broadcast %73 : vector<8x1xf32> to vector<8x128xf32>
    %76 = vector.broadcast %74 : vector<1x128xf32> to vector<8x128xf32>
    %77 = arith.mulf %75, %76 : vector<8x128xf32>
    %78 = arith.mulf %66, %77 : vector<8x128xf32>
    %c0_37 = arith.constant 0 : index
    %c0_38 = arith.constant 0 : index
    %79 = vector.load %arg11[%c0_37, %c0_38] : memref<8x1xf32, #tpu.memory_space<vmem>>, vector<8x1xf32>
    %80 = vector.extract_strided_slice %43 {offsets = [3, 0], sizes = [1, 128], strides = [1, 1]} : vector<8x128xf32> to vector<1x128xf32>
    %81 = vector.broadcast %79 : vector<8x1xf32> to vector<8x128xf32>
    %82 = vector.broadcast %80 : vector<1x128xf32> to vector<8x128xf32>
    %83 = arith.mulf %81, %82 : vector<8x128xf32>
    %84 = arith.mulf %66, %83 : vector<8x128xf32>
    %85 = tpu.concatenate %60, %72, %78, %84 in 0 : vector<8x128xf32>, vector<8x128xf32>, vector<8x128xf32>, vector<8x128xf32> -> vector<32x128xf32>
    %c0_39 = arith.constant 0 : index
    %c0_40 = arith.constant 0 : index
    %86 = vector.load %arg12[%c0_39, %c0_40] : memref<72x32xbf16, #tpu.memory_space<vmem>>, vector<72x32xbf16>
    %87 = arith.truncf %85 : vector<32x128xf32> to vector<32x128xbf16>
    %cst_41 = arith.constant dense<0.000000e+00> : vector<72x128xf32>
    %88 = tpu.matmul %86, %87, %cst_41 {dimension_numbers = #tpu.dot_dimension_numbers<[1], [0], [0], [1], [0, 0, 1, 1], [], []>} : vector<72x32xbf16>, vector<32x128xbf16>, vector<72x128xf32> -> vector<72x128xf32>
    %89 = vector.extract_strided_slice %88 {offsets = [0, 0], sizes = [16, 128], strides = [1, 1]} : vector<72x128xf32> to vector<16x128xf32>
    %90 = vector.extract_strided_slice %88 {offsets = [16, 0], sizes = [8, 128], strides = [1, 1]} : vector<72x128xf32> to vector<8x128xf32>
    %91 = vector.extract_strided_slice %88 {offsets = [24, 0], sizes = [8, 128], strides = [1, 1]} : vector<72x128xf32> to vector<8x128xf32>
    %92 = vector.extract_strided_slice %88 {offsets = [32, 0], sizes = [8, 128], strides = [1, 1]} : vector<72x128xf32> to vector<8x128xf32>
    %93 = vector.extract_strided_slice %88 {offsets = [40, 0], sizes = [32, 128], strides = [1, 1]} : vector<72x128xf32> to vector<32x128xf32>
    %94 = arith.truncf %93 : vector<32x128xf32> to vector<32x128xbf16>
    %cst_42 = arith.constant dense<0.000000e+00> : vector<32x896xf32>
    %95 = tpu.matmul %94, %5, %cst_42 {dimension_numbers = #tpu.dot_dimension_numbers<[1], [0], [0], [1], [0, 0, 1, 1], [], []>} : vector<32x128xbf16>, vector<128x896xbf16>, vector<32x896xf32> -> vector<32x896xf32>
    %96 = vector.extract_strided_slice %95 {offsets = [0, 0], sizes = [8, 896], strides = [1, 1]} : vector<32x896xf32> to vector<8x896xf32>
    %97 = vector.extract_strided_slice %95 {offsets = [8, 0], sizes = [8, 896], strides = [1, 1]} : vector<32x896xf32> to vector<8x896xf32>
    %98 = vector.extract_strided_slice %95 {offsets = [16, 0], sizes = [8, 896], strides = [1, 1]} : vector<32x896xf32> to vector<8x896xf32>
    %99 = vector.extract_strided_slice %95 {offsets = [24, 0], sizes = [8, 896], strides = [1, 1]} : vector<32x896xf32> to vector<8x896xf32>
    %100 = vector.extract_strided_slice %29 {offsets = [0, 0], sizes = [8, 896], strides = [1, 1]} : vector<32x896xf32> to vector<8x896xf32>
    %101 = vector.extract_strided_slice %29 {offsets = [8, 0], sizes = [8, 896], strides = [1, 1]} : vector<32x896xf32> to vector<8x896xf32>
    %102 = vector.extract_strided_slice %29 {offsets = [16, 0], sizes = [8, 896], strides = [1, 1]} : vector<32x896xf32> to vector<8x896xf32>
    %103 = vector.extract_strided_slice %29 {offsets = [24, 0], sizes = [8, 896], strides = [1, 1]} : vector<32x896xf32> to vector<8x896xf32>
    %104 = arith.mulf %100, %96 : vector<8x896xf32>
    %105 = vector.broadcast %10 : vector<1x896xf32> to vector<8x896xf32>
    %106 = arith.mulf %104, %105 : vector<8x896xf32>
    %cst_43 = arith.constant 0.577350259 : f32
    %107 = vector.broadcast %cst_43 : f32 to vector<8x896xf32>
    %108 = arith.mulf %103, %107 : vector<8x896xf32>
    %109 = vector.broadcast %11 : vector<1x896xf32> to vector<8x896xf32>
    %110 = arith.mulf %97, %109 : vector<8x896xf32>
    %111 = vector.broadcast %12 : vector<1x896xf32> to vector<8x896xf32>
    %112 = arith.mulf %98, %111 : vector<8x896xf32>
    %113 = arith.addf %110, %112 : vector<8x896xf32>
    %114 = vector.broadcast %13 : vector<1x896xf32> to vector<8x896xf32>
    %115 = arith.mulf %99, %114 : vector<8x896xf32>
    %116 = arith.addf %113, %115 : vector<8x896xf32>
    %117 = arith.mulf %108, %116 : vector<8x896xf32>
    %118 = arith.mulf %101, %96 : vector<8x896xf32>
    %119 = vector.broadcast %10 : vector<1x896xf32> to vector<8x896xf32>
    %120 = arith.mulf %102, %119 : vector<8x896xf32>
    %121 = tpu.concatenate %106, %117 in 0 : vector<8x896xf32>, vector<8x896xf32> -> vector<16x896xf32>
    %122 = arith.truncf %121 : vector<16x896xf32> to vector<16x896xbf16>
    %c0_44 = arith.constant 0 : index
    %c0_45 = arith.constant 0 : index
    %123 = vector.load %arg17[%c0_44, %c0_45] : memref<64x896xbf16, #tpu.memory_space<vmem>>, vector<16x896xbf16>
    tpu.vector_store %arg17[%c0_44, %c0_45], %122 {strides = array<i32>} : memref<64x896xbf16, #tpu.memory_space<vmem>>, vector<16x896xbf16>,
    %124 = vector.broadcast %11 : vector<1x896xf32> to vector<8x896xf32>
    %125 = arith.mulf %118, %124 : vector<8x896xf32>
    %126 = arith.mulf %120, %97 : vector<8x896xf32>
    %127 = tpu.concatenate %125, %126 in 0 : vector<8x896xf32>, vector<8x896xf32> -> vector<16x896xf32>
    %128 = arith.truncf %127 : vector<16x896xf32> to vector<16x896xbf16>
    %c16 = arith.constant 16 : index
    %c0_46 = arith.constant 0 : index
    %129 = vector.load %arg17[%c16, %c0_46] : memref<64x896xbf16, #tpu.memory_space<vmem>>, vector<16x896xbf16>
    tpu.vector_store %arg17[%c16, %c0_46], %128 {strides = array<i32>} : memref<64x896xbf16, #tpu.memory_space<vmem>>, vector<16x896xbf16>,
    %130 = vector.broadcast %12 : vector<1x896xf32> to vector<8x896xf32>
    %131 = arith.mulf %118, %130 : vector<8x896xf32>
    %132 = arith.mulf %120, %98 : vector<8x896xf32>
    %133 = tpu.concatenate %131, %132 in 0 : vector<8x896xf32>, vector<8x896xf32> -> vector<16x896xf32>
    %134 = arith.truncf %133 : vector<16x896xf32> to vector<16x896xbf16>
    %c32 = arith.constant 32 : index
    %c0_47 = arith.constant 0 : index
    %135 = vector.load %arg17[%c32, %c0_47] : memref<64x896xbf16, #tpu.memory_space<vmem>>, vector<16x896xbf16>
    tpu.vector_store %arg17[%c32, %c0_47], %134 {strides = array<i32>} : memref<64x896xbf16, #tpu.memory_space<vmem>>, vector<16x896xbf16>,
    %136 = vector.broadcast %13 : vector<1x896xf32> to vector<8x896xf32>
    %137 = arith.mulf %118, %136 : vector<8x896xf32>
    %138 = arith.mulf %120, %99 : vector<8x896xf32>
    %139 = tpu.concatenate %137, %138 in 0 : vector<8x896xf32>, vector<8x896xf32> -> vector<16x896xf32>
    %140 = arith.truncf %139 : vector<16x896xf32> to vector<16x896xbf16>
    %c48 = arith.constant 48 : index
    %c0_48 = arith.constant 0 : index
    %141 = vector.load %arg17[%c48, %c0_48] : memref<64x896xbf16, #tpu.memory_space<vmem>>, vector<16x896xbf16>
    tpu.vector_store %arg17[%c48, %c0_48], %140 {strides = array<i32>} : memref<64x896xbf16, #tpu.memory_space<vmem>>, vector<16x896xbf16>,
    %c0_49 = arith.constant 0 : index
    %c0_50 = arith.constant 0 : index
    %142 = vector.load %arg17[%c0_49, %c0_50] : memref<64x896xbf16, #tpu.memory_space<vmem>>, vector<64x896xbf16>
    %cst_51 = arith.constant dense<0.000000e+00> : vector<64x128xf32>
    %143 = tpu.matmul %142, %7, %cst_51 {dimension_numbers = #tpu.dot_dimension_numbers<[1], [0], [0], [1], [0, 0, 1, 1], [], []>} : vector<64x896xbf16>, vector<896x128xbf16>, vector<64x128xf32> -> vector<64x128xf32>
    %c0_52 = arith.constant 0 : index
    %c0_53 = arith.constant 0 : index
    %144 = vector.load %arg13[%c0_52, %c0_53] : memref<40x64xbf16, #tpu.memory_space<vmem>>, vector<40x64xbf16>
    %145 = arith.truncf %143 : vector<64x128xf32> to vector<64x128xbf16>
    %cst_54 = arith.constant dense<0.000000e+00> : vector<40x128xf32>
    %146 = tpu.matmul %144, %145, %cst_54 {dimension_numbers = #tpu.dot_dimension_numbers<[1], [0], [0], [1], [0, 0, 1, 1], [], []>} : vector<40x64xbf16>, vector<64x128xbf16>, vector<40x128xf32> -> vector<40x128xf32>
    %cst_55 = arith.constant 0.382683426 : f32
    %147 = vector.broadcast %cst_55 : f32 to vector<16x128xf32>
    %148 = arith.mulf %147, %89 : vector<16x128xf32>
    %149 = vector.extract_strided_slice %146 {offsets = [0, 0], sizes = [16, 128], strides = [1, 1]} : vector<40x128xf32> to vector<16x128xf32>
    %cst_56 = arith.constant 0.923879504 : f32
    %150 = vector.broadcast %cst_56 : f32 to vector<16x128xf32>
    %151 = arith.mulf %150, %149 : vector<16x128xf32>
    %152 = arith.addf %148, %151 : vector<16x128xf32>
    %cst_57 = arith.constant 0.382683426 : f32
    %153 = vector.broadcast %cst_57 : f32 to vector<8x128xf32>
    %154 = arith.mulf %153, %90 : vector<8x128xf32>
    %155 = vector.extract_strided_slice %146 {offsets = [16, 0], sizes = [8, 128], strides = [1, 1]} : vector<40x128xf32> to vector<8x128xf32>
    %cst_58 = arith.constant 0.923879504 : f32
    %156 = vector.broadcast %cst_58 : f32 to vector<8x128xf32>
    %157 = arith.mulf %156, %155 : vector<8x128xf32>
    %158 = arith.addf %154, %157 : vector<8x128xf32>
    %cst_59 = arith.constant 0.382683426 : f32
    %159 = vector.broadcast %cst_59 : f32 to vector<8x128xf32>
    %160 = arith.mulf %159, %91 : vector<8x128xf32>
    %161 = vector.extract_strided_slice %146 {offsets = [24, 0], sizes = [8, 128], strides = [1, 1]} : vector<40x128xf32> to vector<8x128xf32>
    %cst_60 = arith.constant 0.923879504 : f32
    %162 = vector.broadcast %cst_60 : f32 to vector<8x128xf32>
    %163 = arith.mulf %162, %161 : vector<8x128xf32>
    %164 = arith.addf %160, %163 : vector<8x128xf32>
    %cst_61 = arith.constant 0.382683426 : f32
    %165 = vector.broadcast %cst_61 : f32 to vector<8x128xf32>
    %166 = arith.mulf %165, %92 : vector<8x128xf32>
    %167 = vector.extract_strided_slice %146 {offsets = [32, 0], sizes = [8, 128], strides = [1, 1]} : vector<40x128xf32> to vector<8x128xf32>
    %cst_62 = arith.constant 0.923879504 : f32
    %168 = vector.broadcast %cst_62 : f32 to vector<8x128xf32>
    %169 = arith.mulf %168, %167 : vector<8x128xf32>
    %170 = arith.addf %166, %169 : vector<8x128xf32>
    %171 = vector.extract_strided_slice %152 {offsets = [0, 0], sizes = [8, 128], strides = [1, 1]} : vector<16x128xf32> to vector<8x128xf32>
    %172 = arith.negf %171 : vector<8x128xf32>
    %173 = math.exp %172 : vector<8x128xf32>
    %cst_63 = arith.constant 1.000000e+00 : f32
    %174 = vector.broadcast %cst_63 : f32 to vector<8x128xf32>
    %175 = arith.addf %174, %173 : vector<8x128xf32>
    %176 = arith.divf %174, %175 : vector<8x128xf32>
    %177 = arith.mulf %171, %176 : vector<8x128xf32>
    %178 = vector.extract_strided_slice %152 {offsets = [8, 0], sizes = [8, 128], strides = [1, 1]} : vector<16x128xf32> to vector<8x128xf32>
    %179 = arith.negf %178 : vector<8x128xf32>
    %180 = math.exp %179 : vector<8x128xf32>
    %cst_64 = arith.constant 1.000000e+00 : f32
    %181 = vector.broadcast %cst_64 : f32 to vector<8x128xf32>
    %182 = arith.addf %181, %180 : vector<8x128xf32>
    %183 = arith.divf %181, %182 : vector<8x128xf32>
    %184 = arith.mulf %183, %158 : vector<8x128xf32>
    %185 = arith.mulf %183, %164 : vector<8x128xf32>
    %186 = arith.mulf %183, %170 : vector<8x128xf32>
    %187 = tpu.concatenate %177, %184, %185, %186 in 0 : vector<8x128xf32>, vector<8x128xf32>, vector<8x128xf32>, vector<8x128xf32> -> vector<32x128xf32>
    %c0_65 = arith.constant 0 : index
    %c0_66 = arith.constant 0 : index
    %188 = vector.load %arg14[%c0_65, %c0_66] : memref<40x32xbf16, #tpu.memory_space<vmem>>, vector<40x32xbf16>
    %189 = arith.truncf %187 : vector<32x128xf32> to vector<32x128xbf16>
    %cst_67 = arith.constant dense<0.000000e+00> : vector<40x128xf32>
    %190 = tpu.matmul %188, %189, %cst_67 {dimension_numbers = #tpu.dot_dimension_numbers<[1], [0], [0], [1], [0, 0, 1, 1], [], []>} : vector<40x32xbf16>, vector<32x128xbf16>, vector<40x128xf32> -> vector<40x128xf32>
    %191 = vector.extract_strided_slice %190 {offsets = [0, 0], sizes = [8, 128], strides = [1, 1]} : vector<40x128xf32> to vector<8x128xf32>
    %192 = vector.extract_strided_slice %190 {offsets = [8, 0], sizes = [32, 128], strides = [1, 1]} : vector<40x128xf32> to vector<32x128xf32>
    %193 = arith.truncf %192 : vector<32x128xf32> to vector<32x128xbf16>
    %cst_68 = arith.constant dense<0.000000e+00> : vector<32x896xf32>
    %194 = tpu.matmul %193, %5, %cst_68 {dimension_numbers = #tpu.dot_dimension_numbers<[1], [0], [0], [1], [0, 0, 1, 1], [], []>} : vector<32x128xbf16>, vector<128x896xbf16>, vector<32x896xf32> -> vector<32x896xf32>
    %195 = vector.extract_strided_slice %194 {offsets = [0, 0], sizes = [8, 896], strides = [1, 1]} : vector<32x896xf32> to vector<8x896xf32>
    %196 = vector.extract_strided_slice %194 {offsets = [8, 0], sizes = [8, 896], strides = [1, 1]} : vector<32x896xf32> to vector<8x896xf32>
    %197 = vector.extract_strided_slice %194 {offsets = [16, 0], sizes = [8, 896], strides = [1, 1]} : vector<32x896xf32> to vector<8x896xf32>
    %198 = vector.extract_strided_slice %194 {offsets = [24, 0], sizes = [8, 896], strides = [1, 1]} : vector<32x896xf32> to vector<8x896xf32>
    %199 = vector.extract_strided_slice %30 {offsets = [0, 0], sizes = [8, 896], strides = [1, 1]} : vector<16x896xf32> to vector<8x896xf32>
    %200 = arith.mulf %199, %195 : vector<8x896xf32>
    %201 = vector.broadcast %10 : vector<1x896xf32> to vector<8x896xf32>
    %202 = arith.mulf %200, %201 : vector<8x896xf32>
    %203 = vector.extract_strided_slice %30 {offsets = [8, 0], sizes = [8, 896], strides = [1, 1]} : vector<16x896xf32> to vector<8x896xf32>
    %cst_69 = arith.constant 0.577350259 : f32
    %204 = vector.broadcast %cst_69 : f32 to vector<8x896xf32>
    %205 = arith.mulf %203, %204 : vector<8x896xf32>
    %206 = vector.broadcast %11 : vector<1x896xf32> to vector<8x896xf32>
    %207 = arith.mulf %196, %206 : vector<8x896xf32>
    %208 = vector.broadcast %12 : vector<1x896xf32> to vector<8x896xf32>
    %209 = arith.mulf %197, %208 : vector<8x896xf32>
    %210 = arith.addf %207, %209 : vector<8x896xf32>
    %211 = vector.broadcast %13 : vector<1x896xf32> to vector<8x896xf32>
    %212 = arith.mulf %198, %211 : vector<8x896xf32>
    %213 = arith.addf %210, %212 : vector<8x896xf32>
    %214 = arith.mulf %205, %213 : vector<8x896xf32>
    %215 = tpu.concatenate %202, %214 in 0 : vector<8x896xf32>, vector<8x896xf32> -> vector<16x896xf32>
    %216 = arith.truncf %215 : vector<16x896xf32> to vector<16x896xbf16>
    %c0_70 = arith.constant 0 : index
    %c0_71 = arith.constant 0 : index
    %217 = vector.load %arg17[%c0_70, %c0_71] : memref<64x896xbf16, #tpu.memory_space<vmem>>, vector<16x896xbf16>
    tpu.vector_store %arg17[%c0_70, %c0_71], %216 {strides = array<i32>} : memref<64x896xbf16, #tpu.memory_space<vmem>>, vector<16x896xbf16>,
    %c0_72 = arith.constant 0 : index
    %c0_73 = arith.constant 0 : index
    %218 = vector.load %arg17[%c0_72, %c0_73] : memref<64x896xbf16, #tpu.memory_space<vmem>>, vector<16x896xbf16>
    %cst_74 = arith.constant dense<0.000000e+00> : vector<16x128xf32>
    %219 = tpu.matmul %218, %7, %cst_74 {dimension_numbers = #tpu.dot_dimension_numbers<[1], [0], [0], [1], [0, 0, 1, 1], [], []>} : vector<16x896xbf16>, vector<896x128xbf16>, vector<16x128xf32> -> vector<16x128xf32>
    %c0_75 = arith.constant 0 : index
    %c0_76 = arith.constant 0 : index
    %220 = vector.load %arg15[%c0_75, %c0_76] : memref<8x16xbf16, #tpu.memory_space<vmem>>, vector<8x16xbf16>
    %221 = arith.truncf %219 : vector<16x128xf32> to vector<16x128xbf16>
    %cst_77 = arith.constant dense<0.000000e+00> : vector<8x128xf32>
    %222 = tpu.matmul %220, %221, %cst_77 {dimension_numbers = #tpu.dot_dimension_numbers<[1], [0], [0], [1], [0, 0, 1, 1], [], []>} : vector<8x16xbf16>, vector<16x128xbf16>, vector<8x128xf32> -> vector<8x128xf32>
    %cst_78 = arith.constant 0.135299027 : f32
    %223 = vector.broadcast %cst_78 : f32 to vector<8x128xf32>
    %224 = arith.mulf %223, %191 : vector<8x128xf32>
    %cst_79 = arith.constant 0.326640755 : f32
    %225 = vector.broadcast %cst_79 : f32 to vector<8x128xf32>
    %226 = arith.mulf %225, %222 : vector<8x128xf32>
    %227 = arith.addf %224, %226 : vector<8x128xf32>
    %228 = arith.truncf %227 : vector<8x128xf32> to vector<8x128xbf16>
    %cst_80 = arith.constant dense<0.000000e+00> : vector<8x16xf32>
    %229 = tpu.matmul %228, %9, %cst_80 {dimension_numbers = #tpu.dot_dimension_numbers<[1], [0], [0], [1], [0, 0, 1, 1], [], []>} : vector<8x128xbf16>, vector<128x16xbf16>, vector<8x16xf32> -> vector<8x16xf32>
    %230 = vector.extract_strided_slice %229 {offsets = [0, 0], sizes = [4, 16], strides = [1, 1]} : vector<8x16xf32> to vector<4x16xf32>
    %c0_81 = arith.constant 0 : index
    %c0_82 = arith.constant 0 : index
    %c0_83 = arith.constant 0 : index
    %231 = vector.load %arg16[%c0_81, %c0_82, %c0_83] : memref<1x4x16xf32, #tpu.memory_space<vmem>>, vector<1x4x16xf32>
    %232 = vector.shape_cast %231 : vector<1x4x16xf32> to vector<4x16xf32>
    %233 = vector.shape_cast %230 : vector<4x16xf32> to vector<1x4x16xf32>
    tpu.vector_store %arg16[%c0_81, %c0_82, %c0_83], %233 {strides = array<i32>} : memref<1x4x16xf32, #tpu.memory_space<vmem>>, vector<1x4x16xf32>,
    return
  }
  func.func @transform_0(%arg0: i32) -> (i32, i32, i32) {
    %c0_i32 = arith.constant 0 : i32
    %c0_i32_0 = arith.constant 0 : i32
    %c0_i32_1 = arith.constant 0 : i32
    return %arg0, %c0_i32, %c0_i32_0 : i32, i32, i32
  }
  func.func @transform_1(%arg0: i32) -> (i32, i32, i32) {
    %c0_i32 = arith.constant 0 : i32
    %c0_i32_0 = arith.constant 0 : i32
    %c0_i32_1 = arith.constant 0 : i32
    return %arg0, %c0_i32, %c0_i32_0 : i32, i32, i32
  }
  func.func @transform_2(%arg0: i32) -> (i32, i32, i32) {
    %c0_i32 = arith.constant 0 : i32
    %c0_i32_0 = arith.constant 0 : i32
    %c0_i32_1 = arith.constant 0 : i32
    return %arg0, %c0_i32, %c0_i32_0 : i32, i32, i32
  }
  func.func @transform_3(%arg0: i32) -> (i32, i32, i32) {
    %c0_i32 = arith.constant 0 : i32
    %c0_i32_0 = arith.constant 0 : i32
    %c0_i32_1 = arith.constant 0 : i32
    return %arg0, %c0_i32, %c0_i32_0 : i32, i32, i32
  }
  func.func @transform_4(%arg0: i32) -> (i32, i32, i32) {
    %c0_i32 = arith.constant 0 : i32
    %c0_i32_0 = arith.constant 0 : i32
    %c0_i32_1 = arith.constant 0 : i32
    return %arg0, %c0_i32, %c0_i32_0 : i32, i32, i32
  }
  func.func @transform_5(%arg0: i32) -> (i32, i32, i32) {
    %c0_i32 = arith.constant 0 : i32
    %c0_i32_0 = arith.constant 0 : i32
    %c0_i32_1 = arith.constant 0 : i32
    return %arg0, %c0_i32, %c0_i32_0 : i32, i32, i32
  }
  func.func @transform_6(%arg0: i32) -> (i32, i32) {
    %c0_i32 = arith.constant 0 : i32
    %c0_i32_0 = arith.constant 0 : i32
    %c0_i32_1 = arith.constant 0 : i32
    return %c0_i32, %c0_i32_0 : i32, i32
  }
  func.func @transform_7(%arg0: i32) -> (i32, i32) {
    %c0_i32 = arith.constant 0 : i32
    %c0_i32_0 = arith.constant 0 : i32
    %c0_i32_1 = arith.constant 0 : i32
    return %c0_i32, %c0_i32_0 : i32, i32
  }
  func.func @transform_8(%arg0: i32) -> (i32, i32) {
    %c0_i32 = arith.constant 0 : i32
    %c0_i32_0 = arith.constant 0 : i32
    %c0_i32_1 = arith.constant 0 : i32
    return %c0_i32, %c0_i32_0 : i32, i32
  }
  func.func @transform_9(%arg0: i32) -> (i32, i32) {
    %c0_i32 = arith.constant 0 : i32
    %c0_i32_0 = arith.constant 0 : i32
    %c0_i32_1 = arith.constant 0 : i32
    return %c0_i32, %c0_i32_0 : i32, i32
  }
  func.func @transform_10(%arg0: i32) -> (i32, i32) {
    %c0_i32 = arith.constant 0 : i32
    %c0_i32_0 = arith.constant 0 : i32
    %c0_i32_1 = arith.constant 0 : i32
    return %c0_i32, %c0_i32_0 : i32, i32
  }
  func.func @transform_11(%arg0: i32) -> (i32, i32) {
    %c0_i32 = arith.constant 0 : i32
    %c0_i32_0 = arith.constant 0 : i32
    %c0_i32_1 = arith.constant 0 : i32
    return %c0_i32, %c0_i32_0 : i32, i32
  }
  func.func @transform_12(%arg0: i32) -> (i32, i32) {
    %c0_i32 = arith.constant 0 : i32
    %c0_i32_0 = arith.constant 0 : i32
    %c0_i32_1 = arith.constant 0 : i32
    return %c0_i32, %c0_i32_0 : i32, i32
  }
  func.func @transform_13(%arg0: i32) -> (i32, i32) {
    %c0_i32 = arith.constant 0 : i32
    %c0_i32_0 = arith.constant 0 : i32
    %c0_i32_1 = arith.constant 0 : i32
    return %c0_i32, %c0_i32_0 : i32, i32
  }
  func.func @transform_14(%arg0: i32) -> (i32, i32) {
    %c0_i32 = arith.constant 0 : i32
    %c0_i32_0 = arith.constant 0 : i32
    %c0_i32_1 = arith.constant 0 : i32
    return %c0_i32, %c0_i32_0 : i32, i32
  }
  func.func @transform_15(%arg0: i32) -> (i32, i32, i32) {
    %c0_i32 = arith.constant 0 : i32
    %c0_i32_0 = arith.constant 0 : i32
    %c0_i32_1 = arith.constant 0 : i32
    return %arg0, %c0_i32, %c0_i32_0 : i32, i32, i32
  }
}

</mosaic_0001>

<llo_original>
// kernel: network_forward.1
$region0: #{network_forward.1}
  #allocation0 [shape = 'u32[]', space=smem, size = 0x4, offset = 0x4, fixed_abs, tag = 'smem constant byte address 0x4 - core index']
  #allocation1 [shape = 'u32[144,128]{1,0:T(1,128)}', space=vmem, size = 0x12000, scoped, tag = 'internal scratch']
  #allocation2 [shape = 'bf16[64,896]{1,0:T(16,128)(2,1)}', space=vmem, size = 0x1c000, scoped, tag = 'scratch operand']
  %s0 = inlined_call_operand.hbm [shape: f32[1,1,128], index: 0, kind: input, shape index: {}]
  %s1 = inlined_call_operand.hbm [shape: f32[1,8,896], index: 1, kind: input, shape index: {}]
  %s2 = inlined_call_operand.vmem [shape: f32[1,10,896], index: 2, kind: input, shape index: {}]
  %s3 = inlined_call_operand.vmem [shape: bf16[1,128,896], index: 3, kind: input, shape index: {}]
  %s4 = inlined_call_operand.hbm [shape: bf16[1,896,128], index: 4, kind: input, shape index: {}]
  %s5 = inlined_call_operand.vmem [shape: bf16[1,128,16], index: 5, kind: input, shape index: {}]
  %s6 = inlined_call_operand.vmem [shape: bf16[312,10], index: 6, kind: input, shape index: {}]
  %s7 = inlined_call_operand.vmem [shape: bf16[56,312], index: 7, kind: input, shape index: {}]
  %s8 = inlined_call_operand.vmem [shape: f32[16,1], index: 8, kind: input, shape index: {}]
  %s9 = inlined_call_operand.vmem [shape: f32[16,1], index: 9, kind: input, shape index: {}]
  %s10 = inlined_call_operand.vmem [shape: f32[8,1], index: 10, kind: input, shape index: {}]
  %s11 = inlined_call_operand.vmem [shape: bf16[72,32], index: 11, kind: input, shape index: {}]
  %s12 = inlined_call_operand.vmem [shape: bf16[40,64], index: 12, kind: input, shape index: {}]
  %s13 = inlined_call_operand.vmem [shape: bf16[40,32], index: 13, kind: input, shape index: {}]
  %s14 = inlined_call_operand.vmem [shape: bf16[8,16], index: 14, kind: input, shape index: {}]
  %s15 = inlined_call_operand.hbm [shape: f32[1,4,16], index: 15, kind: output, shape index: {}]
  %s16 = sld [smem:[#allocation0]]
  $region82: #{network_forward.1} parent=0
    _
  %s18 = ssub.s32 1, %s16
  %s19 = scalar_select 0, %s18, %s16
  $region1: #{network_forward.1} parent=0
    #allocation3 [shape = 'u8[512]{0}', space=vmem, size = 0x400, scoped, tag = 'input window, operand 0, single buffered']
    #allocation4 [shape = 's32[1]{0}', space=sflag, size = 0x4, scoped, tag = 'scoped memory for network_forward.1']
    #allocation5 [shape = 's32[1]{0}', space=sflag, size = 0x4, scoped, tag = 'scoped memory for network_forward.1']
    #allocation6 [shape = 'u8[28672]{0}', space=vmem, size = 0x7000, scoped, tag = 'input window, operand 1, single buffered']
    #allocation7 [shape = 's32[1]{0}', space=sflag, size = 0x4, scoped, tag = 'scoped memory for network_forward.1']
    #allocation8 [shape = 'u8[229376]{0}', space=vmem, size = 0x38000, scoped, tag = 'input window, operand 4, single buffered']
    #allocation9 [shape = 'u8[2048]{0}', space=vmem, size = 0x800, scoped, tag = 'output window, operand 0, single buffered']
    %20 = vsyncpa [#allocation4], 0
    %21 = vsyncpa [#allocation7], 0
    %22 = vsyncpa [#allocation5], 0
    // Predicated region
    $region2: #{network_forward.1} parent=1 // pred_check
      _
    $region3: #{network_forward.1} parent=1 // pred_check_branch
      %24 = sbr.rel (0) target = $region5
    $region4: #{network_forward.1} parent=1 // pred_region
      %s26 = ssub.s32 16, 16
      %27 = vsyncadd [#allocation4], %s26
      %s29 = sshll.u32 [#allocation3], 4
      %s30 = int_to_ptr.vmem [resolvable:$true] %s29
      %32 = dma.hbm_to_vmem [thread:$0]  %s0, 16, %s30, [#allocation4]
    $region5: #{network_forward.1} parent=1 // pred_fallthru
      _
    // Predicated region
    $region6: #{network_forward.1} parent=1 // pred_check
      _
    $region7: #{network_forward.1} parent=1 // pred_check_branch
      %34 = sbr.rel (0) target = $region9
    $region8: #{network_forward.1} parent=1 // pred_region
      %s36 = ssub.s32 896, 896
      %37 = vsyncadd [#allocation7], %s36
      %s39 = sshll.u32 [#allocation6], 4
      %s40 = int_to_ptr.vmem [resolvable:$true] %s39
      %42 = dma.hbm_to_vmem [thread:$0]  %s1, 896, %s40, [#allocation7]
    $region9: #{network_forward.1} parent=1 // pred_fallthru
      _
    // Predicated region
    $region10: #{network_forward.1} parent=1 // pred_check
      _
    $region11: #{network_forward.1} parent=1 // pred_check_branch
      %44 = sbr.rel (0) target = $region13
    $region12: #{network_forward.1} parent=1 // pred_region
      _
    $region13: #{network_forward.1} parent=1 // pred_fallthru
      _
    // Predicated region
    $region14: #{network_forward.1} parent=1 // pred_check
      _
    $region15: #{network_forward.1} parent=1 // pred_check_branch
      %46 = sbr.rel (0) target = $region17
    $region16: #{network_forward.1} parent=1 // pred_region
      _
    $region17: #{network_forward.1} parent=1 // pred_fallthru
      _
    // Predicated region
    $region18: #{network_forward.1} parent=1 // pred_check
      _
    $region19: #{network_forward.1} parent=1 // pred_check_branch
      %48 = sbr.rel (0) target = $region21
    $region20: #{network_forward.1} parent=1 // pred_region
      %s50 = ssub.s32 7168, 7168
      %51 = vsyncadd [#allocation7], %s50
      %s52 = sshll.u32 [#allocation8], 4
      %s53 = int_to_ptr.vmem [resolvable:$true] %s52
      %58 = dma.hbm_to_vmem [thread:$0]  %s4, 7168, %s53, [#allocation7], 64, 64, 4
    $region21: #{network_forward.1} parent=1 // pred_fallthru
      _
    // Predicated region
    $region22: #{network_forward.1} parent=1 // pred_check
      _
    $region23: #{network_forward.1} parent=1 // pred_check_branch
      %60 = sbr.rel (0) target = $region25
    $region24: #{network_forward.1} parent=1 // pred_region
      _
    $region25: #{network_forward.1} parent=1 // pred_fallthru
      _
    // Predicated region
    $region26: #{network_forward.1} parent=1 // pred_check
      _
    $region27: #{network_forward.1} parent=1 // pred_check_branch
      %62 = sbr.rel (0) target = $region29
    $region28: #{network_forward.1} parent=1 // pred_region
      _
    $region29: #{network_forward.1} parent=1 // pred_fallthru
      _
    // Predicated region
    $region30: #{network_forward.1} parent=1 // pred_check
      _
    $region31: #{network_forward.1} parent=1 // pred_check_branch
      %64 = sbr.rel (0) target = $region33
    $region32: #{network_forward.1} parent=1 // pred_region
      _
    $region33: #{network_forward.1} parent=1 // pred_fallthru
      _
    // Predicated region
    $region34: #{network_forward.1} parent=1 // pred_check
      _
    $region35: #{network_forward.1} parent=1 // pred_check_branch
      %66 = sbr.rel (0) target = $region37
    $region36: #{network_forward.1} parent=1 // pred_region
      _
    $region37: #{network_forward.1} parent=1 // pred_fallthru
      _
    // Predicated region
    $region38: #{network_forward.1} parent=1 // pred_check
      _
    $region39: #{network_forward.1} parent=1 // pred_check_branch
      %68 = sbr.rel (0) target = $region41
    $region40: #{network_forward.1} parent=1 // pred_region
      _
    $region41: #{network_forward.1} parent=1 // pred_fallthru
      _
    // Predicated region
    $region42: #{network_forward.1} parent=1 // pred_check
      _
    $region43: #{network_forward.1} parent=1 // pred_check_branch
      %70 = sbr.rel (0) target = $region45
    $region44: #{network_forward.1} parent=1 // pred_region
      _
    $region45: #{network_forward.1} parent=1 // pred_fallthru
      _
    // Predicated region
    $region46: #{network_forward.1} parent=1 // pred_check
      _
    $region47: #{network_forward.1} parent=1 // pred_check_branch
      %72 = sbr.rel (0) target = $region49
    $region48: #{network_forward.1} parent=1 // pred_region
      _
    $region49: #{network_forward.1} parent=1 // pred_fallthru
      _
    // Predicated region
    $region50: #{network_forward.1} parent=1 // pred_check
      _
    $region51: #{network_forward.1} parent=1 // pred_check_branch
      %74 = sbr.rel (0) target = $region53
    $region52: #{network_forward.1} parent=1 // pred_region
      _
    $region53: #{network_forward.1} parent=1 // pred_fallthru
      _
    // Predicated region
    $region54: #{network_forward.1} parent=1 // pred_check
      _
    $region55: #{network_forward.1} parent=1 // pred_check_branch
      %76 = sbr.rel (0) target = $region57
    $region56: #{network_forward.1} parent=1 // pred_region
      _
    $region57: #{network_forward.1} parent=1 // pred_fallthru
      _
    // Predicated region
    $region58: #{network_forward.1} parent=1 // pred_check
      _
    $region59: #{network_forward.1} parent=1 // pred_check_branch
      %78 = sbr.rel (0) target = $region61
    $region60: #{network_forward.1} parent=1 // pred_region
      _
    $region61: #{network_forward.1} parent=1 // pred_fallthru
      _
    // Predicated region
    $region62: #{network_forward.1} parent=1 // pred_check
      _
    $region63: #{network_forward.1} parent=1 // pred_check_branch
      %80 = sbr.rel (0) target = $region65
    $region64: #{network_forward.1} parent=1 // pred_region
      %81 = dma.done [#allocation4], 16
    $region65: #{network_forward.1} parent=1 // pred_fallthru
      _
    // Predicated region
    $region66: #{network_forward.1} parent=1 // pred_check
      _
    $region67: #{network_forward.1} parent=1 // pred_check_branch
      %83 = sbr.rel (0) target = $region69
    $region68: #{network_forward.1} parent=1 // pred_region
      %84 = dma.done [#allocation7], 896
    $region69: #{network_forward.1} parent=1 // pred_fallthru
      _
    // Predicated region
    $region70: #{network_forward.1} parent=1 // pred_check
      _
    $region71: #{network_forward.1} parent=1 // pred_check_branch
      %86 = sbr.rel (0) target = $region73
    $region72: #{network_forward.1} parent=1 // pred_region
      %87 = dma.done [#allocation7], 7168
    $region73: #{network_forward.1} parent=1 // pred_fallthru
      _
    %v89 = vld [vmem:[#allocation3] sm:$0x1]
    %v90 = vld [vmem:[#allocation6] sm:$0xff]
    %v91 = vld [vmem:[#allocation6 + $0x8] sm:$0xff]
    %v92 = vld [vmem:[#allocation6 + $0x10] sm:$0xff]
    %v93 = vld [vmem:[#allocation6 + $0x18] sm:$0xff]
    %v94 = vld [vmem:[#allocation6 + $0x20] sm:$0xff]
    %v95 = vld [vmem:[#allocation6 + $0x28] sm:$0xff]
    %v96 = vld [vmem:[#allocation6 + $0x30] sm:$0xff]
    %v97 = vld [vmem:[%s3] sm:$0xff]
    %v98 = vld [vmem:[%s3 + $0x8] sm:$0xff]
    %v99 = vld [vmem:[%s3 + $0x10] sm:$0xff]
    %v100 = vld [vmem:[%s3 + $0x18] sm:$0xf]
    %v101 = vld [vmem:[%s3 + $0x1c] sm:$0xff]
    %v102 = vld [vmem:[%s3 + $0x24] sm:$0xff]
    %v103 = vld [vmem:[%s3 + $0x2c] sm:$0xff]
    %v104 = vld [vmem:[%s3 + $0x34] sm:$0xf]
    %v105 = vld [vmem:[%s3 + $0x38] sm:$0xff]
    %v106 = vld [vmem:[%s3 + $0x40] sm:$0xff]
    %v107 = vld [vmem:[%s3 + $0x48] sm:$0xff]
    %v108 = vld [vmem:[%s3 + $0x50] sm:$0xf]
    %v109 = vld [vmem:[%s3 + $0x54] sm:$0xff]
    %v110 = vld [vmem:[%s3 + $0x5c] sm:$0xff]
    %v111 = vld [vmem:[%s3 + $0x64] sm:$0xff]
    %v112 = vld [vmem:[%s3 + $0x6c] sm:$0xf]
    %v113 = vld [vmem:[%s3 + $0x70] sm:$0xff]
    %v114 = vld [vmem:[%s3 + $0x78] sm:$0xff]
    %v115 = vld [vmem:[%s3 + $0x80] sm:$0xff]
    %v116 = vld [vmem:[%s3 + $0x88] sm:$0xf]
    %v117 = vld [vmem:[%s3 + $0x8c] sm:$0xff]
    %v118 = vld [vmem:[%s3 + $0x94] sm:$0xff]
    %v119 = vld [vmem:[%s3 + $0x9c] sm:$0xff]
    %v120 = vld [vmem:[%s3 + $0xa4] sm:$0xf]
    %v121 = vld [vmem:[%s3 + $0xa8] sm:$0xff]
    %v122 = vld [vmem:[%s3 + $0xb0] sm:$0xff]
    %v123 = vld [vmem:[%s3 + $0xb8] sm:$0xff]
    %v124 = vld [vmem:[%s3 + $0xc0] sm:$0xf]
    %v125 = vld [vmem:[%s3 + $0xc4] sm:$0xff]
    %v126 = vld [vmem:[%s3 + $0xcc] sm:$0xff]
    %v127 = vld [vmem:[%s3 + $0xd4] sm:$0xff]
    %v128 = vld [vmem:[%s3 + $0xdc] sm:$0xf]
    %v129 = vld [vmem:[%s3 + $0xe0] sm:$0xff]
    %v130 = vld [vmem:[%s3 + $0xe8] sm:$0xff]
    %v131 = vld [vmem:[%s3 + $0xf0] sm:$0xff]
    %v132 = vld [vmem:[%s3 + $0xf8] sm:$0xf]
    %v133 = vld [vmem:[%s3 + $0xfc] sm:$0xff]
    %v134 = vld [vmem:[%s3 + $0x104] sm:$0xff]
    %v135 = vld [vmem:[%s3 + $0x10c] sm:$0xff]
    %v136 = vld [vmem:[%s3 + $0x114] sm:$0xf]
    %v137 = vld [vmem:[%s3 + $0x118] sm:$0xff]
    %v138 = vld [vmem:[%s3 + $0x120] sm:$0xff]
    %v139 = vld [vmem:[%s3 + $0x128] sm:$0xff]
    %v140 = vld [vmem:[%s3 + $0x130] sm:$0xf]
    %v141 = vld [vmem:[%s3 + $0x134] sm:$0xff]
    %v142 = vld [vmem:[%s3 + $0x13c] sm:$0xff]
    %v143 = vld [vmem:[%s3 + $0x144] sm:$0xff]
    %v144 = vld [vmem:[%s3 + $0x14c] sm:$0xf]
    %v145 = vld [vmem:[%s3 + $0x150] sm:$0xff]
    %v146 = vld [vmem:[%s3 + $0x158] sm:$0xff]
    %v147 = vld [vmem:[%s3 + $0x160] sm:$0xff]
    %v148 = vld [vmem:[%s3 + $0x168] sm:$0xf]
    %v149 = vld [vmem:[%s3 + $0x16c] sm:$0xff]
    %v150 = vld [vmem:[%s3 + $0x174] sm:$0xff]
    %v151 = vld [vmem:[%s3 + $0x17c] sm:$0xff]
    %v152 = vld [vmem:[%s3 + $0x184] sm:$0xf]
    %v153 = vld [vmem:[%s3 + $0x188] sm:$0xff]
    %v154 = vld [vmem:[%s3 + $0x190] sm:$0xff]
    %v155 = vld [vmem:[%s3 + $0x198] sm:$0xff]
    %v156 = vld [vmem:[%s3 + $0x1a0] sm:$0xf]
    %v157 = vld [vmem:[%s3 + $0x1a4] sm:$0xff]
    %v158 = vld [vmem:[%s3 + $0x1ac] sm:$0xff]
    %v159 = vld [vmem:[%s3 + $0x1b4] sm:$0xff]
    %v160 = vld [vmem:[%s3 + $0x1bc] sm:$0xf]
    %v161 = vld [vmem:[#allocation8] sm:$0xf]
    %v162 = vld [vmem:[#allocation8 + $0x4] sm:$0xf]
    %v163 = vld [vmem:[#allocation8 + $0x8] sm:$0xf]
    %v164 = vld [vmem:[#allocation8 + $0xc] sm:$0xf]
    %v165 = vld [vmem:[#allocation8 + $0x10] sm:$0xf]
    %v166 = vld [vmem:[#allocation8 + $0x14] sm:$0xf]
    %v167 = vld [vmem:[#allocation8 + $0x18] sm:$0xf]
    %v168 = vld [vmem:[#allocation8 + $0x1c] sm:$0xf]
    %v169 = vld [vmem:[#allocation8 + $0x20] sm:$0xf]
    %v170 = vld [vmem:[#allocation8 + $0x24] sm:$0xf]
    %v171 = vld [vmem:[#allocation8 + $0x28] sm:$0xf]
    %v172 = vld [vmem:[#allocation8 + $0x2c] sm:$0xf]
    %v173 = vld [vmem:[#allocation8 + $0x30] sm:$0xf]
    %v174 = vld [vmem:[#allocation8 + $0x34] sm:$0xf]
    %v175 = vld [vmem:[#allocation8 + $0x38] sm:$0xf]
    %v176 = vld [vmem:[#allocation8 + $0x3c] sm:$0xf]
    %v177 = vld [vmem:[#allocation8 + $0x40] sm:$0xf]
    %v178 = vld [vmem:[#allocation8 + $0x44] sm:$0xf]
    %v179 = vld [vmem:[#allocation8 + $0x48] sm:$0xf]
    %v180 = vld [vmem:[#allocation8 + $0x4c] sm:$0xf]
    %v181 = vld [vmem:[#allocation8 + $0x50] sm:$0xf]
    %v182 = vld [vmem:[#allocation8 + $0x54] sm:$0xf]
    %v183 = vld [vmem:[#allocation8 + $0x58] sm:$0xf]
    %v184 = vld [vmem:[#allocation8 + $0x5c] sm:$0xf]
    %v185 = vld [vmem:[#allocation8 + $0x60] sm:$0xf]
    %v186 = vld [vmem:[#allocation8 + $0x64] sm:$0xf]
    %v187 = vld [vmem:[#allocation8 + $0x68] sm:$0xf]
    %v188 = vld [vmem:[#allocation8 + $0x6c] sm:$0xf]
    %v189 = vld [vmem:[#allocation8 + $0x70] sm:$0xf]
    %v190 = vld [vmem:[#allocation8 + $0x74] sm:$0xf]
    %v191 = vld [vmem:[#allocation8 + $0x78] sm:$0xf]
    %v192 = vld [vmem:[#allocation8 + $0x7c] sm:$0xf]
    %v193 = vld [vmem:[#allocation8 + $0x80] sm:$0xf]
    %v194 = vld [vmem:[#allocation8 + $0x84] sm:$0xf]
    %v195 = vld [vmem:[#allocation8 + $0x88] sm:$0xf]
    %v196 = vld [vmem:[#allocation8 + $0x8c] sm:$0xf]
    %v197 = vld [vmem:[#allocation8 + $0x90] sm:$0xf]
    %v198 = vld [vmem:[#allocation8 + $0x94] sm:$0xf]
    %v199 = vld [vmem:[#allocation8 + $0x98] sm:$0xf]
    %v200 = vld [vmem:[#allocation8 + $0x9c] sm:$0xf]
    %v201 = vld [vmem:[#allocation8 + $0xa0] sm:$0xf]
    %v202 = vld [vmem:[#allocation8 + $0xa4] sm:$0xf]
    %v203 = vld [vmem:[#allocation8 + $0xa8] sm:$0xf]
    %v204 = vld [vmem:[#allocation8 + $0xac] sm:$0xf]
    %v205 = vld [vmem:[#allocation8 + $0xb0] sm:$0xf]
    %v206 = vld [vmem:[#allocation8 + $0xb4] sm:$0xf]
    %v207 = vld [vmem:[#allocation8 + $0xb8] sm:$0xf]
    %v208 = vld [vmem:[#allocation8 + $0xbc] sm:$0xf]
    %v209 = vld [vmem:[#allocation8 + $0xc0] sm:$0xf]
    %v210 = vld [vmem:[#allocation8 + $0xc4] sm:$0xf]
    %v211 = vld [vmem:[#allocation8 + $0xc8] sm:$0xf]
    %v212 = vld [vmem:[#allocation8 + $0xcc] sm:$0xf]
    %v213 = vld [vmem:[#allocation8 + $0xd0] sm:$0xf]
    %v214 = vld [vmem:[#allocation8 + $0xd4] sm:$0xf]
    %v215 = vld [vmem:[#allocation8 + $0xd8] sm:$0xf]
    %v216 = vld [vmem:[#allocation8 + $0xdc] sm:$0xf]
    %v217 = vld [vmem:[#allocation8 + $0xe0] sm:$0xf]
    %v218 = vld [vmem:[#allocation8 + $0xe4] sm:$0xf]
    %v219 = vld [vmem:[#allocation8 + $0xe8] sm:$0xf]
    %v220 = vld [vmem:[#allocation8 + $0xec] sm:$0xf]
    %v221 = vld [vmem:[#allocation8 + $0xf0] sm:$0xf]
    %v222 = vld [vmem:[#allocation8 + $0xf4] sm:$0xf]
    %v223 = vld [vmem:[#allocation8 + $0xf8] sm:$0xf]
    %v224 = vld [vmem:[#allocation8 + $0xfc] sm:$0xf]
    %v225 = vld [vmem:[#allocation8 + $0x100] sm:$0xf]
    %v226 = vld [vmem:[#allocation8 + $0x104] sm:$0xf]
    %v227 = vld [vmem:[#allocation8 + $0x108] sm:$0xf]
    %v228 = vld [vmem:[#allocation8 + $0x10c] sm:$0xf]
    %v229 = vld [vmem:[#allocation8 + $0x110] sm:$0xf]
    %v230 = vld [vmem:[#allocation8 + $0x114] sm:$0xf]
    %v231 = vld [vmem:[#allocation8 + $0x118] sm:$0xf]
    %v232 = vld [vmem:[#allocation8 + $0x11c] sm:$0xf]
    %v233 = vld [vmem:[#allocation8 + $0x120] sm:$0xf]
    %v234 = vld [vmem:[#allocation8 + $0x124] sm:$0xf]
    %v235 = vld [vmem:[#allocation8 + $0x128] sm:$0xf]
    %v236 = vld [vmem:[#allocation8 + $0x12c] sm:$0xf]
    %v237 = vld [vmem:[#allocation8 + $0x130] sm:$0xf]
    %v238 = vld [vmem:[#allocation8 + $0x134] sm:$0xf]
    %v239 = vld [vmem:[#allocation8 + $0x138] sm:$0xf]
    %v240 = vld [vmem:[#allocation8 + $0x13c] sm:$0xf]
    %v241 = vld [vmem:[#allocation8 + $0x140] sm:$0xf]
    %v242 = vld [vmem:[#allocation8 + $0x144] sm:$0xf]
    %v243 = vld [vmem:[#allocation8 + $0x148] sm:$0xf]
    %v244 = vld [vmem:[#allocation8 + $0x14c] sm:$0xf]
    %v245 = vld [vmem:[#allocation8 + $0x150] sm:$0xf]
    %v246 = vld [vmem:[#allocation8 + $0x154] sm:$0xf]
    %v247 = vld [vmem:[#allocation8 + $0x158] sm:$0xf]
    %v248 = vld [vmem:[#allocation8 + $0x15c] sm:$0xf]
    %v249 = vld [vmem:[#allocation8 + $0x160] sm:$0xf]
    %v250 = vld [vmem:[#allocation8 + $0x164] sm:$0xf]
    %v251 = vld [vmem:[#allocation8 + $0x168] sm:$0xf]
    %v252 = vld [vmem:[#allocation8 + $0x16c] sm:$0xf]
    %v253 = vld [vmem:[#allocation8 + $0x170] sm:$0xf]
    %v254 = vld [vmem:[#allocation8 + $0x174] sm:$0xf]
    %v255 = vld [vmem:[#allocation8 + $0x178] sm:$0xf]
    %v256 = vld [vmem:[#allocation8 + $0x17c] sm:$0xf]
    %v257 = vld [vmem:[#allocation8 + $0x180] sm:$0xf]
    %v258 = vld [vmem:[#allocation8 + $0x184] sm:$0xf]
    %v259 = vld [vmem:[#allocation8 + $0x188] sm:$0xf]
    %v260 = vld [vmem:[#allocation8 + $0x18c] sm:$0xf]
    %v261 = vld [vmem:[#allocation8 + $0x190] sm:$0xf]
    %v262 = vld [vmem:[#allocation8 + $0x194] sm:$0xf]
    %v263 = vld [vmem:[#allocation8 + $0x198] sm:$0xf]
    %v264 = vld [vmem:[#allocation8 + $0x19c] sm:$0xf]
    %v265 = vld [vmem:[#allocation8 + $0x1a0] sm:$0xf]
    %v266 = vld [vmem:[#allocation8 + $0x1a4] sm:$0xf]
    %v267 = vld [vmem:[#allocation8 + $0x1a8] sm:$0xf]
    %v268 = vld [vmem:[#allocation8 + $0x1ac] sm:$0xf]
    %v269 = vld [vmem:[#allocation8 + $0x1b0] sm:$0xf]
    %v270 = vld [vmem:[#allocation8 + $0x1b4] sm:$0xf]
    %v271 = vld [vmem:[#allocation8 + $0x1b8] sm:$0xf]
    %v272 = vld [vmem:[#allocation8 + $0x1bc] sm:$0xf]
    %v273 = vld [vmem:[%s5] sm:$0xf]
    %v274 = vld [vmem:[%s5 + $0x4] sm:$0xf]
    %v275 = vld [vmem:[%s5 + $0x8] sm:$0xf]
    %v276 = vld [vmem:[%s5 + $0xc] sm:$0xf]
    %v277 = vld [vmem:[%s5 + $0x10] sm:$0xf]
    %v278 = vld [vmem:[%s5 + $0x14] sm:$0xf]
    %v279 = vld [vmem:[%s5 + $0x18] sm:$0xf]
    %v280 = vld [vmem:[%s5 + $0x1c] sm:$0xf]
    %v281 = vld [vmem:[%s5 + $0x20] sm:$0xf]
    %v282 = vld [vmem:[%s5 + $0x24] sm:$0xf]
    %v283 = vld [vmem:[%s5 + $0x28] sm:$0xf]
    %v284 = vld [vmem:[%s5 + $0x2c] sm:$0xf]
    %v285 = vld [vmem:[%s5 + $0x30] sm:$0xf]
    %v286 = vld [vmem:[%s5 + $0x34] sm:$0xf]
    %v287 = vld [vmem:[%s5 + $0x38] sm:$0xf]
    %v288 = vld [vmem:[%s5 + $0x3c] sm:$0xf]
    %v289 = vld [vmem:[%s6] sm:$0xf]
    %v290 = vld [vmem:[%s6 + $0x4] sm:$0xf]
    %v291 = vld [vmem:[%s6 + $0x8] sm:$0xf]
    %v292 = vld [vmem:[%s6 + $0xc] sm:$0xf]
    %v293 = vld [vmem:[%s6 + $0x10] sm:$0xf]
    %v294 = vld [vmem:[%s6 + $0x14] sm:$0xf]
    %v295 = vld [vmem:[%s6 + $0x18] sm:$0xf]
    %v296 = vld [vmem:[%s6 + $0x1c] sm:$0xf]
    %v297 = vld [vmem:[%s6 + $0x20] sm:$0xf]
    %v298 = vld [vmem:[%s6 + $0x24] sm:$0xf]
    %v299 = vld [vmem:[%s6 + $0x28] sm:$0xf]
    %v300 = vld [vmem:[%s6 + $0x2c] sm:$0xf]
    %v301 = vld [vmem:[%s6 + $0x30] sm:$0xf]
    %v302 = vld [vmem:[%s6 + $0x34] sm:$0xf]
    %v303 = vld [vmem:[%s6 + $0x38] sm:$0xf]
    %v304 = vld [vmem:[%s6 + $0x3c] sm:$0xf]
    %v305 = vld [vmem:[%s6 + $0x40] sm:$0xf]
    %v306 = vld [vmem:[%s6 + $0x44] sm:$0xf]
    %v307 = vld [vmem:[%s6 + $0x48] sm:$0xf]
    %v308 = vld [vmem:[%s6 + $0x4c] sm:$0xf]
    %v309 = vld [vmem:[%s6 + $0x50] sm:$0xf]
    %v310 = vld [vmem:[%s6 + $0x54] sm:$0xf]
    %v311 = vld [vmem:[%s6 + $0x58] sm:$0xf]
    %v312 = vld [vmem:[%s6 + $0x5c] sm:$0xf]
    %v313 = vld [vmem:[%s6 + $0x60] sm:$0xf]
    %v314 = vld [vmem:[%s6 + $0x64] sm:$0xf]
    %v315 = vld [vmem:[%s6 + $0x68] sm:$0xf]
    %v316 = vld [vmem:[%s6 + $0x6c] sm:$0xf]
    %v317 = vld [vmem:[%s6 + $0x70] sm:$0xf]
    %v318 = vld [vmem:[%s6 + $0x74] sm:$0xf]
    %v319 = vld [vmem:[%s6 + $0x78] sm:$0xf]
    %v320 = vld [vmem:[%s6 + $0x7c] sm:$0xf]
    %v321 = vld [vmem:[%s6 + $0x80] sm:$0xf]
    %v322 = vld [vmem:[%s6 + $0x84] sm:$0xf]
    %v323 = vld [vmem:[%s6 + $0x88] sm:$0xf]
    %v324 = vld [vmem:[%s6 + $0x8c] sm:$0xf]
    %v325 = vld [vmem:[%s6 + $0x90] sm:$0xf]
    %v326 = vld [vmem:[%s6 + $0x94] sm:$0xf]
    %v327 = vld [vmem:[%s6 + $0x98] sm:$0xf]
    %v328 = vld [vmem:[%s2] sm:$0xff]
    %v329 = vld [vmem:[%s2 + $0x8] sm:$0xff]
    %v330 = vld [vmem:[%s2 + $0x10] sm:$0xff]
    %v331 = vld [vmem:[%s2 + $0x18] sm:$0xff]
    %v332 = vld [vmem:[%s2 + $0x20] sm:$0xff]
    %v333 = vld [vmem:[%s2 + $0x28] sm:$0xff]
    %v334 = vld [vmem:[%s2 + $0x30] sm:$0xff]
    %v335 = vld [vmem:[%s2 + $0x38] sm:$0x3]
    %v336 = vld [vmem:[%s2 + $0x40] sm:$0x3]
    %v337 = vld [vmem:[%s2 + $0x48] sm:$0x3]
    %v338 = vld [vmem:[%s2 + $0x50] sm:$0x3]
    %v339 = vld [vmem:[%s2 + $0x58] sm:$0x3]
    %v340 = vld [vmem:[%s2 + $0x60] sm:$0x3]
    %v341 = vld [vmem:[%s2 + $0x68] sm:$0x3]
    %v342 = vpack.c.bf16 %v335, %v328
    %v343 = vpack.c.bf16 %v336, %v329
    %v344 = vpack.c.bf16 %v337, %v330
    %v345 = vpack.c.bf16 %v338, %v331
    %v346 = vpack.c.bf16 %v339, %v332
    %v347 = vpack.c.bf16 %v340, %v333
    %v348 = vpack.c.bf16 %v341, %v334
    %v388 = vunpack.c.l.b16 %v289
    %v389 = vunpack.c.l.b16 %v290
    %v390 = vunpack.c.l.b16 %v291
    %v391 = vunpack.c.l.b16 %v292
    %v392 = vunpack.c.l.b16 %v293
    %v393 = vunpack.c.l.b16 %v294
    %v394 = vunpack.c.l.b16 %v295
    %v395 = vunpack.c.l.b16 %v296
    %v396 = vunpack.c.l.b16 %v297
    %v397 = vunpack.c.l.b16 %v298
    %v398 = vunpack.c.l.b16 %v299
    %v399 = vunpack.c.l.b16 %v300
    %v400 = vunpack.c.l.b16 %v301
    %v401 = vunpack.c.l.b16 %v302
    %v402 = vunpack.c.l.b16 %v303
    %v403 = vunpack.c.l.b16 %v304
    %v404 = vunpack.c.l.b16 %v305
    %v405 = vunpack.c.l.b16 %v306
    %v406 = vunpack.c.l.b16 %v307
    %v407 = vunpack.c.l.b16 %v308
    %v408 = vunpack.c.l.b16 %v309
    %v409 = vunpack.c.l.b16 %v310
    %v410 = vunpack.c.l.b16 %v311
    %v411 = vunpack.c.l.b16 %v312
    %v412 = vunpack.c.l.b16 %v313
    %v413 = vunpack.c.l.b16 %v314
    %v414 = vunpack.c.l.b16 %v315
    %v415 = vunpack.c.l.b16 %v316
    %v416 = vunpack.c.l.b16 %v317
    %v417 = vunpack.c.l.b16 %v318
    %v418 = vunpack.c.l.b16 %v319
    %v419 = vunpack.c.l.b16 %v320
    %v420 = vunpack.c.l.b16 %v321
    %v421 = vunpack.c.l.b16 %v322
    %v422 = vunpack.c.l.b16 %v323
    %v423 = vunpack.c.l.b16 %v324
    %v424 = vunpack.c.l.b16 %v325
    %v425 = vunpack.c.l.b16 %v326
    %v426 = vunpack.c.l.b16 %v327
    %v427 = vpack.c.b16 %v389, %v388
    %v428 = vpack.c.b16 %v391, %v390
    %v429 = vpack.c.b16 %v393, %v392
    %v430 = vpack.c.b16 %v395, %v394
    %v431 = vpack.c.b16 %v397, %v396
    %v432 = vpack.c.b16 %v399, %v398
    %v433 = vpack.c.b16 %v401, %v400
    %v434 = vpack.c.b16 %v403, %v402
    %v435 = vpack.c.b16 %v405, %v404
    %v436 = vpack.c.b16 %v407, %v406
    %v437 = vpack.c.b16 %v409, %v408
    %v438 = vpack.c.b16 %v411, %v410
    %v439 = vpack.c.b16 %v413, %v412
    %v440 = vpack.c.b16 %v415, %v414
    %v441 = vpack.c.b16 %v417, %v416
    %v442 = vpack.c.b16 %v419, %v418
    %v443 = vpack.c.b16 %v421, %v420
    %v444 = vpack.c.b16 %v423, %v422
    %v445 = vpack.c.b16 %v425, %v424
    %v446 = vpack.c.b16 %v426, %v426
    %vm447 = vcmask 80896
    %v449 = vsel %vm447, %v427, 0
    %v452 = vsel %vm447, %v428, 0
    %v455 = vsel %vm447, %v429, 0
    %v458 = vsel %vm447, %v430, 0
    %v461 = vsel %vm447, %v431, 0
    %v464 = vsel %vm447, %v432, 0
    %v467 = vsel %vm447, %v433, 0
    %v470 = vsel %vm447, %v434, 0
    %v473 = vsel %vm447, %v435, 0
    %v476 = vsel %vm447, %v436, 0
    %v479 = vsel %vm447, %v437, 0
    %v482 = vsel %vm447, %v438, 0
    %v485 = vsel %vm447, %v439, 0
    %v488 = vsel %vm447, %v440, 0
    %v491 = vsel %vm447, %v441, 0
    %v494 = vsel %vm447, %v442, 0
    %v497 = vsel %vm447, %v443, 0
    %v500 = vsel %vm447, %v444, 0
    %v503 = vsel %vm447, %v445, 0
    %v506 = vsel %vm447, %v446, 0
    %vm508 = vcmask 1044480
    %v510 = vsel %vm508, %v342, 0
    %v513 = vsel %vm508, %v343, 0
    %v516 = vsel %vm508, %v344, 0
    %v519 = vsel %vm508, %v345, 0
    %v522 = vsel %vm508, %v346, 0
    %v525 = vsel %vm508, %v347, 0
    %v528 = vsel %vm508, %v348, 0
    %530 = vmatprep.subr.bf16.mxu0 %v513
    %531 = vmatpush1.bf16.msra.mxu0 %v510
    %532 = vmatprep.subr.bf16.mxu0 0
    %533 = vmatpush1.bf16.msra.mxu0 0
    %534 = vmatprep.subr.bf16.mxu0 0
    %535 = vmatpush1.bf16.msra.mxu0 0
    %536 = vmatprep.subr.bf16.mxu0 0
    %537 = vmatpush1.bf16.msra.mxu0 0
    %538 = vmatprep.subr.bf16.mxu0 0
    %539 = vmatpush1.bf16.msra.mxu0 0
    %540 = vmatprep.subr.bf16.mxu0 0
    %541 = vmatpush1.bf16.msra.mxu0 0
    %542 = vmatprep.subr.bf16.mxu0 0
    %543 = vmatpush1.bf16.msra.mxu0 0
    %544 = vmatprep.subr.bf16.mxu0 0
    %545 = vmatpush1.bf16.msra.mxu0 0
    %546 = vmatprep.subr.bf16.mxu0 0
    %547 = vmatpush1.bf16.msra.mxu0 0
    %548 = vmatprep.subr.bf16.mxu0 0
    %549 = vmatpush1.bf16.msra.mxu0 0
    %550 = vmatprep.subr.bf16.mxu0 0
    %551 = vmatpush1.bf16.msra.mxu0 0
    %552 = vmatprep.subr.bf16.mxu0 0
    %553 = vmatpush1.bf16.msra.mxu0 0
    %554 = vmatprep.subr.bf16.mxu0 0
    %555 = vmatpush1.bf16.msra.mxu0 0
    %556 = vmatprep.subr.bf16.mxu0 0
    %557 = vmatpush1.bf16.msra.mxu0 0
    %558 = vmatprep.subr.bf16.mxu0 0
    %559 = vmatpush1.bf16.msra.mxu0 0
    %560 = vmatprep.subr.bf16.mxu0 0
    %561 = vmatpush1.bf16.msra.mxu0 0
    %562 = vmatprep.mubr.bf16.mxu0 0
    %563 = vmatmul.mubr.bf16.gmra.mrb[0].mxu0 %v449
    %v564 = vpop.f32.mrb[0].mxu0
    %v565 = vadd.f32 0.0, %v564
    %v566 = vpop.f32.mrb[0].mxu0
    %v567 = vadd.f32 0.0, %v566
    %v568 = vpop.f32.mrb[0].mxu0
    %v569 = vadd.f32 0.0, %v568
    %v570 = vpop.f32.mrb[0].mxu0
    %v571 = vadd.f32 0.0, %v570
    %572 = vmatprep.mubr.bf16.mxu0 0
    %573 = vmatmul.mubr.bf16.gmra.mrb[0].mxu0 %v452
    %v574 = vpop.f32.mrb[0].mxu0
    %v575 = vadd.f32 0.0, %v574
    %v576 = vpop.f32.mrb[0].mxu0
    %v577 = vadd.f32 0.0, %v576
    %v578 = vpop.f32.mrb[0].mxu0
    %v579 = vadd.f32 0.0, %v578
    %v580 = vpop.f32.mrb[0].mxu0
    %v581 = vadd.f32 0.0, %v580
    %582 = vmatprep.mubr.bf16.mxu0 0
    %583 = vmatmul.mubr.bf16.gmra.mrb[0].mxu0 %v455
    %v584 = vpop.f32.mrb[0].mxu0
    %v585 = vadd.f32 0.0, %v584
    %v586 = vpop.f32.mrb[0].mxu0
    %v587 = vadd.f32 0.0, %v586
    %v588 = vpop.f32.mrb[0].mxu0
    %v589 = vadd.f32 0.0, %v588
    %v590 = vpop.f32.mrb[0].mxu0
    %v591 = vadd.f32 0.0, %v590
    %592 = vmatprep.mubr.bf16.mxu0 0
    %593 = vmatmul.mubr.bf16.gmra.mrb[0].mxu0 %v458
    %v594 = vpop.f32.mrb[0].mxu0
    %v595 = vadd.f32 0.0, %v594
    %v596 = vpop.f32.mrb[0].mxu0
    %v597 = vadd.f32 0.0, %v596
    %v598 = vpop.f32.mrb[0].mxu0
    %v599 = vadd.f32 0.0, %v598
    %v600 = vpop.f32.mrb[0].mxu0
    %v601 = vadd.f32 0.0, %v600
    %602 = vmatprep.mubr.bf16.mxu0 0
    %603 = vmatmul.mubr.bf16.gmra.mrb[0].mxu0 %v461
    %v604 = vpop.f32.mrb[0].mxu0
    %v605 = vadd.f32 0.0, %v604
    %v606 = vpop.f32.mrb[0].mxu0
    %v607 = vadd.f32 0.0, %v606
    %v608 = vpop.f32.mrb[0].mxu0
    %v609 = vadd.f32 0.0, %v608
    %v610 = vpop.f32.mrb[0].mxu0
    %v611 = vadd.f32 0.0, %v610
    %612 = vmatprep.mubr.bf16.mxu0 0
    %613 = vmatmul.mubr.bf16.gmra.mrb[0].mxu0 %v464
    %v614 = vpop.f32.mrb[0].mxu0
    %v615 = vadd.f32 0.0, %v614
    %v616 = vpop.f32.mrb[0].mxu0
    %v617 = vadd.f32 0.0, %v616
    %v618 = vpop.f32.mrb[0].mxu0
    %v619 = vadd.f32 0.0, %v618
    %v620 = vpop.f32.mrb[0].mxu0
    %v621 = vadd.f32 0.0, %v620
    %622 = vmatprep.mubr.bf16.mxu0 0
    %623 = vmatmul.mubr.bf16.gmra.mrb[0].mxu0 %v467
    %v624 = vpop.f32.mrb[0].mxu0
    %v625 = vadd.f32 0.0, %v624
    %v626 = vpop.f32.mrb[0].mxu0
    %v627 = vadd.f32 0.0, %v626
    %v628 = vpop.f32.mrb[0].mxu0
    %v629 = vadd.f32 0.0, %v628
    %v630 = vpop.f32.mrb[0].mxu0
    %v631 = vadd.f32 0.0, %v630
    %632 = vmatprep.mubr.bf16.mxu0 0
    %633 = vmatmul.mubr.bf16.gmra.mrb[0].mxu0 %v470
    %v634 = vpop.f32.mrb[0].mxu0
    %v635 = vadd.f32 0.0, %v634
    %v636 = vpop.f32.mrb[0].mxu0
    %v637 = vadd.f32 0.0, %v636
    %v638 = vpop.f32.mrb[0].mxu0
    %v639 = vadd.f32 0.0, %v638
    %v640 = vpop.f32.mrb[0].mxu0
    %v641 = vadd.f32 0.0, %v640
    %642 = vmatprep.mubr.bf16.mxu0 0
    %643 = vmatmul.mubr.bf16.gmra.mrb[0].mxu0 %v473
    %v644 = vpop.f32.mrb[0].mxu0
    %v645 = vadd.f32 0.0, %v644
    %v646 = vpop.f32.mrb[0].mxu0
    %v647 = vadd.f32 0.0, %v646
    %v648 = vpop.f32.mrb[0].mxu0
    %v649 = vadd.f32 0.0, %v648
    %v650 = vpop.f32.mrb[0].mxu0
    %v651 = vadd.f32 0.0, %v650
    %652 = vmatprep.mubr.bf16.mxu0 0
    %653 = vmatmul.mubr.bf16.gmra.mrb[0].mxu0 %v476
    %v654 = vpop.f32.mrb[0].mxu0
    %v655 = vadd.f32 0.0, %v654
    %v656 = vpop.f32.mrb[0].mxu0
    %v657 = vadd.f32 0.0, %v656
    %v658 = vpop.f32.mrb[0].mxu0
    %v659 = vadd.f32 0.0, %v658
    %v660 = vpop.f32.mrb[0].mxu0
    %v661 = vadd.f32 0.0, %v660
    %662 = vmatprep.mubr.bf16.mxu0 0
    %663 = vmatmul.mubr.bf16.gmra.mrb[0].mxu0 %v479
    %v664 = vpop.f32.mrb[0].mxu0
    %v665 = vadd.f32 0.0, %v664
    %v666 = vpop.f32.mrb[0].mxu0
    %v667 = vadd.f32 0.0, %v666
    %v668 = vpop.f32.mrb[0].mxu0
    %v669 = vadd.f32 0.0, %v668
    %v670 = vpop.f32.mrb[0].mxu0
    %v671 = vadd.f32 0.0, %v670
    %672 = vmatprep.mubr.bf16.mxu0 0
    %673 = vmatmul.mubr.bf16.gmra.mrb[0].mxu0 %v482
    %v674 = vpop.f32.mrb[0].mxu0
    %v675 = vadd.f32 0.0, %v674
    %v676 = vpop.f32.mrb[0].mxu0
    %v677 = vadd.f32 0.0, %v676
    %v678 = vpop.f32.mrb[0].mxu0
    %v679 = vadd.f32 0.0, %v678
    %v680 = vpop.f32.mrb[0].mxu0
    %v681 = vadd.f32 0.0, %v680
    %682 = vmatprep.mubr.bf16.mxu0 0
    %683 = vmatmul.mubr.bf16.gmra.mrb[0].mxu0 %v485
    %v684 = vpop.f32.mrb[0].mxu0
    %v685 = vadd.f32 0.0, %v684
    %v686 = vpop.f32.mrb[0].mxu0
    %v687 = vadd.f32 0.0, %v686
    %v688 = vpop.f32.mrb[0].mxu0
    %v689 = vadd.f32 0.0, %v688
    %v690 = vpop.f32.mrb[0].mxu0
    %v691 = vadd.f32 0.0, %v690
    %692 = vmatprep.mubr.bf16.mxu0 0
    %693 = vmatmul.mubr.bf16.gmra.mrb[0].mxu0 %v488
    %v694 = vpop.f32.mrb[0].mxu0
    %v695 = vadd.f32 0.0, %v694
    %v696 = vpop.f32.mrb[0].mxu0
    %v697 = vadd.f32 0.0, %v696
    %v698 = vpop.f32.mrb[0].mxu0
    %v699 = vadd.f32 0.0, %v698
    %v700 = vpop.f32.mrb[0].mxu0
    %v701 = vadd.f32 0.0, %v700
    %702 = vmatprep.mubr.bf16.mxu0 0
    %703 = vmatmul.mubr.bf16.gmra.mrb[0].mxu0 %v491
    %v704 = vpop.f32.mrb[0].mxu0
    %v705 = vadd.f32 0.0, %v704
    %v706 = vpop.f32.mrb[0].mxu0
    %v707 = vadd.f32 0.0, %v706
    %v708 = vpop.f32.mrb[0].mxu0
    %v709 = vadd.f32 0.0, %v708
    %v710 = vpop.f32.mrb[0].mxu0
    %v711 = vadd.f32 0.0, %v710
    %712 = vmatprep.mubr.bf16.mxu0 0
    %713 = vmatmul.mubr.bf16.gmra.mrb[0].mxu0 %v494
    %v714 = vpop.f32.mrb[0].mxu0
    %v715 = vadd.f32 0.0, %v714
    %v716 = vpop.f32.mrb[0].mxu0
    %v717 = vadd.f32 0.0, %v716
    %v718 = vpop.f32.mrb[0].mxu0
    %v719 = vadd.f32 0.0, %v718
    %v720 = vpop.f32.mrb[0].mxu0
    %v721 = vadd.f32 0.0, %v720
    %722 = vmatprep.mubr.bf16.mxu0 0
    %723 = vmatmul.mubr.bf16.gmra.mrb[0].mxu0 %v497
    %v724 = vpop.f32.mrb[0].mxu0
    %v725 = vadd.f32 0.0, %v724
    %v726 = vpop.f32.mrb[0].mxu0
    %v727 = vadd.f32 0.0, %v726
    %v728 = vpop.f32.mrb[0].mxu0
    %v729 = vadd.f32 0.0, %v728
    %v730 = vpop.f32.mrb[0].mxu0
    %v731 = vadd.f32 0.0, %v730
    %732 = vmatprep.mubr.bf16.mxu0 0
    %733 = vmatmul.mubr.bf16.gmra.mrb[0].mxu0 %v500
    %v734 = vpop.f32.mrb[0].mxu0
    %v735 = vadd.f32 0.0, %v734
    %v736 = vpop.f32.mrb[0].mxu0
    %v737 = vadd.f32 0.0, %v736
    %v738 = vpop.f32.mrb[0].mxu0
    %v739 = vadd.f32 0.0, %v738
    %v740 = vpop.f32.mrb[0].mxu0
    %v741 = vadd.f32 0.0, %v740
    %742 = vmatprep.mubr.bf16.mxu0 0
    %743 = vmatmul.mubr.bf16.gmra.mrb[0].mxu0 %v503
    %v744 = vpop.f32.mrb[0].mxu0
    %v745 = vadd.f32 0.0, %v744
    %v746 = vpop.f32.mrb[0].mxu0
    %v747 = vadd.f32 0.0, %v746
    %v748 = vpop.f32.mrb[0].mxu0
    %v749 = vadd.f32 0.0, %v748
    %v750 = vpop.f32.mrb[0].mxu0
    %v751 = vadd.f32 0.0, %v750
    %752 = vmatprep.mubr.bf16.mxu0 0
    %753 = vmatmul.mubr.bf16.gmra.mrb[0].mxu0 %v506
    %v754 = vpop.f32.mrb[0].mxu0
    %v755 = vadd.f32 0.0, %v754
    %v756 = vpop.f32.mrb[0].mxu0
    %v757 = vadd.f32 0.0, %v756
    %v758 = vpop.f32.mrb[0].mxu0
    %v759 = vpop.f32.mrb[0].mxu0
    %760 = vdwg.mxu0
    %761 = vmatprep.subr.bf16.mxu0 %v519
    %762 = vmatpush1.bf16.msra.mxu0 %v516
    %763 = vmatprep.subr.bf16.mxu0 0
    %764 = vmatpush1.bf16.msra.mxu0 0
    %765 = vmatprep.subr.bf16.mxu0 0
    %766 = vmatpush1.bf16.msra.mxu0 0
    %767 = vmatprep.subr.bf16.mxu0 0
    %768 = vmatpush1.bf16.msra.mxu0 0
    %769 = vmatprep.subr.bf16.mxu0 0
    %770 = vmatpush1.bf16.msra.mxu0 0
    %771 = vmatprep.subr.bf16.mxu0 0
    %772 = vmatpush1.bf16.msra.mxu0 0
    %773 = vmatprep.subr.bf16.mxu0 0
    %774 = vmatpush1.bf16.msra.mxu0 0
    %775 = vmatprep.subr.bf16.mxu0 0
    %776 = vmatpush1.bf16.msra.mxu0 0
    %777 = vmatprep.subr.bf16.mxu0 0
    %778 = vmatpush1.bf16.msra.mxu0 0
    %779 = vmatprep.subr.bf16.mxu0 0
    %780 = vmatpush1.bf16.msra.mxu0 0
    %781 = vmatprep.subr.bf16.mxu0 0
    %782 = vmatpush1.bf16.msra.mxu0 0
    %783 = vmatprep.subr.bf16.mxu0 0
    %784 = vmatpush1.bf16.msra.mxu0 0
    %785 = vmatprep.subr.bf16.mxu0 0
    %786 = vmatpush1.bf16.msra.mxu0 0
    %787 = vmatprep.subr.bf16.mxu0 0
    %788 = vmatpush1.bf16.msra.mxu0 0
    %789 = vmatprep.subr.bf16.mxu0 0
    %790 = vmatpush1.bf16.msra.mxu0 0
    %791 = vmatprep.subr.bf16.mxu0 0
    %792 = vmatpush1.bf16.msra.mxu0 0
    %793 = vmatprep.mubr.bf16.mxu0 0
    %794 = vmatmul.mubr.bf16.gmra.mrb[0].mxu0 %v449
    %v795 = vpop.f32.mrb[0].mxu0
    %v796 = vadd.f32 0.0, %v795
    %v797 = vpop.f32.mrb[0].mxu0
    %v798 = vadd.f32 0.0, %v797
    %v799 = vpop.f32.mrb[0].mxu0
    %v800 = vadd.f32 0.0, %v799
    %v801 = vpop.f32.mrb[0].mxu0
    %v802 = vadd.f32 0.0, %v801
    %803 = vmatprep.mubr.bf16.mxu0 0
    %804 = vmatmul.mubr.bf16.gmra.mrb[0].mxu0 %v452
    %v805 = vpop.f32.mrb[0].mxu0
    %v806 = vadd.f32 0.0, %v805
    %v807 = vpop.f32.mrb[0].mxu0
    %v808 = vadd.f32 0.0, %v807
    %v809 = vpop.f32.mrb[0].mxu0
    %v810 = vadd.f32 0.0, %v809
    %v811 = vpop.f32.mrb[0].mxu0
    %v812 = vadd.f32 0.0, %v811
    %813 = vmatprep.mubr.bf16.mxu0 0
    %814 = vmatmul.mubr.bf16.gmra.mrb[0].mxu0 %v455
    %v815 = vpop.f32.mrb[0].mxu0
    %v816 = vadd.f32 0.0, %v815
    %v817 = vpop.f32.mrb[0].mxu0
    %v818 = vadd.f32 0.0, %v817
    %v819 = vpop.f32.mrb[0].mxu0
    %v820 = vadd.f32 0.0, %v819
    %v821 = vpop.f32.mrb[0].mxu0
    %v822 = vadd.f32 0.0, %v821
    %823 = vmatprep.mubr.bf16.mxu0 0
    %824 = vmatmul.mubr.bf16.gmra.mrb[0].mxu0 %v458
    %v825 = vpop.f32.mrb[0].mxu0
    %v826 = vadd.f32 0.0, %v825
    %v827 = vpop.f32.mrb[0].mxu0
    %v828 = vadd.f32 0.0, %v827
    %v829 = vpop.f32.mrb[0].mxu0
    %v830 = vadd.f32 0.0, %v829
    %v831 = vpop.f32.mrb[0].mxu0
    %v832 = vadd.f32 0.0, %v831
    %833 = vmatprep.mubr.bf16.mxu0 0
    %834 = vmatmul.mubr.bf16.gmra.mrb[0].mxu0 %v461
    %v835 = vpop.f32.mrb[0].mxu0
    %v836 = vadd.f32 0.0, %v835
    %v837 = vpop.f32.mrb[0].mxu0
    %v838 = vadd.f32 0.0, %v837
    %v839 = vpop.f32.mrb[0].mxu0
    %v840 = vadd.f32 0.0, %v839
    %v841 = vpop.f32.mrb[0].mxu0
    %v842 = vadd.f32 0.0, %v841
    %843 = vmatprep.mubr.bf16.mxu0 0
    %844 = vmatmul.mubr.bf16.gmra.mrb[0].mxu0 %v464
    %v845 = vpop.f32.mrb[0].mxu0
    %v846 = vadd.f32 0.0, %v845
    %v847 = vpop.f32.mrb[0].mxu0
    %v848 = vadd.f32 0.0, %v847
    %v849 = vpop.f32.mrb[0].mxu0
    %v850 = vadd.f32 0.0, %v849
    %v851 = vpop.f32.mrb[0].mxu0
    %v852 = vadd.f32 0.0, %v851
    %853 = vmatprep.mubr.bf16.mxu0 0
    %854 = vmatmul.mubr.bf16.gmra.mrb[0].mxu0 %v467
    %v855 = vpop.f32.mrb[0].mxu0
    %v856 = vadd.f32 0.0, %v855
    %v857 = vpop.f32.mrb[0].mxu0
    %v858 = vadd.f32 0.0, %v857
    %v859 = vpop.f32.mrb[0].mxu0
    %v860 = vadd.f32 0.0, %v859
    %v861 = vpop.f32.mrb[0].mxu0
    %v862 = vadd.f32 0.0, %v861
    %863 = vmatprep.mubr.bf16.mxu0 0
    %864 = vmatmul.mubr.bf16.gmra.mrb[0].mxu0 %v470
    %v865 = vpop.f32.mrb[0].mxu0
    %v866 = vadd.f32 0.0, %v865
    %v867 = vpop.f32.mrb[0].mxu0
    %v868 = vadd.f32 0.0, %v867
    %v869 = vpop.f32.mrb[0].mxu0
    %v870 = vadd.f32 0.0, %v869
    %v871 = vpop.f32.mrb[0].mxu0
    %v872 = vadd.f32 0.0, %v871
    %873 = vmatprep.mubr.bf16.mxu0 0
    %874 = vmatmul.mubr.bf16.gmra.mrb[0].mxu0 %v473
    %v875 = vpop.f32.mrb[0].mxu0
    %v876 = vadd.f32 0.0, %v875
    %v877 = vpop.f32.mrb[0].mxu0
    %v878 = vadd.f32 0.0, %v877
    %v879 = vpop.f32.mrb[0].mxu0
    %v880 = vadd.f32 0.0, %v879
    %v881 = vpop.f32.mrb[0].mxu0
    %v882 = vadd.f32 0.0, %v881
    %883 = vmatprep.mubr.bf16.mxu0 0
    %884 = vmatmul.mubr.bf16.gmra.mrb[0].mxu0 %v476
    %v885 = vpop.f32.mrb[0].mxu0
    %v886 = vadd.f32 0.0, %v885
    %v887 = vpop.f32.mrb[0].mxu0
    %v888 = vadd.f32 0.0, %v887
    %v889 = vpop.f32.mrb[0].mxu0
    %v890 = vadd.f32 0.0, %v889
    %v891 = vpop.f32.mrb[0].mxu0
    %v892 = vadd.f32 0.0, %v891
    %893 = vmatprep.mubr.bf16.mxu0 0
    %894 = vmatmul.mubr.bf16.gmra.mrb[0].mxu0 %v479
    %v895 = vpop.f32.mrb[0].mxu0
    %v896 = vadd.f32 0.0, %v895
    %v897 = vpop.f32.mrb[0].mxu0
    %v898 = vadd.f32 0.0, %v897
    %v899 = vpop.f32.mrb[0].mxu0
    %v900 = vadd.f32 0.0, %v899
    %v901 = vpop.f32.mrb[0].mxu0
    %v902 = vadd.f32 0.0, %v901
    %903 = vmatprep.mubr.bf16.mxu0 0
    %904 = vmatmul.mubr.bf16.gmra.mrb[0].mxu0 %v482
    %v905 = vpop.f32.mrb[0].mxu0
    %v906 = vadd.f32 0.0, %v905
    %v907 = vpop.f32.mrb[0].mxu0
    %v908 = vadd.f32 0.0, %v907
    %v909 = vpop.f32.mrb[0].mxu0
    %v910 = vadd.f32 0.0, %v909
    %v911 = vpop.f32.mrb[0].mxu0
    %v912 = vadd.f32 0.0, %v911
    %913 = vmatprep.mubr.bf16.mxu0 0
    %914 = vmatmul.mubr.bf16.gmra.mrb[0].mxu0 %v485
    %v915 = vpop.f32.mrb[0].mxu0
    %v916 = vadd.f32 0.0, %v915
    %v917 = vpop.f32.mrb[0].mxu0
    %v918 = vadd.f32 0.0, %v917
    %v919 = vpop.f32.mrb[0].mxu0
    %v920 = vadd.f32 0.0, %v919
    %v921 = vpop.f32.mrb[0].mxu0
    %v922 = vadd.f32 0.0, %v921
    %923 = vmatprep.mubr.bf16.mxu0 0
    %924 = vmatmul.mubr.bf16.gmra.mrb[0].mxu0 %v488
    %v925 = vpop.f32.mrb[0].mxu0
    %v926 = vadd.f32 0.0, %v925
    %v927 = vpop.f32.mrb[0].mxu0
    %v928 = vadd.f32 0.0, %v927
    %v929 = vpop.f32.mrb[0].mxu0
    %v930 = vadd.f32 0.0, %v929
    %v931 = vpop.f32.mrb[0].mxu0
    %v932 = vadd.f32 0.0, %v931
    %933 = vmatprep.mubr.bf16.mxu0 0
    %934 = vmatmul.mubr.bf16.gmra.mrb[0].mxu0 %v491
    %v935 = vpop.f32.mrb[0].mxu0
    %v936 = vadd.f32 0.0, %v935
    %v937 = vpop.f32.mrb[0].mxu0
    %v938 = vadd.f32 0.0, %v937
    %v939 = vpop.f32.mrb[0].mxu0
    %v940 = vadd.f32 0.0, %v939
    %v941 = vpop.f32.mrb[0].mxu0
    %v942 = vadd.f32 0.0, %v941
    %943 = vmatprep.mubr.bf16.mxu0 0
    %944 = vmatmul.mubr.bf16.gmra.mrb[0].mxu0 %v494
    %v945 = vpop.f32.mrb[0].mxu0
    %v946 = vadd.f32 0.0, %v945
    %v947 = vpop.f32.mrb[0].mxu0
    %v948 = vadd.f32 0.0, %v947
    %v949 = vpop.f32.mrb[0].mxu0
    %v950 = vadd.f32 0.0, %v949
    %v951 = vpop.f32.mrb[0].mxu0
    %v952 = vadd.f32 0.0, %v951
    %953 = vmatprep.mubr.bf16.mxu0 0
    %954 = vmatmul.mubr.bf16.gmra.mrb[0].mxu0 %v497
    %v955 = vpop.f32.mrb[0].mxu0
    %v956 = vadd.f32 0.0, %v955
    %v957 = vpop.f32.mrb[0].mxu0
    %v958 = vadd.f32 0.0, %v957
    %v959 = vpop.f32.mrb[0].mxu0
    %v960 = vadd.f32 0.0, %v959
    %v961 = vpop.f32.mrb[0].mxu0
    %v962 = vadd.f32 0.0, %v961
    %963 = vmatprep.mubr.bf16.mxu0 0
    %964 = vmatmul.mubr.bf16.gmra.mrb[0].mxu0 %v500
    %v965 = vpop.f32.mrb[0].mxu0
    %v966 = vadd.f32 0.0, %v965
    %v967 = vpop.f32.mrb[0].mxu0
    %v968 = vadd.f32 0.0, %v967
    %v969 = vpop.f32.mrb[0].mxu0
    %v970 = vadd.f32 0.0, %v969
    %v971 = vpop.f32.mrb[0].mxu0
    %v972 = vadd.f32 0.0, %v971
    %973 = vmatprep.mubr.bf16.mxu0 0
    %974 = vmatmul.mubr.bf16.gmra.mrb[0].mxu0 %v503
    %v975 = vpop.f32.mrb[0].mxu0
    %v976 = vadd.f32 0.0, %v975
    %v977 = vpop.f32.mrb[0].mxu0
    %v978 = vadd.f32 0.0, %v977
    %v979 = vpop.f32.mrb[0].mxu0
    %v980 = vadd.f32 0.0, %v979
    %v981 = vpop.f32.mrb[0].mxu0
    %v982 = vadd.f32 0.0, %v981
    %983 = vmatprep.mubr.bf16.mxu0 0
    %984 = vmatmul.mubr.bf16.gmra.mrb[0].mxu0 %v506
    %v985 = vpop.f32.mrb[0].mxu0
    %v986 = vadd.f32 0.0, %v985
    %v987 = vpop.f32.mrb[0].mxu0
    %v988 = vadd.f32 0.0, %v987
    %v989 = vpop.f32.mrb[0].mxu0
    %v990 = vpop.f32.mrb[0].mxu0
    %991 = vdwg.mxu0
    %992 = vmatprep.subr.bf16.mxu0 %v525
    %993 = vmatpush1.bf16.msra.mxu0 %v522
    %994 = vmatprep.subr.bf16.mxu0 0
    %995 = vmatpush1.bf16.msra.mxu0 0
    %996 = vmatprep.subr.bf16.mxu0 0
    %997 = vmatpush1.bf16.msra.mxu0 0
    %998 = vmatprep.subr.bf16.mxu0 0
    %999 = vmatpush1.bf16.msra.mxu0 0
    %1000 = vmatprep.subr.bf16.mxu0 0
    %1001 = vmatpush1.bf16.msra.mxu0 0
    %1002 = vmatprep.subr.bf16.mxu0 0
    %1003 = vmatpush1.bf16.msra.mxu0 0
    %1004 = vmatprep.subr.bf16.mxu0 0
    %1005 = vmatpush1.bf16.msra.mxu0 0
    %1006 = vmatprep.subr.bf16.mxu0 0
    %1007 = vmatpush1.bf16.msra.mxu0 0
    %1008 = vmatprep.subr.bf16.mxu0 0
    %1009 = vmatpush1.bf16.msra.mxu0 0
    %1010 = vmatprep.subr.bf16.mxu0 0
    %1011 = vmatpush1.bf16.msra.mxu0 0
    %1012 = vmatprep.subr.bf16.mxu0 0
    %1013 = vmatpush1.bf16.msra.mxu0 0
    %1014 = vmatprep.subr.bf16.mxu0 0
    %1015 = vmatpush1.bf16.msra.mxu0 0
    %1016 = vmatprep.subr.bf16.mxu0 0
    %1017 = vmatpush1.bf16.msra.mxu0 0
    %1018 = vmatprep.subr.bf16.mxu0 0
    %1019 = vmatpush1.bf16.msra.mxu0 0
    %1020 = vmatprep.subr.bf16.mxu0 0
    %1021 = vmatpush1.bf16.msra.mxu0 0
    %1022 = vmatprep.subr.bf16.mxu0 0
    %1023 = vmatpush1.bf16.msra.mxu0 0
    %1024 = vmatprep.mubr.bf16.mxu0 0
    %1025 = vmatmul.mubr.bf16.gmra.mrb[0].mxu0 %v449
    %v1026 = vpop.f32.mrb[0].mxu0
    %v1027 = vadd.f32 0.0, %v1026
    %v1028 = vpop.f32.mrb[0].mxu0
    %v1029 = vadd.f32 0.0, %v1028
    %v1030 = vpop.f32.mrb[0].mxu0
    %v1031 = vadd.f32 0.0, %v1030
    %v1032 = vpop.f32.mrb[0].mxu0
    %v1033 = vadd.f32 0.0, %v1032
    %1034 = vmatprep.mubr.bf16.mxu0 0
    %1035 = vmatmul.mubr.bf16.gmra.mrb[0].mxu0 %v452
    %v1036 = vpop.f32.mrb[0].mxu0
    %v1037 = vadd.f32 0.0, %v1036
    %v1038 = vpop.f32.mrb[0].mxu0
    %v1039 = vadd.f32 0.0, %v1038
    %v1040 = vpop.f32.mrb[0].mxu0
    %v1041 = vadd.f32 0.0, %v1040
    %v1042 = vpop.f32.mrb[0].mxu0
    %v1043 = vadd.f32 0.0, %v1042
    %1044 = vmatprep.mubr.bf16.mxu0 0
    %1045 = vmatmul.mubr.bf16.gmra.mrb[0].mxu0 %v455
    %v1046 = vpop.f32.mrb[0].mxu0
    %v1047 = vadd.f32 0.0, %v1046
    %v1048 = vpop.f32.mrb[0].mxu0
    %v1049 = vadd.f32 0.0, %v1048
    %v1050 = vpop.f32.mrb[0].mxu0
    %v1051 = vadd.f32 0.0, %v1050
    %v1052 = vpop.f32.mrb[0].mxu0
    %v1053 = vadd.f32 0.0, %v1052
    %1054 = vmatprep.mubr.bf16.mxu0 0
    %1055 = vmatmul.mubr.bf16.gmra.mrb[0].mxu0 %v458
    %v1056 = vpop.f32.mrb[0].mxu0
    %v1057 = vadd.f32 0.0, %v1056
    %v1058 = vpop.f32.mrb[0].mxu0
    %v1059 = vadd.f32 0.0, %v1058
    %v1060 = vpop.f32.mrb[0].mxu0
    %v1061 = vadd.f32 0.0, %v1060
    %v1062 = vpop.f32.mrb[0].mxu0
    %v1063 = vadd.f32 0.0, %v1062
    %1064 = vmatprep.mubr.bf16.mxu0 0
    %1065 = vmatmul.mubr.bf16.gmra.mrb[0].mxu0 %v461
    %v1066 = vpop.f32.mrb[0].mxu0
    %v1067 = vadd.f32 0.0, %v1066
    %v1068 = vpop.f32.mrb[0].mxu0
    %v1069 = vadd.f32 0.0, %v1068
    %v1070 = vpop.f32.mrb[0].mxu0
    %v1071 = vadd.f32 0.0, %v1070
    %v1072 = vpop.f32.mrb[0].mxu0
    %v1073 = vadd.f32 0.0, %v1072
    %1074 = vmatprep.mubr.bf16.mxu0 0
    %1075 = vmatmul.mubr.bf16.gmra.mrb[0].mxu0 %v464
    %v1076 = vpop.f32.mrb[0].mxu0
    %v1077 = vadd.f32 0.0, %v1076
    %v1078 = vpop.f32.mrb[0].mxu0
    %v1079 = vadd.f32 0.0, %v1078
    %v1080 = vpop.f32.mrb[0].mxu0
    %v1081 = vadd.f32 0.0, %v1080
    %v1082 = vpop.f32.mrb[0].mxu0
    %v1083 = vadd.f32 0.0, %v1082
    %1084 = vmatprep.mubr.bf16.mxu0 0
    %1085 = vmatmul.mubr.bf16.gmra.mrb[0].mxu0 %v467
    %v1086 = vpop.f32.mrb[0].mxu0
    %v1087 = vadd.f32 0.0, %v1086
    %v1088 = vpop.f32.mrb[0].mxu0
    %v1089 = vadd.f32 0.0, %v1088
    %v1090 = vpop.f32.mrb[0].mxu0
    %v1091 = vadd.f32 0.0, %v1090
    %v1092 = vpop.f32.mrb[0].mxu0
    %v1093 = vadd.f32 0.0, %v1092
    %1094 = vmatprep.mubr.bf16.mxu0 0
    %1095 = vmatmul.mubr.bf16.gmra.mrb[0].mxu0 %v470
    %v1096 = vpop.f32.mrb[0].mxu0
    %v1097 = vadd.f32 0.0, %v1096
    %v1098 = vpop.f32.mrb[0].mxu0
    %v1099 = vadd.f32 0.0, %v1098
    %v1100 = vpop.f32.mrb[0].mxu0
    %v1101 = vadd.f32 0.0, %v1100
    %v1102 = vpop.f32.mrb[0].mxu0
    %v1103 = vadd.f32 0.0, %v1102
    %1104 = vmatprep.mubr.bf16.mxu0 0
    %1105 = vmatmul.mubr.bf16.gmra.mrb[0].mxu0 %v473
    %v1106 = vpop.f32.mrb[0].mxu0
    %v1107 = vadd.f32 0.0, %v1106
    %v1108 = vpop.f32.mrb[0].mxu0
    %v1109 = vadd.f32 0.0, %v1108
    %v1110 = vpop.f32.mrb[0].mxu0
    %v1111 = vadd.f32 0.0, %v1110
    %v1112 = vpop.f32.mrb[0].mxu0
    %v1113 = vadd.f32 0.0, %v1112
    %1114 = vmatprep.mubr.bf16.mxu0 0
    %1115 = vmatmul.mubr.bf16.gmra.mrb[0].mxu0 %v476
    %v1116 = vpop.f32.mrb[0].mxu0
    %v1117 = vadd.f32 0.0, %v1116
    %v1118 = vpop.f32.mrb[0].mxu0
    %v1119 = vadd.f32 0.0, %v1118
    %v1120 = vpop.f32.mrb[0].mxu0
    %v1121 = vadd.f32 0.0, %v1120
    %v1122 = vpop.f32.mrb[0].mxu0
    %v1123 = vadd.f32 0.0, %v1122
    %1124 = vmatprep.mubr.bf16.mxu0 0
    %1125 = vmatmul.mubr.bf16.gmra.mrb[0].mxu0 %v479
    %v1126 = vpop.f32.mrb[0].mxu0
    %v1127 = vadd.f32 0.0, %v1126
    %v1128 = vpop.f32.mrb[0].mxu0
    %v1129 = vadd.f32 0.0, %v1128
    %v1130 = vpop.f32.mrb[0].mxu0
    %v1131 = vadd.f32 0.0, %v1130
    %v1132 = vpop.f32.mrb[0].mxu0
    %v1133 = vadd.f32 0.0, %v1132
    %1134 = vmatprep.mubr.bf16.mxu0 0
    %1135 = vmatmul.mubr.bf16.gmra.mrb[0].mxu0 %v482
    %v1136 = vpop.f32.mrb[0].mxu0
    %v1137 = vadd.f32 0.0, %v1136
    %v1138 = vpop.f32.mrb[0].mxu0
    %v1139 = vadd.f32 0.0, %v1138
    %v1140 = vpop.f32.mrb[0].mxu0
    %v1141 = vadd.f32 0.0, %v1140
    %v1142 = vpop.f32.mrb[0].mxu0
    %v1143 = vadd.f32 0.0, %v1142
    %1144 = vmatprep.mubr.bf16.mxu0 0
    %1145 = vmatmul.mubr.bf16.gmra.mrb[0].mxu0 %v485
    %v1146 = vpop.f32.mrb[0].mxu0
    %v1147 = vadd.f32 0.0, %v1146
    %v1148 = vpop.f32.mrb[0].mxu0
    %v1149 = vadd.f32 0.0, %v1148
    %v1150 = vpop.f32.mrb[0].mxu0
    %v1151 = vadd.f32 0.0, %v1150
    %v1152 = vpop.f32.mrb[0].mxu0
    %v1153 = vadd.f32 0.0, %v1152
    %1154 = vmatprep.mubr.bf16.mxu0 0
    %1155 = vmatmul.mubr.bf16.gmra.mrb[0].mxu0 %v488
    %v1156 = vpop.f32.mrb[0].mxu0
    %v1157 = vadd.f32 0.0, %v1156
    %v1158 = vpop.f32.mrb[0].mxu0
    %v1159 = vadd.f32 0.0, %v1158
    %v1160 = vpop.f32.mrb[0].mxu0
    %v1161 = vadd.f32 0.0, %v1160
    %v1162 = vpop.f32.mrb[0].mxu0
    %v1163 = vadd.f32 0.0, %v1162
    %1164 = vmatprep.mubr.bf16.mxu0 0
    %1165 = vmatmul.mubr.bf16.gmra.mrb[0].mxu0 %v491
    %v1166 = vpop.f32.mrb[0].mxu0
    %v1167 = vadd.f32 0.0, %v1166
    %v1168 = vpop.f32.mrb[0].mxu0
    %v1169 = vadd.f32 0.0, %v1168
    %v1170 = vpop.f32.mrb[0].mxu0
    %v1171 = vadd.f32 0.0, %v1170
    %v1172 = vpop.f32.mrb[0].mxu0
    %v1173 = vadd.f32 0.0, %v1172
    %1174 = vmatprep.mubr.bf16.mxu0 0
    %1175 = vmatmul.mubr.bf16.gmra.mrb[0].mxu0 %v494
    %v1176 = vpop.f32.mrb[0].mxu0
    %v1177 = vadd.f32 0.0, %v1176
    %v1178 = vpop.f32.mrb[0].mxu0
    %v1179 = vadd.f32 0.0, %v1178
    %v1180 = vpop.f32.mrb[0].mxu0
    %v1181 = vadd.f32 0.0, %v1180
    %v1182 = vpop.f32.mrb[0].mxu0
    %v1183 = vadd.f32 0.0, %v1182
    %1184 = vmatprep.mubr.bf16.mxu0 0
    %1185 = vmatmul.mubr.bf16.gmra.mrb[0].mxu0 %v497
    %v1186 = vpop.f32.mrb[0].mxu0
    %v1187 = vadd.f32 0.0, %v1186
    %v1188 = vpop.f32.mrb[0].mxu0
    %v1189 = vadd.f32 0.0, %v1188
    %v1190 = vpop.f32.mrb[0].mxu0
    %v1191 = vadd.f32 0.0, %v1190
    %v1192 = vpop.f32.mrb[0].mxu0
    %v1193 = vadd.f32 0.0, %v1192
    %1194 = vmatprep.mubr.bf16.mxu0 0
    %1195 = vmatmul.mubr.bf16.gmra.mrb[0].mxu0 %v500
    %v1196 = vpop.f32.mrb[0].mxu0
    %v1197 = vadd.f32 0.0, %v1196
    %v1198 = vpop.f32.mrb[0].mxu0
    %v1199 = vadd.f32 0.0, %v1198
    %v1200 = vpop.f32.mrb[0].mxu0
    %v1201 = vadd.f32 0.0, %v1200
    %v1202 = vpop.f32.mrb[0].mxu0
    %v1203 = vadd.f32 0.0, %v1202
    %1204 = vmatprep.mubr.bf16.mxu0 0
    %1205 = vmatmul.mubr.bf16.gmra.mrb[0].mxu0 %v503
    %v1206 = vpop.f32.mrb[0].mxu0
    %v1207 = vadd.f32 0.0, %v1206
    %v1208 = vpop.f32.mrb[0].mxu0
    %v1209 = vadd.f32 0.0, %v1208
    %v1210 = vpop.f32.mrb[0].mxu0
    %v1211 = vadd.f32 0.0, %v1210
    %v1212 = vpop.f32.mrb[0].mxu0
    %v1213 = vadd.f32 0.0, %v1212
    %1214 = vmatprep.mubr.bf16.mxu0 0
    %1215 = vmatmul.mubr.bf16.gmra.mrb[0].mxu0 %v506
    %v1216 = vpop.f32.mrb[0].mxu0
    %v1217 = vadd.f32 0.0, %v1216
    %v1218 = vpop.f32.mrb[0].mxu0
    %v1219 = vadd.f32 0.0, %v1218
    %v1220 = vpop.f32.mrb[0].mxu0
    %v1221 = vpop.f32.mrb[0].mxu0
    %1222 = vdwg.mxu0
    %1223 = vmatprep.subr.bf16.mxu0 0
    %1224 = vmatpush1.bf16.msra.mxu0 %v528
    %1225 = vmatprep.subr.bf16.mxu0 0
    %1226 = vmatpush1.bf16.msra.mxu0 0
    %1227 = vmatprep.subr.bf16.mxu0 0
    %1228 = vmatpush1.bf16.msra.mxu0 0
    %1229 = vmatprep.subr.bf16.mxu0 0
    %1230 = vmatpush1.bf16.msra.mxu0 0
    %1231 = vmatprep.subr.bf16.mxu0 0
    %1232 = vmatpush1.bf16.msra.mxu0 0
    %1233 = vmatprep.subr.bf16.mxu0 0
    %1234 = vmatpush1.bf16.msra.mxu0 0
    %1235 = vmatprep.subr.bf16.mxu0 0
    %1236 = vmatpush1.bf16.msra.mxu0 0
    %1237 = vmatprep.subr.bf16.mxu0 0
    %1238 = vmatpush1.bf16.msra.mxu0 0
    %1239 = vmatprep.subr.bf16.mxu0 0
    %1240 = vmatpush1.bf16.msra.mxu0 0
    %1241 = vmatprep.subr.bf16.mxu0 0
    %1242 = vmatpush1.bf16.msra.mxu0 0
    %1243 = vmatprep.subr.bf16.mxu0 0
    %1244 = vmatpush1.bf16.msra.mxu0 0
    %1245 = vmatprep.subr.bf16.mxu0 0
    %1246 = vmatpush1.bf16.msra.mxu0 0
    %1247 = vmatprep.subr.bf16.mxu0 0
    %1248 = vmatpush1.bf16.msra.mxu0 0
    %1249 = vmatprep.subr.bf16.mxu0 0
    %1250 = vmatpush1.bf16.msra.mxu0 0
    %1251 = vmatprep.subr.bf16.mxu0 0
    %1252 = vmatpush1.bf16.msra.mxu0 0
    %1253 = vmatprep.subr.bf16.mxu0 0
    %1254 = vmatpush1.bf16.msra.mxu0 0
    %1255 = vmatprep.mubr.bf16.mxu0 0
    %1256 = vmatmul.mubr.bf16.gmra.mrb[0].mxu0 %v449
    %v1257 = vpop.f32.mrb[0].mxu0
    %v1258 = vadd.f32 0.0, %v1257
    %v1259 = vpop.f32.mrb[0].mxu0
    %v1260 = vpop.f32.mrb[0].mxu0
    %v1261 = vadd.f32 0.0, %v1260
    %v1262 = vpop.f32.mrb[0].mxu0
    %1263 = vmatprep.mubr.bf16.mxu0 0
    %1264 = vmatmul.mubr.bf16.gmra.mrb[0].mxu0 %v452
    %v1265 = vpop.f32.mrb[0].mxu0
    %v1266 = vadd.f32 0.0, %v1265
    %v1267 = vpop.f32.mrb[0].mxu0
    %v1268 = vpop.f32.mrb[0].mxu0
    %v1269 = vadd.f32 0.0, %v1268
    %v1270 = vpop.f32.mrb[0].mxu0
    %1271 = vmatprep.mubr.bf16.mxu0 0
    %1272 = vmatmul.mubr.bf16.gmra.mrb[0].mxu0 %v455
    %v1273 = vpop.f32.mrb[0].mxu0
    %v1274 = vadd.f32 0.0, %v1273
    %v1275 = vpop.f32.mrb[0].mxu0
    %v1276 = vpop.f32.mrb[0].mxu0
    %v1277 = vadd.f32 0.0, %v1276
    %v1278 = vpop.f32.mrb[0].mxu0
    %1279 = vmatprep.mubr.bf16.mxu0 0
    %1280 = vmatmul.mubr.bf16.gmra.mrb[0].mxu0 %v458
    %v1281 = vpop.f32.mrb[0].mxu0
    %v1282 = vadd.f32 0.0, %v1281
    %v1283 = vpop.f32.mrb[0].mxu0
    %v1284 = vpop.f32.mrb[0].mxu0
    %v1285 = vadd.f32 0.0, %v1284
    %v1286 = vpop.f32.mrb[0].mxu0
    %1287 = vmatprep.mubr.bf16.mxu0 0
    %1288 = vmatmul.mubr.bf16.gmra.mrb[0].mxu0 %v461
    %v1289 = vpop.f32.mrb[0].mxu0
    %v1290 = vadd.f32 0.0, %v1289
    %v1291 = vpop.f32.mrb[0].mxu0
    %v1292 = vpop.f32.mrb[0].mxu0
    %v1293 = vadd.f32 0.0, %v1292
    %v1294 = vpop.f32.mrb[0].mxu0
    %1295 = vmatprep.mubr.bf16.mxu0 0
    %1296 = vmatmul.mubr.bf16.gmra.mrb[0].mxu0 %v464
    %v1297 = vpop.f32.mrb[0].mxu0
    %v1298 = vadd.f32 0.0, %v1297
    %v1299 = vpop.f32.mrb[0].mxu0
    %v1300 = vpop.f32.mrb[0].mxu0
    %v1301 = vadd.f32 0.0, %v1300
    %v1302 = vpop.f32.mrb[0].mxu0
    %1303 = vmatprep.mubr.bf16.mxu0 0
    %1304 = vmatmul.mubr.bf16.gmra.mrb[0].mxu0 %v467
    %v1305 = vpop.f32.mrb[0].mxu0
    %v1306 = vadd.f32 0.0, %v1305
    %v1307 = vpop.f32.mrb[0].mxu0
    %v1308 = vpop.f32.mrb[0].mxu0
    %v1309 = vadd.f32 0.0, %v1308
    %v1310 = vpop.f32.mrb[0].mxu0
    %1311 = vmatprep.mubr.bf16.mxu0 0
    %1312 = vmatmul.mubr.bf16.gmra.mrb[0].mxu0 %v470
    %v1313 = vpop.f32.mrb[0].mxu0
    %v1314 = vadd.f32 0.0, %v1313
    %v1315 = vpop.f32.mrb[0].mxu0
    %v1316 = vpop.f32.mrb[0].mxu0
    %v1317 = vadd.f32 0.0, %v1316
    %v1318 = vpop.f32.mrb[0].mxu0
    %1319 = vmatprep.mubr.bf16.mxu0 0
    %1320 = vmatmul.mubr.bf16.gmra.mrb[0].mxu0 %v473
    %v1321 = vpop.f32.mrb[0].mxu0
    %v1322 = vadd.f32 0.0, %v1321
    %v1323 = vpop.f32.mrb[0].mxu0
    %v1324 = vpop.f32.mrb[0].mxu0
    %v1325 = vadd.f32 0.0, %v1324
    %v1326 = vpop.f32.mrb[0].mxu0
    %1327 = vmatprep.mubr.bf16.mxu0 0
    %1328 = vmatmul.mubr.bf16.gmra.mrb[0].mxu0 %v476
    %v1329 = vpop.f32.mrb[0].mxu0
    %v1330 = vadd.f32 0.0, %v1329
    %v1331 = vpop.f32.mrb[0].mxu0
    %v1332 = vpop.f32.mrb[0].mxu0
    %v1333 = vadd.f32 0.0, %v1332
    %v1334 = vpop.f32.mrb[0].mxu0
    %1335 = vmatprep.mubr.bf16.mxu0 0
    %1336 = vmatmul.mubr.bf16.gmra.mrb[0].mxu0 %v479
    %v1337 = vpop.f32.mrb[0].mxu0
    %v1338 = vadd.f32 0.0, %v1337
    %v1339 = vpop.f32.mrb[0].mxu0
    %v1340 = vpop.f32.mrb[0].mxu0
    %v1341 = vadd.f32 0.0, %v1340
    %v1342 = vpop.f32.mrb[0].mxu0
    %1343 = vmatprep.mubr.bf16.mxu0 0
    %1344 = vmatmul.mubr.bf16.gmra.mrb[0].mxu0 %v482
    %v1345 = vpop.f32.mrb[0].mxu0
    %v1346 = vadd.f32 0.0, %v1345
    %v1347 = vpop.f32.mrb[0].mxu0
    %v1348 = vpop.f32.mrb[0].mxu0
    %v1349 = vadd.f32 0.0, %v1348
    %v1350 = vpop.f32.mrb[0].mxu0
    %1351 = vmatprep.mubr.bf16.mxu0 0
    %1352 = vmatmul.mubr.bf16.gmra.mrb[0].mxu0 %v485
    %v1353 = vpop.f32.mrb[0].mxu0
    %v1354 = vadd.f32 0.0, %v1353
    %v1355 = vpop.f32.mrb[0].mxu0
    %v1356 = vpop.f32.mrb[0].mxu0
    %v1357 = vadd.f32 0.0, %v1356
    %v1358 = vpop.f32.mrb[0].mxu0
    %1359 = vmatprep.mubr.bf16.mxu0 0
    %1360 = vmatmul.mubr.bf16.gmra.mrb[0].mxu0 %v488
    %v1361 = vpop.f32.mrb[0].mxu0
    %v1362 = vadd.f32 0.0, %v1361
    %v1363 = vpop.f32.mrb[0].mxu0
    %v1364 = vpop.f32.mrb[0].mxu0
    %v1365 = vadd.f32 0.0, %v1364
    %v1366 = vpop.f32.mrb[0].mxu0
    %1367 = vmatprep.mubr.bf16.mxu0 0
    %1368 = vmatmul.mubr.bf16.gmra.mrb[0].mxu0 %v491
    %v1369 = vpop.f32.mrb[0].mxu0
    %v1370 = vadd.f32 0.0, %v1369
    %v1371 = vpop.f32.mrb[0].mxu0
    %v1372 = vpop.f32.mrb[0].mxu0
    %v1373 = vadd.f32 0.0, %v1372
    %v1374 = vpop.f32.mrb[0].mxu0
    %1375 = vmatprep.mubr.bf16.mxu0 0
    %1376 = vmatmul.mubr.bf16.gmra.mrb[0].mxu0 %v494
    %v1377 = vpop.f32.mrb[0].mxu0
    %v1378 = vadd.f32 0.0, %v1377
    %v1379 = vpop.f32.mrb[0].mxu0
    %v1380 = vpop.f32.mrb[0].mxu0
    %v1381 = vadd.f32 0.0, %v1380
    %v1382 = vpop.f32.mrb[0].mxu0
    %1383 = vmatprep.mubr.bf16.mxu0 0
    %1384 = vmatmul.mubr.bf16.gmra.mrb[0].mxu0 %v497
    %v1385 = vpop.f32.mrb[0].mxu0
    %v1386 = vadd.f32 0.0, %v1385
    %v1387 = vpop.f32.mrb[0].mxu0
    %v1388 = vpop.f32.mrb[0].mxu0
    %v1389 = vadd.f32 0.0, %v1388
    %v1390 = vpop.f32.mrb[0].mxu0
    %1391 = vmatprep.mubr.bf16.mxu0 0
    %1392 = vmatmul.mubr.bf16.gmra.mrb[0].mxu0 %v500
    %v1393 = vpop.f32.mrb[0].mxu0
    %v1394 = vadd.f32 0.0, %v1393
    %v1395 = vpop.f32.mrb[0].mxu0
    %v1396 = vpop.f32.mrb[0].mxu0
    %v1397 = vadd.f32 0.0, %v1396
    %v1398 = vpop.f32.mrb[0].mxu0
    %1399 = vmatprep.mubr.bf16.mxu0 0
    %1400 = vmatmul.mubr.bf16.gmra.mrb[0].mxu0 %v503
    %v1401 = vpop.f32.mrb[0].mxu0
    %v1402 = vadd.f32 0.0, %v1401
    %v1403 = vpop.f32.mrb[0].mxu0
    %v1404 = vpop.f32.mrb[0].mxu0
    %v1405 = vadd.f32 0.0, %v1404
    %v1406 = vpop.f32.mrb[0].mxu0
    %1407 = vmatprep.mubr.bf16.mxu0 0
    %1408 = vmatmul.mubr.bf16.gmra.mrb[0].mxu0 %v506
    %v1409 = vpop.f32.mrb[0].mxu0
    %v1410 = vadd.f32 0.0, %v1409
    %v1411 = vpop.f32.mrb[0].mxu0
    %v1412 = vpop.f32.mrb[0].mxu0
    %v1413 = vpop.f32.mrb[0].mxu0
    %1414 = vdwg.mxu0
    %v1415 = vxor.u32 %v565, 2147483648
    %v1416 = vxor.u32 %v567, 2147483648
    %v1417 = vxor.u32 %v796, 2147483648
    %v1418 = vxor.u32 %v798, 2147483648
    %v1419 = vxor.u32 %v1027, 2147483648
    %v1420 = vxor.u32 %v1029, 2147483648
    %v1421 = vxor.u32 %v1258, 2147483648
    %v1422 = vxor.u32 %v569, 2147483648
    %v1423 = vxor.u32 %v571, 2147483648
    %v1424 = vxor.u32 %v800, 2147483648
    %v1425 = vxor.u32 %v802, 2147483648
    %v1426 = vxor.u32 %v1031, 2147483648
    %v1427 = vxor.u32 %v1033, 2147483648
    %v1428 = vxor.u32 %v1261, 2147483648
    %v1429 = vxor.u32 %v575, 2147483648
    %v1430 = vxor.u32 %v577, 2147483648
    %v1431 = vxor.u32 %v806, 2147483648
    %v1432 = vxor.u32 %v808, 2147483648
    %v1433 = vxor.u32 %v1037, 2147483648
    %v1434 = vxor.u32 %v1039, 2147483648
    %v1435 = vxor.u32 %v1266, 2147483648
    %v1436 = vxor.u32 %v579, 2147483648
    %v1437 = vxor.u32 %v581, 2147483648
    %v1438 = vxor.u32 %v810, 2147483648
    %v1439 = vxor.u32 %v812, 2147483648
    %v1440 = vxor.u32 %v1041, 2147483648
    %v1441 = vxor.u32 %v1043, 2147483648
    %v1442 = vxor.u32 %v1269, 2147483648
    %v1443 = vxor.u32 %v585, 2147483648
    %v1444 = vxor.u32 %v587, 2147483648
    %v1445 = vxor.u32 %v816, 2147483648
    %v1446 = vxor.u32 %v818, 2147483648
    %v1447 = vxor.u32 %v1047, 2147483648
    %v1448 = vxor.u32 %v1049, 2147483648
    %v1449 = vxor.u32 %v1274, 2147483648
    %v1450 = vxor.u32 %v589, 2147483648
    %v1451 = vxor.u32 %v591, 2147483648
    %v1452 = vxor.u32 %v820, 2147483648
    %v1453 = vxor.u32 %v822, 2147483648
    %v1454 = vxor.u32 %v1051, 2147483648
    %v1455 = vxor.u32 %v1053, 2147483648
    %v1456 = vxor.u32 %v1277, 2147483648
    %v1457 = vxor.u32 %v595, 2147483648
    %v1458 = vxor.u32 %v597, 2147483648
    %v1459 = vxor.u32 %v826, 2147483648
    %v1460 = vxor.u32 %v828, 2147483648
    %v1461 = vxor.u32 %v1057, 2147483648
    %v1462 = vxor.u32 %v1059, 2147483648
    %v1463 = vxor.u32 %v1282, 2147483648
    %v1464 = vxor.u32 %v599, 2147483648
    %v1465 = vxor.u32 %v601, 2147483648
    %v1466 = vxor.u32 %v830, 2147483648
    %v1467 = vxor.u32 %v832, 2147483648
    %v1468 = vxor.u32 %v1061, 2147483648
    %v1469 = vxor.u32 %v1063, 2147483648
    %v1470 = vxor.u32 %v1285, 2147483648
    %v1471 = vxor.u32 %v605, 2147483648
    %v1472 = vxor.u32 %v607, 2147483648
    %v1473 = vxor.u32 %v836, 2147483648
    %v1474 = vxor.u32 %v838, 2147483648
    %v1475 = vxor.u32 %v1067, 2147483648
    %v1476 = vxor.u32 %v1069, 2147483648
    %v1477 = vxor.u32 %v1290, 2147483648
    %v1478 = vxor.u32 %v609, 2147483648
    %v1479 = vxor.u32 %v611, 2147483648
    %v1480 = vxor.u32 %v840, 2147483648
    %v1481 = vxor.u32 %v842, 2147483648
    %v1482 = vxor.u32 %v1071, 2147483648
    %v1483 = vxor.u32 %v1073, 2147483648
    %v1484 = vxor.u32 %v1293, 2147483648
    %v1485 = vxor.u32 %v615, 2147483648
    %v1486 = vxor.u32 %v617, 2147483648
    %v1487 = vxor.u32 %v846, 2147483648
    %v1488 = vxor.u32 %v848, 2147483648
    %v1489 = vxor.u32 %v1077, 2147483648
    %v1490 = vxor.u32 %v1079, 2147483648
    %v1491 = vxor.u32 %v1298, 2147483648
    %v1492 = vxor.u32 %v619, 2147483648
    %v1493 = vxor.u32 %v621, 2147483648
    %v1494 = vxor.u32 %v850, 2147483648
    %v1495 = vxor.u32 %v852, 2147483648
    %v1496 = vxor.u32 %v1081, 2147483648
    %v1497 = vxor.u32 %v1083, 2147483648
    %v1498 = vxor.u32 %v1301, 2147483648
    %v1499 = vxor.u32 %v625, 2147483648
    %v1500 = vxor.u32 %v627, 2147483648
    %v1501 = vxor.u32 %v856, 2147483648
    %v1502 = vxor.u32 %v858, 2147483648
    %v1503 = vxor.u32 %v1087, 2147483648
    %v1504 = vxor.u32 %v1089, 2147483648
    %v1505 = vxor.u32 %v1306, 2147483648
    %v1506 = vxor.u32 %v629, 2147483648
    %v1507 = vxor.u32 %v631, 2147483648
    %v1508 = vxor.u32 %v860, 2147483648
    %v1509 = vxor.u32 %v862, 2147483648
    %v1510 = vxor.u32 %v1091, 2147483648
    %v1511 = vxor.u32 %v1093, 2147483648
    %v1512 = vxor.u32 %v1309, 2147483648
    %v1513 = vxor.u32 %v635, 2147483648
    %v1514 = vxor.u32 %v637, 2147483648
    %v1515 = vxor.u32 %v866, 2147483648
    %v1516 = vxor.u32 %v868, 2147483648
    %v1517 = vxor.u32 %v1097, 2147483648
    %v1518 = vxor.u32 %v1099, 2147483648
    %v1519 = vxor.u32 %v1314, 2147483648
    %v1520 = vxor.u32 %v639, 2147483648
    %v1521 = vxor.u32 %v641, 2147483648
    %v1522 = vxor.u32 %v870, 2147483648
    %v1523 = vxor.u32 %v872, 2147483648
    %v1524 = vxor.u32 %v1101, 2147483648
    %v1525 = vxor.u32 %v1103, 2147483648
    %v1526 = vxor.u32 %v1317, 2147483648
    %v1527 = vxor.u32 %v645, 2147483648
    %v1528 = vxor.u32 %v647, 2147483648
    %v1529 = vxor.u32 %v876, 2147483648
    %v1530 = vxor.u32 %v878, 2147483648
    %v1531 = vxor.u32 %v1107, 2147483648
    %v1532 = vxor.u32 %v1109, 2147483648
    %v1533 = vxor.u32 %v1322, 2147483648
    %v1534 = vxor.u32 %v649, 2147483648
    %v1535 = vxor.u32 %v651, 2147483648
    %v1536 = vxor.u32 %v880, 2147483648
    %v1537 = vxor.u32 %v882, 2147483648
    %v1538 = vxor.u32 %v1111, 2147483648
    %v1539 = vxor.u32 %v1113, 2147483648
    %v1540 = vxor.u32 %v1325, 2147483648
    %v1541 = vxor.u32 %v655, 2147483648
    %v1542 = vxor.u32 %v657, 2147483648
    %v1543 = vxor.u32 %v886, 2147483648
    %v1544 = vxor.u32 %v888, 2147483648
    %v1545 = vxor.u32 %v1117, 2147483648
    %v1546 = vxor.u32 %v1119, 2147483648
    %v1547 = vxor.u32 %v1330, 2147483648
    %v1548 = vxor.u32 %v659, 2147483648
    %v1549 = vxor.u32 %v661, 2147483648
    %v1550 = vxor.u32 %v890, 2147483648
    %v1551 = vxor.u32 %v892, 2147483648
    %v1552 = vxor.u32 %v1121, 2147483648
    %v1553 = vxor.u32 %v1123, 2147483648
    %v1554 = vxor.u32 %v1333, 2147483648
    %v1555 = vxor.u32 %v665, 2147483648
    %v1556 = vxor.u32 %v667, 2147483648
    %v1557 = vxor.u32 %v896, 2147483648
    %v1558 = vxor.u32 %v898, 2147483648
    %v1559 = vxor.u32 %v1127, 2147483648
    %v1560 = vxor.u32 %v1129, 2147483648
    %v1561 = vxor.u32 %v1338, 2147483648
    %v1562 = vxor.u32 %v669, 2147483648
    %v1563 = vxor.u32 %v671, 2147483648
    %v1564 = vxor.u32 %v900, 2147483648
    %v1565 = vxor.u32 %v902, 2147483648
    %v1566 = vxor.u32 %v1131, 2147483648
    %v1567 = vxor.u32 %v1133, 2147483648
    %v1568 = vxor.u32 %v1341, 2147483648
    %v1569 = vxor.u32 %v675, 2147483648
    %v1570 = vxor.u32 %v677, 2147483648
    %v1571 = vxor.u32 %v906, 2147483648
    %v1572 = vxor.u32 %v908, 2147483648
    %v1573 = vxor.u32 %v1137, 2147483648
    %v1574 = vxor.u32 %v1139, 2147483648
    %v1575 = vxor.u32 %v1346, 2147483648
    %v1576 = vxor.u32 %v679, 2147483648
    %v1577 = vxor.u32 %v681, 2147483648
    %v1578 = vxor.u32 %v910, 2147483648
    %v1579 = vxor.u32 %v912, 2147483648
    %v1580 = vxor.u32 %v1141, 2147483648
    %v1581 = vxor.u32 %v1143, 2147483648
    %v1582 = vxor.u32 %v1349, 2147483648
    %v1583 = vxor.u32 %v685, 2147483648
    %v1584 = vxor.u32 %v687, 2147483648
    %v1585 = vxor.u32 %v916, 2147483648
    %v1586 = vxor.u32 %v918, 2147483648
    %v1587 = vxor.u32 %v1147, 2147483648
    %v1588 = vxor.u32 %v1149, 2147483648
    %v1589 = vxor.u32 %v1354, 2147483648
    %v1590 = vxor.u32 %v689, 2147483648
    %v1591 = vxor.u32 %v691, 2147483648
    %v1592 = vxor.u32 %v920, 2147483648
    %v1593 = vxor.u32 %v922, 2147483648
    %v1594 = vxor.u32 %v1151, 2147483648
    %v1595 = vxor.u32 %v1153, 2147483648
    %v1596 = vxor.u32 %v1357, 2147483648
    %v1597 = vxor.u32 %v695, 2147483648
    %v1598 = vxor.u32 %v697, 2147483648
    %v1599 = vxor.u32 %v926, 2147483648
    %v1600 = vxor.u32 %v928, 2147483648
    %v1601 = vxor.u32 %v1157, 2147483648
    %v1602 = vxor.u32 %v1159, 2147483648
    %v1603 = vxor.u32 %v1362, 2147483648
    %v1604 = vxor.u32 %v699, 2147483648
    %v1605 = vxor.u32 %v701, 2147483648
    %v1606 = vxor.u32 %v930, 2147483648
    %v1607 = vxor.u32 %v932, 2147483648
    %v1608 = vxor.u32 %v1161, 2147483648
    %v1609 = vxor.u32 %v1163, 2147483648
    %v1610 = vxor.u32 %v1365, 2147483648
    %v1611 = vxor.u32 %v705, 2147483648
    %v1612 = vxor.u32 %v707, 2147483648
    %v1613 = vxor.u32 %v936, 2147483648
    %v1614 = vxor.u32 %v938, 2147483648
    %v1615 = vxor.u32 %v1167, 2147483648
    %v1616 = vxor.u32 %v1169, 2147483648
    %v1617 = vxor.u32 %v1370, 2147483648
    %v1618 = vxor.u32 %v709, 2147483648
    %v1619 = vxor.u32 %v711, 2147483648
    %v1620 = vxor.u32 %v940, 2147483648
    %v1621 = vxor.u32 %v942, 2147483648
    %v1622 = vxor.u32 %v1171, 2147483648
    %v1623 = vxor.u32 %v1173, 2147483648
    %v1624 = vxor.u32 %v1373, 2147483648
    %v1625 = vxor.u32 %v715, 2147483648
    %v1626 = vxor.u32 %v717, 2147483648
    %v1627 = vxor.u32 %v946, 2147483648
    %v1628 = vxor.u32 %v948, 2147483648
    %v1629 = vxor.u32 %v1177, 2147483648
    %v1630 = vxor.u32 %v1179, 2147483648
    %v1631 = vxor.u32 %v1378, 2147483648
    %v1632 = vxor.u32 %v719, 2147483648
    %v1633 = vxor.u32 %v721, 2147483648
    %v1634 = vxor.u32 %v950, 2147483648
    %v1635 = vxor.u32 %v952, 2147483648
    %v1636 = vxor.u32 %v1181, 2147483648
    %v1637 = vxor.u32 %v1183, 2147483648
    %v1638 = vxor.u32 %v1381, 2147483648
    %v1639 = vxor.u32 %v725, 2147483648
    %v1640 = vxor.u32 %v727, 2147483648
    %v1641 = vxor.u32 %v956, 2147483648
    %v1642 = vxor.u32 %v958, 2147483648
    %v1643 = vxor.u32 %v1187, 2147483648
    %v1644 = vxor.u32 %v1189, 2147483648
    %v1645 = vxor.u32 %v1386, 2147483648
    %v1646 = vxor.u32 %v729, 2147483648
    %v1647 = vxor.u32 %v731, 2147483648
    %v1648 = vxor.u32 %v960, 2147483648
    %v1649 = vxor.u32 %v962, 2147483648
    %v1650 = vxor.u32 %v1191, 2147483648
    %v1651 = vxor.u32 %v1193, 2147483648
    %v1652 = vxor.u32 %v1389, 2147483648
    %v1653 = vxor.u32 %v735, 2147483648
    %v1654 = vxor.u32 %v737, 2147483648
    %v1655 = vxor.u32 %v966, 2147483648
    %v1656 = vxor.u32 %v968, 2147483648
    %v1657 = vxor.u32 %v1197, 2147483648
    %v1658 = vxor.u32 %v1199, 2147483648
    %v1659 = vxor.u32 %v1394, 2147483648
    %v1660 = vxor.u32 %v739, 2147483648
    %v1661 = vxor.u32 %v741, 2147483648
    %v1662 = vxor.u32 %v970, 2147483648
    %v1663 = vxor.u32 %v972, 2147483648
    %v1664 = vxor.u32 %v1201, 2147483648
    %v1665 = vxor.u32 %v1203, 2147483648
    %v1666 = vxor.u32 %v1397, 2147483648
    %v1667 = vxor.u32 %v745, 2147483648
    %v1668 = vxor.u32 %v747, 2147483648
    %v1669 = vxor.u32 %v976, 2147483648
    %v1670 = vxor.u32 %v978, 2147483648
    %v1671 = vxor.u32 %v1207, 2147483648
    %v1672 = vxor.u32 %v1209, 2147483648
    %v1673 = vxor.u32 %v1402, 2147483648
    %v1674 = vxor.u32 %v749, 2147483648
    %v1675 = vxor.u32 %v751, 2147483648
    %v1676 = vxor.u32 %v980, 2147483648
    %v1677 = vxor.u32 %v982, 2147483648
    %v1678 = vxor.u32 %v1211, 2147483648
    %v1679 = vxor.u32 %v1213, 2147483648
    %v1680 = vxor.u32 %v1405, 2147483648
    %v1681 = vxor.u32 %v755, 2147483648
    %v1682 = vxor.u32 %v757, 2147483648
    %v1683 = vxor.u32 %v986, 2147483648
    %v1684 = vxor.u32 %v988, 2147483648
    %v1685 = vxor.u32 %v1217, 2147483648
    %v1686 = vxor.u32 %v1219, 2147483648
    %v1687 = vxor.u32 %v1410, 2147483648
    %v1688 = vmul.f32 %v1415, 1.442695
    %v1689 = vpow.pop %v1688
    %v1690 = vmul.f32 %v1416, 1.442695
    %v1691 = vpow.pop %v1690
    %v1692 = vmul.f32 %v1417, 1.442695
    %v1693 = vpow.pop %v1692
    %v1694 = vmul.f32 %v1418, 1.442695
    %v1695 = vpow.pop %v1694
    %v1696 = vmul.f32 %v1419, 1.442695
    %v1697 = vpow.pop %v1696
    %v1698 = vmul.f32 %v1420, 1.442695
    %v1699 = vpow.pop %v1698
    %v1700 = vmul.f32 %v1421, 1.442695
    %v1701 = vpow.pop %v1700
    %v1702 = vmul.f32 %v1422, 1.442695
    %v1703 = vpow.pop %v1702
    %v1704 = vmul.f32 %v1423, 1.442695
    %v1705 = vpow.pop %v1704
    %v1706 = vmul.f32 %v1424, 1.442695
    %v1707 = vpow.pop %v1706
    %v1708 = vmul.f32 %v1425, 1.442695
    %v1709 = vpow.pop %v1708
    %v1710 = vmul.f32 %v1426, 1.442695
    %v1711 = vpow.pop %v1710
    %v1712 = vmul.f32 %v1427, 1.442695
    %v1713 = vpow.pop %v1712
    %v1714 = vmul.f32 %v1428, 1.442695
    %v1715 = vpow.pop %v1714
    %v1716 = vmul.f32 %v1429, 1.442695
    %v1717 = vpow.pop %v1716
    %v1718 = vmul.f32 %v1430, 1.442695
    %v1719 = vpow.pop %v1718
    %v1720 = vmul.f32 %v1431, 1.442695
    %v1721 = vpow.pop %v1720
    %v1722 = vmul.f32 %v1432, 1.442695
    %v1723 = vpow.pop %v1722
    %v1724 = vmul.f32 %v1433, 1.442695
    %v1725 = vpow.pop %v1724
    %v1726 = vmul.f32 %v1434, 1.442695
    %v1727 = vpow.pop %v1726
    %v1728 = vmul.f32 %v1435, 1.442695
    %v1729 = vpow.pop %v1728
    %v1730 = vmul.f32 %v1436, 1.442695
    %v1731 = vpow.pop %v1730
    %v1732 = vmul.f32 %v1437, 1.442695
    %v1733 = vpow.pop %v1732
    %v1734 = vmul.f32 %v1438, 1.442695
    %v1735 = vpow.pop %v1734
    %v1736 = vmul.f32 %v1439, 1.442695
    %v1737 = vpow.pop %v1736
    %v1738 = vmul.f32 %v1440, 1.442695
    %v1739 = vpow.pop %v1738
    %v1740 = vmul.f32 %v1441, 1.442695
    %v1741 = vpow.pop %v1740
    %v1742 = vmul.f32 %v1442, 1.442695
    %v1743 = vpow.pop %v1742
    %v1744 = vmul.f32 %v1443, 1.442695
    %v1745 = vpow.pop %v1744
    %v1746 = vmul.f32 %v1444, 1.442695
    %v1747 = vpow.pop %v1746
    %v1748 = vmul.f32 %v1445, 1.442695
    %v1749 = vpow.pop %v1748
    %v1750 = vmul.f32 %v1446, 1.442695
    %v1751 = vpow.pop %v1750
    %v1752 = vmul.f32 %v1447, 1.442695
    %v1753 = vpow.pop %v1752
    %v1754 = vmul.f32 %v1448, 1.442695
    %v1755 = vpow.pop %v1754
    %v1756 = vmul.f32 %v1449, 1.442695
    %v1757 = vpow.pop %v1756
    %v1758 = vmul.f32 %v1450, 1.442695
    %v1759 = vpow.pop %v1758
    %v1760 = vmul.f32 %v1451, 1.442695
    %v1761 = vpow.pop %v1760
    %v1762 = vmul.f32 %v1452, 1.442695
    %v1763 = vpow.pop %v1762
    %v1764 = vmul.f32 %v1453, 1.442695
    %v1765 = vpow.pop %v1764
    %v1766 = vmul.f32 %v1454, 1.442695
    %v1767 = vpow.pop %v1766
    %v1768 = vmul.f32 %v1455, 1.442695
    %v1769 = vpow.pop %v1768
    %v1770 = vmul.f32 %v1456, 1.442695
    %v1771 = vpow.pop %v1770
    %v1772 = vmul.f32 %v1457, 1.442695
    %v1773 = vpow.pop %v1772
    %v1774 = vmul.f32 %v1458, 1.442695
    %v1775 = vpow.pop %v1774
    %v1776 = vmul.f32 %v1459, 1.442695
    %v1777 = vpow.pop %v1776
    %v1778 = vmul.f32 %v1460, 1.442695
    %v1779 = vpow.pop %v1778
    %v1780 = vmul.f32 %v1461, 1.442695
    %v1781 = vpow.pop %v1780
    %v1782 = vmul.f32 %v1462, 1.442695
    %v1783 = vpow.pop %v1782
    %v1784 = vmul.f32 %v1463, 1.442695
    %v1785 = vpow.pop %v1784
    %v1786 = vmul.f32 %v1464, 1.442695
    %v1787 = vpow.pop %v1786
    %v1788 = vmul.f32 %v1465, 1.442695
    %v1789 = vpow.pop %v1788
    %v1790 = vmul.f32 %v1466, 1.442695
    %v1791 = vpow.pop %v1790
    %v1792 = vmul.f32 %v1467, 1.442695
    %v1793 = vpow.pop %v1792
    %v1794 = vmul.f32 %v1468, 1.442695
    %v1795 = vpow.pop %v1794
    %v1796 = vmul.f32 %v1469, 1.442695
    %v1797 = vpow.pop %v1796
    %v1798 = vmul.f32 %v1470, 1.442695
    %v1799 = vpow.pop %v1798
    %v1800 = vmul.f32 %v1471, 1.442695
    %v1801 = vpow.pop %v1800
    %v1802 = vmul.f32 %v1472, 1.442695
    %v1803 = vpow.pop %v1802
    %v1804 = vmul.f32 %v1473, 1.442695
    %v1805 = vpow.pop %v1804
    %v1806 = vmul.f32 %v1474, 1.442695
    %v1807 = vpow.pop %v1806
    %v1808 = vmul.f32 %v1475, 1.442695
    %v1809 = vpow.pop %v1808
    %v1810 = vmul.f32 %v1476, 1.442695
    %v1811 = vpow.pop %v1810
    %v1812 = vmul.f32 %v1477, 1.442695
    %v1813 = vpow.pop %v1812
    %v1814 = vmul.f32 %v1478, 1.442695
    %v1815 = vpow.pop %v1814
    %v1816 = vmul.f32 %v1479, 1.442695
    %v1817 = vpow.pop %v1816
    %v1818 = vmul.f32 %v1480, 1.442695
    %v1819 = vpow.pop %v1818
    %v1820 = vmul.f32 %v1481, 1.442695
    %v1821 = vpow.pop %v1820
    %v1822 = vmul.f32 %v1482, 1.442695
    %v1823 = vpow.pop %v1822
    %v1824 = vmul.f32 %v1483, 1.442695
    %v1825 = vpow.pop %v1824
    %v1826 = vmul.f32 %v1484, 1.442695
    %v1827 = vpow.pop %v1826
    %v1828 = vmul.f32 %v1485, 1.442695
    %v1829 = vpow.pop %v1828
    %v1830 = vmul.f32 %v1486, 1.442695
    %v1831 = vpow.pop %v1830
    %v1832 = vmul.f32 %v1487, 1.442695
    %v1833 = vpow.pop %v1832
    %v1834 = vmul.f32 %v1488, 1.442695
    %v1835 = vpow.pop %v1834
    %v1836 = vmul.f32 %v1489, 1.442695
    %v1837 = vpow.pop %v1836
    %v1838 = vmul.f32 %v1490, 1.442695
    %v1839 = vpow.pop %v1838
    %v1840 = vmul.f32 %v1491, 1.442695
    %v1841 = vpow.pop %v1840
    %v1842 = vmul.f32 %v1492, 1.442695
    %v1843 = vpow.pop %v1842
    %v1844 = vmul.f32 %v1493, 1.442695
    %v1845 = vpow.pop %v1844
    %v1846 = vmul.f32 %v1494, 1.442695
    %v1847 = vpow.pop %v1846
    %v1848 = vmul.f32 %v1495, 1.442695
    %v1849 = vpow.pop %v1848
    %v1850 = vmul.f32 %v1496, 1.442695
    %v1851 = vpow.pop %v1850
    %v1852 = vmul.f32 %v1497, 1.442695
    %v1853 = vpow.pop %v1852
    %v1854 = vmul.f32 %v1498, 1.442695
    %v1855 = vpow.pop %v1854
    %v1856 = vmul.f32 %v1499, 1.442695
    %v1857 = vpow.pop %v1856
    %v1858 = vmul.f32 %v1500, 1.442695
    %v1859 = vpow.pop %v1858
    %v1860 = vmul.f32 %v1501, 1.442695
    %v1861 = vpow.pop %v1860
    %v1862 = vmul.f32 %v1502, 1.442695
    %v1863 = vpow.pop %v1862
    %v1864 = vmul.f32 %v1503, 1.442695
    %v1865 = vpow.pop %v1864
    %v1866 = vmul.f32 %v1504, 1.442695
    %v1867 = vpow.pop %v1866
    %v1868 = vmul.f32 %v1505, 1.442695
    %v1869 = vpow.pop %v1868
    %v1870 = vmul.f32 %v1506, 1.442695
    %v1871 = vpow.pop %v1870
    %v1872 = vmul.f32 %v1507, 1.442695
    %v1873 = vpow.pop %v1872
    %v1874 = vmul.f32 %v1508, 1.442695
    %v1875 = vpow.pop %v1874
    %v1876 = vmul.f32 %v1509, 1.442695
    %v1877 = vpow.pop %v1876
    %v1878 = vmul.f32 %v1510, 1.442695
    %v1879 = vpow.pop %v1878
    %v1880 = vmul.f32 %v1511, 1.442695
    %v1881 = vpow.pop %v1880
    %v1882 = vmul.f32 %v1512, 1.442695
    %v1883 = vpow.pop %v1882
    %v1884 = vmul.f32 %v1513, 1.442695
    %v1885 = vpow.pop %v1884
    %v1886 = vmul.f32 %v1514, 1.442695
    %v1887 = vpow.pop %v1886
    %v1888 = vmul.f32 %v1515, 1.442695
    %v1889 = vpow.pop %v1888
    %v1890 = vmul.f32 %v1516, 1.442695
    %v1891 = vpow.pop %v1890
    %v1892 = vmul.f32 %v1517, 1.442695
    %v1893 = vpow.pop %v1892
    %v1894 = vmul.f32 %v1518, 1.442695
    %v1895 = vpow.pop %v1894
    %v1896 = vmul.f32 %v1519, 1.442695
    %v1897 = vpow.pop %v1896
    %v1898 = vmul.f32 %v1520, 1.442695
    %v1899 = vpow.pop %v1898
    %v1900 = vmul.f32 %v1521, 1.442695
    %v1901 = vpow.pop %v1900
    %v1902 = vmul.f32 %v1522, 1.442695
    %v1903 = vpow.pop %v1902
    %v1904 = vmul.f32 %v1523, 1.442695
    %v1905 = vpow.pop %v1904
    %v1906 = vmul.f32 %v1524, 1.442695
    %v1907 = vpow.pop %v1906
    %v1908 = vmul.f32 %v1525, 1.442695
    %v1909 = vpow.pop %v1908
    %v1910 = vmul.f32 %v1526, 1.442695
    %v1911 = vpow.pop %v1910
    %v1912 = vmul.f32 %v1527, 1.442695
    %v1913 = vpow.pop %v1912
    %v1914 = vmul.f32 %v1528, 1.442695
    %v1915 = vpow.pop %v1914
    %v1916 = vmul.f32 %v1529, 1.442695
    %v1917 = vpow.pop %v1916
    %v1918 = vmul.f32 %v1530, 1.442695
    %v1919 = vpow.pop %v1918
    %v1920 = vmul.f32 %v1531, 1.442695
    %v1921 = vpow.pop %v1920
    %v1922 = vmul.f32 %v1532, 1.442695
    %v1923 = vpow.pop %v1922
    %v1924 = vmul.f32 %v1533, 1.442695
    %v1925 = vpow.pop %v1924
    %v1926 = vmul.f32 %v1534, 1.442695
    %v1927 = vpow.pop %v1926
    %v1928 = vmul.f32 %v1535, 1.442695
    %v1929 = vpow.pop %v1928
    %v1930 = vmul.f32 %v1536, 1.442695
    %v1931 = vpow.pop %v1930
    %v1932 = vmul.f32 %v1537, 1.442695
    %v1933 = vpow.pop %v1932
    %v1934 = vmul.f32 %v1538, 1.442695
    %v1935 = vpow.pop %v1934
    %v1936 = vmul.f32 %v1539, 1.442695
    %v1937 = vpow.pop %v1936
    %v1938 = vmul.f32 %v1540, 1.442695
    %v1939 = vpow.pop %v1938
    %v1940 = vmul.f32 %v1541, 1.442695
    %v1941 = vpow.pop %v1940
    %v1942 = vmul.f32 %v1542, 1.442695
    %v1943 = vpow.pop %v1942
    %v1944 = vmul.f32 %v1543, 1.442695
    %v1945 = vpow.pop %v1944
    %v1946 = vmul.f32 %v1544, 1.442695
    %v1947 = vpow.pop %v1946
    %v1948 = vmul.f32 %v1545, 1.442695
    %v1949 = vpow.pop %v1948
    %v1950 = vmul.f32 %v1546, 1.442695
    %v1951 = vpow.pop %v1950
    %v1952 = vmul.f32 %v1547, 1.442695
    %v1953 = vpow.pop %v1952
    %v1954 = vmul.f32 %v1548, 1.442695
    %v1955 = vpow.pop %v1954
    %v1956 = vmul.f32 %v1549, 1.442695
    %v1957 = vpow.pop %v1956
    %v1958 = vmul.f32 %v1550, 1.442695
    %v1959 = vpow.pop %v1958
    %v1960 = vmul.f32 %v1551, 1.442695
    %v1961 = vpow.pop %v1960
    %v1962 = vmul.f32 %v1552, 1.442695
    %v1963 = vpow.pop %v1962
    %v1964 = vmul.f32 %v1553, 1.442695
    %v1965 = vpow.pop %v1964
    %v1966 = vmul.f32 %v1554, 1.442695
    %v1967 = vpow.pop %v1966
    %v1968 = vmul.f32 %v1555, 1.442695
    %v1969 = vpow.pop %v1968
    %v1970 = vmul.f32 %v1556, 1.442695
    %v1971 = vpow.pop %v1970
    %v1972 = vmul.f32 %v1557, 1.442695
    %v1973 = vpow.pop %v1972
    %v1974 = vmul.f32 %v1558, 1.442695
    %v1975 = vpow.pop %v1974
    %v1976 = vmul.f32 %v1559, 1.442695
    %v1977 = vpow.pop %v1976
    %v1978 = vmul.f32 %v1560, 1.442695
    %v1979 = vpow.pop %v1978
    %v1980 = vmul.f32 %v1561, 1.442695
    %v1981 = vpow.pop %v1980
    %v1982 = vmul.f32 %v1562, 1.442695
    %v1983 = vpow.pop %v1982
    %v1984 = vmul.f32 %v1563, 1.442695
    %v1985 = vpow.pop %v1984
    %v1986 = vmul.f32 %v1564, 1.442695
    %v1987 = vpow.pop %v1986
    %v1988 = vmul.f32 %v1565, 1.442695
    %v1989 = vpow.pop %v1988
    %v1990 = vmul.f32 %v1566, 1.442695
    %v1991 = vpow.pop %v1990
    %v1992 = vmul.f32 %v1567, 1.442695
    %v1993 = vpow.pop %v1992
    %v1994 = vmul.f32 %v1568, 1.442695
    %v1995 = vpow.pop %v1994
    %v1996 = vmul.f32 %v1569, 1.442695
    %v1997 = vpow.pop %v1996
    %v1998 = vmul.f32 %v1570, 1.442695
    %v1999 = vpow.pop %v1998
    %v2000 = vmul.f32 %v1571, 1.442695
    %v2001 = vpow.pop %v2000
    %v2002 = vmul.f32 %v1572, 1.442695
    %v2003 = vpow.pop %v2002
    %v2004 = vmul.f32 %v1573, 1.442695
    %v2005 = vpow.pop %v2004
    %v2006 = vmul.f32 %v1574, 1.442695
    %v2007 = vpow.pop %v2006
    %v2008 = vmul.f32 %v1575, 1.442695
    %v2009 = vpow.pop %v2008
    %v2010 = vmul.f32 %v1576, 1.442695
    %v2011 = vpow.pop %v2010
    %v2012 = vmul.f32 %v1577, 1.442695
    %v2013 = vpow.pop %v2012
    %v2014 = vmul.f32 %v1578, 1.442695
    %v2015 = vpow.pop %v2014
    %v2016 = vmul.f32 %v1579, 1.442695
    %v2017 = vpow.pop %v2016
    %v2018 = vmul.f32 %v1580, 1.442695
    %v2019 = vpow.pop %v2018
    %v2020 = vmul.f32 %v1581, 1.442695
    %v2021 = vpow.pop %v2020
    %v2022 = vmul.f32 %v1582, 1.442695
    %v2023 = vpow.pop %v2022
    %v2024 = vmul.f32 %v1583, 1.442695
    %v2025 = vpow.pop %v2024
    %v2026 = vmul.f32 %v1584, 1.442695
    %v2027 = vpow.pop %v2026
    %v2028 = vmul.f32 %v1585, 1.442695
    %v2029 = vpow.pop %v2028
    %v2030 = vmul.f32 %v1586, 1.442695
    %v2031 = vpow.pop %v2030
    %v2032 = vmul.f32 %v1587, 1.442695
    %v2033 = vpow.pop %v2032
    %v2034 = vmul.f32 %v1588, 1.442695
    %v2035 = vpow.pop %v2034
    %v2036 = vmul.f32 %v1589, 1.442695
    %v2037 = vpow.pop %v2036
    %v2038 = vmul.f32 %v1590, 1.442695
    %v2039 = vpow.pop %v2038
    %v2040 = vmul.f32 %v1591, 1.442695
    %v2041 = vpow.pop %v2040
    %v2042 = vmul.f32 %v1592, 1.442695
    %v2043 = vpow.pop %v2042
    %v2044 = vmul.f32 %v1593, 1.442695
    %v2045 = vpow.pop %v2044
    %v2046 = vmul.f32 %v1594, 1.442695
    %v2047 = vpow.pop %v2046
    %v2048 = vmul.f32 %v1595, 1.442695
    %v2049 = vpow.pop %v2048
    %v2050 = vmul.f32 %v1596, 1.442695
    %v2051 = vpow.pop %v2050
    %v2052 = vmul.f32 %v1597, 1.442695
    %v2053 = vpow.pop %v2052
    %v2054 = vmul.f32 %v1598, 1.442695
    %v2055 = vpow.pop %v2054
    %v2056 = vmul.f32 %v1599, 1.442695
    %v2057 = vpow.pop %v2056
    %v2058 = vmul.f32 %v1600, 1.442695
    %v2059 = vpow.pop %v2058
    %v2060 = vmul.f32 %v1601, 1.442695
    %v2061 = vpow.pop %v2060
    %v2062 = vmul.f32 %v1602, 1.442695
    %v2063 = vpow.pop %v2062
    %v2064 = vmul.f32 %v1603, 1.442695
    %v2065 = vpow.pop %v2064
    %v2066 = vmul.f32 %v1604, 1.442695
    %v2067 = vpow.pop %v2066
    %v2068 = vmul.f32 %v1605, 1.442695
    %v2069 = vpow.pop %v2068
    %v2070 = vmul.f32 %v1606, 1.442695
    %v2071 = vpow.pop %v2070
    %v2072 = vmul.f32 %v1607, 1.442695
    %v2073 = vpow.pop %v2072
    %v2074 = vmul.f32 %v1608, 1.442695
    %v2075 = vpow.pop %v2074
    %v2076 = vmul.f32 %v1609, 1.442695
    %v2077 = vpow.pop %v2076
    %v2078 = vmul.f32 %v1610, 1.442695
    %v2079 = vpow.pop %v2078
    %v2080 = vmul.f32 %v1611, 1.442695
    %v2081 = vpow.pop %v2080
    %v2082 = vmul.f32 %v1612, 1.442695
    %v2083 = vpow.pop %v2082
    %v2084 = vmul.f32 %v1613, 1.442695
    %v2085 = vpow.pop %v2084
    %v2086 = vmul.f32 %v1614, 1.442695
    %v2087 = vpow.pop %v2086
    %v2088 = vmul.f32 %v1615, 1.442695
    %v2089 = vpow.pop %v2088
    %v2090 = vmul.f32 %v1616, 1.442695
    %v2091 = vpow.pop %v2090
    %v2092 = vmul.f32 %v1617, 1.442695
    %v2093 = vpow.pop %v2092
    %v2094 = vmul.f32 %v1618, 1.442695
    %v2095 = vpow.pop %v2094
    %v2096 = vmul.f32 %v1619, 1.442695
    %v2097 = vpow.pop %v2096
    %v2098 = vmul.f32 %v1620, 1.442695
    %v2099 = vpow.pop %v2098
    %v2100 = vmul.f32 %v1621, 1.442695
    %v2101 = vpow.pop %v2100
    %v2102 = vmul.f32 %v1622, 1.442695
    %v2103 = vpow.pop %v2102
    %v2104 = vmul.f32 %v1623, 1.442695
    %v2105 = vpow.pop %v2104
    %v2106 = vmul.f32 %v1624, 1.442695
    %v2107 = vpow.pop %v2106
    %v2108 = vmul.f32 %v1625, 1.442695
    %v2109 = vpow.pop %v2108
    %v2110 = vmul.f32 %v1626, 1.442695
    %v2111 = vpow.pop %v2110
    %v2112 = vmul.f32 %v1627, 1.442695
    %v2113 = vpow.pop %v2112
    %v2114 = vmul.f32 %v1628, 1.442695
    %v2115 = vpow.pop %v2114
    %v2116 = vmul.f32 %v1629, 1.442695
    %v2117 = vpow.pop %v2116
    %v2118 = vmul.f32 %v1630, 1.442695
    %v2119 = vpow.pop %v2118
    %v2120 = vmul.f32 %v1631, 1.442695
    %v2121 = vpow.pop %v2120
    %v2122 = vmul.f32 %v1632, 1.442695
    %v2123 = vpow.pop %v2122
    %v2124 = vmul.f32 %v1633, 1.442695
    %v2125 = vpow.pop %v2124
    %v2126 = vmul.f32 %v1634, 1.442695
    %v2127 = vpow.pop %v2126
    %v2128 = vmul.f32 %v1635, 1.442695
    %v2129 = vpow.pop %v2128
    %v2130 = vmul.f32 %v1636, 1.442695
    %v2131 = vpow.pop %v2130
    %v2132 = vmul.f32 %v1637, 1.442695
    %v2133 = vpow.pop %v2132
    %v2134 = vmul.f32 %v1638, 1.442695
    %v2135 = vpow.pop %v2134
    %v2136 = vmul.f32 %v1639, 1.442695
    %v2137 = vpow.pop %v2136
    %v2138 = vmul.f32 %v1640, 1.442695
    %v2139 = vpow.pop %v2138
    %v2140 = vmul.f32 %v1641, 1.442695
    %v2141 = vpow.pop %v2140
    %v2142 = vmul.f32 %v1642, 1.442695
    %v2143 = vpow.pop %v2142
    %v2144 = vmul.f32 %v1643, 1.442695
    %v2145 = vpow.pop %v2144
    %v2146 = vmul.f32 %v1644, 1.442695
    %v2147 = vpow.pop %v2146
    %v2148 = vmul.f32 %v1645, 1.442695
    %v2149 = vpow.pop %v2148
    %v2150 = vmul.f32 %v1646, 1.442695
    %v2151 = vpow.pop %v2150
    %v2152 = vmul.f32 %v1647, 1.442695
    %v2153 = vpow.pop %v2152
    %v2154 = vmul.f32 %v1648, 1.442695
    %v2155 = vpow.pop %v2154
    %v2156 = vmul.f32 %v1649, 1.442695
    %v2157 = vpow.pop %v2156
    %v2158 = vmul.f32 %v1650, 1.442695
    %v2159 = vpow.pop %v2158
    %v2160 = vmul.f32 %v1651, 1.442695
    %v2161 = vpow.pop %v2160
    %v2162 = vmul.f32 %v1652, 1.442695
    %v2163 = vpow.pop %v2162
    %v2164 = vmul.f32 %v1653, 1.442695
    %v2165 = vpow.pop %v2164
    %v2166 = vmul.f32 %v1654, 1.442695
    %v2167 = vpow.pop %v2166
    %v2168 = vmul.f32 %v1655, 1.442695
    %v2169 = vpow.pop %v2168
    %v2170 = vmul.f32 %v1656, 1.442695
    %v2171 = vpow.pop %v2170
    %v2172 = vmul.f32 %v1657, 1.442695
    %v2173 = vpow.pop %v2172
    %v2174 = vmul.f32 %v1658, 1.442695
    %v2175 = vpow.pop %v2174
    %v2176 = vmul.f32 %v1659, 1.442695
    %v2177 = vpow.pop %v2176
    %v2178 = vmul.f32 %v1660, 1.442695
    %v2179 = vpow.pop %v2178
    %v2180 = vmul.f32 %v1661, 1.442695
    %v2181 = vpow.pop %v2180
    %v2182 = vmul.f32 %v1662, 1.442695
    %v2183 = vpow.pop %v2182
    %v2184 = vmul.f32 %v1663, 1.442695
    %v2185 = vpow.pop %v2184
    %v2186 = vmul.f32 %v1664, 1.442695
    %v2187 = vpow.pop %v2186
    %v2188 = vmul.f32 %v1665, 1.442695
    %v2189 = vpow.pop %v2188
    %v2190 = vmul.f32 %v1666, 1.442695
    %v2191 = vpow.pop %v2190
    %v2192 = vmul.f32 %v1667, 1.442695
    %v2193 = vpow.pop %v2192
    %v2194 = vmul.f32 %v1668, 1.442695
    %v2195 = vpow.pop %v2194
    %v2196 = vmul.f32 %v1669, 1.442695
    %v2197 = vpow.pop %v2196
    %v2198 = vmul.f32 %v1670, 1.442695
    %v2199 = vpow.pop %v2198
    %v2200 = vmul.f32 %v1671, 1.442695
    %v2201 = vpow.pop %v2200
    %v2202 = vmul.f32 %v1672, 1.442695
    %v2203 = vpow.pop %v2202
    %v2204 = vmul.f32 %v1673, 1.442695
    %v2205 = vpow.pop %v2204
    %v2206 = vmul.f32 %v1674, 1.442695
    %v2207 = vpow.pop %v2206
    %v2208 = vmul.f32 %v1675, 1.442695
    %v2209 = vpow.pop %v2208
    %v2210 = vmul.f32 %v1676, 1.442695
    %v2211 = vpow.pop %v2210
    %v2212 = vmul.f32 %v1677, 1.442695
    %v2213 = vpow.pop %v2212
    %v2214 = vmul.f32 %v1678, 1.442695
    %v2215 = vpow.pop %v2214
    %v2216 = vmul.f32 %v1679, 1.442695
    %v2217 = vpow.pop %v2216
    %v2218 = vmul.f32 %v1680, 1.442695
    %v2219 = vpow.pop %v2218
    %v2220 = vmul.f32 %v1681, 1.442695
    %v2221 = vpow.pop %v2220
    %v2222 = vmul.f32 %v1682, 1.442695
    %v2223 = vpow.pop %v2222
    %v2224 = vmul.f32 %v1683, 1.442695
    %v2225 = vpow.pop %v2224
    %v2226 = vmul.f32 %v1684, 1.442695
    %v2227 = vpow.pop %v2226
    %v2228 = vmul.f32 %v1685, 1.442695
    %v2229 = vpow.pop %v2228
    %v2230 = vmul.f32 %v1686, 1.442695
    %v2231 = vpow.pop %v2230
    %v2232 = vmul.f32 %v1687, 1.442695
    %v2233 = vpow.pop %v2232
    %v2234 = vadd.f32 %v1689, 1.0
    %v2235 = vadd.f32 %v1691, 1.0
    %v2236 = vadd.f32 %v1693, 1.0
    %v2237 = vadd.f32 %v1695, 1.0
    %v2238 = vadd.f32 %v1697, 1.0
    %v2239 = vadd.f32 %v1699, 1.0
    %v2240 = vadd.f32 %v1701, 1.0
    %v2241 = vadd.f32 %v1703, 1.0
    %v2242 = vadd.f32 %v1705, 1.0
    %v2243 = vadd.f32 %v1707, 1.0
    %v2244 = vadd.f32 %v1709, 1.0
    %v2245 = vadd.f32 %v1711, 1.0
    %v2246 = vadd.f32 %v1713, 1.0
    %v2247 = vadd.f32 %v1715, 1.0
    %v2248 = vadd.f32 %v1717, 1.0
    %v2249 = vadd.f32 %v1719, 1.0
    %v2250 = vadd.f32 %v1721, 1.0
    %v2251 = vadd.f32 %v1723, 1.0
    %v2252 = vadd.f32 %v1725, 1.0
    %v2253 = vadd.f32 %v1727, 1.0
    %v2254 = vadd.f32 %v1729, 1.0
    %v2255 = vadd.f32 %v1731, 1.0
    %v2256 = vadd.f32 %v1733, 1.0
    %v2257 = vadd.f32 %v1735, 1.0
    %v2258 = vadd.f32 %v1737, 1.0
    %v2259 = vadd.f32 %v1739, 1.0
    %v2260 = vadd.f32 %v1741, 1.0
    %v2261 = vadd.f32 %v1743, 1.0
    %v2262 = vadd.f32 %v1745, 1.0
    %v2263 = vadd.f32 %v1747, 1.0
    %v2264 = vadd.f32 %v1749, 1.0
    %v2265 = vadd.f32 %v1751, 1.0
    %v2266 = vadd.f32 %v1753, 1.0
    %v2267 = vadd.f32 %v1755, 1.0
    %v2268 = vadd.f32 %v1757, 1.0
    %v2269 = vadd.f32 %v1759, 1.0
    %v2270 = vadd.f32 %v1761, 1.0
    %v2271 = vadd.f32 %v1763, 1.0
    %v2272 = vadd.f32 %v1765, 1.0
    %v2273 = vadd.f32 %v1767, 1.0
    %v2274 = vadd.f32 %v1769, 1.0
    %v2275 = vadd.f32 %v1771, 1.0
    %v2276 = vadd.f32 %v1773, 1.0
    %v2277 = vadd.f32 %v1775, 1.0
    %v2278 = vadd.f32 %v1777, 1.0
    %v2279 = vadd.f32 %v1779, 1.0
    %v2280 = vadd.f32 %v1781, 1.0
    %v2281 = vadd.f32 %v1783, 1.0
    %v2282 = vadd.f32 %v1785, 1.0
    %v2283 = vadd.f32 %v1787, 1.0
    %v2284 = vadd.f32 %v1789, 1.0
    %v2285 = vadd.f32 %v1791, 1.0
    %v2286 = vadd.f32 %v1793, 1.0
    %v2287 = vadd.f32 %v1795, 1.0
    %v2288 = vadd.f32 %v1797, 1.0
    %v2289 = vadd.f32 %v1799, 1.0
    %v2290 = vadd.f32 %v1801, 1.0
    %v2291 = vadd.f32 %v1803, 1.0
    %v2292 = vadd.f32 %v1805, 1.0
    %v2293 = vadd.f32 %v1807, 1.0
    %v2294 = vadd.f32 %v1809, 1.0
    %v2295 = vadd.f32 %v1811, 1.0
    %v2296 = vadd.f32 %v1813, 1.0
    %v2297 = vadd.f32 %v1815, 1.0
    %v2298 = vadd.f32 %v1817, 1.0
    %v2299 = vadd.f32 %v1819, 1.0
    %v2300 = vadd.f32 %v1821, 1.0
    %v2301 = vadd.f32 %v1823, 1.0
    %v2302 = vadd.f32 %v1825, 1.0
    %v2303 = vadd.f32 %v1827, 1.0
    %v2304 = vadd.f32 %v1829, 1.0
    %v2305 = vadd.f32 %v1831, 1.0
    %v2306 = vadd.f32 %v1833, 1.0
    %v2307 = vadd.f32 %v1835, 1.0
    %v2308 = vadd.f32 %v1837, 1.0
    %v2309 = vadd.f32 %v1839, 1.0
    %v2310 = vadd.f32 %v1841, 1.0
    %v2311 = vadd.f32 %v1843, 1.0
    %v2312 = vadd.f32 %v1845, 1.0
    %v2313 = vadd.f32 %v1847, 1.0
    %v2314 = vadd.f32 %v1849, 1.0
    %v2315 = vadd.f32 %v1851, 1.0
    %v2316 = vadd.f32 %v1853, 1.0
    %v2317 = vadd.f32 %v1855, 1.0
    %v2318 = vadd.f32 %v1857, 1.0
    %v2319 = vadd.f32 %v1859, 1.0
    %v2320 = vadd.f32 %v1861, 1.0
    %v2321 = vadd.f32 %v1863, 1.0
    %v2322 = vadd.f32 %v1865, 1.0
    %v2323 = vadd.f32 %v1867, 1.0
    %v2324 = vadd.f32 %v1869, 1.0
    %v2325 = vadd.f32 %v1871, 1.0
    %v2326 = vadd.f32 %v1873, 1.0
    %v2327 = vadd.f32 %v1875, 1.0
    %v2328 = vadd.f32 %v1877, 1.0
    %v2329 = vadd.f32 %v1879, 1.0
    %v2330 = vadd.f32 %v1881, 1.0
    %v2331 = vadd.f32 %v1883, 1.0
    %v2332 = vadd.f32 %v1885, 1.0
    %v2333 = vadd.f32 %v1887, 1.0
    %v2334 = vadd.f32 %v1889, 1.0
    %v2335 = vadd.f32 %v1891, 1.0
    %v2336 = vadd.f32 %v1893, 1.0
    %v2337 = vadd.f32 %v1895, 1.0
    %v2338 = vadd.f32 %v1897, 1.0
    %v2339 = vadd.f32 %v1899, 1.0
    %v2340 = vadd.f32 %v1901, 1.0
    %v2341 = vadd.f32 %v1903, 1.0
    %v2342 = vadd.f32 %v1905, 1.0
    %v2343 = vadd.f32 %v1907, 1.0
    %v2344 = vadd.f32 %v1909, 1.0
    %v2345 = vadd.f32 %v1911, 1.0
    %v2346 = vadd.f32 %v1913, 1.0
    %v2347 = vadd.f32 %v1915, 1.0
    %v2348 = vadd.f32 %v1917, 1.0
    %v2349 = vadd.f32 %v1919, 1.0
    %v2350 = vadd.f32 %v1921, 1.0
    %v2351 = vadd.f32 %v1923, 1.0
    %v2352 = vadd.f32 %v1925, 1.0
    %v2353 = vadd.f32 %v1927, 1.0
    %v2354 = vadd.f32 %v1929, 1.0
    %v2355 = vadd.f32 %v1931, 1.0
    %v2356 = vadd.f32 %v1933, 1.0
    %v2357 = vadd.f32 %v1935, 1.0
    %v2358 = vadd.f32 %v1937, 1.0
    %v2359 = vadd.f32 %v1939, 1.0
    %v2360 = vadd.f32 %v1941, 1.0
    %v2361 = vadd.f32 %v1943, 1.0
    %v2362 = vadd.f32 %v1945, 1.0
    %v2363 = vadd.f32 %v1947, 1.0
    %v2364 = vadd.f32 %v1949, 1.0
    %v2365 = vadd.f32 %v1951, 1.0
    %v2366 = vadd.f32 %v1953, 1.0
    %v2367 = vadd.f32 %v1955, 1.0
    %v2368 = vadd.f32 %v1957, 1.0
    %v2369 = vadd.f32 %v1959, 1.0
    %v2370 = vadd.f32 %v1961, 1.0
    %v2371 = vadd.f32 %v1963, 1.0
    %v2372 = vadd.f32 %v1965, 1.0
    %v2373 = vadd.f32 %v1967, 1.0
    %v2374 = vadd.f32 %v1969, 1.0
    %v2375 = vadd.f32 %v1971, 1.0
    %v2376 = vadd.f32 %v1973, 1.0
    %v2377 = vadd.f32 %v1975, 1.0
    %v2378 = vadd.f32 %v1977, 1.0
    %v2379 = vadd.f32 %v1979, 1.0
    %v2380 = vadd.f32 %v1981, 1.0
    %v2381 = vadd.f32 %v1983, 1.0
    %v2382 = vadd.f32 %v1985, 1.0
    %v2383 = vadd.f32 %v1987, 1.0
    %v2384 = vadd.f32 %v1989, 1.0
    %v2385 = vadd.f32 %v1991, 1.0
    %v2386 = vadd.f32 %v1993, 1.0
    %v2387 = vadd.f32 %v1995, 1.0
    %v2388 = vadd.f32 %v1997, 1.0
    %v2389 = vadd.f32 %v1999, 1.0
    %v2390 = vadd.f32 %v2001, 1.0
    %v2391 = vadd.f32 %v2003, 1.0
    %v2392 = vadd.f32 %v2005, 1.0
    %v2393 = vadd.f32 %v2007, 1.0
    %v2394 = vadd.f32 %v2009, 1.0
    %v2395 = vadd.f32 %v2011, 1.0
    %v2396 = vadd.f32 %v2013, 1.0
    %v2397 = vadd.f32 %v2015, 1.0
    %v2398 = vadd.f32 %v2017, 1.0
    %v2399 = vadd.f32 %v2019, 1.0
    %v2400 = vadd.f32 %v2021, 1.0
    %v2401 = vadd.f32 %v2023, 1.0
    %v2402 = vadd.f32 %v2025, 1.0
    %v2403 = vadd.f32 %v2027, 1.0
    %v2404 = vadd.f32 %v2029, 1.0
    %v2405 = vadd.f32 %v2031, 1.0
    %v2406 = vadd.f32 %v2033, 1.0
    %v2407 = vadd.f32 %v2035, 1.0
    %v2408 = vadd.f32 %v2037, 1.0
    %v2409 = vadd.f32 %v2039, 1.0
    %v2410 = vadd.f32 %v2041, 1.0
    %v2411 = vadd.f32 %v2043, 1.0
    %v2412 = vadd.f32 %v2045, 1.0
    %v2413 = vadd.f32 %v2047, 1.0
    %v2414 = vadd.f32 %v2049, 1.0
    %v2415 = vadd.f32 %v2051, 1.0
    %v2416 = vadd.f32 %v2053, 1.0
    %v2417 = vadd.f32 %v2055, 1.0
    %v2418 = vadd.f32 %v2057, 1.0
    %v2419 = vadd.f32 %v2059, 1.0
    %v2420 = vadd.f32 %v2061, 1.0
    %v2421 = vadd.f32 %v2063, 1.0
    %v2422 = vadd.f32 %v2065, 1.0
    %v2423 = vadd.f32 %v2067, 1.0
    %v2424 = vadd.f32 %v2069, 1.0
    %v2425 = vadd.f32 %v2071, 1.0
    %v2426 = vadd.f32 %v2073, 1.0
    %v2427 = vadd.f32 %v2075, 1.0
    %v2428 = vadd.f32 %v2077, 1.0
    %v2429 = vadd.f32 %v2079, 1.0
    %v2430 = vadd.f32 %v2081, 1.0
    %v2431 = vadd.f32 %v2083, 1.0
    %v2432 = vadd.f32 %v2085, 1.0
    %v2433 = vadd.f32 %v2087, 1.0
    %v2434 = vadd.f32 %v2089, 1.0
    %v2435 = vadd.f32 %v2091, 1.0
    %v2436 = vadd.f32 %v2093, 1.0
    %v2437 = vadd.f32 %v2095, 1.0
    %v2438 = vadd.f32 %v2097, 1.0
    %v2439 = vadd.f32 %v2099, 1.0
    %v2440 = vadd.f32 %v2101, 1.0
    %v2441 = vadd.f32 %v2103, 1.0
    %v2442 = vadd.f32 %v2105, 1.0
    %v2443 = vadd.f32 %v2107, 1.0
    %v2444 = vadd.f32 %v2109, 1.0
    %v2445 = vadd.f32 %v2111, 1.0
    %v2446 = vadd.f32 %v2113, 1.0
    %v2447 = vadd.f32 %v2115, 1.0
    %v2448 = vadd.f32 %v2117, 1.0
    %v2449 = vadd.f32 %v2119, 1.0
    %v2450 = vadd.f32 %v2121, 1.0
    %v2451 = vadd.f32 %v2123, 1.0
    %v2452 = vadd.f32 %v2125, 1.0
    %v2453 = vadd.f32 %v2127, 1.0
    %v2454 = vadd.f32 %v2129, 1.0
    %v2455 = vadd.f32 %v2131, 1.0
    %v2456 = vadd.f32 %v2133, 1.0
    %v2457 = vadd.f32 %v2135, 1.0
    %v2458 = vadd.f32 %v2137, 1.0
    %v2459 = vadd.f32 %v2139, 1.0
    %v2460 = vadd.f32 %v2141, 1.0
    %v2461 = vadd.f32 %v2143, 1.0
    %v2462 = vadd.f32 %v2145, 1.0
    %v2463 = vadd.f32 %v2147, 1.0
    %v2464 = vadd.f32 %v2149, 1.0
    %v2465 = vadd.f32 %v2151, 1.0
    %v2466 = vadd.f32 %v2153, 1.0
    %v2467 = vadd.f32 %v2155, 1.0
    %v2468 = vadd.f32 %v2157, 1.0
    %v2469 = vadd.f32 %v2159, 1.0
    %v2470 = vadd.f32 %v2161, 1.0
    %v2471 = vadd.f32 %v2163, 1.0
    %v2472 = vadd.f32 %v2165, 1.0
    %v2473 = vadd.f32 %v2167, 1.0
    %v2474 = vadd.f32 %v2169, 1.0
    %v2475 = vadd.f32 %v2171, 1.0
    %v2476 = vadd.f32 %v2173, 1.0
    %v2477 = vadd.f32 %v2175, 1.0
    %v2478 = vadd.f32 %v2177, 1.0
    %v2479 = vadd.f32 %v2179, 1.0
    %v2480 = vadd.f32 %v2181, 1.0
    %v2481 = vadd.f32 %v2183, 1.0
    %v2482 = vadd.f32 %v2185, 1.0
    %v2483 = vadd.f32 %v2187, 1.0
    %v2484 = vadd.f32 %v2189, 1.0
    %v2485 = vadd.f32 %v2191, 1.0
    %v2486 = vadd.f32 %v2193, 1.0
    %v2487 = vadd.f32 %v2195, 1.0
    %v2488 = vadd.f32 %v2197, 1.0
    %v2489 = vadd.f32 %v2199, 1.0
    %v2490 = vadd.f32 %v2201, 1.0
    %v2491 = vadd.f32 %v2203, 1.0
    %v2492 = vadd.f32 %v2205, 1.0
    %v2493 = vadd.f32 %v2207, 1.0
    %v2494 = vadd.f32 %v2209, 1.0
    %v2495 = vadd.f32 %v2211, 1.0
    %v2496 = vadd.f32 %v2213, 1.0
    %v2497 = vadd.f32 %v2215, 1.0
    %v2498 = vadd.f32 %v2217, 1.0
    %v2499 = vadd.f32 %v2219, 1.0
    %v2500 = vadd.f32 %v2221, 1.0
    %v2501 = vadd.f32 %v2223, 1.0
    %v2502 = vadd.f32 %v2225, 1.0
    %v2503 = vadd.f32 %v2227, 1.0
    %v2504 = vadd.f32 %v2229, 1.0
    %v2505 = vadd.f32 %v2231, 1.0
    %v2506 = vadd.f32 %v2233, 1.0
    %v2507 = vrcp.pop %v2234
    %v2508 = vmul.f32 1.0, %v2507
    %v2509 = vrcp.pop %v2235
    %v2510 = vmul.f32 1.0, %v2509
    %v2511 = vrcp.pop %v2236
    %v2512 = vmul.f32 1.0, %v2511
    %v2513 = vrcp.pop %v2237
    %v2514 = vmul.f32 1.0, %v2513
    %v2515 = vrcp.pop %v2238
    %v2516 = vmul.f32 1.0, %v2515
    %v2517 = vrcp.pop %v2239
    %v2518 = vmul.f32 1.0, %v2517
    %v2519 = vrcp.pop %v2240
    %v2520 = vmul.f32 1.0, %v2519
    %v2521 = vrcp.pop %v2241
    %v2522 = vmul.f32 1.0, %v2521
    %v2523 = vrcp.pop %v2242
    %v2524 = vmul.f32 1.0, %v2523
    %v2525 = vrcp.pop %v2243
    %v2526 = vmul.f32 1.0, %v2525
    %v2527 = vrcp.pop %v2244
    %v2528 = vmul.f32 1.0, %v2527
    %v2529 = vrcp.pop %v2245
    %v2530 = vmul.f32 1.0, %v2529
    %v2531 = vrcp.pop %v2246
    %v2532 = vmul.f32 1.0, %v2531
    %v2533 = vrcp.pop %v2247
    %v2534 = vmul.f32 1.0, %v2533
    %v2535 = vrcp.pop %v2248
    %v2536 = vmul.f32 1.0, %v2535
    %v2537 = vrcp.pop %v2249
    %v2538 = vmul.f32 1.0, %v2537
    %v2539 = vrcp.pop %v2250
    %v2540 = vmul.f32 1.0, %v2539
    %v2541 = vrcp.pop %v2251
    %v2542 = vmul.f32 1.0, %v2541
    %v2543 = vrcp.pop %v2252
    %v2544 = vmul.f32 1.0, %v2543
    %v2545 = vrcp.pop %v2253
    %v2546 = vmul.f32 1.0, %v2545
    %v2547 = vrcp.pop %v2254
    %v2548 = vmul.f32 1.0, %v2547
    %v2549 = vrcp.pop %v2255
    %v2550 = vmul.f32 1.0, %v2549
    %v2551 = vrcp.pop %v2256
    %v2552 = vmul.f32 1.0, %v2551
    %v2553 = vrcp.pop %v2257
    %v2554 = vmul.f32 1.0, %v2553
    %v2555 = vrcp.pop %v2258
    %v2556 = vmul.f32 1.0, %v2555
    %v2557 = vrcp.pop %v2259
    %v2558 = vmul.f32 1.0, %v2557
    %v2559 = vrcp.pop %v2260
    %v2560 = vmul.f32 1.0, %v2559
    %v2561 = vrcp.pop %v2261
    %v2562 = vmul.f32 1.0, %v2561
    %v2563 = vrcp.pop %v2262
    %v2564 = vmul.f32 1.0, %v2563
    %v2565 = vrcp.pop %v2263
    %v2566 = vmul.f32 1.0, %v2565
    %v2567 = vrcp.pop %v2264
    %v2568 = vmul.f32 1.0, %v2567
    %v2569 = vrcp.pop %v2265
    %v2570 = vmul.f32 1.0, %v2569
    %v2571 = vrcp.pop %v2266
    %v2572 = vmul.f32 1.0, %v2571
    %v2573 = vrcp.pop %v2267
    %v2574 = vmul.f32 1.0, %v2573
    %v2575 = vrcp.pop %v2268
    %v2576 = vmul.f32 1.0, %v2575
    %v2577 = vrcp.pop %v2269
    %v2578 = vmul.f32 1.0, %v2577
    %v2579 = vrcp.pop %v2270
    %v2580 = vmul.f32 1.0, %v2579
    %v2581 = vrcp.pop %v2271
    %v2582 = vmul.f32 1.0, %v2581
    %v2583 = vrcp.pop %v2272
    %v2584 = vmul.f32 1.0, %v2583
    %v2585 = vrcp.pop %v2273
    %v2586 = vmul.f32 1.0, %v2585
    %v2587 = vrcp.pop %v2274
    %v2588 = vmul.f32 1.0, %v2587
    %v2589 = vrcp.pop %v2275
    %v2590 = vmul.f32 1.0, %v2589
    %v2591 = vrcp.pop %v2276
    %v2592 = vmul.f32 1.0, %v2591
    %v2593 = vrcp.pop %v2277
    %v2594 = vmul.f32 1.0, %v2593
    %v2595 = vrcp.pop %v2278
    %v2596 = vmul.f32 1.0, %v2595
    %v2597 = vrcp.pop %v2279
    %v2598 = vmul.f32 1.0, %v2597
    %v2599 = vrcp.pop %v2280
    %v2600 = vmul.f32 1.0, %v2599
    %v2601 = vrcp.pop %v2281
    %v2602 = vmul.f32 1.0, %v2601
    %v2603 = vrcp.pop %v2282
    %v2604 = vmul.f32 1.0, %v2603
    %v2605 = vrcp.pop %v2283
    %v2606 = vmul.f32 1.0, %v2605
    %v2607 = vrcp.pop %v2284
    %v2608 = vmul.f32 1.0, %v2607
    %v2609 = vrcp.pop %v2285
    %v2610 = vmul.f32 1.0, %v2609
    %v2611 = vrcp.pop %v2286
    %v2612 = vmul.f32 1.0, %v2611
    %v2613 = vrcp.pop %v2287
    %v2614 = vmul.f32 1.0, %v2613
    %v2615 = vrcp.pop %v2288
    %v2616 = vmul.f32 1.0, %v2615
    %v2617 = vrcp.pop %v2289
    %v2618 = vmul.f32 1.0, %v2617
    %v2619 = vrcp.pop %v2290
    %v2620 = vmul.f32 1.0, %v2619
    %v2621 = vrcp.pop %v2291
    %v2622 = vmul.f32 1.0, %v2621
    %v2623 = vrcp.pop %v2292
    %v2624 = vmul.f32 1.0, %v2623
    %v2625 = vrcp.pop %v2293
    %v2626 = vmul.f32 1.0, %v2625
    %v2627 = vrcp.pop %v2294
    %v2628 = vmul.f32 1.0, %v2627
    %v2629 = vrcp.pop %v2295
    %v2630 = vmul.f32 1.0, %v2629
    %v2631 = vrcp.pop %v2296
    %v2632 = vmul.f32 1.0, %v2631
    %v2633 = vrcp.pop %v2297
    %v2634 = vmul.f32 1.0, %v2633
    %v2635 = vrcp.pop %v2298
    %v2636 = vmul.f32 1.0, %v2635
    %v2637 = vrcp.pop %v2299
    %v2638 = vmul.f32 1.0, %v2637
    %v2639 = vrcp.pop %v2300
    %v2640 = vmul.f32 1.0, %v2639
    %v2641 = vrcp.pop %v2301
    %v2642 = vmul.f32 1.0, %v2641
    %v2643 = vrcp.pop %v2302
    %v2644 = vmul.f32 1.0, %v2643
    %v2645 = vrcp.pop %v2303
    %v2646 = vmul.f32 1.0, %v2645
    %v2647 = vrcp.pop %v2304
    %v2648 = vmul.f32 1.0, %v2647
    %v2649 = vrcp.pop %v2305
    %v2650 = vmul.f32 1.0, %v2649
    %v2651 = vrcp.pop %v2306
    %v2652 = vmul.f32 1.0, %v2651
    %v2653 = vrcp.pop %v2307
    %v2654 = vmul.f32 1.0, %v2653
    %v2655 = vrcp.pop %v2308
    %v2656 = vmul.f32 1.0, %v2655
    %v2657 = vrcp.pop %v2309
    %v2658 = vmul.f32 1.0, %v2657
    %v2659 = vrcp.pop %v2310
    %v2660 = vmul.f32 1.0, %v2659
    %v2661 = vrcp.pop %v2311
    %v2662 = vmul.f32 1.0, %v2661
    %v2663 = vrcp.pop %v2312
    %v2664 = vmul.f32 1.0, %v2663
    %v2665 = vrcp.pop %v2313
    %v2666 = vmul.f32 1.0, %v2665
    %v2667 = vrcp.pop %v2314
    %v2668 = vmul.f32 1.0, %v2667
    %v2669 = vrcp.pop %v2315
    %v2670 = vmul.f32 1.0, %v2669
    %v2671 = vrcp.pop %v2316
    %v2672 = vmul.f32 1.0, %v2671
    %v2673 = vrcp.pop %v2317
    %v2674 = vmul.f32 1.0, %v2673
    %v2675 = vrcp.pop %v2318
    %v2676 = vmul.f32 1.0, %v2675
    %v2677 = vrcp.pop %v2319
    %v2678 = vmul.f32 1.0, %v2677
    %v2679 = vrcp.pop %v2320
    %v2680 = vmul.f32 1.0, %v2679
    %v2681 = vrcp.pop %v2321
    %v2682 = vmul.f32 1.0, %v2681
    %v2683 = vrcp.pop %v2322
    %v2684 = vmul.f32 1.0, %v2683
    %v2685 = vrcp.pop %v2323
    %v2686 = vmul.f32 1.0, %v2685
    %v2687 = vrcp.pop %v2324
    %v2688 = vmul.f32 1.0, %v2687
    %v2689 = vrcp.pop %v2325
    %v2690 = vmul.f32 1.0, %v2689
    %v2691 = vrcp.pop %v2326
    %v2692 = vmul.f32 1.0, %v2691
    %v2693 = vrcp.pop %v2327
    %v2694 = vmul.f32 1.0, %v2693
    %v2695 = vrcp.pop %v2328
    %v2696 = vmul.f32 1.0, %v2695
    %v2697 = vrcp.pop %v2329
    %v2698 = vmul.f32 1.0, %v2697
    %v2699 = vrcp.pop %v2330
    %v2700 = vmul.f32 1.0, %v2699
    %v2701 = vrcp.pop %v2331
    %v2702 = vmul.f32 1.0, %v2701
    %v2703 = vrcp.pop %v2332
    %v2704 = vmul.f32 1.0, %v2703
    %v2705 = vrcp.pop %v2333
    %v2706 = vmul.f32 1.0, %v2705
    %v2707 = vrcp.pop %v2334
    %v2708 = vmul.f32 1.0, %v2707
    %v2709 = vrcp.pop %v2335
    %v2710 = vmul.f32 1.0, %v2709
    %v2711 = vrcp.pop %v2336
    %v2712 = vmul.f32 1.0, %v2711
    %v2713 = vrcp.pop %v2337
    %v2714 = vmul.f32 1.0, %v2713
    %v2715 = vrcp.pop %v2338
    %v2716 = vmul.f32 1.0, %v2715
    %v2717 = vrcp.pop %v2339
    %v2718 = vmul.f32 1.0, %v2717
    %v2719 = vrcp.pop %v2340
    %v2720 = vmul.f32 1.0, %v2719
    %v2721 = vrcp.pop %v2341
    %v2722 = vmul.f32 1.0, %v2721
    %v2723 = vrcp.pop %v2342
    %v2724 = vmul.f32 1.0, %v2723
    %v2725 = vrcp.pop %v2343
    %v2726 = vmul.f32 1.0, %v2725
    %v2727 = vrcp.pop %v2344
    %v2728 = vmul.f32 1.0, %v2727
    %v2729 = vrcp.pop %v2345
    %v2730 = vmul.f32 1.0, %v2729
    %v2731 = vrcp.pop %v2346
    %v2732 = vmul.f32 1.0, %v2731
    %v2733 = vrcp.pop %v2347
    %v2734 = vmul.f32 1.0, %v2733
    %v2735 = vrcp.pop %v2348
    %v2736 = vmul.f32 1.0, %v2735
    %v2737 = vrcp.pop %v2349
    %v2738 = vmul.f32 1.0, %v2737
    %v2739 = vrcp.pop %v2350
    %v2740 = vmul.f32 1.0, %v2739
    %v2741 = vrcp.pop %v2351
    %v2742 = vmul.f32 1.0, %v2741
    %v2743 = vrcp.pop %v2352
    %v2744 = vmul.f32 1.0, %v2743
    %v2745 = vrcp.pop %v2353
    %v2746 = vmul.f32 1.0, %v2745
    %v2747 = vrcp.pop %v2354
    %v2748 = vmul.f32 1.0, %v2747
    %v2749 = vrcp.pop %v2355
    %v2750 = vmul.f32 1.0, %v2749
    %v2751 = vrcp.pop %v2356
    %v2752 = vmul.f32 1.0, %v2751
    %v2753 = vrcp.pop %v2357
    %v2754 = vmul.f32 1.0, %v2753
    %v2755 = vrcp.pop %v2358
    %v2756 = vmul.f32 1.0, %v2755
    %v2757 = vrcp.pop %v2359
    %v2758 = vmul.f32 1.0, %v2757
    %v2759 = vrcp.pop %v2360
    %v2760 = vmul.f32 1.0, %v2759
    %v2761 = vrcp.pop %v2361
    %v2762 = vmul.f32 1.0, %v2761
    %v2763 = vrcp.pop %v2362
    %v2764 = vmul.f32 1.0, %v2763
    %v2765 = vrcp.pop %v2363
    %v2766 = vmul.f32 1.0, %v2765
    %v2767 = vrcp.pop %v2364
    %v2768 = vmul.f32 1.0, %v2767
    %v2769 = vrcp.pop %v2365
    %v2770 = vmul.f32 1.0, %v2769
    %v2771 = vrcp.pop %v2366
    %v2772 = vmul.f32 1.0, %v2771
    %v2773 = vrcp.pop %v2367
    %v2774 = vmul.f32 1.0, %v2773
    %v2775 = vrcp.pop %v2368
    %v2776 = vmul.f32 1.0, %v2775
    %v2777 = vrcp.pop %v2369
    %v2778 = vmul.f32 1.0, %v2777
    %v2779 = vrcp.pop %v2370
    %v2780 = vmul.f32 1.0, %v2779
    %v2781 = vrcp.pop %v2371
    %v2782 = vmul.f32 1.0, %v2781
    %v2783 = vrcp.pop %v2372
    %v2784 = vmul.f32 1.0, %v2783
    %v2785 = vrcp.pop %v2373
    %v2786 = vmul.f32 1.0, %v2785
    %v2787 = vrcp.pop %v2374
    %v2788 = vmul.f32 1.0, %v2787
    %v2789 = vrcp.pop %v2375
    %v2790 = vmul.f32 1.0, %v2789
    %v2791 = vrcp.pop %v2376
    %v2792 = vmul.f32 1.0, %v2791
    %v2793 = vrcp.pop %v2377
    %v2794 = vmul.f32 1.0, %v2793
    %v2795 = vrcp.pop %v2378
    %v2796 = vmul.f32 1.0, %v2795
    %v2797 = vrcp.pop %v2379
    %v2798 = vmul.f32 1.0, %v2797
    %v2799 = vrcp.pop %v2380
    %v2800 = vmul.f32 1.0, %v2799
    %v2801 = vrcp.pop %v2381
    %v2802 = vmul.f32 1.0, %v2801
    %v2803 = vrcp.pop %v2382
    %v2804 = vmul.f32 1.0, %v2803
    %v2805 = vrcp.pop %v2383
    %v2806 = vmul.f32 1.0, %v2805
    %v2807 = vrcp.pop %v2384
    %v2808 = vmul.f32 1.0, %v2807
    %v2809 = vrcp.pop %v2385
    %v2810 = vmul.f32 1.0, %v2809
    %v2811 = vrcp.pop %v2386
    %v2812 = vmul.f32 1.0, %v2811
    %v2813 = vrcp.pop %v2387
    %v2814 = vmul.f32 1.0, %v2813
    %v2815 = vrcp.pop %v2388
    %v2816 = vmul.f32 1.0, %v2815
    %v2817 = vrcp.pop %v2389
    %v2818 = vmul.f32 1.0, %v2817
    %v2819 = vrcp.pop %v2390
    %v2820 = vmul.f32 1.0, %v2819
    %v2821 = vrcp.pop %v2391
    %v2822 = vmul.f32 1.0, %v2821
    %v2823 = vrcp.pop %v2392
    %v2824 = vmul.f32 1.0, %v2823
    %v2825 = vrcp.pop %v2393
    %v2826 = vmul.f32 1.0, %v2825
    %v2827 = vrcp.pop %v2394
    %v2828 = vmul.f32 1.0, %v2827
    %v2829 = vrcp.pop %v2395
    %v2830 = vmul.f32 1.0, %v2829
    %v2831 = vrcp.pop %v2396
    %v2832 = vmul.f32 1.0, %v2831
    %v2833 = vrcp.pop %v2397
    %v2834 = vmul.f32 1.0, %v2833
    %v2835 = vrcp.pop %v2398
    %v2836 = vmul.f32 1.0, %v2835
    %v2837 = vrcp.pop %v2399
    %v2838 = vmul.f32 1.0, %v2837
    %v2839 = vrcp.pop %v2400
    %v2840 = vmul.f32 1.0, %v2839
    %v2841 = vrcp.pop %v2401
    %v2842 = vmul.f32 1.0, %v2841
    %v2843 = vrcp.pop %v2402
    %v2844 = vmul.f32 1.0, %v2843
    %v2845 = vrcp.pop %v2403
    %v2846 = vmul.f32 1.0, %v2845
    %v2847 = vrcp.pop %v2404
    %v2848 = vmul.f32 1.0, %v2847
    %v2849 = vrcp.pop %v2405
    %v2850 = vmul.f32 1.0, %v2849
    %v2851 = vrcp.pop %v2406
    %v2852 = vmul.f32 1.0, %v2851
    %v2853 = vrcp.pop %v2407
    %v2854 = vmul.f32 1.0, %v2853
    %v2855 = vrcp.pop %v2408
    %v2856 = vmul.f32 1.0, %v2855
    %v2857 = vrcp.pop %v2409
    %v2858 = vmul.f32 1.0, %v2857
    %v2859 = vrcp.pop %v2410
    %v2860 = vmul.f32 1.0, %v2859
    %v2861 = vrcp.pop %v2411
    %v2862 = vmul.f32 1.0, %v2861
    %v2863 = vrcp.pop %v2412
    %v2864 = vmul.f32 1.0, %v2863
    %v2865 = vrcp.pop %v2413
    %v2866 = vmul.f32 1.0, %v2865
    %v2867 = vrcp.pop %v2414
    %v2868 = vmul.f32 1.0, %v2867
    %v2869 = vrcp.pop %v2415
    %v2870 = vmul.f32 1.0, %v2869
    %v2871 = vrcp.pop %v2416
    %v2872 = vmul.f32 1.0, %v2871
    %v2873 = vrcp.pop %v2417
    %v2874 = vmul.f32 1.0, %v2873
    %v2875 = vrcp.pop %v2418
    %v2876 = vmul.f32 1.0, %v2875
    %v2877 = vrcp.pop %v2419
    %v2878 = vmul.f32 1.0, %v2877
    %v2879 = vrcp.pop %v2420
    %v2880 = vmul.f32 1.0, %v2879
    %v2881 = vrcp.pop %v2421
    %v2882 = vmul.f32 1.0, %v2881
    %v2883 = vrcp.pop %v2422
    %v2884 = vmul.f32 1.0, %v2883
    %v2885 = vrcp.pop %v2423
    %v2886 = vmul.f32 1.0, %v2885
    %v2887 = vrcp.pop %v2424
    %v2888 = vmul.f32 1.0, %v2887
    %v2889 = vrcp.pop %v2425
    %v2890 = vmul.f32 1.0, %v2889
    %v2891 = vrcp.pop %v2426
    %v2892 = vmul.f32 1.0, %v2891
    %v2893 = vrcp.pop %v2427
    %v2894 = vmul.f32 1.0, %v2893
    %v2895 = vrcp.pop %v2428
    %v2896 = vmul.f32 1.0, %v2895
    %v2897 = vrcp.pop %v2429
    %v2898 = vmul.f32 1.0, %v2897
    %v2899 = vrcp.pop %v2430
    %v2900 = vmul.f32 1.0, %v2899
    %v2901 = vrcp.pop %v2431
    %v2902 = vmul.f32 1.0, %v2901
    %v2903 = vrcp.pop %v2432
    %v2904 = vmul.f32 1.0, %v2903
    %v2905 = vrcp.pop %v2433
    %v2906 = vmul.f32 1.0, %v2905
    %v2907 = vrcp.pop %v2434
    %v2908 = vmul.f32 1.0, %v2907
    %v2909 = vrcp.pop %v2435
    %v2910 = vmul.f32 1.0, %v2909
    %v2911 = vrcp.pop %v2436
    %v2912 = vmul.f32 1.0, %v2911
    %v2913 = vrcp.pop %v2437
    %v2914 = vmul.f32 1.0, %v2913
    %v2915 = vrcp.pop %v2438
    %v2916 = vmul.f32 1.0, %v2915
    %v2917 = vrcp.pop %v2439
    %v2918 = vmul.f32 1.0, %v2917
    %v2919 = vrcp.pop %v2440
    %v2920 = vmul.f32 1.0, %v2919
    %v2921 = vrcp.pop %v2441
    %v2922 = vmul.f32 1.0, %v2921
    %v2923 = vrcp.pop %v2442
    %v2924 = vmul.f32 1.0, %v2923
    %v2925 = vrcp.pop %v2443
    %v2926 = vmul.f32 1.0, %v2925
    %v2927 = vrcp.pop %v2444
    %v2928 = vmul.f32 1.0, %v2927
    %v2929 = vrcp.pop %v2445
    %v2930 = vmul.f32 1.0, %v2929
    %v2931 = vrcp.pop %v2446
    %v2932 = vmul.f32 1.0, %v2931
    %v2933 = vrcp.pop %v2447
    %v2934 = vmul.f32 1.0, %v2933
    %v2935 = vrcp.pop %v2448
    %v2936 = vmul.f32 1.0, %v2935
    %v2937 = vrcp.pop %v2449
    %v2938 = vmul.f32 1.0, %v2937
    %v2939 = vrcp.pop %v2450
    %v2940 = vmul.f32 1.0, %v2939
    %v2941 = vrcp.pop %v2451
    %v2942 = vmul.f32 1.0, %v2941
    %v2943 = vrcp.pop %v2452
    %v2944 = vmul.f32 1.0, %v2943
    %v2945 = vrcp.pop %v2453
    %v2946 = vmul.f32 1.0, %v2945
    %v2947 = vrcp.pop %v2454
    %v2948 = vmul.f32 1.0, %v2947
    %v2949 = vrcp.pop %v2455
    %v2950 = vmul.f32 1.0, %v2949
    %v2951 = vrcp.pop %v2456
    %v2952 = vmul.f32 1.0, %v2951
    %v2953 = vrcp.pop %v2457
    %v2954 = vmul.f32 1.0, %v2953
    %v2955 = vrcp.pop %v2458
    %v2956 = vmul.f32 1.0, %v2955
    %v2957 = vrcp.pop %v2459
    %v2958 = vmul.f32 1.0, %v2957
    %v2959 = vrcp.pop %v2460
    %v2960 = vmul.f32 1.0, %v2959
    %v2961 = vrcp.pop %v2461
    %v2962 = vmul.f32 1.0, %v2961
    %v2963 = vrcp.pop %v2462
    %v2964 = vmul.f32 1.0, %v2963
    %v2965 = vrcp.pop %v2463
    %v2966 = vmul.f32 1.0, %v2965
    %v2967 = vrcp.pop %v2464
    %v2968 = vmul.f32 1.0, %v2967
    %v2969 = vrcp.pop %v2465
    %v2970 = vmul.f32 1.0, %v2969
    %v2971 = vrcp.pop %v2466
    %v2972 = vmul.f32 1.0, %v2971
    %v2973 = vrcp.pop %v2467
    %v2974 = vmul.f32 1.0, %v2973
    %v2975 = vrcp.pop %v2468
    %v2976 = vmul.f32 1.0, %v2975
    %v2977 = vrcp.pop %v2469
    %v2978 = vmul.f32 1.0, %v2977
    %v2979 = vrcp.pop %v2470
    %v2980 = vmul.f32 1.0, %v2979
    %v2981 = vrcp.pop %v2471
    %v2982 = vmul.f32 1.0, %v2981
    %v2983 = vrcp.pop %v2472
    %v2984 = vmul.f32 1.0, %v2983
    %v2985 = vrcp.pop %v2473
    %v2986 = vmul.f32 1.0, %v2985
    %v2987 = vrcp.pop %v2474
    %v2988 = vmul.f32 1.0, %v2987
    %v2989 = vrcp.pop %v2475
    %v2990 = vmul.f32 1.0, %v2989
    %v2991 = vrcp.pop %v2476
    %v2992 = vmul.f32 1.0, %v2991
    %v2993 = vrcp.pop %v2477
    %v2994 = vmul.f32 1.0, %v2993
    %v2995 = vrcp.pop %v2478
    %v2996 = vmul.f32 1.0, %v2995
    %v2997 = vrcp.pop %v2479
    %v2998 = vmul.f32 1.0, %v2997
    %v2999 = vrcp.pop %v2480
    %v3000 = vmul.f32 1.0, %v2999
    %v3001 = vrcp.pop %v2481
    %v3002 = vmul.f32 1.0, %v3001
    %v3003 = vrcp.pop %v2482
    %v3004 = vmul.f32 1.0, %v3003
    %v3005 = vrcp.pop %v2483
    %v3006 = vmul.f32 1.0, %v3005
    %v3007 = vrcp.pop %v2484
    %v3008 = vmul.f32 1.0, %v3007
    %v3009 = vrcp.pop %v2485
    %v3010 = vmul.f32 1.0, %v3009
    %v3011 = vrcp.pop %v2486
    %v3012 = vmul.f32 1.0, %v3011
    %v3013 = vrcp.pop %v2487
    %v3014 = vmul.f32 1.0, %v3013
    %v3015 = vrcp.pop %v2488
    %v3016 = vmul.f32 1.0, %v3015
    %v3017 = vrcp.pop %v2489
    %v3018 = vmul.f32 1.0, %v3017
    %v3019 = vrcp.pop %v2490
    %v3020 = vmul.f32 1.0, %v3019
    %v3021 = vrcp.pop %v2491
    %v3022 = vmul.f32 1.0, %v3021
    %v3023 = vrcp.pop %v2492
    %v3024 = vmul.f32 1.0, %v3023
    %v3025 = vrcp.pop %v2493
    %v3026 = vmul.f32 1.0, %v3025
    %v3027 = vrcp.pop %v2494
    %v3028 = vmul.f32 1.0, %v3027
    %v3029 = vrcp.pop %v2495
    %v3030 = vmul.f32 1.0, %v3029
    %v3031 = vrcp.pop %v2496
    %v3032 = vmul.f32 1.0, %v3031
    %v3033 = vrcp.pop %v2497
    %v3034 = vmul.f32 1.0, %v3033
    %v3035 = vrcp.pop %v2498
    %v3036 = vmul.f32 1.0, %v3035
    %v3037 = vrcp.pop %v2499
    %v3038 = vmul.f32 1.0, %v3037
    %v3039 = vrcp.pop %v2500
    %v3040 = vmul.f32 1.0, %v3039
    %v3041 = vrcp.pop %v2501
    %v3042 = vmul.f32 1.0, %v3041
    %v3043 = vrcp.pop %v2502
    %v3044 = vmul.f32 1.0, %v3043
    %v3045 = vrcp.pop %v2503
    %v3046 = vmul.f32 1.0, %v3045
    %v3047 = vrcp.pop %v2504
    %v3048 = vmul.f32 1.0, %v3047
    %v3049 = vrcp.pop %v2505
    %v3050 = vmul.f32 1.0, %v3049
    %v3051 = vrcp.pop %v2506
    %v3052 = vmul.f32 1.0, %v3051
    %v3053 = vmul.f32 %v565, %v2508
    %v3054 = vmul.f32 %v567, %v2510
    %v3055 = vmul.f32 %v796, %v2512
    %v3056 = vmul.f32 %v798, %v2514
    %v3057 = vmul.f32 %v1027, %v2516
    %v3058 = vmul.f32 %v1029, %v2518
    %v3059 = vmul.f32 %v1258, %v2520
    %v3060 = vmul.f32 %v569, %v2522
    %v3061 = vmul.f32 %v571, %v2524
    %v3062 = vmul.f32 %v800, %v2526
    %v3063 = vmul.f32 %v802, %v2528
    %v3064 = vmul.f32 %v1031, %v2530
    %v3065 = vmul.f32 %v1033, %v2532
    %v3066 = vmul.f32 %v1261, %v2534
    %v3067 = vmul.f32 %v575, %v2536
    %v3068 = vmul.f32 %v577, %v2538
    %v3069 = vmul.f32 %v806, %v2540
    %v3070 = vmul.f32 %v808, %v2542
    %v3071 = vmul.f32 %v1037, %v2544
    %v3072 = vmul.f32 %v1039, %v2546
    %v3073 = vmul.f32 %v1266, %v2548
    %v3074 = vmul.f32 %v579, %v2550
    %v3075 = vmul.f32 %v581, %v2552
    %v3076 = vmul.f32 %v810, %v2554
    %v3077 = vmul.f32 %v812, %v2556
    %v3078 = vmul.f32 %v1041, %v2558
    %v3079 = vmul.f32 %v1043, %v2560
    %v3080 = vmul.f32 %v1269, %v2562
    %v3081 = vmul.f32 %v585, %v2564
    %v3082 = vmul.f32 %v587, %v2566
    %v3083 = vmul.f32 %v816, %v2568
    %v3084 = vmul.f32 %v818, %v2570
    %v3085 = vmul.f32 %v1047, %v2572
    %v3086 = vmul.f32 %v1049, %v2574
    %v3087 = vmul.f32 %v1274, %v2576
    %v3088 = vmul.f32 %v589, %v2578
    %v3089 = vmul.f32 %v591, %v2580
    %v3090 = vmul.f32 %v820, %v2582
    %v3091 = vmul.f32 %v822, %v2584
    %v3092 = vmul.f32 %v1051, %v2586
    %v3093 = vmul.f32 %v1053, %v2588
    %v3094 = vmul.f32 %v1277, %v2590
    %v3095 = vmul.f32 %v595, %v2592
    %v3096 = vmul.f32 %v597, %v2594
    %v3097 = vmul.f32 %v826, %v2596
    %v3098 = vmul.f32 %v828, %v2598
    %v3099 = vmul.f32 %v1057, %v2600
    %v3100 = vmul.f32 %v1059, %v2602
    %v3101 = vmul.f32 %v1282, %v2604
    %v3102 = vmul.f32 %v599, %v2606
    %v3103 = vmul.f32 %v601, %v2608
    %v3104 = vmul.f32 %v830, %v2610
    %v3105 = vmul.f32 %v832, %v2612
    %v3106 = vmul.f32 %v1061, %v2614
    %v3107 = vmul.f32 %v1063, %v2616
    %v3108 = vmul.f32 %v1285, %v2618
    %v3109 = vmul.f32 %v605, %v2620
    %v3110 = vmul.f32 %v607, %v2622
    %v3111 = vmul.f32 %v836, %v2624
    %v3112 = vmul.f32 %v838, %v2626
    %v3113 = vmul.f32 %v1067, %v2628
    %v3114 = vmul.f32 %v1069, %v2630
    %v3115 = vmul.f32 %v1290, %v2632
    %v3116 = vmul.f32 %v609, %v2634
    %v3117 = vmul.f32 %v611, %v2636
    %v3118 = vmul.f32 %v840, %v2638
    %v3119 = vmul.f32 %v842, %v2640
    %v3120 = vmul.f32 %v1071, %v2642
    %v3121 = vmul.f32 %v1073, %v2644
    %v3122 = vmul.f32 %v1293, %v2646
    %v3123 = vmul.f32 %v615, %v2648
    %v3124 = vmul.f32 %v617, %v2650
    %v3125 = vmul.f32 %v846, %v2652
    %v3126 = vmul.f32 %v848, %v2654
    %v3127 = vmul.f32 %v1077, %v2656
    %v3128 = vmul.f32 %v1079, %v2658
    %v3129 = vmul.f32 %v1298, %v2660
    %v3130 = vmul.f32 %v619, %v2662
    %v3131 = vmul.f32 %v621, %v2664
    %v3132 = vmul.f32 %v850, %v2666
    %v3133 = vmul.f32 %v852, %v2668
    %v3134 = vmul.f32 %v1081, %v2670
    %v3135 = vmul.f32 %v1083, %v2672
    %v3136 = vmul.f32 %v1301, %v2674
    %v3137 = vmul.f32 %v625, %v2676
    %v3138 = vmul.f32 %v627, %v2678
    %v3139 = vmul.f32 %v856, %v2680
    %v3140 = vmul.f32 %v858, %v2682
    %v3141 = vmul.f32 %v1087, %v2684
    %v3142 = vmul.f32 %v1089, %v2686
    %v3143 = vmul.f32 %v1306, %v2688
    %v3144 = vmul.f32 %v629, %v2690
    %v3145 = vmul.f32 %v631, %v2692
    %v3146 = vmul.f32 %v860, %v2694
    %v3147 = vmul.f32 %v862, %v2696
    %v3148 = vmul.f32 %v1091, %v2698
    %v3149 = vmul.f32 %v1093, %v2700
    %v3150 = vmul.f32 %v1309, %v2702
    %v3151 = vmul.f32 %v635, %v2704
    %v3152 = vmul.f32 %v637, %v2706
    %v3153 = vmul.f32 %v866, %v2708
    %v3154 = vmul.f32 %v868, %v2710
    %v3155 = vmul.f32 %v1097, %v2712
    %v3156 = vmul.f32 %v1099, %v2714
    %v3157 = vmul.f32 %v1314, %v2716
    %v3158 = vmul.f32 %v639, %v2718
    %v3159 = vmul.f32 %v641, %v2720
    %v3160 = vmul.f32 %v870, %v2722
    %v3161 = vmul.f32 %v872, %v2724
    %v3162 = vmul.f32 %v1101, %v2726
    %v3163 = vmul.f32 %v1103, %v2728
    %v3164 = vmul.f32 %v1317, %v2730
    %v3165 = vmul.f32 %v645, %v2732
    %v3166 = vmul.f32 %v647, %v2734
    %v3167 = vmul.f32 %v876, %v2736
    %v3168 = vmul.f32 %v878, %v2738
    %v3169 = vmul.f32 %v1107, %v2740
    %v3170 = vmul.f32 %v1109, %v2742
    %v3171 = vmul.f32 %v1322, %v2744
    %v3172 = vmul.f32 %v649, %v2746
    %v3173 = vmul.f32 %v651, %v2748
    %v3174 = vmul.f32 %v880, %v2750
    %v3175 = vmul.f32 %v882, %v2752
    %v3176 = vmul.f32 %v1111, %v2754
    %v3177 = vmul.f32 %v1113, %v2756
    %v3178 = vmul.f32 %v1325, %v2758
    %v3179 = vmul.f32 %v655, %v2760
    %v3180 = vmul.f32 %v657, %v2762
    %v3181 = vmul.f32 %v886, %v2764
    %v3182 = vmul.f32 %v888, %v2766
    %v3183 = vmul.f32 %v1117, %v2768
    %v3184 = vmul.f32 %v1119, %v2770
    %v3185 = vmul.f32 %v1330, %v2772
    %v3186 = vmul.f32 %v659, %v2774
    %v3187 = vmul.f32 %v661, %v2776
    %v3188 = vmul.f32 %v890, %v2778
    %v3189 = vmul.f32 %v892, %v2780
    %v3190 = vmul.f32 %v1121, %v2782
    %v3191 = vmul.f32 %v1123, %v2784
    %v3192 = vmul.f32 %v1333, %v2786
    %v3193 = vmul.f32 %v665, %v2788
    %v3194 = vmul.f32 %v667, %v2790
    %v3195 = vmul.f32 %v896, %v2792
    %v3196 = vmul.f32 %v898, %v2794
    %v3197 = vmul.f32 %v1127, %v2796
    %v3198 = vmul.f32 %v1129, %v2798
    %v3199 = vmul.f32 %v1338, %v2800
    %v3200 = vmul.f32 %v669, %v2802
    %v3201 = vmul.f32 %v671, %v2804
    %v3202 = vmul.f32 %v900, %v2806
    %v3203 = vmul.f32 %v902, %v2808
    %v3204 = vmul.f32 %v1131, %v2810
    %v3205 = vmul.f32 %v1133, %v2812
    %v3206 = vmul.f32 %v1341, %v2814
    %v3207 = vmul.f32 %v675, %v2816
    %v3208 = vmul.f32 %v677, %v2818
    %v3209 = vmul.f32 %v906, %v2820
    %v3210 = vmul.f32 %v908, %v2822
    %v3211 = vmul.f32 %v1137, %v2824
    %v3212 = vmul.f32 %v1139, %v2826
    %v3213 = vmul.f32 %v1346, %v2828
    %v3214 = vmul.f32 %v679, %v2830
    %v3215 = vmul.f32 %v681, %v2832
    %v3216 = vmul.f32 %v910, %v2834
    %v3217 = vmul.f32 %v912, %v2836
    %v3218 = vmul.f32 %v1141, %v2838
    %v3219 = vmul.f32 %v1143, %v2840
    %v3220 = vmul.f32 %v1349, %v2842
    %v3221 = vmul.f32 %v685, %v2844
    %v3222 = vmul.f32 %v687, %v2846
    %v3223 = vmul.f32 %v916, %v2848
    %v3224 = vmul.f32 %v918, %v2850
    %v3225 = vmul.f32 %v1147, %v2852
    %v3226 = vmul.f32 %v1149, %v2854
    %v3227 = vmul.f32 %v1354, %v2856
    %v3228 = vmul.f32 %v689, %v2858
    %v3229 = vmul.f32 %v691, %v2860
    %v3230 = vmul.f32 %v920, %v2862
    %v3231 = vmul.f32 %v922, %v2864
    %v3232 = vmul.f32 %v1151, %v2866
    %v3233 = vmul.f32 %v1153, %v2868
    %v3234 = vmul.f32 %v1357, %v2870
    %v3235 = vmul.f32 %v695, %v2872
    %v3236 = vmul.f32 %v697, %v2874
    %v3237 = vmul.f32 %v926, %v2876
    %v3238 = vmul.f32 %v928, %v2878
    %v3239 = vmul.f32 %v1157, %v2880
    %v3240 = vmul.f32 %v1159, %v2882
    %v3241 = vmul.f32 %v1362, %v2884
    %v3242 = vmul.f32 %v699, %v2886
    %v3243 = vmul.f32 %v701, %v2888
    %v3244 = vmul.f32 %v930, %v2890
    %v3245 = vmul.f32 %v932, %v2892
    %v3246 = vmul.f32 %v1161, %v2894
    %v3247 = vmul.f32 %v1163, %v2896
    %v3248 = vmul.f32 %v1365, %v2898
    %v3249 = vmul.f32 %v705, %v2900
    %v3250 = vmul.f32 %v707, %v2902
    %v3251 = vmul.f32 %v936, %v2904
    %v3252 = vmul.f32 %v938, %v2906
    %v3253 = vmul.f32 %v1167, %v2908
    %v3254 = vmul.f32 %v1169, %v2910
    %v3255 = vmul.f32 %v1370, %v2912
    %v3256 = vmul.f32 %v709, %v2914
    %v3257 = vmul.f32 %v711, %v2916
    %v3258 = vmul.f32 %v940, %v2918
    %v3259 = vmul.f32 %v942, %v2920
    %v3260 = vmul.f32 %v1171, %v2922
    %v3261 = vmul.f32 %v1173, %v2924
    %v3262 = vmul.f32 %v1373, %v2926
    %v3263 = vmul.f32 %v715, %v2928
    %v3264 = vmul.f32 %v717, %v2930
    %v3265 = vmul.f32 %v946, %v2932
    %v3266 = vmul.f32 %v948, %v2934
    %v3267 = vmul.f32 %v1177, %v2936
    %v3268 = vmul.f32 %v1179, %v2938
    %v3269 = vmul.f32 %v1378, %v2940
    %v3270 = vmul.f32 %v719, %v2942
    %v3271 = vmul.f32 %v721, %v2944
    %v3272 = vmul.f32 %v950, %v2946
    %v3273 = vmul.f32 %v952, %v2948
    %v3274 = vmul.f32 %v1181, %v2950
    %v3275 = vmul.f32 %v1183, %v2952
    %v3276 = vmul.f32 %v1381, %v2954
    %v3277 = vmul.f32 %v725, %v2956
    %v3278 = vmul.f32 %v727, %v2958
    %v3279 = vmul.f32 %v956, %v2960
    %v3280 = vmul.f32 %v958, %v2962
    %v3281 = vmul.f32 %v1187, %v2964
    %v3282 = vmul.f32 %v1189, %v2966
    %v3283 = vmul.f32 %v1386, %v2968
    %v3284 = vmul.f32 %v729, %v2970
    %v3285 = vmul.f32 %v731, %v2972
    %v3286 = vmul.f32 %v960, %v2974
    %v3287 = vmul.f32 %v962, %v2976
    %v3288 = vmul.f32 %v1191, %v2978
    %v3289 = vmul.f32 %v1193, %v2980
    %v3290 = vmul.f32 %v1389, %v2982
    %v3291 = vmul.f32 %v735, %v2984
    %v3292 = vmul.f32 %v737, %v2986
    %v3293 = vmul.f32 %v966, %v2988
    %v3294 = vmul.f32 %v968, %v2990
    %v3295 = vmul.f32 %v1197, %v2992
    %v3296 = vmul.f32 %v1199, %v2994
    %v3297 = vmul.f32 %v1394, %v2996
    %v3298 = vmul.f32 %v739, %v2998
    %v3299 = vmul.f32 %v741, %v3000
    %v3300 = vmul.f32 %v970, %v3002
    %v3301 = vmul.f32 %v972, %v3004
    %v3302 = vmul.f32 %v1201, %v3006
    %v3303 = vmul.f32 %v1203, %v3008
    %v3304 = vmul.f32 %v1397, %v3010
    %v3305 = vmul.f32 %v745, %v3012
    %v3306 = vmul.f32 %v747, %v3014
    %v3307 = vmul.f32 %v976, %v3016
    %v3308 = vmul.f32 %v978, %v3018
    %v3309 = vmul.f32 %v1207, %v3020
    %v3310 = vmul.f32 %v1209, %v3022
    %v3311 = vmul.f32 %v1402, %v3024
    %v3312 = vmul.f32 %v749, %v3026
    %v3313 = vmul.f32 %v751, %v3028
    %v3314 = vmul.f32 %v980, %v3030
    %v3315 = vmul.f32 %v982, %v3032
    %v3316 = vmul.f32 %v1211, %v3034
    %v3317 = vmul.f32 %v1213, %v3036
    %v3318 = vmul.f32 %v1405, %v3038
    %v3319 = vmul.f32 %v755, %v3040
    %v3320 = vmul.f32 %v757, %v3042
    %v3321 = vmul.f32 %v986, %v3044
    %v3322 = vmul.f32 %v988, %v3046
    %v3323 = vmul.f32 %v1217, %v3048
    %v3324 = vmul.f32 %v1219, %v3050
    %v3325 = vmul.f32 %v1410, %v3052
    %v3326 = vld [vmem:[%s7] sm:$0xff]
    %v3327 = vld [vmem:[%s7 + $0x8] sm:$0xf]
    %v3328 = vld [vmem:[%s7 + $0xc] sm:$0xff]
    %v3329 = vld [vmem:[%s7 + $0x14] sm:$0xf]
    %v3330 = vld [vmem:[%s7 + $0x18] sm:$0xff]
    %v3331 = vld [vmem:[%s7 + $0x20] sm:$0xf]
    %v3332 = vld [vmem:[%s7 + $0x24] sm:$0xff]
    %v3333 = vld [vmem:[%s7 + $0x2c] sm:$0xf]
    %v3334 = vld [vmem:[%s7 + $0x30] sm:$0xff]
    %v3335 = vld [vmem:[%s7 + $0x38] sm:$0xf]
    %v3336 = vld [vmem:[%s7 + $0x3c] sm:$0xff]
    %v3337 = vld [vmem:[%s7 + $0x44] sm:$0xf]
    %v3338 = vld [vmem:[%s7 + $0x48] sm:$0xff]
    %v3339 = vld [vmem:[%s7 + $0x50] sm:$0xf]
    %v3340 = vpack.c.bf16 %v3060, %v3053
    %v3341 = vpack.c.bf16 %v3061, %v3054
    %v3342 = vpack.c.bf16 %v3062, %v3055
    %v3343 = vpack.c.bf16 %v3063, %v3056
    %v3344 = vpack.c.bf16 %v3064, %v3057
    %v3345 = vpack.c.bf16 %v3065, %v3058
    %v3346 = vpack.c.bf16 %v3066, %v3059
    %v3347 = vpack.c.bf16 %v3074, %v3067
    %v3348 = vpack.c.bf16 %v3075, %v3068
    %v3349 = vpack.c.bf16 %v3076, %v3069
    %v3350 = vpack.c.bf16 %v3077, %v3070
    %v3351 = vpack.c.bf16 %v3078, %v3071
    %v3352 = vpack.c.bf16 %v3079, %v3072
    %v3353 = vpack.c.bf16 %v3080, %v3073
    %v3354 = vpack.c.bf16 %v3088, %v3081
    %v3355 = vpack.c.bf16 %v3089, %v3082
    %v3356 = vpack.c.bf16 %v3090, %v3083
    %v3357 = vpack.c.bf16 %v3091, %v3084
    %v3358 = vpack.c.bf16 %v3092, %v3085
    %v3359 = vpack.c.bf16 %v3093, %v3086
    %v3360 = vpack.c.bf16 %v3094, %v3087
    %v3361 = vpack.c.bf16 %v3102, %v3095
    %v3362 = vpack.c.bf16 %v3103, %v3096
    %v3363 = vpack.c.bf16 %v3104, %v3097
    %v3364 = vpack.c.bf16 %v3105, %v3098
    %v3365 = vpack.c.bf16 %v3106, %v3099
    %v3366 = vpack.c.bf16 %v3107, %v3100
    %v3367 = vpack.c.bf16 %v3108, %v3101
    %v3368 = vpack.c.bf16 %v3116, %v3109
    %v3369 = vpack.c.bf16 %v3117, %v3110
    %v3370 = vpack.c.bf16 %v3118, %v3111
    %v3371 = vpack.c.bf16 %v3119, %v3112
    %v3372 = vpack.c.bf16 %v3120, %v3113
    %v3373 = vpack.c.bf16 %v3121, %v3114
    %v3374 = vpack.c.bf16 %v3122, %v3115
    %v3375 = vpack.c.bf16 %v3130, %v3123
    %v3376 = vpack.c.bf16 %v3131, %v3124
    %v3377 = vpack.c.bf16 %v3132, %v3125
    %v3378 = vpack.c.bf16 %v3133, %v3126
    %v3379 = vpack.c.bf16 %v3134, %v3127
    %v3380 = vpack.c.bf16 %v3135, %v3128
    %v3381 = vpack.c.bf16 %v3136, %v3129
    %v3382 = vpack.c.bf16 %v3144, %v3137
    %v3383 = vpack.c.bf16 %v3145, %v3138
    %v3384 = vpack.c.bf16 %v3146, %v3139
    %v3385 = vpack.c.bf16 %v3147, %v3140
    %v3386 = vpack.c.bf16 %v3148, %v3141
    %v3387 = vpack.c.bf16 %v3149, %v3142
    %v3388 = vpack.c.bf16 %v3150, %v3143
    %v3389 = vpack.c.bf16 %v3158, %v3151
    %v3390 = vpack.c.bf16 %v3159, %v3152
    %v3391 = vpack.c.bf16 %v3160, %v3153
    %v3392 = vpack.c.bf16 %v3161, %v3154
    %v3393 = vpack.c.bf16 %v3162, %v3155
    %v3394 = vpack.c.bf16 %v3163, %v3156
    %v3395 = vpack.c.bf16 %v3164, %v3157
    %v3396 = vpack.c.bf16 %v3172, %v3165
    %v3397 = vpack.c.bf16 %v3173, %v3166
    %v3398 = vpack.c.bf16 %v3174, %v3167
    %v3399 = vpack.c.bf16 %v3175, %v3168
    %v3400 = vpack.c.bf16 %v3176, %v3169
    %v3401 = vpack.c.bf16 %v3177, %v3170
    %v3402 = vpack.c.bf16 %v3178, %v3171
    %v3403 = vpack.c.bf16 %v3186, %v3179
    %v3404 = vpack.c.bf16 %v3187, %v3180
    %v3405 = vpack.c.bf16 %v3188, %v3181
    %v3406 = vpack.c.bf16 %v3189, %v3182
    %v3407 = vpack.c.bf16 %v3190, %v3183
    %v3408 = vpack.c.bf16 %v3191, %v3184
    %v3409 = vpack.c.bf16 %v3192, %v3185
    %v3410 = vpack.c.bf16 %v3200, %v3193
    %v3411 = vpack.c.bf16 %v3201, %v3194
    %v3412 = vpack.c.bf16 %v3202, %v3195
    %v3413 = vpack.c.bf16 %v3203, %v3196
    %v3414 = vpack.c.bf16 %v3204, %v3197
    %v3415 = vpack.c.bf16 %v3205, %v3198
    %v3416 = vpack.c.bf16 %v3206, %v3199
    %v3417 = vpack.c.bf16 %v3214, %v3207
    %v3418 = vpack.c.bf16 %v3215, %v3208
    %v3419 = vpack.c.bf16 %v3216, %v3209
    %v3420 = vpack.c.bf16 %v3217, %v3210
    %v3421 = vpack.c.bf16 %v3218, %v3211
    %v3422 = vpack.c.bf16 %v3219, %v3212
    %v3423 = vpack.c.bf16 %v3220, %v3213
    %v3424 = vpack.c.bf16 %v3228, %v3221
    %v3425 = vpack.c.bf16 %v3229, %v3222
    %v3426 = vpack.c.bf16 %v3230, %v3223
    %v3427 = vpack.c.bf16 %v3231, %v3224
    %v3428 = vpack.c.bf16 %v3232, %v3225
    %v3429 = vpack.c.bf16 %v3233, %v3226
    %v3430 = vpack.c.bf16 %v3234, %v3227
    %v3431 = vpack.c.bf16 %v3242, %v3235
    %v3432 = vpack.c.bf16 %v3243, %v3236
    %v3433 = vpack.c.bf16 %v3244, %v3237
    %v3434 = vpack.c.bf16 %v3245, %v3238
    %v3435 = vpack.c.bf16 %v3246, %v3239
    %v3436 = vpack.c.bf16 %v3247, %v3240
    %v3437 = vpack.c.bf16 %v3248, %v3241
    %v3438 = vpack.c.bf16 %v3256, %v3249
    %v3439 = vpack.c.bf16 %v3257, %v3250
    %v3440 = vpack.c.bf16 %v3258, %v3251
    %v3441 = vpack.c.bf16 %v3259, %v3252
    %v3442 = vpack.c.bf16 %v3260, %v3253
    %v3443 = vpack.c.bf16 %v3261, %v3254
    %v3444 = vpack.c.bf16 %v3262, %v3255
    %v3445 = vpack.c.bf16 %v3270, %v3263
    %v3446 = vpack.c.bf16 %v3271, %v3264
    %v3447 = vpack.c.bf16 %v3272, %v3265
    %v3448 = vpack.c.bf16 %v3273, %v3266
    %v3449 = vpack.c.bf16 %v3274, %v3267
    %v3450 = vpack.c.bf16 %v3275, %v3268
    %v3451 = vpack.c.bf16 %v3276, %v3269
    %v3452 = vpack.c.bf16 %v3284, %v3277
    %v3453 = vpack.c.bf16 %v3285, %v3278
    %v3454 = vpack.c.bf16 %v3286, %v3279
    %v3455 = vpack.c.bf16 %v3287, %v3280
    %v3456 = vpack.c.bf16 %v3288, %v3281
    %v3457 = vpack.c.bf16 %v3289, %v3282
    %v3458 = vpack.c.bf16 %v3290, %v3283
    %v3459 = vpack.c.bf16 %v3298, %v3291
    %v3460 = vpack.c.bf16 %v3299, %v3292
    %v3461 = vpack.c.bf16 %v3300, %v3293
    %v3462 = vpack.c.bf16 %v3301, %v3294
    %v3463 = vpack.c.bf16 %v3302, %v3295
    %v3464 = vpack.c.bf16 %v3303, %v3296
    %v3465 = vpack.c.bf16 %v3304, %v3297
    %v3466 = vpack.c.bf16 %v3312, %v3305
    %v3467 = vpack.c.bf16 %v3313, %v3306
    %v3468 = vpack.c.bf16 %v3314, %v3307
    %v3469 = vpack.c.bf16 %v3315, %v3308
    %v3470 = vpack.c.bf16 %v3316, %v3309
    %v3471 = vpack.c.bf16 %v3317, %v3310
    %v3472 = vpack.c.bf16 %v3318, %v3311
    %v3473 = vpack.c.bf16 %v3319, %v3319
    %v3474 = vpack.c.bf16 %v3320, %v3320
    %v3475 = vpack.c.bf16 %v3321, %v3321
    %v3476 = vpack.c.bf16 %v3322, %v3322
    %v3477 = vpack.c.bf16 %v3323, %v3323
    %v3478 = vpack.c.bf16 %v3324, %v3324
    %v3479 = vpack.c.bf16 %v3325, %v3325
    %v3494 = vunpack.c.l.b16 %v3326
    %v3495 = vunpack.c.h.b16 %v3326
    %v3496 = vunpack.c.l.b16 %v3327
    %v3497 = vunpack.c.l.b16 %v3328
    %v3498 = vunpack.c.h.b16 %v3328
    %v3499 = vunpack.c.l.b16 %v3329
    %v3500 = vunpack.c.l.b16 %v3330
    %v3501 = vunpack.c.h.b16 %v3330
    %v3502 = vunpack.c.l.b16 %v3331
    %v3503 = vunpack.c.l.b16 %v3332
    %v3504 = vunpack.c.h.b16 %v3332
    %v3505 = vunpack.c.l.b16 %v3333
    %v3506 = vunpack.c.l.b16 %v3334
    %v3507 = vunpack.c.h.b16 %v3334
    %v3508 = vunpack.c.l.b16 %v3335
    %v3509 = vunpack.c.l.b16 %v3336
    %v3510 = vunpack.c.h.b16 %v3336
    %v3511 = vunpack.c.l.b16 %v3337
    %v3512 = vunpack.c.l.b16 %v3338
    %v3513 = vunpack.c.h.b16 %v3338
    %v3514 = vunpack.c.l.b16 %v3339
    %v3515 = vpack.c.b16 %v3497, %v3494
    %v3516 = vpack.c.b16 %v3498, %v3495
    %v3517 = vpack.c.b16 %v3499, %v3496
    %v3518 = vpack.c.b16 %v3503, %v3500
    %v3519 = vpack.c.b16 %v3504, %v3501
    %v3520 = vpack.c.b16 %v3505, %v3502
    %v3521 = vpack.c.b16 %v3509, %v3506
    %v3522 = vpack.c.b16 %v3510, %v3507
    %v3523 = vpack.c.b16 %v3511, %v3508
    %v3524 = vpack.c.b16 %v3512, %v3512
    %v3525 = vpack.c.b16 %v3513, %v3513
    %v3526 = vpack.c.b16 %v3514, %v3514
    %vm3535 = vcmask 457728
    %v3537 = vsel %vm3535, %v3517, 0
    %v3540 = vsel %vm3535, %v3520, 0
    %v3543 = vsel %vm3535, %v3523, 0
    %v3546 = vsel %vm3535, %v3526, 0
    %vm3548 = vcmask 1043456
    %v3550 = vsel %vm3548, %v3473, 0
    %v3553 = vsel %vm3548, %v3474, 0
    %v3556 = vsel %vm3548, %v3475, 0
    %v3559 = vsel %vm3548, %v3476, 0
    %v3562 = vsel %vm3548, %v3477, 0
    %v3565 = vsel %vm3548, %v3478, 0
    %v3568 = vsel %vm3548, %v3479, 0
    %3570 = vmatprep.subr.bf16.mxu0 %v3341
    %3571 = vmatpush1.bf16.msra.mxu0 %v3340
    %3572 = vmatprep.subr.bf16.mxu0 %v3348
    %3573 = vmatpush1.bf16.msra.mxu0 %v3347
    %3574 = vmatprep.subr.bf16.mxu0 %v3355
    %3575 = vmatpush1.bf16.msra.mxu0 %v3354
    %3576 = vmatprep.subr.bf16.mxu0 %v3362
    %3577 = vmatpush1.bf16.msra.mxu0 %v3361
    %3578 = vmatprep.subr.bf16.mxu0 %v3369
    %3579 = vmatpush1.bf16.msra.mxu0 %v3368
    %3580 = vmatprep.subr.bf16.mxu0 %v3376
    %3581 = vmatpush1.bf16.msra.mxu0 %v3375
    %3582 = vmatprep.subr.bf16.mxu0 %v3383
    %3583 = vmatpush1.bf16.msra.mxu0 %v3382
    %3584 = vmatprep.subr.bf16.mxu0 %v3390
    %3585 = vmatpush1.bf16.msra.mxu0 %v3389
    %3586 = vmatprep.subr.bf16.mxu0 %v3397
    %3587 = vmatpush1.bf16.msra.mxu0 %v3396
    %3588 = vmatprep.subr.bf16.mxu0 %v3404
    %3589 = vmatpush1.bf16.msra.mxu0 %v3403
    %3590 = vmatprep.subr.bf16.mxu0 %v3411
    %3591 = vmatpush1.bf16.msra.mxu0 %v3410
    %3592 = vmatprep.subr.bf16.mxu0 %v3418
    %3593 = vmatpush1.bf16.msra.mxu0 %v3417
    %3594 = vmatprep.subr.bf16.mxu0 %v3425
    %3595 = vmatpush1.bf16.msra.mxu0 %v3424
    %3596 = vmatprep.subr.bf16.mxu0 %v3432
    %3597 = vmatpush1.bf16.msra.mxu0 %v3431
    %3598 = vmatprep.subr.bf16.mxu0 %v3439
    %3599 = vmatpush1.bf16.msra.mxu0 %v3438
    %3600 = vmatprep.subr.bf16.mxu0 %v3446
    %3601 = vmatpush1.bf16.msra.mxu0 %v3445
    %3602 = vmatprep.mubr.bf16.mxu0 %v3516
    %3603 = vmatmul.mubr.bf16.gmra.mrb[0].mxu0 %v3515
    %v3604 = vpop.f32.mrb[0].mxu0
    %v3605 = vadd.f32 0.0, %v3604
    %v3606 = vpop.f32.mrb[0].mxu0
    %v3607 = vadd.f32 0.0, %v3606
    %v3608 = vpop.f32.mrb[0].mxu0
    %v3609 = vadd.f32 0.0, %v3608
    %v3610 = vpop.f32.mrb[0].mxu0
    %v3611 = vadd.f32 0.0, %v3610
    %3612 = vmatprep.mubr.bf16.mxu0 %v3519
    %3613 = vmatmul.mubr.bf16.gmra.mrb[0].mxu0 %v3518
    %v3614 = vpop.f32.mrb[0].mxu0
    %v3615 = vadd.f32 0.0, %v3614
    %v3616 = vpop.f32.mrb[0].mxu0
    %v3617 = vadd.f32 0.0, %v3616
    %v3618 = vpop.f32.mrb[0].mxu0
    %v3619 = vadd.f32 0.0, %v3618
    %v3620 = vpop.f32.mrb[0].mxu0
    %v3621 = vadd.f32 0.0, %v3620
    %3622 = vmatprep.mubr.bf16.mxu0 %v3522
    %3623 = vmatmul.mubr.bf16.gmra.mrb[0].mxu0 %v3521
    %v3624 = vpop.f32.mrb[0].mxu0
    %v3625 = vadd.f32 0.0, %v3624
    %v3626 = vpop.f32.mrb[0].mxu0
    %v3627 = vadd.f32 0.0, %v3626
    %v3628 = vpop.f32.mrb[0].mxu0
    %v3629 = vadd.f32 0.0, %v3628
    %v3630 = vpop.f32.mrb[0].mxu0
    %v3631 = vadd.f32 0.0, %v3630
    %3632 = vmatprep.mubr.bf16.mxu0 %v3525
    %3633 = vmatmul.mubr.bf16.gmra.mrb[0].mxu0 %v3524
    %v3634 = vpop.f32.mrb[0].mxu0
    %v3635 = vadd.f32 0.0, %v3634
    %v3636 = vpop.f32.mrb[0].mxu0
    %v3637 = vadd.f32 0.0, %v3636
    %v3638 = vpop.f32.mrb[0].mxu0
    %v3639 = vpop.f32.mrb[0].mxu0
    %3640 = vdwg.mxu0
    %3641 = vmatprep.subr.bf16.mxu0 %v3453
    %3642 = vmatpush1.bf16.msra.mxu0 %v3452
    %3643 = vmatprep.subr.bf16.mxu0 %v3460
    %3644 = vmatpush1.bf16.msra.mxu0 %v3459
    %3645 = vmatprep.subr.bf16.mxu0 %v3467
    %3646 = vmatpush1.bf16.msra.mxu0 %v3466
    %3647 = vmatprep.subr.bf16.mxu0 %v3553
    %3648 = vmatpush1.bf16.msra.mxu0 %v3550
    %3649 = vmatprep.subr.bf16.mxu0 0
    %3650 = vmatpush1.bf16.msra.mxu0 0
    %3651 = vmatprep.subr.bf16.mxu0 0
    %3652 = vmatpush1.bf16.msra.mxu0 0
    %3653 = vmatprep.subr.bf16.mxu0 0
    %3654 = vmatpush1.bf16.msra.mxu0 0
    %3655 = vmatprep.subr.bf16.mxu0 0
    %3656 = vmatpush1.bf16.msra.mxu0 0
    %3657 = vmatprep.subr.bf16.mxu0 0
    %3658 = vmatpush1.bf16.msra.mxu0 0
    %3659 = vmatprep.subr.bf16.mxu0 0
    %3660 = vmatpush1.bf16.msra.mxu0 0
    %3661 = vmatprep.subr.bf16.mxu0 0
    %3662 = vmatpush1.bf16.msra.mxu0 0
    %3663 = vmatprep.subr.bf16.mxu0 0
    %3664 = vmatpush1.bf16.msra.mxu0 0
    %3665 = vmatprep.subr.bf16.mxu0 0
    %3666 = vmatpush1.bf16.msra.mxu0 0
    %3667 = vmatprep.subr.bf16.mxu0 0
    %3668 = vmatpush1.bf16.msra.mxu0 0
    %3669 = vmatprep.subr.bf16.mxu0 0
    %3670 = vmatpush1.bf16.msra.mxu0 0
    %3671 = vmatprep.subr.bf16.mxu0 0
    %3672 = vmatpush1.bf16.msra.mxu0 0
    %3673 = vmatprep.mubr.bf16.mxu0 0
    %3674 = vmatmul.mubr.bf16.gmra.mrb[0].mxu0 %v3537
    %v3675 = vpop.f32.mrb[0].mxu0
    %v3676 = vadd.f32 %v3605, %v3675
    %v3677 = vpop.f32.mrb[0].mxu0
    %v3678 = vadd.f32 %v3607, %v3677
    %v3679 = vpop.f32.mrb[0].mxu0
    %v3680 = vadd.f32 %v3609, %v3679
    %v3681 = vpop.f32.mrb[0].mxu0
    %v3682 = vadd.f32 %v3611, %v3681
    %3683 = vmatprep.mubr.bf16.mxu0 0
    %3684 = vmatmul.mubr.bf16.gmra.mrb[0].mxu0 %v3540
    %v3685 = vpop.f32.mrb[0].mxu0
    %v3686 = vadd.f32 %v3615, %v3685
    %v3687 = vpop.f32.mrb[0].mxu0
    %v3688 = vadd.f32 %v3617, %v3687
    %v3689 = vpop.f32.mrb[0].mxu0
    %v3690 = vadd.f32 %v3619, %v3689
    %v3691 = vpop.f32.mrb[0].mxu0
    %v3692 = vadd.f32 %v3621, %v3691
    %3693 = vmatprep.mubr.bf16.mxu0 0
    %3694 = vmatmul.mubr.bf16.gmra.mrb[0].mxu0 %v3543
    %v3695 = vpop.f32.mrb[0].mxu0
    %v3696 = vadd.f32 %v3625, %v3695
    %v3697 = vpop.f32.mrb[0].mxu0
    %v3698 = vadd.f32 %v3627, %v3697
    %v3699 = vpop.f32.mrb[0].mxu0
    %v3700 = vadd.f32 %v3629, %v3699
    %v3701 = vpop.f32.mrb[0].mxu0
    %v3702 = vadd.f32 %v3631, %v3701
    %3703 = vmatprep.mubr.bf16.mxu0 0
    %3704 = vmatmul.mubr.bf16.gmra.mrb[0].mxu0 %v3546
    %v3705 = vpop.f32.mrb[0].mxu0
    %v3706 = vadd.f32 %v3635, %v3705
    %v3707 = vpop.f32.mrb[0].mxu0
    %v3708 = vadd.f32 %v3637, %v3707
    %v3709 = vpop.f32.mrb[0].mxu0
    %v3710 = vpop.f32.mrb[0].mxu0
    %3711 = vdwg.mxu0
    %3712 = vmatprep.subr.bf16.mxu0 %v3343
    %3713 = vmatpush1.bf16.msra.mxu0 %v3342
    %3714 = vmatprep.subr.bf16.mxu0 %v3350
    %3715 = vmatpush1.bf16.msra.mxu0 %v3349
    %3716 = vmatprep.subr.bf16.mxu0 %v3357
    %3717 = vmatpush1.bf16.msra.mxu0 %v3356
    %3718 = vmatprep.subr.bf16.mxu0 %v3364
    %3719 = vmatpush1.bf16.msra.mxu0 %v3363
    %3720 = vmatprep.subr.bf16.mxu0 %v3371
    %3721 = vmatpush1.bf16.msra.mxu0 %v3370
    %3722 = vmatprep.subr.bf16.mxu0 %v3378
    %3723 = vmatpush1.bf16.msra.mxu0 %v3377
    %3724 = vmatprep.subr.bf16.mxu0 %v3385
    %3725 = vmatpush1.bf16.msra.mxu0 %v3384
    %3726 = vmatprep.subr.bf16.mxu0 %v3392
    %3727 = vmatpush1.bf16.msra.mxu0 %v3391
    %3728 = vmatprep.subr.bf16.mxu0 %v3399
    %3729 = vmatpush1.bf16.msra.mxu0 %v3398
    %3730 = vmatprep.subr.bf16.mxu0 %v3406
    %3731 = vmatpush1.bf16.msra.mxu0 %v3405
    %3732 = vmatprep.subr.bf16.mxu0 %v3413
    %3733 = vmatpush1.bf16.msra.mxu0 %v3412
    %3734 = vmatprep.subr.bf16.mxu0 %v3420
    %3735 = vmatpush1.bf16.msra.mxu0 %v3419
    %3736 = vmatprep.subr.bf16.mxu0 %v3427
    %3737 = vmatpush1.bf16.msra.mxu0 %v3426
    %3738 = vmatprep.subr.bf16.mxu0 %v3434
    %3739 = vmatpush1.bf16.msra.mxu0 %v3433
    %3740 = vmatprep.subr.bf16.mxu0 %v3441
    %3741 = vmatpush1.bf16.msra.mxu0 %v3440
    %3742 = vmatprep.subr.bf16.mxu0 %v3448
    %3743 = vmatpush1.bf16.msra.mxu0 %v3447
    %3744 = vmatprep.mubr.bf16.mxu0 %v3516
    %3745 = vmatmul.mubr.bf16.gmra.mrb[0].mxu0 %v3515
    %v3746 = vpop.f32.mrb[0].mxu0
    %v3747 = vadd.f32 0.0, %v3746
    %v3748 = vpop.f32.mrb[0].mxu0
    %v3749 = vadd.f32 0.0, %v3748
    %v3750 = vpop.f32.mrb[0].mxu0
    %v3751 = vadd.f32 0.0, %v3750
    %v3752 = vpop.f32.mrb[0].mxu0
    %v3753 = vadd.f32 0.0, %v3752
    %3754 = vmatprep.mubr.bf16.mxu0 %v3519
    %3755 = vmatmul.mubr.bf16.gmra.mrb[0].mxu0 %v3518
    %v3756 = vpop.f32.mrb[0].mxu0
    %v3757 = vadd.f32 0.0, %v3756
    %v3758 = vpop.f32.mrb[0].mxu0
    %v3759 = vadd.f32 0.0, %v3758
    %v3760 = vpop.f32.mrb[0].mxu0
    %v3761 = vadd.f32 0.0, %v3760
    %v3762 = vpop.f32.mrb[0].mxu0
    %v3763 = vadd.f32 0.0, %v3762
    %3764 = vmatprep.mubr.bf16.mxu0 %v3522
    %3765 = vmatmul.mubr.bf16.gmra.mrb[0].mxu0 %v3521
    %v3766 = vpop.f32.mrb[0].mxu0
    %v3767 = vadd.f32 0.0, %v3766
    %v3768 = vpop.f32.mrb[0].mxu0
    %v3769 = vadd.f32 0.0, %v3768
    %v3770 = vpop.f32.mrb[0].mxu0
    %v3771 = vadd.f32 0.0, %v3770
    %v3772 = vpop.f32.mrb[0].mxu0
    %v3773 = vadd.f32 0.0, %v3772
    %3774 = vmatprep.mubr.bf16.mxu0 %v3525
    %3775 = vmatmul.mubr.bf16.gmra.mrb[0].mxu0 %v3524
    %v3776 = vpop.f32.mrb[0].mxu0
    %v3777 = vadd.f32 0.0, %v3776
    %v3778 = vpop.f32.mrb[0].mxu0
    %v3779 = vadd.f32 0.0, %v3778
    %v3780 = vpop.f32.mrb[0].mxu0
    %v3781 = vpop.f32.mrb[0].mxu0
    %3782 = vdwg.mxu0
    %3783 = vmatprep.subr.bf16.mxu0 %v3455
    %3784 = vmatpush1.bf16.msra.mxu0 %v3454
    %3785 = vmatprep.subr.bf16.mxu0 %v3462
    %3786 = vmatpush1.bf16.msra.mxu0 %v3461
    %3787 = vmatprep.subr.bf16.mxu0 %v3469
    %3788 = vmatpush1.bf16.msra.mxu0 %v3468
    %3789 = vmatprep.subr.bf16.mxu0 %v3559
    %3790 = vmatpush1.bf16.msra.mxu0 %v3556
    %3791 = vmatprep.subr.bf16.mxu0 0
    %3792 = vmatpush1.bf16.msra.mxu0 0
    %3793 = vmatprep.subr.bf16.mxu0 0
    %3794 = vmatpush1.bf16.msra.mxu0 0
    %3795 = vmatprep.subr.bf16.mxu0 0
    %3796 = vmatpush1.bf16.msra.mxu0 0
    %3797 = vmatprep.subr.bf16.mxu0 0
    %3798 = vmatpush1.bf16.msra.mxu0 0
    %3799 = vmatprep.subr.bf16.mxu0 0
    %3800 = vmatpush1.bf16.msra.mxu0 0
    %3801 = vmatprep.subr.bf16.mxu0 0
    %3802 = vmatpush1.bf16.msra.mxu0 0
    %3803 = vmatprep.subr.bf16.mxu0 0
    %3804 = vmatpush1.bf16.msra.mxu0 0
    %3805 = vmatprep.subr.bf16.mxu0 0
    %3806 = vmatpush1.bf16.msra.mxu0 0
    %3807 = vmatprep.subr.bf16.mxu0 0
    %3808 = vmatpush1.bf16.msra.mxu0 0
    %3809 = vmatprep.subr.bf16.mxu0 0
    %3810 = vmatpush1.bf16.msra.mxu0 0
    %3811 = vmatprep.subr.bf16.mxu0 0
    %3812 = vmatpush1.bf16.msra.mxu0 0
    %3813 = vmatprep.subr.bf16.mxu0 0
    %3814 = vmatpush1.bf16.msra.mxu0 0
    %3815 = vmatprep.mubr.bf16.mxu0 0
    %3816 = vmatmul.mubr.bf16.gmra.mrb[0].mxu0 %v3537
    %v3817 = vpop.f32.mrb[0].mxu0
    %v3818 = vadd.f32 %v3747, %v3817
    %v3819 = vpop.f32.mrb[0].mxu0
    %v3820 = vadd.f32 %v3749, %v3819
    %v3821 = vpop.f32.mrb[0].mxu0
    %v3822 = vadd.f32 %v3751, %v3821
    %v3823 = vpop.f32.mrb[0].mxu0
    %v3824 = vadd.f32 %v3753, %v3823
    %3825 = vmatprep.mubr.bf16.mxu0 0
    %3826 = vmatmul.mubr.bf16.gmra.mrb[0].mxu0 %v3540
    %v3827 = vpop.f32.mrb[0].mxu0
    %v3828 = vadd.f32 %v3757, %v3827
    %v3829 = vpop.f32.mrb[0].mxu0
    %v3830 = vadd.f32 %v3759, %v3829
    %v3831 = vpop.f32.mrb[0].mxu0
    %v3832 = vadd.f32 %v3761, %v3831
    %v3833 = vpop.f32.mrb[0].mxu0
    %v3834 = vadd.f32 %v3763, %v3833
    %3835 = vmatprep.mubr.bf16.mxu0 0
    %3836 = vmatmul.mubr.bf16.gmra.mrb[0].mxu0 %v3543
    %v3837 = vpop.f32.mrb[0].mxu0
    %v3838 = vadd.f32 %v3767, %v3837
    %v3839 = vpop.f32.mrb[0].mxu0
    %v3840 = vadd.f32 %v3769, %v3839
    %v3841 = vpop.f32.mrb[0].mxu0
    %v3842 = vadd.f32 %v3771, %v3841
    %v3843 = vpop.f32.mrb[0].mxu0
    %v3844 = vadd.f32 %v3773, %v3843
    %3845 = vmatprep.mubr.bf16.mxu0 0
    %3846 = vmatmul.mubr.bf16.gmra.mrb[0].mxu0 %v3546
    %v3847 = vpop.f32.mrb[0].mxu0
    %v3848 = vadd.f32 %v3777, %v3847
    %v3849 = vpop.f32.mrb[0].mxu0
    %v3850 = vadd.f32 %v3779, %v3849
    %v3851 = vpop.f32.mrb[0].mxu0
    %v3852 = vpop.f32.mrb[0].mxu0
    %3853 = vdwg.mxu0
    %3854 = vmatprep.subr.bf16.mxu0 %v3345
    %3855 = vmatpush1.bf16.msra.mxu0 %v3344
    %3856 = vmatprep.subr.bf16.mxu0 %v3352
    %3857 = vmatpush1.bf16.msra.mxu0 %v3351
    %3858 = vmatprep.subr.bf16.mxu0 %v3359
    %3859 = vmatpush1.bf16.msra.mxu0 %v3358
    %3860 = vmatprep.subr.bf16.mxu0 %v3366
    %3861 = vmatpush1.bf16.msra.mxu0 %v3365
    %3862 = vmatprep.subr.bf16.mxu0 %v3373
    %3863 = vmatpush1.bf16.msra.mxu0 %v3372
    %3864 = vmatprep.subr.bf16.mxu0 %v3380
    %3865 = vmatpush1.bf16.msra.mxu0 %v3379
    %3866 = vmatprep.subr.bf16.mxu0 %v3387
    %3867 = vmatpush1.bf16.msra.mxu0 %v3386
    %3868 = vmatprep.subr.bf16.mxu0 %v3394
    %3869 = vmatpush1.bf16.msra.mxu0 %v3393
    %3870 = vmatprep.subr.bf16.mxu0 %v3401
    %3871 = vmatpush1.bf16.msra.mxu0 %v3400
    %3872 = vmatprep.subr.bf16.mxu0 %v3408
    %3873 = vmatpush1.bf16.msra.mxu0 %v3407
    %3874 = vmatprep.subr.bf16.mxu0 %v3415
    %3875 = vmatpush1.bf16.msra.mxu0 %v3414
    %3876 = vmatprep.subr.bf16.mxu0 %v3422
    %3877 = vmatpush1.bf16.msra.mxu0 %v3421
    %3878 = vmatprep.subr.bf16.mxu0 %v3429
    %3879 = vmatpush1.bf16.msra.mxu0 %v3428
    %3880 = vmatprep.subr.bf16.mxu0 %v3436
    %3881 = vmatpush1.bf16.msra.mxu0 %v3435
    %3882 = vmatprep.subr.bf16.mxu0 %v3443
    %3883 = vmatpush1.bf16.msra.mxu0 %v3442
    %3884 = vmatprep.subr.bf16.mxu0 %v3450
    %3885 = vmatpush1.bf16.msra.mxu0 %v3449
    %3886 = vmatprep.mubr.bf16.mxu0 %v3516
    %3887 = vmatmul.mubr.bf16.gmra.mrb[0].mxu0 %v3515
    %v3888 = vpop.f32.mrb[0].mxu0
    %v3889 = vadd.f32 0.0, %v3888
    %v3890 = vpop.f32.mrb[0].mxu0
    %v3891 = vadd.f32 0.0, %v3890
    %v3892 = vpop.f32.mrb[0].mxu0
    %v3893 = vadd.f32 0.0, %v3892
    %v3894 = vpop.f32.mrb[0].mxu0
    %v3895 = vadd.f32 0.0, %v3894
    %3896 = vmatprep.mubr.bf16.mxu0 %v3519
    %3897 = vmatmul.mubr.bf16.gmra.mrb[0].mxu0 %v3518
    %v3898 = vpop.f32.mrb[0].mxu0
    %v3899 = vadd.f32 0.0, %v3898
    %v3900 = vpop.f32.mrb[0].mxu0
    %v3901 = vadd.f32 0.0, %v3900
    %v3902 = vpop.f32.mrb[0].mxu0
    %v3903 = vadd.f32 0.0, %v3902
    %v3904 = vpop.f32.mrb[0].mxu0
    %v3905 = vadd.f32 0.0, %v3904
    %3906 = vmatprep.mubr.bf16.mxu0 %v3522
    %3907 = vmatmul.mubr.bf16.gmra.mrb[0].mxu0 %v3521
    %v3908 = vpop.f32.mrb[0].mxu0
    %v3909 = vadd.f32 0.0, %v3908
    %v3910 = vpop.f32.mrb[0].mxu0
    %v3911 = vadd.f32 0.0, %v3910
    %v3912 = vpop.f32.mrb[0].mxu0
    %v3913 = vadd.f32 0.0, %v3912
    %v3914 = vpop.f32.mrb[0].mxu0
    %v3915 = vadd.f32 0.0, %v3914
    %3916 = vmatprep.mubr.bf16.mxu0 %v3525
    %3917 = vmatmul.mubr.bf16.gmra.mrb[0].mxu0 %v3524
    %v3918 = vpop.f32.mrb[0].mxu0
    %v3919 = vadd.f32 0.0, %v3918
    %v3920 = vpop.f32.mrb[0].mxu0
    %v3921 = vadd.f32 0.0, %v3920
    %v3922 = vpop.f32.mrb[0].mxu0
    %v3923 = vpop.f32.mrb[0].mxu0
    %3924 = vdwg.mxu0
    %3925 = vmatprep.subr.bf16.mxu0 %v3457
    %3926 = vmatpush1.bf16.msra.mxu0 %v3456
    %3927 = vmatprep.subr.bf16.mxu0 %v3464
    %3928 = vmatpush1.bf16.msra.mxu0 %v3463
    %3929 = vmatprep.subr.bf16.mxu0 %v3471
    %3930 = vmatpush1.bf16.msra.mxu0 %v3470
    %3931 = vmatprep.subr.bf16.mxu0 %v3565
    %3932 = vmatpush1.bf16.msra.mxu0 %v3562
    %3933 = vmatprep.subr.bf16.mxu0 0
    %3934 = vmatpush1.bf16.msra.mxu0 0
    %3935 = vmatprep.subr.bf16.mxu0 0
    %3936 = vmatpush1.bf16.msra.mxu0 0
    %3937 = vmatprep.subr.bf16.mxu0 0
    %3938 = vmatpush1.bf16.msra.mxu0 0
    %3939 = vmatprep.subr.bf16.mxu0 0
    %3940 = vmatpush1.bf16.msra.mxu0 0
    %3941 = vmatprep.subr.bf16.mxu0 0
    %3942 = vmatpush1.bf16.msra.mxu0 0
    %3943 = vmatprep.subr.bf16.mxu0 0
    %3944 = vmatpush1.bf16.msra.mxu0 0
    %3945 = vmatprep.subr.bf16.mxu0 0
    %3946 = vmatpush1.bf16.msra.mxu0 0
    %3947 = vmatprep.subr.bf16.mxu0 0
    %3948 = vmatpush1.bf16.msra.mxu0 0
    %3949 = vmatprep.subr.bf16.mxu0 0
    %3950 = vmatpush1.bf16.msra.mxu0 0
    %3951 = vmatprep.subr.bf16.mxu0 0
    %3952 = vmatpush1.bf16.msra.mxu0 0
    %3953 = vmatprep.subr.bf16.mxu0 0
    %3954 = vmatpush1.bf16.msra.mxu0 0
    %3955 = vmatprep.subr.bf16.mxu0 0
    %3956 = vmatpush1.bf16.msra.mxu0 0
    %3957 = vmatprep.mubr.bf16.mxu0 0
    %3958 = vmatmul.mubr.bf16.gmra.mrb[0].mxu0 %v3537
    %v3959 = vpop.f32.mrb[0].mxu0
    %v3960 = vadd.f32 %v3889, %v3959
    %v3961 = vpop.f32.mrb[0].mxu0
    %v3962 = vadd.f32 %v3891, %v3961
    %v3963 = vpop.f32.mrb[0].mxu0
    %v3964 = vadd.f32 %v3893, %v3963
    %v3965 = vpop.f32.mrb[0].mxu0
    %v3966 = vadd.f32 %v3895, %v3965
    %3967 = vmatprep.mubr.bf16.mxu0 0
    %3968 = vmatmul.mubr.bf16.gmra.mrb[0].mxu0 %v3540
    %v3969 = vpop.f32.mrb[0].mxu0
    %v3970 = vadd.f32 %v3899, %v3969
    %v3971 = vpop.f32.mrb[0].mxu0
    %v3972 = vadd.f32 %v3901, %v3971
    %v3973 = vpop.f32.mrb[0].mxu0
    %v3974 = vadd.f32 %v3903, %v3973
    %v3975 = vpop.f32.mrb[0].mxu0
    %v3976 = vadd.f32 %v3905, %v3975
    %3977 = vmatprep.mubr.bf16.mxu0 0
    %3978 = vmatmul.mubr.bf16.gmra.mrb[0].mxu0 %v3543
    %v3979 = vpop.f32.mrb[0].mxu0
    %v3980 = vadd.f32 %v3909, %v3979
    %v3981 = vpop.f32.mrb[0].mxu0
    %v3982 = vadd.f32 %v3911, %v3981
    %v3983 = vpop.f32.mrb[0].mxu0
    %v3984 = vadd.f32 %v3913, %v3983
    %v3985 = vpop.f32.mrb[0].mxu0
    %v3986 = vadd.f32 %v3915, %v3985
    %3987 = vmatprep.mubr.bf16.mxu0 0
    %3988 = vmatmul.mubr.bf16.gmra.mrb[0].mxu0 %v3546
    %v3989 = vpop.f32.mrb[0].mxu0
    %v3990 = vadd.f32 %v3919, %v3989
    %v3991 = vpop.f32.mrb[0].mxu0
    %v3992 = vadd.f32 %v3921, %v3991
    %v3993 = vpop.f32.mrb[0].mxu0
    %v3994 = vpop.f32.mrb[0].mxu0
    %3995 = vdwg.mxu0
    %3996 = vmatprep.subr.bf16.mxu0 0
    %3997 = vmatpush1.bf16.msra.mxu0 %v3346
    %3998 = vmatprep.subr.bf16.mxu0 0
    %3999 = vmatpush1.bf16.msra.mxu0 %v3353
    %4000 = vmatprep.subr.bf16.mxu0 0
    %4001 = vmatpush1.bf16.msra.mxu0 %v3360
    %4002 = vmatprep.subr.bf16.mxu0 0
    %4003 = vmatpush1.bf16.msra.mxu0 %v3367
    %4004 = vmatprep.subr.bf16.mxu0 0
    %4005 = vmatpush1.bf16.msra.mxu0 %v3374
    %4006 = vmatprep.subr.bf16.mxu0 0
    %4007 = vmatpush1.bf16.msra.mxu0 %v3381
    %4008 = vmatprep.subr.bf16.mxu0 0
    %4009 = vmatpush1.bf16.msra.mxu0 %v3388
    %4010 = vmatprep.subr.bf16.mxu0 0
    %4011 = vmatpush1.bf16.msra.mxu0 %v3395
    %4012 = vmatprep.subr.bf16.mxu0 0
    %4013 = vmatpush1.bf16.msra.mxu0 %v3402
    %4014 = vmatprep.subr.bf16.mxu0 0
    %4015 = vmatpush1.bf16.msra.mxu0 %v3409
    %4016 = vmatprep.subr.bf16.mxu0 0
    %4017 = vmatpush1.bf16.msra.mxu0 %v3416
    %4018 = vmatprep.subr.bf16.mxu0 0
    %4019 = vmatpush1.bf16.msra.mxu0 %v3423
    %4020 = vmatprep.subr.bf16.mxu0 0
    %4021 = vmatpush1.bf16.msra.mxu0 %v3430
    %4022 = vmatprep.subr.bf16.mxu0 0
    %4023 = vmatpush1.bf16.msra.mxu0 %v3437
    %4024 = vmatprep.subr.bf16.mxu0 0
    %4025 = vmatpush1.bf16.msra.mxu0 %v3444
    %4026 = vmatprep.subr.bf16.mxu0 0
    %4027 = vmatpush1.bf16.msra.mxu0 %v3451
    %4028 = vmatprep.mubr.bf16.mxu0 %v3516
    %4029 = vmatmul.mubr.bf16.gmra.mrb[0].mxu0 %v3515
    %v4030 = vpop.f32.mrb[0].mxu0
    %v4031 = vadd.f32 0.0, %v4030
    %v4032 = vpop.f32.mrb[0].mxu0
    %v4033 = vpop.f32.mrb[0].mxu0
    %v4034 = vadd.f32 0.0, %v4033
    %v4035 = vpop.f32.mrb[0].mxu0
    %4036 = vmatprep.mubr.bf16.mxu0 %v3519
    %4037 = vmatmul.mubr.bf16.gmra.mrb[0].mxu0 %v3518
    %v4038 = vpop.f32.mrb[0].mxu0
    %v4039 = vadd.f32 0.0, %v4038
    %v4040 = vpop.f32.mrb[0].mxu0
    %v4041 = vpop.f32.mrb[0].mxu0
    %v4042 = vadd.f32 0.0, %v4041
    %v4043 = vpop.f32.mrb[0].mxu0
    %4044 = vmatprep.mubr.bf16.mxu0 %v3522
    %4045 = vmatmul.mubr.bf16.gmra.mrb[0].mxu0 %v3521
    %v4046 = vpop.f32.mrb[0].mxu0
    %v4047 = vadd.f32 0.0, %v4046
    %v4048 = vpop.f32.mrb[0].mxu0
    %v4049 = vpop.f32.mrb[0].mxu0
    %v4050 = vadd.f32 0.0, %v4049
    %v4051 = vpop.f32.mrb[0].mxu0
    %4052 = vmatprep.mubr.bf16.mxu0 %v3525
    %4053 = vmatmul.mubr.bf16.gmra.mrb[0].mxu0 %v3524
    %v4054 = vpop.f32.mrb[0].mxu0
    %v4055 = vadd.f32 0.0, %v4054
    %v4056 = vpop.f32.mrb[0].mxu0
    %v4057 = vpop.f32.mrb[0].mxu0
    %v4058 = vpop.f32.mrb[0].mxu0
    %4059 = vdwg.mxu0
    %4060 = vmatprep.subr.bf16.mxu0 0
    %4061 = vmatpush1.bf16.msra.mxu0 %v3458
    %4062 = vmatprep.subr.bf16.mxu0 0
    %4063 = vmatpush1.bf16.msra.mxu0 %v3465
    %4064 = vmatprep.subr.bf16.mxu0 0
    %4065 = vmatpush1.bf16.msra.mxu0 %v3472
    %4066 = vmatprep.subr.bf16.mxu0 0
    %4067 = vmatpush1.bf16.msra.mxu0 %v3568
    %4068 = vmatprep.subr.bf16.mxu0 0
    %4069 = vmatpush1.bf16.msra.mxu0 0
    %4070 = vmatprep.subr.bf16.mxu0 0
    %4071 = vmatpush1.bf16.msra.mxu0 0
    %4072 = vmatprep.subr.bf16.mxu0 0
    %4073 = vmatpush1.bf16.msra.mxu0 0
    %4074 = vmatprep.subr.bf16.mxu0 0
    %4075 = vmatpush1.bf16.msra.mxu0 0
    %4076 = vmatprep.subr.bf16.mxu0 0
    %4077 = vmatpush1.bf16.msra.mxu0 0
    %4078 = vmatprep.subr.bf16.mxu0 0
    %4079 = vmatpush1.bf16.msra.mxu0 0
    %4080 = vmatprep.subr.bf16.mxu0 0
    %4081 = vmatpush1.bf16.msra.mxu0 0
    %4082 = vmatprep.subr.bf16.mxu0 0
    %4083 = vmatpush1.bf16.msra.mxu0 0
    %4084 = vmatprep.subr.bf16.mxu0 0
    %4085 = vmatpush1.bf16.msra.mxu0 0
    %4086 = vmatprep.subr.bf16.mxu0 0
    %4087 = vmatpush1.bf16.msra.mxu0 0
    %4088 = vmatprep.subr.bf16.mxu0 0
    %4089 = vmatpush1.bf16.msra.mxu0 0
    %4090 = vmatprep.subr.bf16.mxu0 0
    %4091 = vmatpush1.bf16.msra.mxu0 0
    %4092 = vmatprep.mubr.bf16.mxu0 0
    %4093 = vmatmul.mubr.bf16.gmra.mrb[0].mxu0 %v3537
    %v4094 = vpop.f32.mrb[0].mxu0
    %v4095 = vadd.f32 %v4031, %v4094
    %v4096 = vpop.f32.mrb[0].mxu0
    %v4097 = vpop.f32.mrb[0].mxu0
    %v4098 = vadd.f32 %v4034, %v4097
    %v4099 = vpop.f32.mrb[0].mxu0
    %4100 = vmatprep.mubr.bf16.mxu0 0
    %4101 = vmatmul.mubr.bf16.gmra.mrb[0].mxu0 %v3540
    %v4102 = vpop.f32.mrb[0].mxu0
    %v4103 = vadd.f32 %v4039, %v4102
    %v4104 = vpop.f32.mrb[0].mxu0
    %v4105 = vpop.f32.mrb[0].mxu0
    %v4106 = vadd.f32 %v4042, %v4105
    %v4107 = vpop.f32.mrb[0].mxu0
    %4108 = vmatprep.mubr.bf16.mxu0 0
    %4109 = vmatmul.mubr.bf16.gmra.mrb[0].mxu0 %v3543
    %v4110 = vpop.f32.mrb[0].mxu0
    %v4111 = vadd.f32 %v4047, %v4110
    %v4112 = vpop.f32.mrb[0].mxu0
    %v4113 = vpop.f32.mrb[0].mxu0
    %v4114 = vadd.f32 %v4050, %v4113
    %v4115 = vpop.f32.mrb[0].mxu0
    %4116 = vmatprep.mubr.bf16.mxu0 0
    %4117 = vmatmul.mubr.bf16.gmra.mrb[0].mxu0 %v3546
    %v4118 = vpop.f32.mrb[0].mxu0
    %v4119 = vadd.f32 %v4055, %v4118
    %v4120 = vpop.f32.mrb[0].mxu0
    %v4121 = vpop.f32.mrb[0].mxu0
    %v4122 = vpop.f32.mrb[0].mxu0
    %4123 = vdwg.mxu0
    %v4124 = vld [vmem:[%s8] sm:$0xff]
    %v4125 = vld [vmem:[%s8 + $0x8] sm:$0xff]
    %4127 = vset.pattern.permute.xlu0 0
    %4128 = vperm.xlu0 %4127, %v4124
    %v4129 = vpop.permute.xlu0 %4128
    %4132 = vset.pattern.permute.xlu0 0
    %4133 = vperm.xlu0 %4132, %v4125
    %v4134 = vpop.permute.xlu0 %4133
    %v4137 = vlaneseq
    %v4138 = vshrl.u32 %v4137, 7
    %v4139 = vsub.s32 0, %v4138
    %v4140 = vrot.slane %v89, %v4139
    %v4142 = vmul.f32 %v4129, %v4140
    %v4143 = vmul.f32 %v4134, %v4140
    %v4151 = vrot.slane %v3676, 7
    %v4152 = vrot.slane %v3678, 7
    %v4153 = vrot.slane %v3818, 7
    %v4154 = vrot.slane %v3820, 7
    %v4155 = vrot.slane %v3960, 7
    %v4156 = vrot.slane %v3962, 7
    %v4157 = vrot.slane %v4095, 7
    %v4165 = vrot.slane %v3676, 6
    %v4166 = vrot.slane %v3678, 6
    %v4167 = vrot.slane %v3818, 6
    %v4168 = vrot.slane %v3820, 6
    %v4169 = vrot.slane %v3960, 6
    %v4170 = vrot.slane %v3962, 6
    %v4171 = vrot.slane %v4095, 6
    %vm4179 = vcmask 1041408
    %v4180 = vsel %vm4179, %v3676, %v4151
    %v4181 = vsel %vm4179, %v3678, %v4152
    %v4182 = vsel %vm4179, %v3818, %v4153
    %v4183 = vsel %vm4179, %v3820, %v4154
    %v4184 = vsel %vm4179, %v3960, %v4155
    %v4185 = vsel %vm4179, %v3962, %v4156
    %v4186 = vsel %vm4179, %v4095, %v4157
    %vm4187 = vcmask 1042432
    %v4188 = vsel %vm4187, %v4180, %v4165
    %v4189 = vsel %vm4187, %v4181, %v4166
    %v4190 = vsel %vm4187, %v4182, %v4167
    %v4191 = vsel %vm4187, %v4183, %v4168
    %v4192 = vsel %vm4187, %v4184, %v4169
    %v4193 = vsel %vm4187, %v4185, %v4170
    %v4194 = vsel %vm4187, %v4186, %v4171
    %v4195 = vsel %vm3548, %v4188, 0.0
    %v4196 = vsel %vm3548, %v4189, 0.0
    %v4197 = vsel %vm3548, %v4190, 0.0
    %v4198 = vsel %vm3548, %v4191, 0.0
    %v4199 = vsel %vm3548, %v4192, 0.0
    %v4200 = vsel %vm3548, %v4193, 0.0
    %v4201 = vsel %vm3548, %v4194, 0.0
    %v4202 = vmul.f32 %v4195, %v90
    %v4203 = vmul.f32 %v4196, %v91
    %v4204 = vmul.f32 %v4197, %v92
    %v4205 = vmul.f32 %v4198, %v93
    %v4206 = vmul.f32 %v4199, %v94
    %v4207 = vmul.f32 %v4200, %v95
    %v4208 = vmul.f32 %v4201, %v96
    %v4209 = vpack.c.bf16 %v4202, %v4202
    %v4210 = vpack.c.bf16 %v4203, %v4203
    %v4211 = vpack.c.bf16 %v4204, %v4204
    %v4212 = vpack.c.bf16 %v4205, %v4205
    %v4213 = vpack.c.bf16 %v4206, %v4206
    %v4214 = vpack.c.bf16 %v4207, %v4207
    %v4215 = vpack.c.bf16 %v4208, %v4208
    %v4328 = vunpack.c.l.b16 %v161
    %v4329 = vunpack.c.l.b16 %v162
    %v4330 = vunpack.c.l.b16 %v163
    %v4331 = vunpack.c.l.b16 %v164
    %v4332 = vunpack.c.l.b16 %v165
    %v4333 = vunpack.c.l.b16 %v166
    %v4334 = vunpack.c.l.b16 %v167
    %v4335 = vunpack.c.l.b16 %v168
    %v4336 = vunpack.c.l.b16 %v169
    %v4337 = vunpack.c.l.b16 %v170
    %v4338 = vunpack.c.l.b16 %v171
    %v4339 = vunpack.c.l.b16 %v172
    %v4340 = vunpack.c.l.b16 %v173
    %v4341 = vunpack.c.l.b16 %v174
    %v4342 = vunpack.c.l.b16 %v175
    %v4343 = vunpack.c.l.b16 %v176
    %v4344 = vunpack.c.l.b16 %v177
    %v4345 = vunpack.c.l.b16 %v178
    %v4346 = vunpack.c.l.b16 %v179
    %v4347 = vunpack.c.l.b16 %v180
    %v4348 = vunpack.c.l.b16 %v181
    %v4349 = vunpack.c.l.b16 %v182
    %v4350 = vunpack.c.l.b16 %v183
    %v4351 = vunpack.c.l.b16 %v184
    %v4352 = vunpack.c.l.b16 %v185
    %v4353 = vunpack.c.l.b16 %v186
    %v4354 = vunpack.c.l.b16 %v187
    %v4355 = vunpack.c.l.b16 %v188
    %v4356 = vunpack.c.l.b16 %v189
    %v4357 = vunpack.c.l.b16 %v190
    %v4358 = vunpack.c.l.b16 %v191
    %v4359 = vunpack.c.l.b16 %v192
    %v4360 = vunpack.c.l.b16 %v193
    %v4361 = vunpack.c.l.b16 %v194
    %v4362 = vunpack.c.l.b16 %v195
    %v4363 = vunpack.c.l.b16 %v196
    %v4364 = vunpack.c.l.b16 %v197
    %v4365 = vunpack.c.l.b16 %v198
    %v4366 = vunpack.c.l.b16 %v199
    %v4367 = vunpack.c.l.b16 %v200
    %v4368 = vunpack.c.l.b16 %v201
    %v4369 = vunpack.c.l.b16 %v202
    %v4370 = vunpack.c.l.b16 %v203
    %v4371 = vunpack.c.l.b16 %v204
    %v4372 = vunpack.c.l.b16 %v205
    %v4373 = vunpack.c.l.b16 %v206
    %v4374 = vunpack.c.l.b16 %v207
    %v4375 = vunpack.c.l.b16 %v208
    %v4376 = vunpack.c.l.b16 %v209
    %v4377 = vunpack.c.l.b16 %v210
    %v4378 = vunpack.c.l.b16 %v211
    %v4379 = vunpack.c.l.b16 %v212
    %v4380 = vunpack.c.l.b16 %v213
    %v4381 = vunpack.c.l.b16 %v214
    %v4382 = vunpack.c.l.b16 %v215
    %v4383 = vunpack.c.l.b16 %v216
    %v4384 = vunpack.c.l.b16 %v217
    %v4385 = vunpack.c.l.b16 %v218
    %v4386 = vunpack.c.l.b16 %v219
    %v4387 = vunpack.c.l.b16 %v220
    %v4388 = vunpack.c.l.b16 %v221
    %v4389 = vunpack.c.l.b16 %v222
    %v4390 = vunpack.c.l.b16 %v223
    %v4391 = vunpack.c.l.b16 %v224
    %v4392 = vunpack.c.l.b16 %v225
    %v4393 = vunpack.c.l.b16 %v226
    %v4394 = vunpack.c.l.b16 %v227
    %v4395 = vunpack.c.l.b16 %v228
    %v4396 = vunpack.c.l.b16 %v229
    %v4397 = vunpack.c.l.b16 %v230
    %v4398 = vunpack.c.l.b16 %v231
    %v4399 = vunpack.c.l.b16 %v232
    %v4400 = vunpack.c.l.b16 %v233
    %v4401 = vunpack.c.l.b16 %v234
    %v4402 = vunpack.c.l.b16 %v235
    %v4403 = vunpack.c.l.b16 %v236
    %v4404 = vunpack.c.l.b16 %v237
    %v4405 = vunpack.c.l.b16 %v238
    %v4406 = vunpack.c.l.b16 %v239
    %v4407 = vunpack.c.l.b16 %v240
    %v4408 = vunpack.c.l.b16 %v241
    %v4409 = vunpack.c.l.b16 %v242
    %v4410 = vunpack.c.l.b16 %v243
    %v4411 = vunpack.c.l.b16 %v244
    %v4412 = vunpack.c.l.b16 %v245
    %v4413 = vunpack.c.l.b16 %v246
    %v4414 = vunpack.c.l.b16 %v247
    %v4415 = vunpack.c.l.b16 %v248
    %v4416 = vunpack.c.l.b16 %v249
    %v4417 = vunpack.c.l.b16 %v250
    %v4418 = vunpack.c.l.b16 %v251
    %v4419 = vunpack.c.l.b16 %v252
    %v4420 = vunpack.c.l.b16 %v253
    %v4421 = vunpack.c.l.b16 %v254
    %v4422 = vunpack.c.l.b16 %v255
    %v4423 = vunpack.c.l.b16 %v256
    %v4424 = vunpack.c.l.b16 %v257
    %v4425 = vunpack.c.l.b16 %v258
    %v4426 = vunpack.c.l.b16 %v259
    %v4427 = vunpack.c.l.b16 %v260
    %v4428 = vunpack.c.l.b16 %v261
    %v4429 = vunpack.c.l.b16 %v262
    %v4430 = vunpack.c.l.b16 %v263
    %v4431 = vunpack.c.l.b16 %v264
    %v4432 = vunpack.c.l.b16 %v265
    %v4433 = vunpack.c.l.b16 %v266
    %v4434 = vunpack.c.l.b16 %v267
    %v4435 = vunpack.c.l.b16 %v268
    %v4436 = vunpack.c.l.b16 %v269
    %v4437 = vunpack.c.l.b16 %v270
    %v4438 = vunpack.c.l.b16 %v271
    %v4439 = vunpack.c.l.b16 %v272
    %v4440 = vpack.c.b16 %v4329, %v4328
    %v4441 = vpack.c.b16 %v4331, %v4330
    %v4442 = vpack.c.b16 %v4333, %v4332
    %v4443 = vpack.c.b16 %v4335, %v4334
    %v4444 = vpack.c.b16 %v4337, %v4336
    %v4445 = vpack.c.b16 %v4339, %v4338
    %v4446 = vpack.c.b16 %v4341, %v4340
    %v4447 = vpack.c.b16 %v4343, %v4342
    %v4448 = vpack.c.b16 %v4345, %v4344
    %v4449 = vpack.c.b16 %v4347, %v4346
    %v4450 = vpack.c.b16 %v4349, %v4348
    %v4451 = vpack.c.b16 %v4351, %v4350
    %v4452 = vpack.c.b16 %v4353, %v4352
    %v4453 = vpack.c.b16 %v4355, %v4354
    %v4454 = vpack.c.b16 %v4357, %v4356
    %v4455 = vpack.c.b16 %v4359, %v4358
    %v4456 = vpack.c.b16 %v4361, %v4360
    %v4457 = vpack.c.b16 %v4363, %v4362
    %v4458 = vpack.c.b16 %v4365, %v4364
    %v4459 = vpack.c.b16 %v4367, %v4366
    %v4460 = vpack.c.b16 %v4369, %v4368
    %v4461 = vpack.c.b16 %v4371, %v4370
    %v4462 = vpack.c.b16 %v4373, %v4372
    %v4463 = vpack.c.b16 %v4375, %v4374
    %v4464 = vpack.c.b16 %v4377, %v4376
    %v4465 = vpack.c.b16 %v4379, %v4378
    %v4466 = vpack.c.b16 %v4381, %v4380
    %v4467 = vpack.c.b16 %v4383, %v4382
    %v4468 = vpack.c.b16 %v4385, %v4384
    %v4469 = vpack.c.b16 %v4387, %v4386
    %v4470 = vpack.c.b16 %v4389, %v4388
    %v4471 = vpack.c.b16 %v4391, %v4390
    %v4472 = vpack.c.b16 %v4393, %v4392
    %v4473 = vpack.c.b16 %v4395, %v4394
    %v4474 = vpack.c.b16 %v4397, %v4396
    %v4475 = vpack.c.b16 %v4399, %v4398
    %v4476 = vpack.c.b16 %v4401, %v4400
    %v4477 = vpack.c.b16 %v4403, %v4402
    %v4478 = vpack.c.b16 %v4405, %v4404
    %v4479 = vpack.c.b16 %v4407, %v4406
    %v4480 = vpack.c.b16 %v4409, %v4408
    %v4481 = vpack.c.b16 %v4411, %v4410
    %v4482 = vpack.c.b16 %v4413, %v4412
    %v4483 = vpack.c.b16 %v4415, %v4414
    %v4484 = vpack.c.b16 %v4417, %v4416
    %v4485 = vpack.c.b16 %v4419, %v4418
    %v4486 = vpack.c.b16 %v4421, %v4420
    %v4487 = vpack.c.b16 %v4423, %v4422
    %v4488 = vpack.c.b16 %v4425, %v4424
    %v4489 = vpack.c.b16 %v4427, %v4426
    %v4490 = vpack.c.b16 %v4429, %v4428
    %v4491 = vpack.c.b16 %v4431, %v4430
    %v4492 = vpack.c.b16 %v4433, %v4432
    %v4493 = vpack.c.b16 %v4435, %v4434
    %v4494 = vpack.c.b16 %v4437, %v4436
    %v4495 = vpack.c.b16 %v4439, %v4438
    %4552 = vmatprep.subr.bf16.mxu0 0
    %4553 = vmatpush1.bf16.msra.mxu0 %v4440
    %4554 = vmatprep.subr.bf16.mxu0 0
    %4555 = vmatpush1.bf16.msra.mxu0 %v4441
    %4556 = vmatprep.subr.bf16.mxu0 0
    %4557 = vmatpush1.bf16.msra.mxu0 %v4442
    %4558 = vmatprep.subr.bf16.mxu0 0
    %4559 = vmatpush1.bf16.msra.mxu0 %v4443
    %4560 = vmatprep.subr.bf16.mxu0 0
    %4561 = vmatpush1.bf16.msra.mxu0 %v4444
    %4562 = vmatprep.subr.bf16.mxu0 0
    %4563 = vmatpush1.bf16.msra.mxu0 %v4445
    %4564 = vmatprep.subr.bf16.mxu0 0
    %4565 = vmatpush1.bf16.msra.mxu0 %v4446
    %4566 = vmatprep.subr.bf16.mxu0 0
    %4567 = vmatpush1.bf16.msra.mxu0 %v4447
    %4568 = vmatprep.subr.bf16.mxu0 0
    %4569 = vmatpush1.bf16.msra.mxu0 %v4448
    %4570 = vmatprep.subr.bf16.mxu0 0
    %4571 = vmatpush1.bf16.msra.mxu0 %v4449
    %4572 = vmatprep.subr.bf16.mxu0 0
    %4573 = vmatpush1.bf16.msra.mxu0 %v4450
    %4574 = vmatprep.subr.bf16.mxu0 0
    %4575 = vmatpush1.bf16.msra.mxu0 %v4451
    %4576 = vmatprep.subr.bf16.mxu0 0
    %4577 = vmatpush1.bf16.msra.mxu0 %v4452
    %4578 = vmatprep.subr.bf16.mxu0 0
    %4579 = vmatpush1.bf16.msra.mxu0 %v4453
    %4580 = vmatprep.subr.bf16.mxu0 0
    %4581 = vmatpush1.bf16.msra.mxu0 %v4454
    %4582 = vmatprep.subr.bf16.mxu0 0
    %4583 = vmatpush1.bf16.msra.mxu0 %v4455
    %4584 = vmatprep.mubr.bf16.mxu0 %v4210
    %4585 = vmatmul.mubr.bf16.gmra.mrb[0].mxu0 %v4209
    %v4586 = vpop.f32.mrb[0].mxu0
    %v4587 = vadd.f32 0.0, %v4586
    %v4588 = vpop.f32.mrb[0].mxu0
    %v4589 = vpop.f32.mrb[0].mxu0
    %v4590 = vpop.f32.mrb[0].mxu0
    %4591 = vdwg.mxu0
    %4592 = vmatprep.subr.bf16.mxu0 0
    %4593 = vmatpush1.bf16.msra.mxu0 %v4456
    %4594 = vmatprep.subr.bf16.mxu0 0
    %4595 = vmatpush1.bf16.msra.mxu0 %v4457
    %4596 = vmatprep.subr.bf16.mxu0 0
    %4597 = vmatpush1.bf16.msra.mxu0 %v4458
    %4598 = vmatprep.subr.bf16.mxu0 0
    %4599 = vmatpush1.bf16.msra.mxu0 %v4459
    %4600 = vmatprep.subr.bf16.mxu0 0
    %4601 = vmatpush1.bf16.msra.mxu0 %v4460
    %4602 = vmatprep.subr.bf16.mxu0 0
    %4603 = vmatpush1.bf16.msra.mxu0 %v4461
    %4604 = vmatprep.subr.bf16.mxu0 0
    %4605 = vmatpush1.bf16.msra.mxu0 %v4462
    %4606 = vmatprep.subr.bf16.mxu0 0
    %4607 = vmatpush1.bf16.msra.mxu0 %v4463
    %4608 = vmatprep.subr.bf16.mxu0 0
    %4609 = vmatpush1.bf16.msra.mxu0 %v4464
    %4610 = vmatprep.subr.bf16.mxu0 0
    %4611 = vmatpush1.bf16.msra.mxu0 %v4465
    %4612 = vmatprep.subr.bf16.mxu0 0
    %4613 = vmatpush1.bf16.msra.mxu0 %v4466
    %4614 = vmatprep.subr.bf16.mxu0 0
    %4615 = vmatpush1.bf16.msra.mxu0 %v4467
    %4616 = vmatprep.subr.bf16.mxu0 0
    %4617 = vmatpush1.bf16.msra.mxu0 %v4468
    %4618 = vmatprep.subr.bf16.mxu0 0
    %4619 = vmatpush1.bf16.msra.mxu0 %v4469
    %4620 = vmatprep.subr.bf16.mxu0 0
    %4621 = vmatpush1.bf16.msra.mxu0 %v4470
    %4622 = vmatprep.subr.bf16.mxu0 0
    %4623 = vmatpush1.bf16.msra.mxu0 %v4471
    %4624 = vmatprep.mubr.bf16.mxu0 %v4212
    %4625 = vmatmul.mubr.bf16.gmra.mrb[0].mxu0 %v4211
    %v4626 = vpop.f32.mrb[0].mxu0
    %v4627 = vadd.f32 %v4587, %v4626
    %v4628 = vpop.f32.mrb[0].mxu0
    %v4629 = vpop.f32.mrb[0].mxu0
    %v4630 = vpop.f32.mrb[0].mxu0
    %4631 = vdwg.mxu0
    %4632 = vmatprep.subr.bf16.mxu0 0
    %4633 = vmatpush1.bf16.msra.mxu0 %v4472
    %4634 = vmatprep.subr.bf16.mxu0 0
    %4635 = vmatpush1.bf16.msra.mxu0 %v4473
    %4636 = vmatprep.subr.bf16.mxu0 0
    %4637 = vmatpush1.bf16.msra.mxu0 %v4474
    %4638 = vmatprep.subr.bf16.mxu0 0
    %4639 = vmatpush1.bf16.msra.mxu0 %v4475
    %4640 = vmatprep.subr.bf16.mxu0 0
    %4641 = vmatpush1.bf16.msra.mxu0 %v4476
    %4642 = vmatprep.subr.bf16.mxu0 0
    %4643 = vmatpush1.bf16.msra.mxu0 %v4477
    %4644 = vmatprep.subr.bf16.mxu0 0
    %4645 = vmatpush1.bf16.msra.mxu0 %v4478
    %4646 = vmatprep.subr.bf16.mxu0 0
    %4647 = vmatpush1.bf16.msra.mxu0 %v4479
    %4648 = vmatprep.subr.bf16.mxu0 0
    %4649 = vmatpush1.bf16.msra.mxu0 %v4480
    %4650 = vmatprep.subr.bf16.mxu0 0
    %4651 = vmatpush1.bf16.msra.mxu0 %v4481
    %4652 = vmatprep.subr.bf16.mxu0 0
    %4653 = vmatpush1.bf16.msra.mxu0 %v4482
    %4654 = vmatprep.subr.bf16.mxu0 0
    %4655 = vmatpush1.bf16.msra.mxu0 %v4483
    %4656 = vmatprep.subr.bf16.mxu0 0
    %4657 = vmatpush1.bf16.msra.mxu0 %v4484
    %4658 = vmatprep.subr.bf16.mxu0 0
    %4659 = vmatpush1.bf16.msra.mxu0 %v4485
    %4660 = vmatprep.subr.bf16.mxu0 0
    %4661 = vmatpush1.bf16.msra.mxu0 %v4486
    %4662 = vmatprep.subr.bf16.mxu0 0
    %4663 = vmatpush1.bf16.msra.mxu0 %v4487
    %4664 = vmatprep.mubr.bf16.mxu0 %v4214
    %4665 = vmatmul.mubr.bf16.gmra.mrb[0].mxu0 %v4213
    %v4666 = vpop.f32.mrb[0].mxu0
    %v4667 = vadd.f32 %v4627, %v4666
    %v4668 = vpop.f32.mrb[0].mxu0
    %v4669 = vpop.f32.mrb[0].mxu0
    %v4670 = vpop.f32.mrb[0].mxu0
    %4671 = vdwg.mxu0
    %4672 = vmatprep.subr.bf16.mxu0 0
    %4673 = vmatpush1.bf16.msra.mxu0 %v4488
    %4674 = vmatprep.subr.bf16.mxu0 0
    %4675 = vmatpush1.bf16.msra.mxu0 %v4489
    %4676 = vmatprep.subr.bf16.mxu0 0
    %4677 = vmatpush1.bf16.msra.mxu0 %v4490
    %4678 = vmatprep.subr.bf16.mxu0 0
    %4679 = vmatpush1.bf16.msra.mxu0 %v4491
    %4680 = vmatprep.subr.bf16.mxu0 0
    %4681 = vmatpush1.bf16.msra.mxu0 %v4492
    %4682 = vmatprep.subr.bf16.mxu0 0
    %4683 = vmatpush1.bf16.msra.mxu0 %v4493
    %4684 = vmatprep.subr.bf16.mxu0 0
    %4685 = vmatpush1.bf16.msra.mxu0 %v4494
    %4686 = vmatprep.subr.bf16.mxu0 0
    %4687 = vmatpush1.bf16.msra.mxu0 %v4495
    %4688 = vmatprep.subr.bf16.mxu0 0
    %4689 = vmatpush1.bf16.msra.mxu0 0
    %4690 = vmatprep.subr.bf16.mxu0 0
    %4691 = vmatpush1.bf16.msra.mxu0 0
    %4692 = vmatprep.subr.bf16.mxu0 0
    %4693 = vmatpush1.bf16.msra.mxu0 0
    %4694 = vmatprep.subr.bf16.mxu0 0
    %4695 = vmatpush1.bf16.msra.mxu0 0
    %4696 = vmatprep.subr.bf16.mxu0 0
    %4697 = vmatpush1.bf16.msra.mxu0 0
    %4698 = vmatprep.subr.bf16.mxu0 0
    %4699 = vmatpush1.bf16.msra.mxu0 0
    %4700 = vmatprep.subr.bf16.mxu0 0
    %4701 = vmatpush1.bf16.msra.mxu0 0
    %4702 = vmatprep.subr.bf16.mxu0 0
    %4703 = vmatpush1.bf16.msra.mxu0 0
    %4704 = vmatprep.mubr.bf16.mxu0 0
    %4705 = vmatmul.mubr.bf16.gmra.mrb[0].mxu0 %v4215
    %v4706 = vpop.f32.mrb[0].mxu0
    %v4707 = vadd.f32 %v4667, %v4706
    %v4708 = vpop.f32.mrb[0].mxu0
    %v4709 = vpop.f32.mrb[0].mxu0
    %v4710 = vpop.f32.mrb[0].mxu0
    %4711 = vdwg.mxu0
    %v4712 = vld [vmem:[%s9] sm:$0xff]
    %v4713 = vld [vmem:[%s9 + $0x8] sm:$0xff]
    %4715 = vset.pattern.permute.xlu0 0
    %4716 = vperm.xlu0 %4715, %v4712
    %v4717 = vpop.permute.xlu0 %4716
    %4720 = vset.pattern.permute.xlu0 0
    %4721 = vperm.xlu0 %4720, %v4713
    %v4722 = vpop.permute.xlu0 %4721
    %v4724 = vlaneseq
    %v4725 = vshrl.u32 %v4724, 7
    %v4726 = vsub.s32 0, %v4725
    %v4727 = vrot.slane %v4707, %v4726
    %v4728 = vmul.f32 %v4717, %v4727
    %v4729 = vmul.f32 %v4722, %v4727
    %v4730 = vmul.f32 %v4142, 0.38268343
    %v4731 = vmul.f32 %v4143, 0.38268343
    %v4732 = vmul.f32 %v4728, 0.9238795
    %v4733 = vmul.f32 %v4729, 0.9238795
    %v4734 = vadd.f32 %v4730, %v4732
    %v4735 = vadd.f32 %v4731, %v4733
    %v4736 = vxor.u32 %v4734, 2147483648
    %v4737 = vmul.f32 %v4736, 1.442695
    %v4738 = vpow.pop %v4737
    %v4739 = vadd.f32 %v4738, 1.0
    %v4740 = vrcp.pop %v4739
    %v4741 = vmul.f32 1.0, %v4740
    %v4742 = vmul.f32 %v4734, %v4741
    %v4743 = vxor.u32 %v4735, 2147483648
    %v4744 = vmul.f32 %v4743, 1.442695
    %v4745 = vpow.pop %v4744
    %v4746 = vadd.f32 %v4745, 1.0
    %v4747 = vrcp.pop %v4746
    %v4748 = vmul.f32 1.0, %v4747
    %v4749 = vld [vmem:[%s10] sm:$0xff]
    %4751 = vset.pattern.permute.xlu0 0
    %4752 = vperm.xlu0 %4751, %v4749
    %v4753 = vpop.permute.xlu0 %4752
    %v4755 = vlaneseq
    %v4756 = vshrl.u32 %v4755, 7
    %v4757 = vsub.s32 1, %v4756
    %v4758 = vrot.slane %v4707, %v4757
    %v4759 = vmul.f32 %v4753, %v4758
    %v4760 = vmul.f32 %v4748, %v4759
    %v4761 = vlaneseq
    %v4762 = vshrl.u32 %v4761, 7
    %v4763 = vsub.s32 2, %v4762
    %v4764 = vrot.slane %v4707, %v4763
    %v4765 = vmul.f32 %v4753, %v4764
    %v4766 = vmul.f32 %v4748, %v4765
    %v4767 = vlaneseq
    %v4768 = vshrl.u32 %v4767, 7
    %v4769 = vsub.s32 3, %v4768
    %v4770 = vrot.slane %v4707, %v4769
    %v4771 = vmul.f32 %v4753, %v4770
    %v4772 = vmul.f32 %v4748, %v4771
    %v4773 = vld [vmem:[%s11] sm:$0xf]
    %v4774 = vld [vmem:[%s11 + $0x4] sm:$0xf]
    %v4775 = vld [vmem:[%s11 + $0x8] sm:$0xf]
    %v4776 = vld [vmem:[%s11 + $0xc] sm:$0xf]
    %v4777 = vld [vmem:[%s11 + $0x10] sm:$0xf]
    %v4778 = vld [vmem:[%s11 + $0x14] sm:$0xf]
    %v4779 = vld [vmem:[%s11 + $0x18] sm:$0xf]
    %v4780 = vld [vmem:[%s11 + $0x1c] sm:$0xf]
    %v4781 = vld [vmem:[%s11 + $0x20] sm:$0xf]
    %v4782 = vpack.c.bf16 %v4760, %v4742
    %v4783 = vpack.c.bf16 %v4772, %v4766
    %v4793 = vunpack.c.l.b16 %v4773
    %v4794 = vunpack.c.l.b16 %v4774
    %v4795 = vunpack.c.l.b16 %v4775
    %v4796 = vunpack.c.l.b16 %v4776
    %v4797 = vunpack.c.l.b16 %v4777
    %v4798 = vunpack.c.l.b16 %v4778
    %v4799 = vunpack.c.l.b16 %v4779
    %v4800 = vunpack.c.l.b16 %v4780
    %v4801 = vunpack.c.l.b16 %v4781
    %v4802 = vpack.c.b16 %v4794, %v4793
    %v4803 = vpack.c.b16 %v4796, %v4795
    %v4804 = vpack.c.b16 %v4798, %v4797
    %v4805 = vpack.c.b16 %v4800, %v4799
    %v4806 = vpack.c.b16 %v4801, %v4801
    %vm4807 = vcmask 261120
    %v4809 = vsel %vm4807, %v4802, 0
    %v4812 = vsel %vm4807, %v4803, 0
    %v4815 = vsel %vm4807, %v4804, 0
    %v4818 = vsel %vm4807, %v4805, 0
    %v4821 = vsel %vm4807, %v4806, 0
    %4823 = vmatprep.subr.bf16.mxu0 0
    %4824 = vmatpush1.bf16.msra.mxu0 %v4782
    %4825 = vmatprep.subr.bf16.mxu0 0
    %4826 = vmatpush1.bf16.msra.mxu0 %v4783
    %4827 = vmatprep.subr.bf16.mxu0 0
    %4828 = vmatpush1.bf16.msra.mxu0 0
    %4829 = vmatprep.subr.bf16.mxu0 0
    %4830 = vmatpush1.bf16.msra.mxu0 0
    %4831 = vmatprep.subr.bf16.mxu0 0
    %4832 = vmatpush1.bf16.msra.mxu0 0
    %4833 = vmatprep.subr.bf16.mxu0 0
    %4834 = vmatpush1.bf16.msra.mxu0 0
    %4835 = vmatprep.subr.bf16.mxu0 0
    %4836 = vmatpush1.bf16.msra.mxu0 0
    %4837 = vmatprep.subr.bf16.mxu0 0
    %4838 = vmatpush1.bf16.msra.mxu0 0
    %4839 = vmatprep.subr.bf16.mxu0 0
    %4840 = vmatpush1.bf16.msra.mxu0 0
    %4841 = vmatprep.subr.bf16.mxu0 0
    %4842 = vmatpush1.bf16.msra.mxu0 0
    %4843 = vmatprep.subr.bf16.mxu0 0
    %4844 = vmatpush1.bf16.msra.mxu0 0
    %4845 = vmatprep.subr.bf16.mxu0 0
    %4846 = vmatpush1.bf16.msra.mxu0 0
    %4847 = vmatprep.subr.bf16.mxu0 0
    %4848 = vmatpush1.bf16.msra.mxu0 0
    %4849 = vmatprep.subr.bf16.mxu0 0
    %4850 = vmatpush1.bf16.msra.mxu0 0
    %4851 = vmatprep.subr.bf16.mxu0 0
    %4852 = vmatpush1.bf16.msra.mxu0 0
    %4853 = vmatprep.subr.bf16.mxu0 0
    %4854 = vmatpush1.bf16.msra.mxu0 0
    %4855 = vmatprep.mubr.bf16.mxu0 0
    %4856 = vmatmul.mubr.bf16.gmra.mrb[0].mxu0 %v4809
    %v4857 = vpop.f32.mrb[0].mxu0
    %v4858 = vadd.f32 0.0, %v4857
    %v4859 = vpop.f32.mrb[0].mxu0
    %v4860 = vpop.f32.mrb[0].mxu0
    %v4861 = vadd.f32 0.0, %v4860
    %v4862 = vpop.f32.mrb[0].mxu0
    %4863 = vmatprep.mubr.bf16.mxu0 0
    %4864 = vmatmul.mubr.bf16.gmra.mrb[0].mxu0 %v4812
    %v4865 = vpop.f32.mrb[0].mxu0
    %v4866 = vadd.f32 0.0, %v4865
    %v4867 = vpop.f32.mrb[0].mxu0
    %v4868 = vpop.f32.mrb[0].mxu0
    %v4869 = vadd.f32 0.0, %v4868
    %v4870 = vpop.f32.mrb[0].mxu0
    %4871 = vmatprep.mubr.bf16.mxu0 0
    %4872 = vmatmul.mubr.bf16.gmra.mrb[0].mxu0 %v4815
    %v4873 = vpop.f32.mrb[0].mxu0
    %v4874 = vadd.f32 0.0, %v4873
    %v4875 = vpop.f32.mrb[0].mxu0
    %v4876 = vpop.f32.mrb[0].mxu0
    %v4877 = vadd.f32 0.0, %v4876
    %v4878 = vpop.f32.mrb[0].mxu0
    %4879 = vmatprep.mubr.bf16.mxu0 0
    %4880 = vmatmul.mubr.bf16.gmra.mrb[0].mxu0 %v4818
    %v4881 = vpop.f32.mrb[0].mxu0
    %v4882 = vadd.f32 0.0, %v4881
    %v4883 = vpop.f32.mrb[0].mxu0
    %v4884 = vpop.f32.mrb[0].mxu0
    %v4885 = vadd.f32 0.0, %v4884
    %v4886 = vpop.f32.mrb[0].mxu0
    %4887 = vmatprep.mubr.bf16.mxu0 0
    %4888 = vmatmul.mubr.bf16.gmra.mrb[0].mxu0 %v4821
    %v4889 = vpop.f32.mrb[0].mxu0
    %v4890 = vadd.f32 0.0, %v4889
    %v4891 = vpop.f32.mrb[0].mxu0
    %v4892 = vpop.f32.mrb[0].mxu0
    %v4893 = vpop.f32.mrb[0].mxu0
    %4894 = vdwg.mxu0
    %v4895 = vpack.c.bf16 %v4882, %v4877
    %v4896 = vpack.c.bf16 %v4890, %v4885
    %v4961 = vunpack.c.l.b16 %v97
    %v4962 = vunpack.c.h.b16 %v97
    %v4963 = vunpack.c.l.b16 %v98
    %v4964 = vunpack.c.h.b16 %v98
    %v4965 = vunpack.c.l.b16 %v99
    %v4966 = vunpack.c.h.b16 %v99
    %v4967 = vunpack.c.l.b16 %v100
    %v4968 = vunpack.c.l.b16 %v101
    %v4969 = vunpack.c.h.b16 %v101
    %v4970 = vunpack.c.l.b16 %v102
    %v4971 = vunpack.c.h.b16 %v102
    %v4972 = vunpack.c.l.b16 %v103
    %v4973 = vunpack.c.h.b16 %v103
    %v4974 = vunpack.c.l.b16 %v104
    %v4975 = vunpack.c.l.b16 %v105
    %v4976 = vunpack.c.h.b16 %v105
    %v4977 = vunpack.c.l.b16 %v106
    %v4978 = vunpack.c.h.b16 %v106
    %v4979 = vunpack.c.l.b16 %v107
    %v4980 = vunpack.c.h.b16 %v107
    %v4981 = vunpack.c.l.b16 %v108
    %v4982 = vunpack.c.l.b16 %v109
    %v4983 = vunpack.c.h.b16 %v109
    %v4984 = vunpack.c.l.b16 %v110
    %v4985 = vunpack.c.h.b16 %v110
    %v4986 = vunpack.c.l.b16 %v111
    %v4987 = vunpack.c.h.b16 %v111
    %v4988 = vunpack.c.l.b16 %v112
    %v4989 = vunpack.c.l.b16 %v113
    %v4990 = vunpack.c.h.b16 %v113
    %v4991 = vunpack.c.l.b16 %v114
    %v4992 = vunpack.c.h.b16 %v114
    %v4993 = vunpack.c.l.b16 %v115
    %v4994 = vunpack.c.h.b16 %v115
    %v4995 = vunpack.c.l.b16 %v116
    %v4996 = vunpack.c.l.b16 %v117
    %v4997 = vunpack.c.h.b16 %v117
    %v4998 = vunpack.c.l.b16 %v118
    %v4999 = vunpack.c.h.b16 %v118
    %v5000 = vunpack.c.l.b16 %v119
    %v5001 = vunpack.c.h.b16 %v119
    %v5002 = vunpack.c.l.b16 %v120
    %v5003 = vunpack.c.l.b16 %v121
    %v5004 = vunpack.c.h.b16 %v121
    %v5005 = vunpack.c.l.b16 %v122
    %v5006 = vunpack.c.h.b16 %v122
    %v5007 = vunpack.c.l.b16 %v123
    %v5008 = vunpack.c.h.b16 %v123
    %v5009 = vunpack.c.l.b16 %v124
    %v5010 = vunpack.c.l.b16 %v125
    %v5011 = vunpack.c.h.b16 %v125
    %v5012 = vunpack.c.l.b16 %v126
    %v5013 = vunpack.c.h.b16 %v126
    %v5014 = vunpack.c.l.b16 %v127
    %v5015 = vunpack.c.h.b16 %v127
    %v5016 = vunpack.c.l.b16 %v128
    %v5017 = vunpack.c.l.b16 %v129
    %v5018 = vunpack.c.h.b16 %v129
    %v5019 = vunpack.c.l.b16 %v130
    %v5020 = vunpack.c.h.b16 %v130
    %v5021 = vunpack.c.l.b16 %v131
    %v5022 = vunpack.c.h.b16 %v131
    %v5023 = vunpack.c.l.b16 %v132
    %v5024 = vunpack.c.l.b16 %v133
    %v5025 = vunpack.c.h.b16 %v133
    %v5026 = vunpack.c.l.b16 %v134
    %v5027 = vunpack.c.h.b16 %v134
    %v5028 = vunpack.c.l.b16 %v135
    %v5029 = vunpack.c.h.b16 %v135
    %v5030 = vunpack.c.l.b16 %v136
    %v5031 = vunpack.c.l.b16 %v137
    %v5032 = vunpack.c.h.b16 %v137
    %v5033 = vunpack.c.l.b16 %v138
    %v5034 = vunpack.c.h.b16 %v138
    %v5035 = vunpack.c.l.b16 %v139
    %v5036 = vunpack.c.h.b16 %v139
    %v5037 = vunpack.c.l.b16 %v140
    %v5038 = vunpack.c.l.b16 %v141
    %v5039 = vunpack.c.h.b16 %v141
    %v5040 = vunpack.c.l.b16 %v142
    %v5041 = vunpack.c.h.b16 %v142
    %v5042 = vunpack.c.l.b16 %v143
    %v5043 = vunpack.c.h.b16 %v143
    %v5044 = vunpack.c.l.b16 %v144
    %v5045 = vunpack.c.l.b16 %v145
    %v5046 = vunpack.c.h.b16 %v145
    %v5047 = vunpack.c.l.b16 %v146
    %v5048 = vunpack.c.h.b16 %v146
    %v5049 = vunpack.c.l.b16 %v147
    %v5050 = vunpack.c.h.b16 %v147
    %v5051 = vunpack.c.l.b16 %v148
    %v5052 = vunpack.c.l.b16 %v149
    %v5053 = vunpack.c.h.b16 %v149
    %v5054 = vunpack.c.l.b16 %v150
    %v5055 = vunpack.c.h.b16 %v150
    %v5056 = vunpack.c.l.b16 %v151
    %v5057 = vunpack.c.h.b16 %v151
    %v5058 = vunpack.c.l.b16 %v152
    %v5059 = vunpack.c.l.b16 %v153
    %v5060 = vunpack.c.h.b16 %v153
    %v5061 = vunpack.c.l.b16 %v154
    %v5062 = vunpack.c.h.b16 %v154
    %v5063 = vunpack.c.l.b16 %v155
    %v5064 = vunpack.c.h.b16 %v155
    %v5065 = vunpack.c.l.b16 %v156
    %v5066 = vunpack.c.l.b16 %v157
    %v5067 = vunpack.c.h.b16 %v157
    %v5068 = vunpack.c.l.b16 %v158
    %v5069 = vunpack.c.h.b16 %v158
    %v5070 = vunpack.c.l.b16 %v159
    %v5071 = vunpack.c.h.b16 %v159
    %v5072 = vunpack.c.l.b16 %v160
    %v5073 = vpack.c.b16 %v4968, %v4961
    %v5074 = vpack.c.b16 %v4969, %v4962
    %v5075 = vpack.c.b16 %v4970, %v4963
    %v5076 = vpack.c.b16 %v4971, %v4964
    %v5077 = vpack.c.b16 %v4972, %v4965
    %v5078 = vpack.c.b16 %v4973, %v4966
    %v5079 = vpack.c.b16 %v4974, %v4967
    %v5080 = vpack.c.b16 %v4982, %v4975
    %v5081 = vpack.c.b16 %v4983, %v4976
    %v5082 = vpack.c.b16 %v4984, %v4977
    %v5083 = vpack.c.b16 %v4985, %v4978
    %v5084 = vpack.c.b16 %v4986, %v4979
    %v5085 = vpack.c.b16 %v4987, %v4980
    %v5086 = vpack.c.b16 %v4988, %v4981
    %v5087 = vpack.c.b16 %v4996, %v4989
    %v5088 = vpack.c.b16 %v4997, %v4990
    %v5089 = vpack.c.b16 %v4998, %v4991
    %v5090 = vpack.c.b16 %v4999, %v4992
    %v5091 = vpack.c.b16 %v5000, %v4993
    %v5092 = vpack.c.b16 %v5001, %v4994
    %v5093 = vpack.c.b16 %v5002, %v4995
    %v5094 = vpack.c.b16 %v5010, %v5003
    %v5095 = vpack.c.b16 %v5011, %v5004
    %v5096 = vpack.c.b16 %v5012, %v5005
    %v5097 = vpack.c.b16 %v5013, %v5006
    %v5098 = vpack.c.b16 %v5014, %v5007
    %v5099 = vpack.c.b16 %v5015, %v5008
    %v5100 = vpack.c.b16 %v5016, %v5009
    %v5101 = vpack.c.b16 %v5024, %v5017
    %v5102 = vpack.c.b16 %v5025, %v5018
    %v5103 = vpack.c.b16 %v5026, %v5019
    %v5104 = vpack.c.b16 %v5027, %v5020
    %v5105 = vpack.c.b16 %v5028, %v5021
    %v5106 = vpack.c.b16 %v5029, %v5022
    %v5107 = vpack.c.b16 %v5030, %v5023
    %v5108 = vpack.c.b16 %v5038, %v5031
    %v5109 = vpack.c.b16 %v5039, %v5032
    %v5110 = vpack.c.b16 %v5040, %v5033
    %v5111 = vpack.c.b16 %v5041, %v5034
    %v5112 = vpack.c.b16 %v5042, %v5035
    %v5113 = vpack.c.b16 %v5043, %v5036
    %v5114 = vpack.c.b16 %v5044, %v5037
    %v5115 = vpack.c.b16 %v5052, %v5045
    %v5116 = vpack.c.b16 %v5053, %v5046
    %v5117 = vpack.c.b16 %v5054, %v5047
    %v5118 = vpack.c.b16 %v5055, %v5048
    %v5119 = vpack.c.b16 %v5056, %v5049
    %v5120 = vpack.c.b16 %v5057, %v5050
    %v5121 = vpack.c.b16 %v5058, %v5051
    %v5122 = vpack.c.b16 %v5066, %v5059
    %v5123 = vpack.c.b16 %v5067, %v5060
    %v5124 = vpack.c.b16 %v5068, %v5061
    %v5125 = vpack.c.b16 %v5069, %v5062
    %v5126 = vpack.c.b16 %v5070, %v5063
    %v5127 = vpack.c.b16 %v5071, %v5064
    %v5128 = vpack.c.b16 %v5072, %v5065
    %5185 = vmatprep.subr.bf16.mxu0 %v5074
    %5186 = vmatpush1.bf16.msra.mxu0 %v5073
    %5187 = vmatprep.subr.bf16.mxu0 %v5081
    %5188 = vmatpush1.bf16.msra.mxu0 %v5080
    %5189 = vmatprep.subr.bf16.mxu0 %v5088
    %5190 = vmatpush1.bf16.msra.mxu0 %v5087
    %5191 = vmatprep.subr.bf16.mxu0 %v5095
    %5192 = vmatpush1.bf16.msra.mxu0 %v5094
    %5193 = vmatprep.subr.bf16.mxu0 %v5102
    %5194 = vmatpush1.bf16.msra.mxu0 %v5101
    %5195 = vmatprep.subr.bf16.mxu0 %v5109
    %5196 = vmatpush1.bf16.msra.mxu0 %v5108
    %5197 = vmatprep.subr.bf16.mxu0 %v5116
    %5198 = vmatpush1.bf16.msra.mxu0 %v5115
    %5199 = vmatprep.subr.bf16.mxu0 %v5123
    %5200 = vmatpush1.bf16.msra.mxu0 %v5122
    %5201 = vmatprep.subr.bf16.mxu0 0
    %5202 = vmatpush1.bf16.msra.mxu0 0
    %5203 = vmatprep.subr.bf16.mxu0 0
    %5204 = vmatpush1.bf16.msra.mxu0 0
    %5205 = vmatprep.subr.bf16.mxu0 0
    %5206 = vmatpush1.bf16.msra.mxu0 0
    %5207 = vmatprep.subr.bf16.mxu0 0
    %5208 = vmatpush1.bf16.msra.mxu0 0
    %5209 = vmatprep.subr.bf16.mxu0 0
    %5210 = vmatpush1.bf16.msra.mxu0 0
    %5211 = vmatprep.subr.bf16.mxu0 0
    %5212 = vmatpush1.bf16.msra.mxu0 0
    %5213 = vmatprep.subr.bf16.mxu0 0
    %5214 = vmatpush1.bf16.msra.mxu0 0
    %5215 = vmatprep.subr.bf16.mxu0 0
    %5216 = vmatpush1.bf16.msra.mxu0 0
    %5217 = vmatprep.mubr.bf16.mxu0 0
    %5218 = vmatmul.mubr.bf16.gmra.mrb[0].mxu0 %v4895
    %v5219 = vpop.f32.mrb[0].mxu0
    %v5220 = vadd.f32 0.0, %v5219
    %v5221 = vpop.f32.mrb[0].mxu0
    %v5222 = vadd.f32 0.0, %v5221
    %v5223 = vpop.f32.mrb[0].mxu0
    %v5224 = vadd.f32 0.0, %v5223
    %v5225 = vpop.f32.mrb[0].mxu0
    %v5226 = vadd.f32 0.0, %v5225
    %5227 = vmatprep.mubr.bf16.mxu0 0
    %5228 = vmatmul.mubr.bf16.gmra.mrb[0].mxu0 %v4896
    %v5229 = vpop.f32.mrb[0].mxu0
    %v5230 = vadd.f32 0.0, %v5229
    %v5231 = vpop.f32.mrb[0].mxu0
    %v5232 = vadd.f32 0.0, %v5231
    %v5233 = vpop.f32.mrb[0].mxu0
    %v5234 = vadd.f32 0.0, %v5233
    %v5235 = vpop.f32.mrb[0].mxu0
    %v5236 = vadd.f32 0.0, %v5235
    %5237 = vdwg.mxu0
    %5238 = vmatprep.subr.bf16.mxu0 %v5076
    %5239 = vmatpush1.bf16.msra.mxu0 %v5075
    %5240 = vmatprep.subr.bf16.mxu0 %v5083
    %5241 = vmatpush1.bf16.msra.mxu0 %v5082
    %5242 = vmatprep.subr.bf16.mxu0 %v5090
    %5243 = vmatpush1.bf16.msra.mxu0 %v5089
    %5244 = vmatprep.subr.bf16.mxu0 %v5097
    %5245 = vmatpush1.bf16.msra.mxu0 %v5096
    %5246 = vmatprep.subr.bf16.mxu0 %v5104
    %5247 = vmatpush1.bf16.msra.mxu0 %v5103
    %5248 = vmatprep.subr.bf16.mxu0 %v5111
    %5249 = vmatpush1.bf16.msra.mxu0 %v5110
    %5250 = vmatprep.subr.bf16.mxu0 %v5118
    %5251 = vmatpush1.bf16.msra.mxu0 %v5117
    %5252 = vmatprep.subr.bf16.mxu0 %v5125
    %5253 = vmatpush1.bf16.msra.mxu0 %v5124
    %5254 = vmatprep.subr.bf16.mxu0 0
    %5255 = vmatpush1.bf16.msra.mxu0 0
    %5256 = vmatprep.subr.bf16.mxu0 0
    %5257 = vmatpush1.bf16.msra.mxu0 0
    %5258 = vmatprep.subr.bf16.mxu0 0
    %5259 = vmatpush1.bf16.msra.mxu0 0
    %5260 = vmatprep.subr.bf16.mxu0 0
    %5261 = vmatpush1.bf16.msra.mxu0 0
    %5262 = vmatprep.subr.bf16.mxu0 0
    %5263 = vmatpush1.bf16.msra.mxu0 0
    %5264 = vmatprep.subr.bf16.mxu0 0
    %5265 = vmatpush1.bf16.msra.mxu0 0
    %5266 = vmatprep.subr.bf16.mxu0 0
    %5267 = vmatpush1.bf16.msra.mxu0 0
    %5268 = vmatprep.subr.bf16.mxu0 0
    %5269 = vmatpush1.bf16.msra.mxu0 0
    %5270 = vmatprep.mubr.bf16.mxu0 0
    %5271 = vmatmul.mubr.bf16.gmra.mrb[0].mxu0 %v4895
    %v5272 = vpop.f32.mrb[0].mxu0
    %v5273 = vadd.f32 0.0, %v5272
    %v5274 = vpop.f32.mrb[0].mxu0
    %v5275 = vadd.f32 0.0, %v5274
    %v5276 = vpop.f32.mrb[0].mxu0
    %v5277 = vadd.f32 0.0, %v5276
    %v5278 = vpop.f32.mrb[0].mxu0
    %v5279 = vadd.f32 0.0, %v5278
    %5280 = vmatprep.mubr.bf16.mxu0 0
    %5281 = vmatmul.mubr.bf16.gmra.mrb[0].mxu0 %v4896
    %v5282 = vpop.f32.mrb[0].mxu0
    %v5283 = vadd.f32 0.0, %v5282
    %v5284 = vpop.f32.mrb[0].mxu0
    %v5285 = vadd.f32 0.0, %v5284
    %v5286 = vpop.f32.mrb[0].mxu0
    %v5287 = vadd.f32 0.0, %v5286
    %v5288 = vpop.f32.mrb[0].mxu0
    %v5289 = vadd.f32 0.0, %v5288
    %5290 = vdwg.mxu0
    %5291 = vmatprep.subr.bf16.mxu0 %v5078
    %5292 = vmatpush1.bf16.msra.mxu0 %v5077
    %5293 = vmatprep.subr.bf16.mxu0 %v5085
    %5294 = vmatpush1.bf16.msra.mxu0 %v5084
    %5295 = vmatprep.subr.bf16.mxu0 %v5092
    %5296 = vmatpush1.bf16.msra.mxu0 %v5091
    %5297 = vmatprep.subr.bf16.mxu0 %v5099
    %5298 = vmatpush1.bf16.msra.mxu0 %v5098
    %5299 = vmatprep.subr.bf16.mxu0 %v5106
    %5300 = vmatpush1.bf16.msra.mxu0 %v5105
    %5301 = vmatprep.subr.bf16.mxu0 %v5113
    %5302 = vmatpush1.bf16.msra.mxu0 %v5112
    %5303 = vmatprep.subr.bf16.mxu0 %v5120
    %5304 = vmatpush1.bf16.msra.mxu0 %v5119
    %5305 = vmatprep.subr.bf16.mxu0 %v5127
    %5306 = vmatpush1.bf16.msra.mxu0 %v5126
    %5307 = vmatprep.subr.bf16.mxu0 0
    %5308 = vmatpush1.bf16.msra.mxu0 0
    %5309 = vmatprep.subr.bf16.mxu0 0
    %5310 = vmatpush1.bf16.msra.mxu0 0
    %5311 = vmatprep.subr.bf16.mxu0 0
    %5312 = vmatpush1.bf16.msra.mxu0 0
    %5313 = vmatprep.subr.bf16.mxu0 0
    %5314 = vmatpush1.bf16.msra.mxu0 0
    %5315 = vmatprep.subr.bf16.mxu0 0
    %5316 = vmatpush1.bf16.msra.mxu0 0
    %5317 = vmatprep.subr.bf16.mxu0 0
    %5318 = vmatpush1.bf16.msra.mxu0 0
    %5319 = vmatprep.subr.bf16.mxu0 0
    %5320 = vmatpush1.bf16.msra.mxu0 0
    %5321 = vmatprep.subr.bf16.mxu0 0
    %5322 = vmatpush1.bf16.msra.mxu0 0
    %5323 = vmatprep.mubr.bf16.mxu0 0
    %5324 = vmatmul.mubr.bf16.gmra.mrb[0].mxu0 %v4895
    %v5325 = vpop.f32.mrb[0].mxu0
    %v5326 = vadd.f32 0.0, %v5325
    %v5327 = vpop.f32.mrb[0].mxu0
    %v5328 = vadd.f32 0.0, %v5327
    %v5329 = vpop.f32.mrb[0].mxu0
    %v5330 = vadd.f32 0.0, %v5329
    %v5331 = vpop.f32.mrb[0].mxu0
    %v5332 = vadd.f32 0.0, %v5331
    %5333 = vmatprep.mubr.bf16.mxu0 0
    %5334 = vmatmul.mubr.bf16.gmra.mrb[0].mxu0 %v4896
    %v5335 = vpop.f32.mrb[0].mxu0
    %v5336 = vadd.f32 0.0, %v5335
    %v5337 = vpop.f32.mrb[0].mxu0
    %v5338 = vadd.f32 0.0, %v5337
    %v5339 = vpop.f32.mrb[0].mxu0
    %v5340 = vadd.f32 0.0, %v5339
    %v5341 = vpop.f32.mrb[0].mxu0
    %v5342 = vadd.f32 0.0, %v5341
    %5343 = vdwg.mxu0
    %5344 = vmatprep.subr.bf16.mxu0 0
    %5345 = vmatpush1.bf16.msra.mxu0 %v5079
    %5346 = vmatprep.subr.bf16.mxu0 0
    %5347 = vmatpush1.bf16.msra.mxu0 %v5086
    %5348 = vmatprep.subr.bf16.mxu0 0
    %5349 = vmatpush1.bf16.msra.mxu0 %v5093
    %5350 = vmatprep.subr.bf16.mxu0 0
    %5351 = vmatpush1.bf16.msra.mxu0 %v5100
    %5352 = vmatprep.subr.bf16.mxu0 0
    %5353 = vmatpush1.bf16.msra.mxu0 %v5107
    %5354 = vmatprep.subr.bf16.mxu0 0
    %5355 = vmatpush1.bf16.msra.mxu0 %v5114
    %5356 = vmatprep.subr.bf16.mxu0 0
    %5357 = vmatpush1.bf16.msra.mxu0 %v5121
    %5358 = vmatprep.subr.bf16.mxu0 0
    %5359 = vmatpush1.bf16.msra.mxu0 %v5128
    %5360 = vmatprep.subr.bf16.mxu0 0
    %5361 = vmatpush1.bf16.msra.mxu0 0
    %5362 = vmatprep.subr.bf16.mxu0 0
    %5363 = vmatpush1.bf16.msra.mxu0 0
    %5364 = vmatprep.subr.bf16.mxu0 0
    %5365 = vmatpush1.bf16.msra.mxu0 0
    %5366 = vmatprep.subr.bf16.mxu0 0
    %5367 = vmatpush1.bf16.msra.mxu0 0
    %5368 = vmatprep.subr.bf16.mxu0 0
    %5369 = vmatpush1.bf16.msra.mxu0 0
    %5370 = vmatprep.subr.bf16.mxu0 0
    %5371 = vmatpush1.bf16.msra.mxu0 0
    %5372 = vmatprep.subr.bf16.mxu0 0
    %5373 = vmatpush1.bf16.msra.mxu0 0
    %5374 = vmatprep.subr.bf16.mxu0 0
    %5375 = vmatpush1.bf16.msra.mxu0 0
    %5376 = vmatprep.mubr.bf16.mxu0 0
    %5377 = vmatmul.mubr.bf16.gmra.mrb[0].mxu0 %v4895
    %v5378 = vpop.f32.mrb[0].mxu0
    %v5379 = vadd.f32 0.0, %v5378
    %v5380 = vpop.f32.mrb[0].mxu0
    %v5381 = vpop.f32.mrb[0].mxu0
    %v5382 = vadd.f32 0.0, %v5381
    %v5383 = vpop.f32.mrb[0].mxu0
    %5384 = vmatprep.mubr.bf16.mxu0 0
    %5385 = vmatmul.mubr.bf16.gmra.mrb[0].mxu0 %v4896
    %v5386 = vpop.f32.mrb[0].mxu0
    %v5387 = vadd.f32 0.0, %v5386
    %v5388 = vpop.f32.mrb[0].mxu0
    %v5389 = vpop.f32.mrb[0].mxu0
    %v5390 = vadd.f32 0.0, %v5389
    %v5391 = vpop.f32.mrb[0].mxu0
    %5392 = vdwg.mxu0
    %v5393 = vmul.f32 %v3680, %v5220
    %v5394 = vmul.f32 %v3682, %v5222
    %v5395 = vmul.f32 %v3822, %v5273
    %v5396 = vmul.f32 %v3824, %v5275
    %v5397 = vmul.f32 %v3964, %v5326
    %v5398 = vmul.f32 %v3966, %v5328
    %v5399 = vmul.f32 %v4098, %v5379
    %v5400 = vlaneseq
    %v5401 = vshrl.u32 %v5400, 7
    %v5402 = vsub.s32 0, %v5401
    %v5403 = vrot.slane %v90, %v5402
    %v5404 = vlaneseq
    %v5405 = vshrl.u32 %v5404, 7
    %v5406 = vsub.s32 0, %v5405
    %v5407 = vrot.slane %v91, %v5406
    %v5408 = vlaneseq
    %v5409 = vshrl.u32 %v5408, 7
    %v5410 = vsub.s32 0, %v5409
    %v5411 = vrot.slane %v92, %v5410
    %v5412 = vlaneseq
    %v5413 = vshrl.u32 %v5412, 7
    %v5414 = vsub.s32 0, %v5413
    %v5415 = vrot.slane %v93, %v5414
    %v5416 = vlaneseq
    %v5417 = vshrl.u32 %v5416, 7
    %v5418 = vsub.s32 0, %v5417
    %v5419 = vrot.slane %v94, %v5418
    %v5420 = vlaneseq
    %v5421 = vshrl.u32 %v5420, 7
    %v5422 = vsub.s32 0, %v5421
    %v5423 = vrot.slane %v95, %v5422
    %v5424 = vlaneseq
    %v5425 = vshrl.u32 %v5424, 7
    %v5426 = vsub.s32 0, %v5425
    %v5427 = vrot.slane %v96, %v5426
    %v5428 = vmul.f32 %v5393, %v5403
    %v5429 = vmul.f32 %v5394, %v5407
    %v5430 = vmul.f32 %v5395, %v5411
    %v5431 = vmul.f32 %v5396, %v5415
    %v5432 = vmul.f32 %v5397, %v5419
    %v5433 = vmul.f32 %v5398, %v5423
    %v5434 = vmul.f32 %v5399, %v5427
    %v5435 = vmul.f32 %v3696, 0.57735026
    %v5436 = vmul.f32 %v3698, 0.57735026
    %v5437 = vmul.f32 %v3838, 0.57735026
    %v5438 = vmul.f32 %v3840, 0.57735026
    %v5439 = vmul.f32 %v3980, 0.57735026
    %v5440 = vmul.f32 %v3982, 0.57735026
    %v5441 = vmul.f32 %v4111, 0.57735026
    %v5442 = vlaneseq
    %v5443 = vshrl.u32 %v5442, 7
    %v5444 = vsub.s32 1, %v5443
    %v5445 = vrot.slane %v90, %v5444
    %v5446 = vlaneseq
    %v5447 = vshrl.u32 %v5446, 7
    %v5448 = vsub.s32 1, %v5447
    %v5449 = vrot.slane %v91, %v5448
    %v5450 = vlaneseq
    %v5451 = vshrl.u32 %v5450, 7
    %v5452 = vsub.s32 1, %v5451
    %v5453 = vrot.slane %v92, %v5452
    %v5454 = vlaneseq
    %v5455 = vshrl.u32 %v5454, 7
    %v5456 = vsub.s32 1, %v5455
    %v5457 = vrot.slane %v93, %v5456
    %v5458 = vlaneseq
    %v5459 = vshrl.u32 %v5458, 7
    %v5460 = vsub.s32 1, %v5459
    %v5461 = vrot.slane %v94, %v5460
    %v5462 = vlaneseq
    %v5463 = vshrl.u32 %v5462, 7
    %v5464 = vsub.s32 1, %v5463
    %v5465 = vrot.slane %v95, %v5464
    %v5466 = vlaneseq
    %v5467 = vshrl.u32 %v5466, 7
    %v5468 = vsub.s32 1, %v5467
    %v5469 = vrot.slane %v96, %v5468
    %v5470 = vmul.f32 %v5224, %v5445
    %v5471 = vmul.f32 %v5226, %v5449
    %v5472 = vmul.f32 %v5277, %v5453
    %v5473 = vmul.f32 %v5279, %v5457
    %v5474 = vmul.f32 %v5330, %v5461
    %v5475 = vmul.f32 %v5332, %v5465
    %v5476 = vmul.f32 %v5382, %v5469
    %v5477 = vlaneseq
    %v5478 = vshrl.u32 %v5477, 7
    %v5479 = vsub.s32 2, %v5478
    %v5480 = vrot.slane %v90, %v5479
    %v5481 = vlaneseq
    %v5482 = vshrl.u32 %v5481, 7
    %v5483 = vsub.s32 2, %v5482
    %v5484 = vrot.slane %v91, %v5483
    %v5485 = vlaneseq
    %v5486 = vshrl.u32 %v5485, 7
    %v5487 = vsub.s32 2, %v5486
    %v5488 = vrot.slane %v92, %v5487
    %v5489 = vlaneseq
    %v5490 = vshrl.u32 %v5489, 7
    %v5491 = vsub.s32 2, %v5490
    %v5492 = vrot.slane %v93, %v5491
    %v5493 = vlaneseq
    %v5494 = vshrl.u32 %v5493, 7
    %v5495 = vsub.s32 2, %v5494
    %v5496 = vrot.slane %v94, %v5495
    %v5497 = vlaneseq
    %v5498 = vshrl.u32 %v5497, 7
    %v5499 = vsub.s32 2, %v5498
    %v5500 = vrot.slane %v95, %v5499
    %v5501 = vlaneseq
    %v5502 = vshrl.u32 %v5501, 7
    %v5503 = vsub.s32 2, %v5502
    %v5504 = vrot.slane %v96, %v5503
    %v5505 = vmul.f32 %v5230, %v5480
    %v5506 = vmul.f32 %v5232, %v5484
    %v5507 = vmul.f32 %v5283, %v5488
    %v5508 = vmul.f32 %v5285, %v5492
    %v5509 = vmul.f32 %v5336, %v5496
    %v5510 = vmul.f32 %v5338, %v5500
    %v5511 = vmul.f32 %v5387, %v5504
    %v5512 = vadd.f32 %v5470, %v5505
    %v5513 = vadd.f32 %v5471, %v5506
    %v5514 = vadd.f32 %v5472, %v5507
    %v5515 = vadd.f32 %v5473, %v5508
    %v5516 = vadd.f32 %v5474, %v5509
    %v5517 = vadd.f32 %v5475, %v5510
    %v5518 = vadd.f32 %v5476, %v5511
    %v5519 = vlaneseq
    %v5520 = vshrl.u32 %v5519, 7
    %v5521 = vsub.s32 3, %v5520
    %v5522 = vrot.slane %v90, %v5521
    %v5523 = vlaneseq
    %v5524 = vshrl.u32 %v5523, 7
    %v5525 = vsub.s32 3, %v5524
    %v5526 = vrot.slane %v91, %v5525
    %v5527 = vlaneseq
    %v5528 = vshrl.u32 %v5527, 7
    %v5529 = vsub.s32 3, %v5528
    %v5530 = vrot.slane %v92, %v5529
    %v5531 = vlaneseq
    %v5532 = vshrl.u32 %v5531, 7
    %v5533 = vsub.s32 3, %v5532
    %v5534 = vrot.slane %v93, %v5533
    %v5535 = vlaneseq
    %v5536 = vshrl.u32 %v5535, 7
    %v5537 = vsub.s32 3, %v5536
    %v5538 = vrot.slane %v94, %v5537
    %v5539 = vlaneseq
    %v5540 = vshrl.u32 %v5539, 7
    %v5541 = vsub.s32 3, %v5540
    %v5542 = vrot.slane %v95, %v5541
    %v5543 = vlaneseq
    %v5544 = vshrl.u32 %v5543, 7
    %v5545 = vsub.s32 3, %v5544
    %v5546 = vrot.slane %v96, %v5545
    %v5547 = vmul.f32 %v5234, %v5522
    %v5548 = vmul.f32 %v5236, %v5526
    %v5549 = vmul.f32 %v5287, %v5530
    %v5550 = vmul.f32 %v5289, %v5534
    %v5551 = vmul.f32 %v5340, %v5538
    %v5552 = vmul.f32 %v5342, %v5542
    %v5553 = vmul.f32 %v5390, %v5546
    %v5554 = vadd.f32 %v5512, %v5547
    %v5555 = vadd.f32 %v5513, %v5548
    %v5556 = vadd.f32 %v5514, %v5549
    %v5557 = vadd.f32 %v5515, %v5550
    %v5558 = vadd.f32 %v5516, %v5551
    %v5559 = vadd.f32 %v5517, %v5552
    %v5560 = vadd.f32 %v5518, %v5553
    %v5561 = vmul.f32 %v5435, %v5554
    %v5562 = vmul.f32 %v5436, %v5555
    %v5563 = vmul.f32 %v5437, %v5556
    %v5564 = vmul.f32 %v5438, %v5557
    %v5565 = vmul.f32 %v5439, %v5558
    %v5566 = vmul.f32 %v5440, %v5559
    %v5567 = vmul.f32 %v5441, %v5560
    %v5568 = vmul.f32 %v3686, %v5220
    %v5569 = vmul.f32 %v3688, %v5222
    %v5570 = vmul.f32 %v3828, %v5273
    %v5571 = vmul.f32 %v3830, %v5275
    %v5572 = vmul.f32 %v3970, %v5326
    %v5573 = vmul.f32 %v3972, %v5328
    %v5574 = vmul.f32 %v4103, %v5379
    %v5575 = vmul.f32 %v3690, %v5403
    %v5576 = vmul.f32 %v3692, %v5407
    %v5577 = vmul.f32 %v3832, %v5411
    %v5578 = vmul.f32 %v3834, %v5415
    %v5579 = vmul.f32 %v3974, %v5419
    %v5580 = vmul.f32 %v3976, %v5423
    %v5581 = vmul.f32 %v4106, %v5427
    %v5582 = vpack.c.bf16 %v5561, %v5428
    %v5583 = vpack.c.bf16 %v5562, %v5429
    %v5584 = vpack.c.bf16 %v5563, %v5430
    %v5585 = vpack.c.bf16 %v5564, %v5431
    %v5586 = vpack.c.bf16 %v5565, %v5432
    %v5587 = vpack.c.bf16 %v5566, %v5433
    %v5588 = vpack.c.bf16 %v5567, %v5434
    %5589 = vst [vmem:[#allocation2] sm:$0xff] %v5582
    %5590 = vst [vmem:[#allocation2 + $0x8] sm:$0xff] %v5583
    %5591 = vst [vmem:[#allocation2 + $0x10] sm:$0xff] %v5584
    %5592 = vst [vmem:[#allocation2 + $0x18] sm:$0xff] %v5585
    %5593 = vst [vmem:[#allocation2 + $0x20] sm:$0xff] %v5586
    %5594 = vst [vmem:[#allocation2 + $0x28] sm:$0xff] %v5587
    %5595 = vst [vmem:[#allocation2 + $0x30] sm:$0xff] %v5588
    %v5596 = vmul.f32 %v5568, %v5445
    %v5597 = vmul.f32 %v5569, %v5449
    %v5598 = vmul.f32 %v5570, %v5453
    %v5599 = vmul.f32 %v5571, %v5457
    %v5600 = vmul.f32 %v5572, %v5461
    %v5601 = vmul.f32 %v5573, %v5465
    %v5602 = vmul.f32 %v5574, %v5469
    %v5603 = vmul.f32 %v5575, %v5224
    %v5604 = vmul.f32 %v5576, %v5226
    %v5605 = vmul.f32 %v5577, %v5277
    %v5606 = vmul.f32 %v5578, %v5279
    %v5607 = vmul.f32 %v5579, %v5330
    %v5608 = vmul.f32 %v5580, %v5332
    %v5609 = vmul.f32 %v5581, %v5382
    %v5610 = vpack.c.bf16 %v5603, %v5596
    %v5611 = vpack.c.bf16 %v5604, %v5597
    %v5612 = vpack.c.bf16 %v5605, %v5598
    %v5613 = vpack.c.bf16 %v5606, %v5599
    %v5614 = vpack.c.bf16 %v5607, %v5600
    %v5615 = vpack.c.bf16 %v5608, %v5601
    %v5616 = vpack.c.bf16 %v5609, %v5602
    %5617 = vst [vmem:[#allocation2 + $0x38] sm:$0xff] %v5610
    %5618 = vst [vmem:[#allocation2 + $0x40] sm:$0xff] %v5611
    %5619 = vst [vmem:[#allocation2 + $0x48] sm:$0xff] %v5612
    %5620 = vst [vmem:[#allocation2 + $0x50] sm:$0xff] %v5613
    %5621 = vst [vmem:[#allocation2 + $0x58] sm:$0xff] %v5614
    %5622 = vst [vmem:[#allocation2 + $0x60] sm:$0xff] %v5615
    %5623 = vst [vmem:[#allocation2 + $0x68] sm:$0xff] %v5616
    %v5624 = vmul.f32 %v5568, %v5480
    %v5625 = vmul.f32 %v5569, %v5484
    %v5626 = vmul.f32 %v5570, %v5488
    %v5627 = vmul.f32 %v5571, %v5492
    %v5628 = vmul.f32 %v5572, %v5496
    %v5629 = vmul.f32 %v5573, %v5500
    %v5630 = vmul.f32 %v5574, %v5504
    %v5631 = vmul.f32 %v5575, %v5230
    %v5632 = vmul.f32 %v5576, %v5232
    %v5633 = vmul.f32 %v5577, %v5283
    %v5634 = vmul.f32 %v5578, %v5285
    %v5635 = vmul.f32 %v5579, %v5336
    %v5636 = vmul.f32 %v5580, %v5338
    %v5637 = vmul.f32 %v5581, %v5387
    %v5638 = vpack.c.bf16 %v5631, %v5624
    %v5639 = vpack.c.bf16 %v5632, %v5625
    %v5640 = vpack.c.bf16 %v5633, %v5626
    %v5641 = vpack.c.bf16 %v5634, %v5627
    %v5642 = vpack.c.bf16 %v5635, %v5628
    %v5643 = vpack.c.bf16 %v5636, %v5629
    %v5644 = vpack.c.bf16 %v5637, %v5630
    %5645 = vst [vmem:[#allocation2 + $0x70] sm:$0xff] %v5638
    %5646 = vst [vmem:[#allocation2 + $0x78] sm:$0xff] %v5639
    %5647 = vst [vmem:[#allocation2 + $0x80] sm:$0xff] %v5640
    %5648 = vst [vmem:[#allocation2 + $0x88] sm:$0xff] %v5641
    %5649 = vst [vmem:[#allocation2 + $0x90] sm:$0xff] %v5642
    %5650 = vst [vmem:[#allocation2 + $0x98] sm:$0xff] %v5643
    %5651 = vst [vmem:[#allocation2 + $0xa0] sm:$0xff] %v5644
    %v5652 = vmul.f32 %v5568, %v5522
    %v5653 = vmul.f32 %v5569, %v5526
    %v5654 = vmul.f32 %v5570, %v5530
    %v5655 = vmul.f32 %v5571, %v5534
    %v5656 = vmul.f32 %v5572, %v5538
    %v5657 = vmul.f32 %v5573, %v5542
    %v5658 = vmul.f32 %v5574, %v5546
    %v5659 = vmul.f32 %v5575, %v5234
    %v5660 = vmul.f32 %v5576, %v5236
    %v5661 = vmul.f32 %v5577, %v5287
    %v5662 = vmul.f32 %v5578, %v5289
    %v5663 = vmul.f32 %v5579, %v5340
    %v5664 = vmul.f32 %v5580, %v5342
    %v5665 = vmul.f32 %v5581, %v5390
    %v5666 = vpack.c.bf16 %v5659, %v5652
    %v5667 = vpack.c.bf16 %v5660, %v5653
    %v5668 = vpack.c.bf16 %v5661, %v5654
    %v5669 = vpack.c.bf16 %v5662, %v5655
    %v5670 = vpack.c.bf16 %v5663, %v5656
    %v5671 = vpack.c.bf16 %v5664, %v5657
    %v5672 = vpack.c.bf16 %v5665, %v5658
    %5673 = vst [vmem:[#allocation2 + $0xa8] sm:$0xff] %v5666
    %5674 = vst [vmem:[#allocation2 + $0xb0] sm:$0xff] %v5667
    %5675 = vst [vmem:[#allocation2 + $0xb8] sm:$0xff] %v5668
    %5676 = vst [vmem:[#allocation2 + $0xc0] sm:$0xff] %v5669
    %5677 = vst [vmem:[#allocation2 + $0xc8] sm:$0xff] %v5670
    %5678 = vst [vmem:[#allocation2 + $0xd0] sm:$0xff] %v5671
    %5679 = vst [vmem:[#allocation2 + $0xd8] sm:$0xff] %v5672
    %v5680 = vld [vmem:[#allocation2] sm:$0xff]
    %v5681 = vld [vmem:[#allocation2 + $0x8] sm:$0xff]
    %v5682 = vld [vmem:[#allocation2 + $0x10] sm:$0xff]
    %v5683 = vld [vmem:[#allocation2 + $0x18] sm:$0xff]
    %v5684 = vld [vmem:[#allocation2 + $0x20] sm:$0xff]
    %v5685 = vld [vmem:[#allocation2 + $0x28] sm:$0xff]
    %v5686 = vld [vmem:[#allocation2 + $0x30] sm:$0xff]
    %v5687 = vld [vmem:[#allocation2 + $0x38] sm:$0xff]
    %v5688 = vld [vmem:[#allocation2 + $0x40] sm:$0xff]
    %v5689 = vld [vmem:[#allocation2 + $0x48] sm:$0xff]
    %v5690 = vld [vmem:[#allocation2 + $0x50] sm:$0xff]
    %v5691 = vld [vmem:[#allocation2 + $0x58] sm:$0xff]
    %v5692 = vld [vmem:[#allocation2 + $0x60] sm:$0xff]
    %v5693 = vld [vmem:[#allocation2 + $0x68] sm:$0xff]
    %v5694 = vld [vmem:[#allocation2 + $0x70] sm:$0xff]
    %v5695 = vld [vmem:[#allocation2 + $0x78] sm:$0xff]
    %v5696 = vld [vmem:[#allocation2 + $0x80] sm:$0xff]
    %v5697 = vld [vmem:[#allocation2 + $0x88] sm:$0xff]
    %v5698 = vld [vmem:[#allocation2 + $0x90] sm:$0xff]
    %v5699 = vld [vmem:[#allocation2 + $0x98] sm:$0xff]
    %v5700 = vld [vmem:[#allocation2 + $0xa0] sm:$0xff]
    %v5701 = vld [vmem:[#allocation2 + $0xa8] sm:$0xff]
    %v5702 = vld [vmem:[#allocation2 + $0xb0] sm:$0xff]
    %v5703 = vld [vmem:[#allocation2 + $0xb8] sm:$0xff]
    %v5704 = vld [vmem:[#allocation2 + $0xc0] sm:$0xff]
    %v5705 = vld [vmem:[#allocation2 + $0xc8] sm:$0xff]
    %v5706 = vld [vmem:[#allocation2 + $0xd0] sm:$0xff]
    %v5707 = vld [vmem:[#allocation2 + $0xd8] sm:$0xff]
    %5708 = vmatprep.subr.bf16.mxu0 0
    %5709 = vmatpush1.bf16.msra.mxu0 %v4440
    %5710 = vmatprep.subr.bf16.mxu0 0
    %5711 = vmatpush1.bf16.msra.mxu0 %v4441
    %5712 = vmatprep.subr.bf16.mxu0 0
    %5713 = vmatpush1.bf16.msra.mxu0 %v4442
    %5714 = vmatprep.subr.bf16.mxu0 0
    %5715 = vmatpush1.bf16.msra.mxu0 %v4443
    %5716 = vmatprep.subr.bf16.mxu0 0
    %5717 = vmatpush1.bf16.msra.mxu0 %v4444
    %5718 = vmatprep.subr.bf16.mxu0 0
    %5719 = vmatpush1.bf16.msra.mxu0 %v4445
    %5720 = vmatprep.subr.bf16.mxu0 0
    %5721 = vmatpush1.bf16.msra.mxu0 %v4446
    %5722 = vmatprep.subr.bf16.mxu0 0
    %5723 = vmatpush1.bf16.msra.mxu0 %v4447
    %5724 = vmatprep.subr.bf16.mxu0 0
    %5725 = vmatpush1.bf16.msra.mxu0 %v4448
    %5726 = vmatprep.subr.bf16.mxu0 0
    %5727 = vmatpush1.bf16.msra.mxu0 %v4449
    %5728 = vmatprep.subr.bf16.mxu0 0
    %5729 = vmatpush1.bf16.msra.mxu0 %v4450
    %5730 = vmatprep.subr.bf16.mxu0 0
    %5731 = vmatpush1.bf16.msra.mxu0 %v4451
    %5732 = vmatprep.subr.bf16.mxu0 0
    %5733 = vmatpush1.bf16.msra.mxu0 %v4452
    %5734 = vmatprep.subr.bf16.mxu0 0
    %5735 = vmatpush1.bf16.msra.mxu0 %v4453
    %5736 = vmatprep.subr.bf16.mxu0 0
    %5737 = vmatpush1.bf16.msra.mxu0 %v4454
    %5738 = vmatprep.subr.bf16.mxu0 0
    %5739 = vmatpush1.bf16.msra.mxu0 %v4455
    %5740 = vmatprep.mubr.bf16.mxu0 %v5681
    %5741 = vmatmul.mubr.bf16.gmra.mrb[0].mxu0 %v5680
    %v5742 = vpop.f32.mrb[0].mxu0
    %v5743 = vadd.f32 0.0, %v5742
    %v5744 = vpop.f32.mrb[0].mxu0
    %v5745 = vpop.f32.mrb[0].mxu0
    %v5746 = vadd.f32 0.0, %v5745
    %v5747 = vpop.f32.mrb[0].mxu0
    %5748 = vmatprep.mubr.bf16.mxu0 %v5688
    %5749 = vmatmul.mubr.bf16.gmra.mrb[0].mxu0 %v5687
    %v5750 = vpop.f32.mrb[0].mxu0
    %v5751 = vadd.f32 0.0, %v5750
    %v5752 = vpop.f32.mrb[0].mxu0
    %v5753 = vpop.f32.mrb[0].mxu0
    %v5754 = vadd.f32 0.0, %v5753
    %v5755 = vpop.f32.mrb[0].mxu0
    %5756 = vmatprep.mubr.bf16.mxu0 %v5695
    %5757 = vmatmul.mubr.bf16.gmra.mrb[0].mxu0 %v5694
    %v5758 = vpop.f32.mrb[0].mxu0
    %v5759 = vadd.f32 0.0, %v5758
    %v5760 = vpop.f32.mrb[0].mxu0
    %v5761 = vpop.f32.mrb[0].mxu0
    %v5762 = vadd.f32 0.0, %v5761
    %v5763 = vpop.f32.mrb[0].mxu0
    %5764 = vmatprep.mubr.bf16.mxu0 %v5702
    %5765 = vmatmul.mubr.bf16.gmra.mrb[0].mxu0 %v5701
    %v5766 = vpop.f32.mrb[0].mxu0
    %v5767 = vadd.f32 0.0, %v5766
    %v5768 = vpop.f32.mrb[0].mxu0
    %v5769 = vpop.f32.mrb[0].mxu0
    %v5770 = vadd.f32 0.0, %v5769
    %v5771 = vpop.f32.mrb[0].mxu0
    %5772 = vdwg.mxu0
    %5773 = vmatprep.subr.bf16.mxu0 0
    %5774 = vmatpush1.bf16.msra.mxu0 %v4456
    %5775 = vmatprep.subr.bf16.mxu0 0
    %5776 = vmatpush1.bf16.msra.mxu0 %v4457
    %5777 = vmatprep.subr.bf16.mxu0 0
    %5778 = vmatpush1.bf16.msra.mxu0 %v4458
    %5779 = vmatprep.subr.bf16.mxu0 0
    %5780 = vmatpush1.bf16.msra.mxu0 %v4459
    %5781 = vmatprep.subr.bf16.mxu0 0
    %5782 = vmatpush1.bf16.msra.mxu0 %v4460
    %5783 = vmatprep.subr.bf16.mxu0 0
    %5784 = vmatpush1.bf16.msra.mxu0 %v4461
    %5785 = vmatprep.subr.bf16.mxu0 0
    %5786 = vmatpush1.bf16.msra.mxu0 %v4462
    %5787 = vmatprep.subr.bf16.mxu0 0
    %5788 = vmatpush1.bf16.msra.mxu0 %v4463
    %5789 = vmatprep.subr.bf16.mxu0 0
    %5790 = vmatpush1.bf16.msra.mxu0 %v4464
    %5791 = vmatprep.subr.bf16.mxu0 0
    %5792 = vmatpush1.bf16.msra.mxu0 %v4465
    %5793 = vmatprep.subr.bf16.mxu0 0
    %5794 = vmatpush1.bf16.msra.mxu0 %v4466
    %5795 = vmatprep.subr.bf16.mxu0 0
    %5796 = vmatpush1.bf16.msra.mxu0 %v4467
    %5797 = vmatprep.subr.bf16.mxu0 0
    %5798 = vmatpush1.bf16.msra.mxu0 %v4468
    %5799 = vmatprep.subr.bf16.mxu0 0
    %5800 = vmatpush1.bf16.msra.mxu0 %v4469
    %5801 = vmatprep.subr.bf16.mxu0 0
    %5802 = vmatpush1.bf16.msra.mxu0 %v4470
    %5803 = vmatprep.subr.bf16.mxu0 0
    %5804 = vmatpush1.bf16.msra.mxu0 %v4471
    %5805 = vmatprep.mubr.bf16.mxu0 %v5683
    %5806 = vmatmul.mubr.bf16.gmra.mrb[0].mxu0 %v5682
    %v5807 = vpop.f32.mrb[0].mxu0
    %v5808 = vadd.f32 %v5743, %v5807
    %v5809 = vpop.f32.mrb[0].mxu0
    %v5810 = vpop.f32.mrb[0].mxu0
    %v5811 = vadd.f32 %v5746, %v5810
    %v5812 = vpop.f32.mrb[0].mxu0
    %5813 = vmatprep.mubr.bf16.mxu0 %v5690
    %5814 = vmatmul.mubr.bf16.gmra.mrb[0].mxu0 %v5689
    %v5815 = vpop.f32.mrb[0].mxu0
    %v5816 = vadd.f32 %v5751, %v5815
    %v5817 = vpop.f32.mrb[0].mxu0
    %v5818 = vpop.f32.mrb[0].mxu0
    %v5819 = vadd.f32 %v5754, %v5818
    %v5820 = vpop.f32.mrb[0].mxu0
    %5821 = vmatprep.mubr.bf16.mxu0 %v5697
    %5822 = vmatmul.mubr.bf16.gmra.mrb[0].mxu0 %v5696
    %v5823 = vpop.f32.mrb[0].mxu0
    %v5824 = vadd.f32 %v5759, %v5823
    %v5825 = vpop.f32.mrb[0].mxu0
    %v5826 = vpop.f32.mrb[0].mxu0
    %v5827 = vadd.f32 %v5762, %v5826
    %v5828 = vpop.f32.mrb[0].mxu0
    %5829 = vmatprep.mubr.bf16.mxu0 %v5704
    %5830 = vmatmul.mubr.bf16.gmra.mrb[0].mxu0 %v5703
    %v5831 = vpop.f32.mrb[0].mxu0
    %v5832 = vadd.f32 %v5767, %v5831
    %v5833 = vpop.f32.mrb[0].mxu0
    %v5834 = vpop.f32.mrb[0].mxu0
    %v5835 = vadd.f32 %v5770, %v5834
    %v5836 = vpop.f32.mrb[0].mxu0
    %5837 = vdwg.mxu0
    %5838 = vmatprep.subr.bf16.mxu0 0
    %5839 = vmatpush1.bf16.msra.mxu0 %v4472
    %5840 = vmatprep.subr.bf16.mxu0 0
    %5841 = vmatpush1.bf16.msra.mxu0 %v4473
    %5842 = vmatprep.subr.bf16.mxu0 0
    %5843 = vmatpush1.bf16.msra.mxu0 %v4474
    %5844 = vmatprep.subr.bf16.mxu0 0
    %5845 = vmatpush1.bf16.msra.mxu0 %v4475
    %5846 = vmatprep.subr.bf16.mxu0 0
    %5847 = vmatpush1.bf16.msra.mxu0 %v4476
    %5848 = vmatprep.subr.bf16.mxu0 0
    %5849 = vmatpush1.bf16.msra.mxu0 %v4477
    %5850 = vmatprep.subr.bf16.mxu0 0
    %5851 = vmatpush1.bf16.msra.mxu0 %v4478
    %5852 = vmatprep.subr.bf16.mxu0 0
    %5853 = vmatpush1.bf16.msra.mxu0 %v4479
    %5854 = vmatprep.subr.bf16.mxu0 0
    %5855 = vmatpush1.bf16.msra.mxu0 %v4480
    %5856 = vmatprep.subr.bf16.mxu0 0
    %5857 = vmatpush1.bf16.msra.mxu0 %v4481
    %5858 = vmatprep.subr.bf16.mxu0 0
    %5859 = vmatpush1.bf16.msra.mxu0 %v4482
    %5860 = vmatprep.subr.bf16.mxu0 0
    %5861 = vmatpush1.bf16.msra.mxu0 %v4483
    %5862 = vmatprep.subr.bf16.mxu0 0
    %5863 = vmatpush1.bf16.msra.mxu0 %v4484
    %5864 = vmatprep.subr.bf16.mxu0 0
    %5865 = vmatpush1.bf16.msra.mxu0 %v4485
    %5866 = vmatprep.subr.bf16.mxu0 0
    %5867 = vmatpush1.bf16.msra.mxu0 %v4486
    %5868 = vmatprep.subr.bf16.mxu0 0
    %5869 = vmatpush1.bf16.msra.mxu0 %v4487
    %5870 = vmatprep.mubr.bf16.mxu0 %v5685
    %5871 = vmatmul.mubr.bf16.gmra.mrb[0].mxu0 %v5684
    %v5872 = vpop.f32.mrb[0].mxu0
    %v5873 = vadd.f32 %v5808, %v5872
    %v5874 = vpop.f32.mrb[0].mxu0
    %v5875 = vpop.f32.mrb[0].mxu0
    %v5876 = vadd.f32 %v5811, %v5875
    %v5877 = vpop.f32.mrb[0].mxu0
    %5878 = vmatprep.mubr.bf16.mxu0 %v5692
    %5879 = vmatmul.mubr.bf16.gmra.mrb[0].mxu0 %v5691
    %v5880 = vpop.f32.mrb[0].mxu0
    %v5881 = vadd.f32 %v5816, %v5880
    %v5882 = vpop.f32.mrb[0].mxu0
    %v5883 = vpop.f32.mrb[0].mxu0
    %v5884 = vadd.f32 %v5819, %v5883
    %v5885 = vpop.f32.mrb[0].mxu0
    %5886 = vmatprep.mubr.bf16.mxu0 %v5699
    %5887 = vmatmul.mubr.bf16.gmra.mrb[0].mxu0 %v5698
    %v5888 = vpop.f32.mrb[0].mxu0
    %v5889 = vadd.f32 %v5824, %v5888
    %v5890 = vpop.f32.mrb[0].mxu0
    %v5891 = vpop.f32.mrb[0].mxu0
    %v5892 = vadd.f32 %v5827, %v5891
    %v5893 = vpop.f32.mrb[0].mxu0
    %5894 = vmatprep.mubr.bf16.mxu0 %v5706
    %5895 = vmatmul.mubr.bf16.gmra.mrb[0].mxu0 %v5705
    %v5896 = vpop.f32.mrb[0].mxu0
    %v5897 = vadd.f32 %v5832, %v5896
    %v5898 = vpop.f32.mrb[0].mxu0
    %v5899 = vpop.f32.mrb[0].mxu0
    %v5900 = vadd.f32 %v5835, %v5899
    %v5901 = vpop.f32.mrb[0].mxu0
    %5902 = vdwg.mxu0
    %5903 = vmatprep.subr.bf16.mxu0 0
    %5904 = vmatpush1.bf16.msra.mxu0 %v4488
    %5905 = vmatprep.subr.bf16.mxu0 0
    %5906 = vmatpush1.bf16.msra.mxu0 %v4489
    %5907 = vmatprep.subr.bf16.mxu0 0
    %5908 = vmatpush1.bf16.msra.mxu0 %v4490
    %5909 = vmatprep.subr.bf16.mxu0 0
    %5910 = vmatpush1.bf16.msra.mxu0 %v4491
    %5911 = vmatprep.subr.bf16.mxu0 0
    %5912 = vmatpush1.bf16.msra.mxu0 %v4492
    %5913 = vmatprep.subr.bf16.mxu0 0
    %5914 = vmatpush1.bf16.msra.mxu0 %v4493
    %5915 = vmatprep.subr.bf16.mxu0 0
    %5916 = vmatpush1.bf16.msra.mxu0 %v4494
    %5917 = vmatprep.subr.bf16.mxu0 0
    %5918 = vmatpush1.bf16.msra.mxu0 %v4495
    %5919 = vmatprep.subr.bf16.mxu0 0
    %5920 = vmatpush1.bf16.msra.mxu0 0
    %5921 = vmatprep.subr.bf16.mxu0 0
    %5922 = vmatpush1.bf16.msra.mxu0 0
    %5923 = vmatprep.subr.bf16.mxu0 0
    %5924 = vmatpush1.bf16.msra.mxu0 0
    %5925 = vmatprep.subr.bf16.mxu0 0
    %5926 = vmatpush1.bf16.msra.mxu0 0
    %5927 = vmatprep.subr.bf16.mxu0 0
    %5928 = vmatpush1.bf16.msra.mxu0 0
    %5929 = vmatprep.subr.bf16.mxu0 0
    %5930 = vmatpush1.bf16.msra.mxu0 0
    %5931 = vmatprep.subr.bf16.mxu0 0
    %5932 = vmatpush1.bf16.msra.mxu0 0
    %5933 = vmatprep.subr.bf16.mxu0 0
    %5934 = vmatpush1.bf16.msra.mxu0 0
    %5935 = vmatprep.mubr.bf16.mxu0 0
    %5936 = vmatmul.mubr.bf16.gmra.mrb[0].mxu0 %v5686
    %v5937 = vpop.f32.mrb[0].mxu0
    %v5938 = vadd.f32 %v5873, %v5937
    %v5939 = vpop.f32.mrb[0].mxu0
    %v5940 = vpop.f32.mrb[0].mxu0
    %v5941 = vadd.f32 %v5876, %v5940
    %v5942 = vpop.f32.mrb[0].mxu0
    %5943 = vmatprep.mubr.bf16.mxu0 0
    %5944 = vmatmul.mubr.bf16.gmra.mrb[0].mxu0 %v5693
    %v5945 = vpop.f32.mrb[0].mxu0
    %v5946 = vadd.f32 %v5881, %v5945
    %v5947 = vpop.f32.mrb[0].mxu0
    %v5948 = vpop.f32.mrb[0].mxu0
    %v5949 = vadd.f32 %v5884, %v5948
    %v5950 = vpop.f32.mrb[0].mxu0
    %5951 = vmatprep.mubr.bf16.mxu0 0
    %5952 = vmatmul.mubr.bf16.gmra.mrb[0].mxu0 %v5700
    %v5953 = vpop.f32.mrb[0].mxu0
    %v5954 = vadd.f32 %v5889, %v5953
    %v5955 = vpop.f32.mrb[0].mxu0
    %v5956 = vpop.f32.mrb[0].mxu0
    %v5957 = vadd.f32 %v5892, %v5956
    %v5958 = vpop.f32.mrb[0].mxu0
    %5959 = vmatprep.mubr.bf16.mxu0 0
    %5960 = vmatmul.mubr.bf16.gmra.mrb[0].mxu0 %v5707
    %v5961 = vpop.f32.mrb[0].mxu0
    %v5962 = vadd.f32 %v5897, %v5961
    %v5963 = vpop.f32.mrb[0].mxu0
    %v5964 = vpop.f32.mrb[0].mxu0
    %v5965 = vadd.f32 %v5900, %v5964
    %v5966 = vpop.f32.mrb[0].mxu0
    %5967 = vdwg.mxu0
    %v5968 = vld [vmem:[%s12] sm:$0xf]
    %v5969 = vld [vmem:[%s12 + $0x4] sm:$0xf]
    %v5970 = vld [vmem:[%s12 + $0x8] sm:$0xf]
    %v5971 = vld [vmem:[%s12 + $0xc] sm:$0xf]
    %v5972 = vld [vmem:[%s12 + $0x10] sm:$0xf]
    %v5973 = vpack.c.bf16 %v5941, %v5938
    %v5974 = vpack.c.bf16 %v5949, %v5946
    %v5975 = vpack.c.bf16 %v5957, %v5954
    %v5976 = vpack.c.bf16 %v5965, %v5962
    %v5982 = vunpack.c.l.b16 %v5968
    %v5983 = vunpack.c.l.b16 %v5969
    %v5984 = vunpack.c.l.b16 %v5970
    %v5985 = vunpack.c.l.b16 %v5971
    %v5986 = vunpack.c.l.b16 %v5972
    %v5987 = vpack.c.b16 %v5983, %v5982
    %v5988 = vpack.c.b16 %v5985, %v5984
    %v5989 = vpack.c.b16 %v5986, %v5986
    %vm5990 = vcmask 523264
    %v5992 = vsel %vm5990, %v5987, 0
    %v5995 = vsel %vm5990, %v5988, 0
    %v5998 = vsel %vm5990, %v5989, 0
    %6000 = vmatprep.subr.bf16.mxu0 0
    %6001 = vmatpush1.bf16.msra.mxu0 %v5973
    %6002 = vmatprep.subr.bf16.mxu0 0
    %6003 = vmatpush1.bf16.msra.mxu0 %v5974
    %6004 = vmatprep.subr.bf16.mxu0 0
    %6005 = vmatpush1.bf16.msra.mxu0 %v5975
    %6006 = vmatprep.subr.bf16.mxu0 0
    %6007 = vmatpush1.bf16.msra.mxu0 %v5976
    %6008 = vmatprep.subr.bf16.mxu0 0
    %6009 = vmatpush1.bf16.msra.mxu0 0
    %6010 = vmatprep.subr.bf16.mxu0 0
    %6011 = vmatpush1.bf16.msra.mxu0 0
    %6012 = vmatprep.subr.bf16.mxu0 0
    %6013 = vmatpush1.bf16.msra.mxu0 0
    %6014 = vmatprep.subr.bf16.mxu0 0
    %6015 = vmatpush1.bf16.msra.mxu0 0
    %6016 = vmatprep.subr.bf16.mxu0 0
    %6017 = vmatpush1.bf16.msra.mxu0 0
    %6018 = vmatprep.subr.bf16.mxu0 0
    %6019 = vmatpush1.bf16.msra.mxu0 0
    %6020 = vmatprep.subr.bf16.mxu0 0
    %6021 = vmatpush1.bf16.msra.mxu0 0
    %6022 = vmatprep.subr.bf16.mxu0 0
    %6023 = vmatpush1.bf16.msra.mxu0 0
    %6024 = vmatprep.subr.bf16.mxu0 0
    %6025 = vmatpush1.bf16.msra.mxu0 0
    %6026 = vmatprep.subr.bf16.mxu0 0
    %6027 = vmatpush1.bf16.msra.mxu0 0
    %6028 = vmatprep.subr.bf16.mxu0 0
    %6029 = vmatpush1.bf16.msra.mxu0 0
    %6030 = vmatprep.subr.bf16.mxu0 0
    %6031 = vmatpush1.bf16.msra.mxu0 0
    %6032 = vmatprep.mubr.bf16.mxu0 0
    %6033 = vmatmul.mubr.bf16.gmra.mrb[0].mxu0 %v5992
    %v6034 = vpop.f32.mrb[0].mxu0
    %v6035 = vadd.f32 0.0, %v6034
    %v6036 = vpop.f32.mrb[0].mxu0
    %v6037 = vpop.f32.mrb[0].mxu0
    %v6038 = vadd.f32 0.0, %v6037
    %v6039 = vpop.f32.mrb[0].mxu0
    %6040 = vmatprep.mubr.bf16.mxu0 0
    %6041 = vmatmul.mubr.bf16.gmra.mrb[0].mxu0 %v5995
    %v6042 = vpop.f32.mrb[0].mxu0
    %v6043 = vadd.f32 0.0, %v6042
    %v6044 = vpop.f32.mrb[0].mxu0
    %v6045 = vpop.f32.mrb[0].mxu0
    %v6046 = vadd.f32 0.0, %v6045
    %v6047 = vpop.f32.mrb[0].mxu0
    %6048 = vmatprep.mubr.bf16.mxu0 0
    %6049 = vmatmul.mubr.bf16.gmra.mrb[0].mxu0 %v5998
    %v6050 = vpop.f32.mrb[0].mxu0
    %v6051 = vadd.f32 0.0, %v6050
    %v6052 = vpop.f32.mrb[0].mxu0
    %v6053 = vpop.f32.mrb[0].mxu0
    %v6054 = vpop.f32.mrb[0].mxu0
    %6055 = vdwg.mxu0
    %v6056 = vmul.f32 %v4858, 0.38268343
    %v6057 = vmul.f32 %v4861, 0.38268343
    %v6058 = vmul.f32 %v6035, 0.9238795
    %v6059 = vmul.f32 %v6038, 0.9238795
    %v6060 = vadd.f32 %v6056, %v6058
    %v6061 = vadd.f32 %v6057, %v6059
    %v6062 = vmul.f32 %v4866, 0.38268343
    %v6063 = vmul.f32 %v6043, 0.9238795
    %v6064 = vadd.f32 %v6062, %v6063
    %v6065 = vmul.f32 %v4869, 0.38268343
    %v6066 = vmul.f32 %v6046, 0.9238795
    %v6067 = vadd.f32 %v6065, %v6066
    %v6068 = vmul.f32 %v4874, 0.38268343
    %v6069 = vmul.f32 %v6051, 0.9238795
    %v6070 = vadd.f32 %v6068, %v6069
    %v6071 = vxor.u32 %v6060, 2147483648
    %v6072 = vmul.f32 %v6071, 1.442695
    %v6073 = vpow.pop %v6072
    %v6074 = vadd.f32 %v6073, 1.0
    %v6075 = vrcp.pop %v6074
    %v6076 = vmul.f32 1.0, %v6075
    %v6077 = vmul.f32 %v6060, %v6076
    %v6078 = vxor.u32 %v6061, 2147483648
    %v6079 = vmul.f32 %v6078, 1.442695
    %v6080 = vpow.pop %v6079
    %v6081 = vadd.f32 %v6080, 1.0
    %v6082 = vrcp.pop %v6081
    %v6083 = vmul.f32 1.0, %v6082
    %v6084 = vmul.f32 %v6083, %v6064
    %v6085 = vmul.f32 %v6083, %v6067
    %v6086 = vmul.f32 %v6083, %v6070
    %v6087 = vld [vmem:[%s13] sm:$0xf]
    %v6088 = vld [vmem:[%s13 + $0x4] sm:$0xf]
    %v6089 = vld [vmem:[%s13 + $0x8] sm:$0xf]
    %v6090 = vld [vmem:[%s13 + $0xc] sm:$0xf]
    %v6091 = vld [vmem:[%s13 + $0x10] sm:$0xf]
    %v6092 = vpack.c.bf16 %v6084, %v6077
    %v6093 = vpack.c.bf16 %v6086, %v6085
    %v6099 = vunpack.c.l.b16 %v6087
    %v6100 = vunpack.c.l.b16 %v6088
    %v6101 = vunpack.c.l.b16 %v6089
    %v6102 = vunpack.c.l.b16 %v6090
    %v6103 = vunpack.c.l.b16 %v6091
    %v6104 = vpack.c.b16 %v6100, %v6099
    %v6105 = vpack.c.b16 %v6102, %v6101
    %v6106 = vpack.c.b16 %v6103, %v6103
    %v6108 = vsel %vm4807, %v6104, 0
    %v6111 = vsel %vm4807, %v6105, 0
    %v6114 = vsel %vm4807, %v6106, 0
    %6116 = vmatprep.subr.bf16.mxu0 0
    %6117 = vmatpush1.bf16.msra.mxu0 %v6092
    %6118 = vmatprep.subr.bf16.mxu0 0
    %6119 = vmatpush1.bf16.msra.mxu0 %v6093
    %6120 = vmatprep.subr.bf16.mxu0 0
    %6121 = vmatpush1.bf16.msra.mxu0 0
    %6122 = vmatprep.subr.bf16.mxu0 0
    %6123 = vmatpush1.bf16.msra.mxu0 0
    %6124 = vmatprep.subr.bf16.mxu0 0
    %6125 = vmatpush1.bf16.msra.mxu0 0
    %6126 = vmatprep.subr.bf16.mxu0 0
    %6127 = vmatpush1.bf16.msra.mxu0 0
    %6128 = vmatprep.subr.bf16.mxu0 0
    %6129 = vmatpush1.bf16.msra.mxu0 0
    %6130 = vmatprep.subr.bf16.mxu0 0
    %6131 = vmatpush1.bf16.msra.mxu0 0
    %6132 = vmatprep.subr.bf16.mxu0 0
    %6133 = vmatpush1.bf16.msra.mxu0 0
    %6134 = vmatprep.subr.bf16.mxu0 0
    %6135 = vmatpush1.bf16.msra.mxu0 0
    %6136 = vmatprep.subr.bf16.mxu0 0
    %6137 = vmatpush1.bf16.msra.mxu0 0
    %6138 = vmatprep.subr.bf16.mxu0 0
    %6139 = vmatpush1.bf16.msra.mxu0 0
    %6140 = vmatprep.subr.bf16.mxu0 0
    %6141 = vmatpush1.bf16.msra.mxu0 0
    %6142 = vmatprep.subr.bf16.mxu0 0
    %6143 = vmatpush1.bf16.msra.mxu0 0
    %6144 = vmatprep.subr.bf16.mxu0 0
    %6145 = vmatpush1.bf16.msra.mxu0 0
    %6146 = vmatprep.subr.bf16.mxu0 0
    %6147 = vmatpush1.bf16.msra.mxu0 0
    %6148 = vmatprep.mubr.bf16.mxu0 0
    %6149 = vmatmul.mubr.bf16.gmra.mrb[0].mxu0 %v6108
    %v6150 = vpop.f32.mrb[0].mxu0
    %v6151 = vadd.f32 0.0, %v6150
    %v6152 = vpop.f32.mrb[0].mxu0
    %v6153 = vpop.f32.mrb[0].mxu0
    %v6154 = vadd.f32 0.0, %v6153
    %v6155 = vpop.f32.mrb[0].mxu0
    %6156 = vmatprep.mubr.bf16.mxu0 0
    %6157 = vmatmul.mubr.bf16.gmra.mrb[0].mxu0 %v6111
    %v6158 = vpop.f32.mrb[0].mxu0
    %v6159 = vadd.f32 0.0, %v6158
    %v6160 = vpop.f32.mrb[0].mxu0
    %v6161 = vpop.f32.mrb[0].mxu0
    %v6162 = vadd.f32 0.0, %v6161
    %v6163 = vpop.f32.mrb[0].mxu0
    %6164 = vmatprep.mubr.bf16.mxu0 0
    %6165 = vmatmul.mubr.bf16.gmra.mrb[0].mxu0 %v6114
    %v6166 = vpop.f32.mrb[0].mxu0
    %v6167 = vadd.f32 0.0, %v6166
    %v6168 = vpop.f32.mrb[0].mxu0
    %v6169 = vpop.f32.mrb[0].mxu0
    %v6170 = vpop.f32.mrb[0].mxu0
    %6171 = vdwg.mxu0
    %v6172 = vpack.c.bf16 %v6159, %v6154
    %v6173 = vpack.c.bf16 %v6167, %v6162
    %6174 = vmatprep.subr.bf16.mxu0 %v5074
    %6175 = vmatpush1.bf16.msra.mxu0 %v5073
    %6176 = vmatprep.subr.bf16.mxu0 %v5081
    %6177 = vmatpush1.bf16.msra.mxu0 %v5080
    %6178 = vmatprep.subr.bf16.mxu0 %v5088
    %6179 = vmatpush1.bf16.msra.mxu0 %v5087
    %6180 = vmatprep.subr.bf16.mxu0 %v5095
    %6181 = vmatpush1.bf16.msra.mxu0 %v5094
    %6182 = vmatprep.subr.bf16.mxu0 %v5102
    %6183 = vmatpush1.bf16.msra.mxu0 %v5101
    %6184 = vmatprep.subr.bf16.mxu0 %v5109
    %6185 = vmatpush1.bf16.msra.mxu0 %v5108
    %6186 = vmatprep.subr.bf16.mxu0 %v5116
    %6187 = vmatpush1.bf16.msra.mxu0 %v5115
    %6188 = vmatprep.subr.bf16.mxu0 %v5123
    %6189 = vmatpush1.bf16.msra.mxu0 %v5122
    %6190 = vmatprep.subr.bf16.mxu0 0
    %6191 = vmatpush1.bf16.msra.mxu0 0
    %6192 = vmatprep.subr.bf16.mxu0 0
    %6193 = vmatpush1.bf16.msra.mxu0 0
    %6194 = vmatprep.subr.bf16.mxu0 0
    %6195 = vmatpush1.bf16.msra.mxu0 0
    %6196 = vmatprep.subr.bf16.mxu0 0
    %6197 = vmatpush1.bf16.msra.mxu0 0
    %6198 = vmatprep.subr.bf16.mxu0 0
    %6199 = vmatpush1.bf16.msra.mxu0 0
    %6200 = vmatprep.subr.bf16.mxu0 0
    %6201 = vmatpush1.bf16.msra.mxu0 0
    %6202 = vmatprep.subr.bf16.mxu0 0
    %6203 = vmatpush1.bf16.msra.mxu0 0
    %6204 = vmatprep.subr.bf16.mxu0 0
    %6205 = vmatpush1.bf16.msra.mxu0 0
    %6206 = vmatprep.mubr.bf16.mxu0 0
    %6207 = vmatmul.mubr.bf16.gmra.mrb[0].mxu0 %v6172
    %v6208 = vpop.f32.mrb[0].mxu0
    %v6209 = vadd.f32 0.0, %v6208
    %v6210 = vpop.f32.mrb[0].mxu0
    %v6211 = vadd.f32 0.0, %v6210
    %v6212 = vpop.f32.mrb[0].mxu0
    %v6213 = vadd.f32 0.0, %v6212
    %v6214 = vpop.f32.mrb[0].mxu0
    %v6215 = vadd.f32 0.0, %v6214
    %6216 = vmatprep.mubr.bf16.mxu0 0
    %6217 = vmatmul.mubr.bf16.gmra.mrb[0].mxu0 %v6173
    %v6218 = vpop.f32.mrb[0].mxu0
    %v6219 = vadd.f32 0.0, %v6218
    %v6220 = vpop.f32.mrb[0].mxu0
    %v6221 = vadd.f32 0.0, %v6220
    %v6222 = vpop.f32.mrb[0].mxu0
    %v6223 = vadd.f32 0.0, %v6222
    %v6224 = vpop.f32.mrb[0].mxu0
    %v6225 = vadd.f32 0.0, %v6224
    %6226 = vdwg.mxu0
    %6227 = vmatprep.subr.bf16.mxu0 %v5076
    %6228 = vmatpush1.bf16.msra.mxu0 %v5075
    %6229 = vmatprep.subr.bf16.mxu0 %v5083
    %6230 = vmatpush1.bf16.msra.mxu0 %v5082
    %6231 = vmatprep.subr.bf16.mxu0 %v5090
    %6232 = vmatpush1.bf16.msra.mxu0 %v5089
    %6233 = vmatprep.subr.bf16.mxu0 %v5097
    %6234 = vmatpush1.bf16.msra.mxu0 %v5096
    %6235 = vmatprep.subr.bf16.mxu0 %v5104
    %6236 = vmatpush1.bf16.msra.mxu0 %v5103
    %6237 = vmatprep.subr.bf16.mxu0 %v5111
    %6238 = vmatpush1.bf16.msra.mxu0 %v5110
    %6239 = vmatprep.subr.bf16.mxu0 %v5118
    %6240 = vmatpush1.bf16.msra.mxu0 %v5117
    %6241 = vmatprep.subr.bf16.mxu0 %v5125
    %6242 = vmatpush1.bf16.msra.mxu0 %v5124
    %6243 = vmatprep.subr.bf16.mxu0 0
    %6244 = vmatpush1.bf16.msra.mxu0 0
    %6245 = vmatprep.subr.bf16.mxu0 0
    %6246 = vmatpush1.bf16.msra.mxu0 0
    %6247 = vmatprep.subr.bf16.mxu0 0
    %6248 = vmatpush1.bf16.msra.mxu0 0
    %6249 = vmatprep.subr.bf16.mxu0 0
    %6250 = vmatpush1.bf16.msra.mxu0 0
    %6251 = vmatprep.subr.bf16.mxu0 0
    %6252 = vmatpush1.bf16.msra.mxu0 0
    %6253 = vmatprep.subr.bf16.mxu0 0
    %6254 = vmatpush1.bf16.msra.mxu0 0
    %6255 = vmatprep.subr.bf16.mxu0 0
    %6256 = vmatpush1.bf16.msra.mxu0 0
    %6257 = vmatprep.subr.bf16.mxu0 0
    %6258 = vmatpush1.bf16.msra.mxu0 0
    %6259 = vmatprep.mubr.bf16.mxu0 0
    %6260 = vmatmul.mubr.bf16.gmra.mrb[0].mxu0 %v6172
    %v6261 = vpop.f32.mrb[0].mxu0
    %v6262 = vadd.f32 0.0, %v6261
    %v6263 = vpop.f32.mrb[0].mxu0
    %v6264 = vadd.f32 0.0, %v6263
    %v6265 = vpop.f32.mrb[0].mxu0
    %v6266 = vadd.f32 0.0, %v6265
    %v6267 = vpop.f32.mrb[0].mxu0
    %v6268 = vadd.f32 0.0, %v6267
    %6269 = vmatprep.mubr.bf16.mxu0 0
    %6270 = vmatmul.mubr.bf16.gmra.mrb[0].mxu0 %v6173
    %v6271 = vpop.f32.mrb[0].mxu0
    %v6272 = vadd.f32 0.0, %v6271
    %v6273 = vpop.f32.mrb[0].mxu0
    %v6274 = vadd.f32 0.0, %v6273
    %v6275 = vpop.f32.mrb[0].mxu0
    %v6276 = vadd.f32 0.0, %v6275
    %v6277 = vpop.f32.mrb[0].mxu0
    %v6278 = vadd.f32 0.0, %v6277
    %6279 = vdwg.mxu0
    %6280 = vmatprep.subr.bf16.mxu0 %v5078
    %6281 = vmatpush1.bf16.msra.mxu0 %v5077
    %6282 = vmatprep.subr.bf16.mxu0 %v5085
    %6283 = vmatpush1.bf16.msra.mxu0 %v5084
    %6284 = vmatprep.subr.bf16.mxu0 %v5092
    %6285 = vmatpush1.bf16.msra.mxu0 %v5091
    %6286 = vmatprep.subr.bf16.mxu0 %v5099
    %6287 = vmatpush1.bf16.msra.mxu0 %v5098
    %6288 = vmatprep.subr.bf16.mxu0 %v5106
    %6289 = vmatpush1.bf16.msra.mxu0 %v5105
    %6290 = vmatprep.subr.bf16.mxu0 %v5113
    %6291 = vmatpush1.bf16.msra.mxu0 %v5112
    %6292 = vmatprep.subr.bf16.mxu0 %v5120
    %6293 = vmatpush1.bf16.msra.mxu0 %v5119
    %6294 = vmatprep.subr.bf16.mxu0 %v5127
    %6295 = vmatpush1.bf16.msra.mxu0 %v5126
    %6296 = vmatprep.subr.bf16.mxu0 0
    %6297 = vmatpush1.bf16.msra.mxu0 0
    %6298 = vmatprep.subr.bf16.mxu0 0
    %6299 = vmatpush1.bf16.msra.mxu0 0
    %6300 = vmatprep.subr.bf16.mxu0 0
    %6301 = vmatpush1.bf16.msra.mxu0 0
    %6302 = vmatprep.subr.bf16.mxu0 0
    %6303 = vmatpush1.bf16.msra.mxu0 0
    %6304 = vmatprep.subr.bf16.mxu0 0
    %6305 = vmatpush1.bf16.msra.mxu0 0
    %6306 = vmatprep.subr.bf16.mxu0 0
    %6307 = vmatpush1.bf16.msra.mxu0 0
    %6308 = vmatprep.subr.bf16.mxu0 0
    %6309 = vmatpush1.bf16.msra.mxu0 0
    %6310 = vmatprep.subr.bf16.mxu0 0
    %6311 = vmatpush1.bf16.msra.mxu0 0
    %6312 = vmatprep.mubr.bf16.mxu0 0
    %6313 = vmatmul.mubr.bf16.gmra.mrb[0].mxu0 %v6172
    %v6314 = vpop.f32.mrb[0].mxu0
    %v6315 = vadd.f32 0.0, %v6314
    %v6316 = vpop.f32.mrb[0].mxu0
    %v6317 = vadd.f32 0.0, %v6316
    %v6318 = vpop.f32.mrb[0].mxu0
    %v6319 = vadd.f32 0.0, %v6318
    %v6320 = vpop.f32.mrb[0].mxu0
    %v6321 = vadd.f32 0.0, %v6320
    %6322 = vmatprep.mubr.bf16.mxu0 0
    %6323 = vmatmul.mubr.bf16.gmra.mrb[0].mxu0 %v6173
    %v6324 = vpop.f32.mrb[0].mxu0
    %v6325 = vadd.f32 0.0, %v6324
    %v6326 = vpop.f32.mrb[0].mxu0
    %v6327 = vadd.f32 0.0, %v6326
    %v6328 = vpop.f32.mrb[0].mxu0
    %v6329 = vadd.f32 0.0, %v6328
    %v6330 = vpop.f32.mrb[0].mxu0
    %v6331 = vadd.f32 0.0, %v6330
    %6332 = vdwg.mxu0
    %6333 = vmatprep.subr.bf16.mxu0 0
    %6334 = vmatpush1.bf16.msra.mxu0 %v5079
    %6335 = vmatprep.subr.bf16.mxu0 0
    %6336 = vmatpush1.bf16.msra.mxu0 %v5086
    %6337 = vmatprep.subr.bf16.mxu0 0
    %6338 = vmatpush1.bf16.msra.mxu0 %v5093
    %6339 = vmatprep.subr.bf16.mxu0 0
    %6340 = vmatpush1.bf16.msra.mxu0 %v5100
    %6341 = vmatprep.subr.bf16.mxu0 0
    %6342 = vmatpush1.bf16.msra.mxu0 %v5107
    %6343 = vmatprep.subr.bf16.mxu0 0
    %6344 = vmatpush1.bf16.msra.mxu0 %v5114
    %6345 = vmatprep.subr.bf16.mxu0 0
    %6346 = vmatpush1.bf16.msra.mxu0 %v5121
    %6347 = vmatprep.subr.bf16.mxu0 0
    %6348 = vmatpush1.bf16.msra.mxu0 %v5128
    %6349 = vmatprep.subr.bf16.mxu0 0
    %6350 = vmatpush1.bf16.msra.mxu0 0
    %6351 = vmatprep.subr.bf16.mxu0 0
    %6352 = vmatpush1.bf16.msra.mxu0 0
    %6353 = vmatprep.subr.bf16.mxu0 0
    %6354 = vmatpush1.bf16.msra.mxu0 0
    %6355 = vmatprep.subr.bf16.mxu0 0
    %6356 = vmatpush1.bf16.msra.mxu0 0
    %6357 = vmatprep.subr.bf16.mxu0 0
    %6358 = vmatpush1.bf16.msra.mxu0 0
    %6359 = vmatprep.subr.bf16.mxu0 0
    %6360 = vmatpush1.bf16.msra.mxu0 0
    %6361 = vmatprep.subr.bf16.mxu0 0
    %6362 = vmatpush1.bf16.msra.mxu0 0
    %6363 = vmatprep.subr.bf16.mxu0 0
    %6364 = vmatpush1.bf16.msra.mxu0 0
    %6365 = vmatprep.mubr.bf16.mxu0 0
    %6366 = vmatmul.mubr.bf16.gmra.mrb[0].mxu0 %v6172
    %v6367 = vpop.f32.mrb[0].mxu0
    %v6368 = vadd.f32 0.0, %v6367
    %v6369 = vpop.f32.mrb[0].mxu0
    %v6370 = vpop.f32.mrb[0].mxu0
    %v6371 = vadd.f32 0.0, %v6370
    %v6372 = vpop.f32.mrb[0].mxu0
    %6373 = vmatprep.mubr.bf16.mxu0 0
    %6374 = vmatmul.mubr.bf16.gmra.mrb[0].mxu0 %v6173
    %v6375 = vpop.f32.mrb[0].mxu0
    %v6376 = vadd.f32 0.0, %v6375
    %v6377 = vpop.f32.mrb[0].mxu0
    %v6378 = vpop.f32.mrb[0].mxu0
    %v6379 = vadd.f32 0.0, %v6378
    %v6380 = vpop.f32.mrb[0].mxu0
    %6381 = vdwg.mxu0
    %v6382 = vmul.f32 %v3700, %v6209
    %v6383 = vmul.f32 %v3702, %v6211
    %v6384 = vmul.f32 %v3842, %v6262
    %v6385 = vmul.f32 %v3844, %v6264
    %v6386 = vmul.f32 %v3984, %v6315
    %v6387 = vmul.f32 %v3986, %v6317
    %v6388 = vmul.f32 %v4114, %v6368
    %v6389 = vmul.f32 %v6382, %v5403
    %v6390 = vmul.f32 %v6383, %v5407
    %v6391 = vmul.f32 %v6384, %v5411
    %v6392 = vmul.f32 %v6385, %v5415
    %v6393 = vmul.f32 %v6386, %v5419
    %v6394 = vmul.f32 %v6387, %v5423
    %v6395 = vmul.f32 %v6388, %v5427
    %v6396 = vmul.f32 %v3706, 0.57735026
    %v6397 = vmul.f32 %v3708, 0.57735026
    %v6398 = vmul.f32 %v3848, 0.57735026
    %v6399 = vmul.f32 %v3850, 0.57735026
    %v6400 = vmul.f32 %v3990, 0.57735026
    %v6401 = vmul.f32 %v3992, 0.57735026
    %v6402 = vmul.f32 %v4119, 0.57735026
    %v6403 = vmul.f32 %v6213, %v5445
    %v6404 = vmul.f32 %v6215, %v5449
    %v6405 = vmul.f32 %v6266, %v5453
    %v6406 = vmul.f32 %v6268, %v5457
    %v6407 = vmul.f32 %v6319, %v5461
    %v6408 = vmul.f32 %v6321, %v5465
    %v6409 = vmul.f32 %v6371, %v5469
    %v6410 = vmul.f32 %v6219, %v5480
    %v6411 = vmul.f32 %v6221, %v5484
    %v6412 = vmul.f32 %v6272, %v5488
    %v6413 = vmul.f32 %v6274, %v5492
    %v6414 = vmul.f32 %v6325, %v5496
    %v6415 = vmul.f32 %v6327, %v5500
    %v6416 = vmul.f32 %v6376, %v5504
    %v6417 = vadd.f32 %v6403, %v6410
    %v6418 = vadd.f32 %v6404, %v6411
    %v6419 = vadd.f32 %v6405, %v6412
    %v6420 = vadd.f32 %v6406, %v6413
    %v6421 = vadd.f32 %v6407, %v6414
    %v6422 = vadd.f32 %v6408, %v6415
    %v6423 = vadd.f32 %v6409, %v6416
    %v6424 = vmul.f32 %v6223, %v5522
    %v6425 = vmul.f32 %v6225, %v5526
    %v6426 = vmul.f32 %v6276, %v5530
    %v6427 = vmul.f32 %v6278, %v5534
    %v6428 = vmul.f32 %v6329, %v5538
    %v6429 = vmul.f32 %v6331, %v5542
    %v6430 = vmul.f32 %v6379, %v5546
    %v6431 = vadd.f32 %v6417, %v6424
    %v6432 = vadd.f32 %v6418, %v6425
    %v6433 = vadd.f32 %v6419, %v6426
    %v6434 = vadd.f32 %v6420, %v6427
    %v6435 = vadd.f32 %v6421, %v6428
    %v6436 = vadd.f32 %v6422, %v6429
    %v6437 = vadd.f32 %v6423, %v6430
    %v6438 = vmul.f32 %v6396, %v6431
    %v6439 = vmul.f32 %v6397, %v6432
    %v6440 = vmul.f32 %v6398, %v6433
    %v6441 = vmul.f32 %v6399, %v6434
    %v6442 = vmul.f32 %v6400, %v6435
    %v6443 = vmul.f32 %v6401, %v6436
    %v6444 = vmul.f32 %v6402, %v6437
    %v6445 = vpack.c.bf16 %v6438, %v6389
    %v6446 = vpack.c.bf16 %v6439, %v6390
    %v6447 = vpack.c.bf16 %v6440, %v6391
    %v6448 = vpack.c.bf16 %v6441, %v6392
    %v6449 = vpack.c.bf16 %v6442, %v6393
    %v6450 = vpack.c.bf16 %v6443, %v6394
    %v6451 = vpack.c.bf16 %v6444, %v6395
    %6452 = vst [vmem:[#allocation2] sm:$0xff] %v6445
    %6453 = vst [vmem:[#allocation2 + $0x8] sm:$0xff] %v6446
    %6454 = vst [vmem:[#allocation2 + $0x10] sm:$0xff] %v6447
    %6455 = vst [vmem:[#allocation2 + $0x18] sm:$0xff] %v6448
    %6456 = vst [vmem:[#allocation2 + $0x20] sm:$0xff] %v6449
    %6457 = vst [vmem:[#allocation2 + $0x28] sm:$0xff] %v6450
    %6458 = vst [vmem:[#allocation2 + $0x30] sm:$0xff] %v6451
    %v6459 = vld [vmem:[#allocation2] sm:$0xff]
    %v6460 = vld [vmem:[#allocation2 + $0x8] sm:$0xff]
    %v6461 = vld [vmem:[#allocation2 + $0x10] sm:$0xff]
    %v6462 = vld [vmem:[#allocation2 + $0x18] sm:$0xff]
    %v6463 = vld [vmem:[#allocation2 + $0x20] sm:$0xff]
    %v6464 = vld [vmem:[#allocation2 + $0x28] sm:$0xff]
    %v6465 = vld [vmem:[#allocation2 + $0x30] sm:$0xff]
    %6466 = vmatprep.subr.bf16.mxu0 0
    %6467 = vmatpush1.bf16.msra.mxu0 %v4440
    %6468 = vmatprep.subr.bf16.mxu0 0
    %6469 = vmatpush1.bf16.msra.mxu0 %v4441
    %6470 = vmatprep.subr.bf16.mxu0 0
    %6471 = vmatpush1.bf16.msra.mxu0 %v4442
    %6472 = vmatprep.subr.bf16.mxu0 0
    %6473 = vmatpush1.bf16.msra.mxu0 %v4443
    %6474 = vmatprep.subr.bf16.mxu0 0
    %6475 = vmatpush1.bf16.msra.mxu0 %v4444
    %6476 = vmatprep.subr.bf16.mxu0 0
    %6477 = vmatpush1.bf16.msra.mxu0 %v4445
    %6478 = vmatprep.subr.bf16.mxu0 0
    %6479 = vmatpush1.bf16.msra.mxu0 %v4446
    %6480 = vmatprep.subr.bf16.mxu0 0
    %6481 = vmatpush1.bf16.msra.mxu0 %v4447
    %6482 = vmatprep.subr.bf16.mxu0 0
    %6483 = vmatpush1.bf16.msra.mxu0 %v4448
    %6484 = vmatprep.subr.bf16.mxu0 0
    %6485 = vmatpush1.bf16.msra.mxu0 %v4449
    %6486 = vmatprep.subr.bf16.mxu0 0
    %6487 = vmatpush1.bf16.msra.mxu0 %v4450
    %6488 = vmatprep.subr.bf16.mxu0 0
    %6489 = vmatpush1.bf16.msra.mxu0 %v4451
    %6490 = vmatprep.subr.bf16.mxu0 0
    %6491 = vmatpush1.bf16.msra.mxu0 %v4452
    %6492 = vmatprep.subr.bf16.mxu0 0
    %6493 = vmatpush1.bf16.msra.mxu0 %v4453
    %6494 = vmatprep.subr.bf16.mxu0 0
    %6495 = vmatpush1.bf16.msra.mxu0 %v4454
    %6496 = vmatprep.subr.bf16.mxu0 0
    %6497 = vmatpush1.bf16.msra.mxu0 %v4455
    %6498 = vmatprep.mubr.bf16.mxu0 %v6460
    %6499 = vmatmul.mubr.bf16.gmra.mrb[0].mxu0 %v6459
    %v6500 = vpop.f32.mrb[0].mxu0
    %v6501 = vadd.f32 0.0, %v6500
    %v6502 = vpop.f32.mrb[0].mxu0
    %v6503 = vpop.f32.mrb[0].mxu0
    %v6504 = vadd.f32 0.0, %v6503
    %v6505 = vpop.f32.mrb[0].mxu0
    %6506 = vdwg.mxu0
    %6507 = vmatprep.subr.bf16.mxu0 0
    %6508 = vmatpush1.bf16.msra.mxu0 %v4456
    %6509 = vmatprep.subr.bf16.mxu0 0
    %6510 = vmatpush1.bf16.msra.mxu0 %v4457
    %6511 = vmatprep.subr.bf16.mxu0 0
    %6512 = vmatpush1.bf16.msra.mxu0 %v4458
    %6513 = vmatprep.subr.bf16.mxu0 0
    %6514 = vmatpush1.bf16.msra.mxu0 %v4459
    %6515 = vmatprep.subr.bf16.mxu0 0
    %6516 = vmatpush1.bf16.msra.mxu0 %v4460
    %6517 = vmatprep.subr.bf16.mxu0 0
    %6518 = vmatpush1.bf16.msra.mxu0 %v4461
    %6519 = vmatprep.subr.bf16.mxu0 0
    %6520 = vmatpush1.bf16.msra.mxu0 %v4462
    %6521 = vmatprep.subr.bf16.mxu0 0
    %6522 = vmatpush1.bf16.msra.mxu0 %v4463
    %6523 = vmatprep.subr.bf16.mxu0 0
    %6524 = vmatpush1.bf16.msra.mxu0 %v4464
    %6525 = vmatprep.subr.bf16.mxu0 0
    %6526 = vmatpush1.bf16.msra.mxu0 %v4465
    %6527 = vmatprep.subr.bf16.mxu0 0
    %6528 = vmatpush1.bf16.msra.mxu0 %v4466
    %6529 = vmatprep.subr.bf16.mxu0 0
    %6530 = vmatpush1.bf16.msra.mxu0 %v4467
    %6531 = vmatprep.subr.bf16.mxu0 0
    %6532 = vmatpush1.bf16.msra.mxu0 %v4468
    %6533 = vmatprep.subr.bf16.mxu0 0
    %6534 = vmatpush1.bf16.msra.mxu0 %v4469
    %6535 = vmatprep.subr.bf16.mxu0 0
    %6536 = vmatpush1.bf16.msra.mxu0 %v4470
    %6537 = vmatprep.subr.bf16.mxu0 0
    %6538 = vmatpush1.bf16.msra.mxu0 %v4471
    %6539 = vmatprep.mubr.bf16.mxu0 %v6462
    %6540 = vmatmul.mubr.bf16.gmra.mrb[0].mxu0 %v6461
    %v6541 = vpop.f32.mrb[0].mxu0
    %v6542 = vadd.f32 %v6501, %v6541
    %v6543 = vpop.f32.mrb[0].mxu0
    %v6544 = vpop.f32.mrb[0].mxu0
    %v6545 = vadd.f32 %v6504, %v6544
    %v6546 = vpop.f32.mrb[0].mxu0
    %6547 = vdwg.mxu0
    %6548 = vmatprep.subr.bf16.mxu0 0
    %6549 = vmatpush1.bf16.msra.mxu0 %v4472
    %6550 = vmatprep.subr.bf16.mxu0 0
    %6551 = vmatpush1.bf16.msra.mxu0 %v4473
    %6552 = vmatprep.subr.bf16.mxu0 0
    %6553 = vmatpush1.bf16.msra.mxu0 %v4474
    %6554 = vmatprep.subr.bf16.mxu0 0
    %6555 = vmatpush1.bf16.msra.mxu0 %v4475
    %6556 = vmatprep.subr.bf16.mxu0 0
    %6557 = vmatpush1.bf16.msra.mxu0 %v4476
    %6558 = vmatprep.subr.bf16.mxu0 0
    %6559 = vmatpush1.bf16.msra.mxu0 %v4477
    %6560 = vmatprep.subr.bf16.mxu0 0
    %6561 = vmatpush1.bf16.msra.mxu0 %v4478
    %6562 = vmatprep.subr.bf16.mxu0 0
    %6563 = vmatpush1.bf16.msra.mxu0 %v4479
    %6564 = vmatprep.subr.bf16.mxu0 0
    %6565 = vmatpush1.bf16.msra.mxu0 %v4480
    %6566 = vmatprep.subr.bf16.mxu0 0
    %6567 = vmatpush1.bf16.msra.mxu0 %v4481
    %6568 = vmatprep.subr.bf16.mxu0 0
    %6569 = vmatpush1.bf16.msra.mxu0 %v4482
    %6570 = vmatprep.subr.bf16.mxu0 0
    %6571 = vmatpush1.bf16.msra.mxu0 %v4483
    %6572 = vmatprep.subr.bf16.mxu0 0
    %6573 = vmatpush1.bf16.msra.mxu0 %v4484
    %6574 = vmatprep.subr.bf16.mxu0 0
    %6575 = vmatpush1.bf16.msra.mxu0 %v4485
    %6576 = vmatprep.subr.bf16.mxu0 0
    %6577 = vmatpush1.bf16.msra.mxu0 %v4486
    %6578 = vmatprep.subr.bf16.mxu0 0
    %6579 = vmatpush1.bf16.msra.mxu0 %v4487
    %6580 = vmatprep.mubr.bf16.mxu0 %v6464
    %6581 = vmatmul.mubr.bf16.gmra.mrb[0].mxu0 %v6463
    %v6582 = vpop.f32.mrb[0].mxu0
    %v6583 = vadd.f32 %v6542, %v6582
    %v6584 = vpop.f32.mrb[0].mxu0
    %v6585 = vpop.f32.mrb[0].mxu0
    %v6586 = vadd.f32 %v6545, %v6585
    %v6587 = vpop.f32.mrb[0].mxu0
    %6588 = vdwg.mxu0
    %6589 = vmatprep.subr.bf16.mxu0 0
    %6590 = vmatpush1.bf16.msra.mxu0 %v4488
    %6591 = vmatprep.subr.bf16.mxu0 0
    %6592 = vmatpush1.bf16.msra.mxu0 %v4489
    %6593 = vmatprep.subr.bf16.mxu0 0
    %6594 = vmatpush1.bf16.msra.mxu0 %v4490
    %6595 = vmatprep.subr.bf16.mxu0 0
    %6596 = vmatpush1.bf16.msra.mxu0 %v4491
    %6597 = vmatprep.subr.bf16.mxu0 0
    %6598 = vmatpush1.bf16.msra.mxu0 %v4492
    %6599 = vmatprep.subr.bf16.mxu0 0
    %6600 = vmatpush1.bf16.msra.mxu0 %v4493
    %6601 = vmatprep.subr.bf16.mxu0 0
    %6602 = vmatpush1.bf16.msra.mxu0 %v4494
    %6603 = vmatprep.subr.bf16.mxu0 0
    %6604 = vmatpush1.bf16.msra.mxu0 %v4495
    %6605 = vmatprep.subr.bf16.mxu0 0
    %6606 = vmatpush1.bf16.msra.mxu0 0
    %6607 = vmatprep.subr.bf16.mxu0 0
    %6608 = vmatpush1.bf16.msra.mxu0 0
    %6609 = vmatprep.subr.bf16.mxu0 0
    %6610 = vmatpush1.bf16.msra.mxu0 0
    %6611 = vmatprep.subr.bf16.mxu0 0
    %6612 = vmatpush1.bf16.msra.mxu0 0
    %6613 = vmatprep.subr.bf16.mxu0 0
    %6614 = vmatpush1.bf16.msra.mxu0 0
    %6615 = vmatprep.subr.bf16.mxu0 0
    %6616 = vmatpush1.bf16.msra.mxu0 0
    %6617 = vmatprep.subr.bf16.mxu0 0
    %6618 = vmatpush1.bf16.msra.mxu0 0
    %6619 = vmatprep.subr.bf16.mxu0 0
    %6620 = vmatpush1.bf16.msra.mxu0 0
    %6621 = vmatprep.mubr.bf16.mxu0 0
    %6622 = vmatmul.mubr.bf16.gmra.mrb[0].mxu0 %v6465
    %v6623 = vpop.f32.mrb[0].mxu0
    %v6624 = vadd.f32 %v6583, %v6623
    %v6625 = vpop.f32.mrb[0].mxu0
    %v6626 = vpop.f32.mrb[0].mxu0
    %v6627 = vadd.f32 %v6586, %v6626
    %v6628 = vpop.f32.mrb[0].mxu0
    %6629 = vdwg.mxu0
    %v6630 = vld [vmem:[%s14] sm:$0xf]
    %v6631 = vpack.c.bf16 %v6627, %v6624
    %vm6632 = vcmask 130048
    %v6634 = vsel %vm6632, %v6630, 0
    %6636 = vmatprep.subr.bf16.mxu0 0
    %6637 = vmatpush1.bf16.msra.mxu0 %v6631
    %6638 = vmatprep.subr.bf16.mxu0 0
    %6639 = vmatpush1.bf16.msra.mxu0 0
    %6640 = vmatprep.subr.bf16.mxu0 0
    %6641 = vmatpush1.bf16.msra.mxu0 0
    %6642 = vmatprep.subr.bf16.mxu0 0
    %6643 = vmatpush1.bf16.msra.mxu0 0
    %6644 = vmatprep.subr.bf16.mxu0 0
    %6645 = vmatpush1.bf16.msra.mxu0 0
    %6646 = vmatprep.subr.bf16.mxu0 0
    %6647 = vmatpush1.bf16.msra.mxu0 0
    %6648 = vmatprep.subr.bf16.mxu0 0
    %6649 = vmatpush1.bf16.msra.mxu0 0
    %6650 = vmatprep.subr.bf16.mxu0 0
    %6651 = vmatpush1.bf16.msra.mxu0 0
    %6652 = vmatprep.subr.bf16.mxu0 0
    %6653 = vmatpush1.bf16.msra.mxu0 0
    %6654 = vmatprep.subr.bf16.mxu0 0
    %6655 = vmatpush1.bf16.msra.mxu0 0
    %6656 = vmatprep.subr.bf16.mxu0 0
    %6657 = vmatpush1.bf16.msra.mxu0 0
    %6658 = vmatprep.subr.bf16.mxu0 0
    %6659 = vmatpush1.bf16.msra.mxu0 0
    %6660 = vmatprep.subr.bf16.mxu0 0
    %6661 = vmatpush1.bf16.msra.mxu0 0
    %6662 = vmatprep.subr.bf16.mxu0 0
    %6663 = vmatpush1.bf16.msra.mxu0 0
    %6664 = vmatprep.subr.bf16.mxu0 0
    %6665 = vmatpush1.bf16.msra.mxu0 0
    %6666 = vmatprep.subr.bf16.mxu0 0
    %6667 = vmatpush1.bf16.msra.mxu0 0
    %6668 = vmatprep.mubr.bf16.mxu0 0
    %6669 = vmatmul.mubr.bf16.gmra.mrb[0].mxu0 %v6634
    %v6670 = vpop.f32.mrb[0].mxu0
    %v6671 = vadd.f32 0.0, %v6670
    %v6672 = vpop.f32.mrb[0].mxu0
    %v6673 = vpop.f32.mrb[0].mxu0
    %v6674 = vpop.f32.mrb[0].mxu0
    %6675 = vdwg.mxu0
    %v6676 = vmul.f32 %v6151, 0.13529903
    %v6677 = vmul.f32 %v6671, 0.32664075
    %v6678 = vadd.f32 %v6676, %v6677
    %v6679 = vpack.c.bf16 %v6678, %v6678
    %v6696 = vunpack.c.l.b16 %v273
    %v6697 = vunpack.c.l.b16 %v274
    %v6698 = vunpack.c.l.b16 %v275
    %v6699 = vunpack.c.l.b16 %v276
    %v6700 = vunpack.c.l.b16 %v277
    %v6701 = vunpack.c.l.b16 %v278
    %v6702 = vunpack.c.l.b16 %v279
    %v6703 = vunpack.c.l.b16 %v280
    %v6704 = vunpack.c.l.b16 %v281
    %v6705 = vunpack.c.l.b16 %v282
    %v6706 = vunpack.c.l.b16 %v283
    %v6707 = vunpack.c.l.b16 %v284
    %v6708 = vunpack.c.l.b16 %v285
    %v6709 = vunpack.c.l.b16 %v286
    %v6710 = vunpack.c.l.b16 %v287
    %v6711 = vunpack.c.l.b16 %v288
    %v6712 = vpack.c.b16 %v6697, %v6696
    %v6713 = vpack.c.b16 %v6699, %v6698
    %v6714 = vpack.c.b16 %v6701, %v6700
    %v6715 = vpack.c.b16 %v6703, %v6702
    %v6716 = vpack.c.b16 %v6705, %v6704
    %v6717 = vpack.c.b16 %v6707, %v6706
    %v6718 = vpack.c.b16 %v6709, %v6708
    %v6719 = vpack.c.b16 %v6711, %v6710
    %6728 = vmatprep.subr.bf16.mxu0 0
    %6729 = vmatpush1.bf16.msra.mxu0 %v6712
    %6730 = vmatprep.subr.bf16.mxu0 0
    %6731 = vmatpush1.bf16.msra.mxu0 %v6713
    %6732 = vmatprep.subr.bf16.mxu0 0
    %6733 = vmatpush1.bf16.msra.mxu0 %v6714
    %6734 = vmatprep.subr.bf16.mxu0 0
    %6735 = vmatpush1.bf16.msra.mxu0 %v6715
    %6736 = vmatprep.subr.bf16.mxu0 0
    %6737 = vmatpush1.bf16.msra.mxu0 %v6716
    %6738 = vmatprep.subr.bf16.mxu0 0
    %6739 = vmatpush1.bf16.msra.mxu0 %v6717
    %6740 = vmatprep.subr.bf16.mxu0 0
    %6741 = vmatpush1.bf16.msra.mxu0 %v6718
    %6742 = vmatprep.subr.bf16.mxu0 0
    %6743 = vmatpush1.bf16.msra.mxu0 %v6719
    %6744 = vmatprep.subr.bf16.mxu0 0
    %6745 = vmatpush1.bf16.msra.mxu0 0
    %6746 = vmatprep.subr.bf16.mxu0 0
    %6747 = vmatpush1.bf16.msra.mxu0 0
    %6748 = vmatprep.subr.bf16.mxu0 0
    %6749 = vmatpush1.bf16.msra.mxu0 0
    %6750 = vmatprep.subr.bf16.mxu0 0
    %6751 = vmatpush1.bf16.msra.mxu0 0
    %6752 = vmatprep.subr.bf16.mxu0 0
    %6753 = vmatpush1.bf16.msra.mxu0 0
    %6754 = vmatprep.subr.bf16.mxu0 0
    %6755 = vmatpush1.bf16.msra.mxu0 0
    %6756 = vmatprep.subr.bf16.mxu0 0
    %6757 = vmatpush1.bf16.msra.mxu0 0
    %6758 = vmatprep.subr.bf16.mxu0 0
    %6759 = vmatpush1.bf16.msra.mxu0 0
    %6760 = vmatprep.mubr.bf16.mxu0 0
    %6761 = vmatmul.mubr.bf16.gmra.mrb[0].mxu0 %v6679
    %v6762 = vpop.f32.mrb[0].mxu0
    %v6763 = vadd.f32 0.0, %v6762
    %v6764 = vpop.f32.mrb[0].mxu0
    %v6765 = vpop.f32.mrb[0].mxu0
    %v6766 = vpop.f32.mrb[0].mxu0
    %6767 = vdwg.mxu0
    %vm6768 = vcmask 125952
    %6769 = vst.msk [vmem:[#allocation9] sm:$0xf] %vm6768, %v6763
    // Predicated region
    $region74: #{network_forward.1} parent=1 // pred_check
      _
    $region75: #{network_forward.1} parent=1 // pred_check_branch
      %6771 = sbr.rel (0) target = $region77
    $region76: #{network_forward.1} parent=1 // pred_region
      %s6773 = ssub.s32 64, 64
      %6774 = vsyncadd [#allocation5], %s6773
      %s6776 = sshll.u32 [#allocation9], 4
      %s6777 = int_to_ptr.vmem [resolvable:$true] %s6776
      %6779 = dma.vmem_to_hbm [thread:$0]  %s6777, 64, %s15, [#allocation5]
    $region77: #{network_forward.1} parent=1 // pred_fallthru
      _
    // Predicated region
    $region78: #{network_forward.1} parent=1 // pred_check
      _
    $region79: #{network_forward.1} parent=1 // pred_check_branch
      %6781 = sbr.rel (0) target = $region81
    $region80: #{network_forward.1} parent=1 // pred_region
      %6782 = dma.done [#allocation5], 64
    $region81: #{network_forward.1} parent=1 // pred_fallthru
      _
    %6783 = vsyncpa [#allocation4], 1
    %6784 = vsyncpa [#allocation7], 1
    %6785 = vsyncpa [#allocation5], 1

</llo_original>
